<compile_context>
chip_gen: v7x
topology: tpu7x:2x2x1
jax: 0.10.0
libtpu: 0.0.40
codegen_flags: <defaults>
</compile_context>

<pallas_src>
import jax
import jax.numpy as jnp
from jax.experimental import pallas as pl
from jax.experimental.pallas import tpu as pltpu


# ----------------------------------------------------------------------------
# Pallas kernel: layers 2/3 of the shared PointNet MLP + max-pool over samples
# ----------------------------------------------------------------------------
def _sa_mlp_maxpool_kernel(h1_ref, w2_ref, b2_ref, w3_ref, b3_ref, o_ref):
    """h1_ref : (tm, S, C1) bf16 post-layer-1 activations (xyz+feat+bias+ReLU)
    w2/w3    : bf16 weights; b2/b3 : (1, C) f32 folded-BN biases
    o_ref    : (tm, Cout) f32 max over S of the layer-3 output."""
    tm, S, c1 = h1_ref.shape
    h = h1_ref[...].reshape(tm * S, c1)                        # bf16, free reshape
    # Layer 2: bf16 MXU matmul, f32 accumulation; bias/ReLU in f32.
    h = jnp.dot(h, w2_ref[...], preferred_element_type=jnp.float32) + b2_ref[...]
    h = jnp.maximum(h, 0.0)
    # Layer 3.
    h = jnp.dot(h.astype(jnp.bfloat16), w3_ref[...],
                preferred_element_type=jnp.float32) + b3_ref[...]
    h = jnp.maximum(h, 0.0)
    cout = h.shape[-1]
    # TODO(synk): if tm is ever raised past ~256, stream this max over S-chunks
    # instead of materializing the full (tm*S, Cout) f32 intermediate.
    o_ref[...] = jnp.max(h.reshape(tm, S, cout), axis=1)


_TM_CANDIDATES = (256, 128, 64, 32, 16, 8)


def _tpu_config():
    """(prefer_split_grid, vmem_limit_bytes) based on the TPU generation."""
    kind = ""
    try:
        kind = jax.devices()[0].device_kind.lower()
    except Exception:
        pass
    if "v7" in kind:
        # 2 TensorCores/chip, 64 MiB physical VMEM per TC.
        return True, 48 * 1024 * 1024
    # v5e / v6e: 1 TensorCore, 128 MiB physical VMEM.
    return False, 96 * 1024 * 1024


def _choose_tm(M, prefer_split):
    if prefer_split:
        # v7x megacore: prefer a balanced >=2-step grid for "parallel" sharding.
        for tm in _TM_CANDIDATES:
            if M % tm == 0 and M // tm >= 2:
                return tm
    # v5e/v6e (the grid is a serial loop) or tiny M: one max-size tile.
    for tm in _TM_CANDIDATES:
        if tm <= M and M % tm == 0:
            return tm
    return M


def sa_mlp_maxpool(h1, w2, b2, w3, b3):
    """h1: (M, S, C1) post-layer-1 activations -> (M, Cout) f32 max-pool."""
    M, S, C1 = h1.shape
    C2, Cout = w2.shape[1], w3.shape[1]
    prefer_split, vmem_limit = _tpu_config()
    tm = _choose_tm(M, prefer_split)
    grid = (M // tm,)
    return pl.pallas_call(
        _sa_mlp_maxpool_kernel,
        out_shape=jax.ShapeDtypeStruct((M, Cout), jnp.float32),
        grid=grid,
        in_specs=[
            pl.BlockSpec((tm, S, C1), lambda i: (i, 0, 0)),
            # TODO(synk): the grid-invariant weight/bias operands below could be
            # single-buffered (pipeline_mode=pl.Buffered(1)); left at the default
            # double-buffering for compile portability (they total < 200 KiB).
            pl.BlockSpec((C1, C2), lambda i: (0, 0)),
            pl.BlockSpec((1, C2), lambda i: (0, 0)),
            pl.BlockSpec((C2, Cout), lambda i: (0, 0)),
            pl.BlockSpec((1, Cout), lambda i: (0, 0)),
        ],
        out_specs=pl.BlockSpec((tm, Cout), lambda i: (i, 0)),
        compiler_params=pltpu.CompilerParams(
            dimension_semantics=(("parallel",) if prefer_split else ("arbitrary",)),
            vmem_limit_bytes=vmem_limit),
    )(h1.astype(jnp.bfloat16), w2.astype(jnp.bfloat16), b2,
      w3.astype(jnp.bfloat16), b3)


# ----------------------------------------------------------------------------
# Plain-JAX glue: FPS, ball query, grouping (data-dependent gathers)
# ----------------------------------------------------------------------------
# TODO(synk): FPS (inherently sequential) and ball-query remain plain-JAX glue
# and dominate wall clock at these sizes; a Pallas version needs the distance
# array resident in VMEM across FPS iterations, SMEM index tables, and
# scalar-prefetch-driven gathers feeding the MLP kernel.
def farthest_point_sample(xyz, npoint):
    """xyz: (B, N, 3) -> (B, npoint) int32 indices (starts at point 0)."""
    B, N, _ = xyz.shape

    def body(i, carry):
        dist, idxs, farthest = carry
        idxs = idxs.at[:, i].set(farthest)
        centroid = jnp.take_along_axis(xyz, farthest[:, None, None], axis=1)
        d = jnp.sum((xyz - centroid) ** 2, axis=-1)
        dist = jnp.minimum(dist, d)
        farthest = jnp.argmax(dist, axis=-1).astype(jnp.int32)
        return dist, idxs, farthest

    dist0 = jnp.full((B, N), 1e10, jnp.float32)
    idxs0 = jnp.zeros((B, npoint), jnp.int32)
    far0 = jnp.zeros((B,), jnp.int32)
    _, idxs, _ = jax.lax.fori_loop(0, npoint, body, (dist0, idxs0, far0))
    return idxs


def ball_query(radius, nsample, xyz, new_xyz):
    """First `nsample` points within `radius` of each center (padded with the
    first valid index, or 0 if none), matching the pointnet2 CUDA semantics.
    Sort-free: rank within-radius hits via cumsum and pick slot j by argmax.
    xyz: (B,N,3), new_xyz: (B,S,3) -> (B,S,nsample) int32."""
    sqrd = jnp.sum((new_xyz[:, :, None, :] - xyz[:, None, :, :]) ** 2, axis=-1)
    within = sqrd <= radius * radius                          # (B,S,N)
    rank = jnp.cumsum(within.astype(jnp.int32), axis=-1)      # 1-based rank
    slots = jnp.arange(1, nsample + 1, dtype=jnp.int32)       # (K,)
    match = within[..., None] & (rank[..., None] == slots)    # (B,S,N,K)
    idx = jnp.argmax(match, axis=2).astype(jnp.int32)         # (B,S,K)
    found = jnp.any(match, axis=2)                            # (B,S,K)
    first = jnp.where(found[..., :1], idx[..., :1], 0)        # pad value
    return jnp.where(found, idx, first)


def gather_points(points, idx):
    """points: (B, N, C), idx: (B, ...) -> (B, ..., C)."""
    return jax.vmap(lambda p, i: p[i])(points, idx)


def query_and_group(xyz, feat, new_xyz, radius, nsample, normalize_xyz=True):
    """Returns (grouped_xyz (B,S,K,3), grouped_feat (B,S,K,C)), channel-last."""
    idx = ball_query(radius, nsample, xyz, new_xyz)            # (B,S,K)
    grouped_xyz = gather_points(xyz, idx) - new_xyz[:, :, None, :]
    if normalize_xyz:
        grouped_xyz = grouped_xyz / radius
    grouped_feat = gather_points(feat, idx)                    # (B,S,K,C)
    return grouped_xyz, grouped_feat


# ----------------------------------------------------------------------------
# VoteQN2 forward (PointNet2SASSG neck with 3 SA modules, no FP modules)
# ----------------------------------------------------------------------------
NUM_POINTS = (64, 16, 1)
RADII = (1.2, 3.6, 3.6)
# Keep nsample a multiple of 16 (bf16 sublane tile) so the in-kernel
# (tm,S,C)->(tm*S,C) reshapes stay free reinterpretations.
NUM_SAMPLES = (16, 16, 16)


def sa_channels(output_shape):
    return ((64, 64, 128), (128, 128, 256), (128, 64, output_shape))


def init_params(output_shape, in_channels=259, seed=0):
    """Deterministic SYNTHETIC weights (not a checkpoint load).  Real BN must
    be folded into (W, b) before use -- see header note."""
    key = jax.random.PRNGKey(seed)
    params = []
    c_prev_feat = in_channels - 3  # 256 point features (first 3 dims are xyz)
    for chans in sa_channels(output_shape):
        cin = c_prev_feat + 3      # use_xyz=True: [xyz(3); features]
        layer = []
        for cout in chans:
            key, kw, kb = jax.random.split(key, 3)
            w = (jax.random.normal(kw, (cin, cout), jnp.float32)
                 * (1.0 / jnp.sqrt(cin)))
            b = jax.random.normal(kb, (1, cout), jnp.float32) * 0.01
            layer.append((w, b))
            cin = cout
        params.append(layer)
        c_prev_feat = chans[-1]
    return params


@jax.jit
def vote_qn2_forward(obs, action_mask, params):
    """obs: (B, N, 259) point cloud; action_mask: (B, output_shape)."""
    xyz = obs[..., :3]
    features = obs[..., 3:]                     # (B, N, 256), channel-last

    for li in range(3):
        npoint, radius, nsample = NUM_POINTS[li], RADII[li], NUM_SAMPLES[li]
        (w1, b1), (w2, b2), (w3, b3) = params[li]
        w1_xyz, w1_feat = w1[:3], w1[3:]

        # Hoisted layer-1 feature projection: once per point, before grouping.
        proj = jnp.dot(features, w1_feat,
                       preferred_element_type=jnp.float32)     # (B, N, C1) f32

        fps_idx = farthest_point_sample(xyz, npoint)            # (B, npoint)
        new_xyz = gather_points(xyz, fps_idx)                   # (B, npoint, 3)
        gxyz, gproj = query_and_group(xyz, proj, new_xyz, radius, nsample)

        # Layer 1 (xyz contribution + folded-BN bias + ReLU) in f32 plain JAX,
        # fused by XLA with the gather; a single bf16 cast feeds the kernel.
        h1 = jnp.maximum(jnp.dot(gxyz, w1_xyz) + gproj + b1, 0.0)
        B, S, K, C1 = h1.shape

        if li < 2:
            pooled = sa_mlp_maxpool(h1.reshape(B * S, K, C1),
                                    w2, b2, w3, b3)              # (B*S, Cout)
            features = pooled.reshape(B, S, -1)
        else:
            # SA3: M=B rows, Cout=output_shape (tiny) -- a pallas launch would
            # be pure overhead and worst-case masked stores; stay in plain JAX.
            h = jnp.maximum(jnp.dot(h1, w2) + b2, 0.0)
            h = jnp.maximum(jnp.dot(h, w3) + b3, 0.0)            # (B,S,K,out)
            features = jnp.max(h, axis=2)                        # (B, S=1, out)
        xyz = new_xyz

    # fp_channels=() -> fp_features[0] == sa_features[-1]; squeeze -> (B, out)
    y = jnp.squeeze(features, axis=1)
    # Trivial masked multiply stays in plain JAX (XLA fuses; no kernel launch).
    y = y * action_mask
    return y, y


@jax.jit
def vote_qn2_forward_ref(obs, action_mask, params):
    """Pure-f32 plain-JAX reference (same FPS/ball-query/grouping)."""
    xyz = obs[..., :3]
    features = obs[..., 3:]
    for li in range(3):
        npoint, radius, nsample = NUM_POINTS[li], RADII[li], NUM_SAMPLES[li]
        fps_idx = farthest_point_sample(xyz, npoint)
        new_xyz = gather_points(xyz, fps_idx)
        gxyz, gfeat = query_and_group(xyz, features, new_xyz, radius, nsample)
        h = jnp.concatenate([gxyz, gfeat], axis=-1)     # use_xyz=True
        for (w, b) in params[li]:
            h = jnp.maximum(jnp.dot(h, w) + b, 0.0)
        features = jnp.max(h, axis=2)
        xyz = new_xyz
    y = jnp.squeeze(features, axis=1) * action_mask
    return y


# ----------------------------------------------------------------------------
if __name__ == "__main__":
    B, N, IN_CH = 2, 128, 259
    OUTPUT_SHAPE = 8

    key = jax.random.PRNGKey(0)
    k_obs, k_mask = jax.random.split(key)
    obs = jax.random.normal(k_obs, (B, N, IN_CH), jnp.float32)
    # scale xyz a bit so the ball queries find neighbors
    obs = obs.at[..., :3].multiply(0.8)
    action_mask = (jax.random.uniform(k_mask, (B, OUTPUT_SHAPE))
                   > 0.3).astype(jnp.float32)

    params = init_params(OUTPUT_SHAPE, IN_CH, seed=0)

    y, y2 = vote_qn2_forward(obs, action_mask, params)
    jax.block_until_ready(y)
    jax.block_until_ready(y2)

    assert y.shape == (B, OUTPUT_SHAPE)
    assert bool(jnp.all(jnp.isfinite(y)))
    # masked-out actions must be exactly zero
    assert bool(jnp.all(jnp.where(action_mask == 0.0, y == 0.0, True)))

    # compare against the pure-f32 reference (bf16 MXU path => loose tolerance)
    y_ref = vote_qn2_forward_ref(obs, action_mask, params)
    jax.block_until_ready(y_ref)
    err = float(jnp.max(jnp.abs(y - y_ref)))
    scale = float(jnp.maximum(jnp.max(jnp.abs(y_ref)), 1e-3))
    assert err <= 0.1 * scale + 1e-3, f"mismatch vs f32 ref: err={err}, scale={scale}"

    print("KERNEL_OK")
</pallas_src>

<mosaic_0001>
module attributes {stable_mosaic.version = 11 : i64} {
  func.func @_sa_mlp_maxpool_kernel(%arg0: i32, %arg1: memref<128x16x64xbf16, #tpu.memory_space<vmem>>, %arg2: memref<64x64xbf16, #tpu.memory_space<vmem>>, %arg3: memref<1x64xf32, #tpu.memory_space<vmem>>, %arg4: memref<64x128xbf16, #tpu.memory_space<vmem>>, %arg5: memref<1x128xf32, #tpu.memory_space<vmem>>, %arg6: memref<128x128xf32, #tpu.memory_space<vmem>>) attributes {dimension_semantics = [#tpu.dimension_semantics<arbitrary>], iteration_bounds = array<i64: 1>, scalar_prefetch = 0 : i64, scratch_operands = 0 : i64, tpu.core_type = #tpu.core_type<tc>, window_params = [{transform_indices = @transform_0, window_bounds = array<i64: 128, 16, 64>}, {pipeline_mode = #tpu.pipeline_mode<synchronous>, transform_indices = @transform_1, window_bounds = array<i64: 64, 64>}, {pipeline_mode = #tpu.pipeline_mode<synchronous>, transform_indices = @transform_2, window_bounds = array<i64: 1, 64>}, {pipeline_mode = #tpu.pipeline_mode<synchronous>, transform_indices = @transform_3, window_bounds = array<i64: 64, 128>}, {pipeline_mode = #tpu.pipeline_mode<synchronous>, transform_indices = @transform_4, window_bounds = array<i64: 1, 128>}, {transform_indices = @transform_5, window_bounds = array<i64: 128, 128>}]} {
    %c0 = arith.constant 0 : index
    %c0_0 = arith.constant 0 : index
    %c0_1 = arith.constant 0 : index
    %0 = vector.load %arg1[%c0, %c0_0, %c0_1] : memref<128x16x64xbf16, #tpu.memory_space<vmem>>, vector<128x16x64xbf16>
    %1 = vector.shape_cast %0 : vector<128x16x64xbf16> to vector<2048x64xbf16>
    %c0_2 = arith.constant 0 : index
    %c0_3 = arith.constant 0 : index
    %2 = vector.load %arg2[%c0_2, %c0_3] : memref<64x64xbf16, #tpu.memory_space<vmem>>, vector<64x64xbf16>
    %cst = arith.constant dense<0.000000e+00> : vector<2048x64xf32>
    %3 = tpu.matmul %1, %2, %cst {dimension_numbers = #tpu.dot_dimension_numbers<[1], [0], [0], [1], [0, 0, 1, 1], [], []>} : vector<2048x64xbf16>, vector<64x64xbf16>, vector<2048x64xf32> -> vector<2048x64xf32>
    %c0_4 = arith.constant 0 : index
    %c0_5 = arith.constant 0 : index
    %4 = vector.load %arg3[%c0_4, %c0_5] : memref<1x64xf32, #tpu.memory_space<vmem>>, vector<1x64xf32>
    %5 = vector.broadcast %4 : vector<1x64xf32> to vector<2048x64xf32>
    %6 = arith.addf %3, %5 : vector<2048x64xf32>
    %cst_6 = arith.constant 0.000000e+00 : f32
    %7 = vector.broadcast %cst_6 : f32 to vector<2048x64xf32>
    %8 = arith.maximumf %6, %7 : vector<2048x64xf32>
    %9 = arith.truncf %8 : vector<2048x64xf32> to vector<2048x64xbf16>
    %c0_7 = arith.constant 0 : index
    %c0_8 = arith.constant 0 : index
    %10 = vector.load %arg4[%c0_7, %c0_8] : memref<64x128xbf16, #tpu.memory_space<vmem>>, vector<64x128xbf16>
    %cst_9 = arith.constant dense<0.000000e+00> : vector<2048x128xf32>
    %11 = tpu.matmul %9, %10, %cst_9 {dimension_numbers = #tpu.dot_dimension_numbers<[1], [0], [0], [1], [0, 0, 1, 1], [], []>} : vector<2048x64xbf16>, vector<64x128xbf16>, vector<2048x128xf32> -> vector<2048x128xf32>
    %c0_10 = arith.constant 0 : index
    %c0_11 = arith.constant 0 : index
    %12 = vector.load %arg5[%c0_10, %c0_11] : memref<1x128xf32, #tpu.memory_space<vmem>>, vector<1x128xf32>
    %13 = vector.broadcast %12 : vector<1x128xf32> to vector<2048x128xf32>
    %14 = arith.addf %11, %13 : vector<2048x128xf32>
    %cst_12 = arith.constant 0.000000e+00 : f32
    %15 = vector.broadcast %cst_12 : f32 to vector<2048x128xf32>
    %16 = arith.maximumf %14, %15 : vector<2048x128xf32>
    %17 = vector.shape_cast %16 : vector<2048x128xf32> to vector<128x16x128xf32>
    %cst_13 = arith.constant dense<0xFF800000> : vector<128x128xf32>
    %18 = vector.multi_reduction <maximumf>, %17, %cst_13 [1] : vector<128x16x128xf32> to vector<128x128xf32>
    %c0_14 = arith.constant 0 : index
    %c0_15 = arith.constant 0 : index
    %19 = vector.load %arg6[%c0_14, %c0_15] : memref<128x128xf32, #tpu.memory_space<vmem>>, vector<128x128xf32>
    tpu.vector_store %arg6[%c0_14, %c0_15], %18 {strides = array<i32>} : memref<128x128xf32, #tpu.memory_space<vmem>>, vector<128x128xf32>,
    return
  }
  func.func @transform_0(%arg0: i32) -> (i32, i32, i32) {
    %c0_i32 = arith.constant 0 : i32
    %c0_i32_0 = arith.constant 0 : i32
    %c0_i32_1 = arith.constant 0 : i32
    return %arg0, %c0_i32, %c0_i32_0 : i32, i32, i32
  }
  func.func @transform_1(%arg0: i32) -> (i32, i32) {
    %c0_i32 = arith.constant 0 : i32
    %c0_i32_0 = arith.constant 0 : i32
    %c0_i32_1 = arith.constant 0 : i32
    return %c0_i32, %c0_i32_0 : i32, i32
  }
  func.func @transform_2(%arg0: i32) -> (i32, i32) {
    %c0_i32 = arith.constant 0 : i32
    %c0_i32_0 = arith.constant 0 : i32
    %c0_i32_1 = arith.constant 0 : i32
    return %c0_i32, %c0_i32_0 : i32, i32
  }
  func.func @transform_3(%arg0: i32) -> (i32, i32) {
    %c0_i32 = arith.constant 0 : i32
    %c0_i32_0 = arith.constant 0 : i32
    %c0_i32_1 = arith.constant 0 : i32
    return %c0_i32, %c0_i32_0 : i32, i32
  }
  func.func @transform_4(%arg0: i32) -> (i32, i32) {
    %c0_i32 = arith.constant 0 : i32
    %c0_i32_0 = arith.constant 0 : i32
    %c0_i32_1 = arith.constant 0 : i32
    return %c0_i32, %c0_i32_0 : i32, i32
  }
  func.func @transform_5(%arg0: i32) -> (i32, i32) {
    %c0_i32 = arith.constant 0 : i32
    %c0_i32_0 = arith.constant 0 : i32
    return %arg0, %c0_i32 : i32, i32
  }
}

module attributes {stable_mosaic.version = 11 : i64} {
  func.func @_sa_mlp_maxpool_kernel(%arg0: i32, %arg1: memref<32x16x128xbf16, #tpu.memory_space<vmem>>, %arg2: memref<128x128xbf16, #tpu.memory_space<vmem>>, %arg3: memref<1x128xf32, #tpu.memory_space<vmem>>, %arg4: memref<128x256xbf16, #tpu.memory_space<vmem>>, %arg5: memref<1x256xf32, #tpu.memory_space<vmem>>, %arg6: memref<32x256xf32, #tpu.memory_space<vmem>>) attributes {dimension_semantics = [#tpu.dimension_semantics<arbitrary>], iteration_bounds = array<i64: 1>, scalar_prefetch = 0 : i64, scratch_operands = 0 : i64, tpu.core_type = #tpu.core_type<tc>, window_params = [{transform_indices = @transform_0, window_bounds = array<i64: 32, 16, 128>}, {pipeline_mode = #tpu.pipeline_mode<synchronous>, transform_indices = @transform_1, window_bounds = array<i64: 128, 128>}, {pipeline_mode = #tpu.pipeline_mode<synchronous>, transform_indices = @transform_2, window_bounds = array<i64: 1, 128>}, {pipeline_mode = #tpu.pipeline_mode<synchronous>, transform_indices = @transform_3, window_bounds = array<i64: 128, 256>}, {pipeline_mode = #tpu.pipeline_mode<synchronous>, transform_indices = @transform_4, window_bounds = array<i64: 1, 256>}, {transform_indices = @transform_5, window_bounds = array<i64: 32, 256>}]} {
    %c0 = arith.constant 0 : index
    %c0_0 = arith.constant 0 : index
    %c0_1 = arith.constant 0 : index
    %0 = vector.load %arg1[%c0, %c0_0, %c0_1] : memref<32x16x128xbf16, #tpu.memory_space<vmem>>, vector<32x16x128xbf16>
    %1 = vector.shape_cast %0 : vector<32x16x128xbf16> to vector<512x128xbf16>
    %c0_2 = arith.constant 0 : index
    %c0_3 = arith.constant 0 : index
    %2 = vector.load %arg2[%c0_2, %c0_3] : memref<128x128xbf16, #tpu.memory_space<vmem>>, vector<128x128xbf16>
    %cst = arith.constant dense<0.000000e+00> : vector<512x128xf32>
    %3 = tpu.matmul %1, %2, %cst {dimension_numbers = #tpu.dot_dimension_numbers<[1], [0], [0], [1], [0, 0, 1, 1], [], []>} : vector<512x128xbf16>, vector<128x128xbf16>, vector<512x128xf32> -> vector<512x128xf32>
    %c0_4 = arith.constant 0 : index
    %c0_5 = arith.constant 0 : index
    %4 = vector.load %arg3[%c0_4, %c0_5] : memref<1x128xf32, #tpu.memory_space<vmem>>, vector<1x128xf32>
    %5 = vector.broadcast %4 : vector<1x128xf32> to vector<512x128xf32>
    %6 = arith.addf %3, %5 : vector<512x128xf32>
    %cst_6 = arith.constant 0.000000e+00 : f32
    %7 = vector.broadcast %cst_6 : f32 to vector<512x128xf32>
    %8 = arith.maximumf %6, %7 : vector<512x128xf32>
    %9 = arith.truncf %8 : vector<512x128xf32> to vector<512x128xbf16>
    %c0_7 = arith.constant 0 : index
    %c0_8 = arith.constant 0 : index
    %10 = vector.load %arg4[%c0_7, %c0_8] : memref<128x256xbf16, #tpu.memory_space<vmem>>, vector<128x256xbf16>
    %cst_9 = arith.constant dense<0.000000e+00> : vector<512x256xf32>
    %11 = tpu.matmul %9, %10, %cst_9 {dimension_numbers = #tpu.dot_dimension_numbers<[1], [0], [0], [1], [0, 0, 1, 1], [], []>} : vector<512x128xbf16>, vector<128x256xbf16>, vector<512x256xf32> -> vector<512x256xf32>
    %c0_10 = arith.constant 0 : index
    %c0_11 = arith.constant 0 : index
    %12 = vector.load %arg5[%c0_10, %c0_11] : memref<1x256xf32, #tpu.memory_space<vmem>>, vector<1x256xf32>
    %13 = vector.broadcast %12 : vector<1x256xf32> to vector<512x256xf32>
    %14 = arith.addf %11, %13 : vector<512x256xf32>
    %cst_12 = arith.constant 0.000000e+00 : f32
    %15 = vector.broadcast %cst_12 : f32 to vector<512x256xf32>
    %16 = arith.maximumf %14, %15 : vector<512x256xf32>
    %17 = vector.shape_cast %16 : vector<512x256xf32> to vector<32x16x256xf32>
    %cst_13 = arith.constant dense<0xFF800000> : vector<32x256xf32>
    %18 = vector.multi_reduction <maximumf>, %17, %cst_13 [1] : vector<32x16x256xf32> to vector<32x256xf32>
    %c0_14 = arith.constant 0 : index
    %c0_15 = arith.constant 0 : index
    %19 = vector.load %arg6[%c0_14, %c0_15] : memref<32x256xf32, #tpu.memory_space<vmem>>, vector<32x256xf32>
    tpu.vector_store %arg6[%c0_14, %c0_15], %18 {strides = array<i32>} : memref<32x256xf32, #tpu.memory_space<vmem>>, vector<32x256xf32>,
    return
  }
  func.func @transform_0(%arg0: i32) -> (i32, i32, i32) {
    %c0_i32 = arith.constant 0 : i32
    %c0_i32_0 = arith.constant 0 : i32
    %c0_i32_1 = arith.constant 0 : i32
    return %arg0, %c0_i32, %c0_i32_0 : i32, i32, i32
  }
  func.func @transform_1(%arg0: i32) -> (i32, i32) {
    %c0_i32 = arith.constant 0 : i32
    %c0_i32_0 = arith.constant 0 : i32
    %c0_i32_1 = arith.constant 0 : i32
    return %c0_i32, %c0_i32_0 : i32, i32
  }
  func.func @transform_2(%arg0: i32) -> (i32, i32) {
    %c0_i32 = arith.constant 0 : i32
    %c0_i32_0 = arith.constant 0 : i32
    %c0_i32_1 = arith.constant 0 : i32
    return %c0_i32, %c0_i32_0 : i32, i32
  }
  func.func @transform_3(%arg0: i32) -> (i32, i32) {
    %c0_i32 = arith.constant 0 : i32
    %c0_i32_0 = arith.constant 0 : i32
    %c0_i32_1 = arith.constant 0 : i32
    return %c0_i32, %c0_i32_0 : i32, i32
  }
  func.func @transform_4(%arg0: i32) -> (i32, i32) {
    %c0_i32 = arith.constant 0 : i32
    %c0_i32_0 = arith.constant 0 : i32
    %c0_i32_1 = arith.constant 0 : i32
    return %c0_i32, %c0_i32_0 : i32, i32
  }
  func.func @transform_5(%arg0: i32) -> (i32, i32) {
    %c0_i32 = arith.constant 0 : i32
    %c0_i32_0 = arith.constant 0 : i32
    return %arg0, %c0_i32 : i32, i32
  }
}

</mosaic_0001>

<llo_original>
// kernel: custom-call.22
$region0: #{custom-call.22}
  %s0 = inlined_call_operand.vmem [shape: f32[2,128], index: 0, kind: output, shape index: {}]

// kernel: custom-call.23
$region0: #{custom-call.23}
  %s0 = inlined_call_operand.vmem [shape: f32[2,64], index: 0, kind: output, shape index: {}]

// kernel: vote_qn2_forward.2
$region0: #{vote_qn2_forward.2}
  #allocation0 [shape = 'u32[]', space=smem, size = 0x4, offset = 0x4, fixed_abs, tag = 'smem constant byte address 0x4 - core index']
  #allocation1 [shape = 'u32[144,128]{1,0:T(1,128)}', space=vmem, size = 0x12000, scoped, tag = 'internal scratch']
  %s0 = inlined_call_operand.hbm [shape: bf16[128,16,64], index: 0, kind: input, shape index: {}]
  %s1 = inlined_call_operand.hbm [shape: bf16[64,64], index: 1, kind: input, shape index: {}]
  %s2 = inlined_call_operand.hbm [shape: f32[1,64], index: 2, kind: input, shape index: {}]
  %s3 = inlined_call_operand.hbm [shape: bf16[64,128], index: 3, kind: input, shape index: {}]
  %s4 = inlined_call_operand.hbm [shape: f32[1,128], index: 4, kind: input, shape index: {}]
  %s5 = inlined_call_operand.hbm [shape: f32[128,128], index: 5, kind: output, shape index: {}]
  %s6 = sld [smem:[#allocation0]]
  $region50: #{vote_qn2_forward.2} parent=0
    _
  %s8 = ssub.s32 1, %s6
  %s9 = scalar_select 0, %s8, %s6
  $region1: #{vote_qn2_forward.2} parent=0
    #allocation2 [shape = 'u8[524288]{0}', space=vmem, size = 0x80000, scoped, tag = 'input window, operand 0, single buffered']
    #allocation3 [shape = 's32[1]{0}', space=sflag, size = 0x4, scoped, tag = 'scoped memory for vote_qn2_forward.2']
    #allocation4 [shape = 's32[1]{0}', space=sflag, size = 0x4, scoped, tag = 'scoped memory for vote_qn2_forward.2']
    #allocation5 [shape = 'u8[16384]{0}', space=vmem, size = 0x4000, scoped, tag = 'input window, operand 1, single buffered']
    #allocation6 [shape = 's32[1]{0}', space=sflag, size = 0x4, scoped, tag = 'scoped memory for vote_qn2_forward.2']
    #allocation7 [shape = 'u8[512]{0}', space=vmem, size = 0x400, scoped, tag = 'input window, operand 2, single buffered']
    #allocation8 [shape = 'u8[16384]{0}', space=vmem, size = 0x4000, scoped, tag = 'input window, operand 3, single buffered']
    #allocation9 [shape = 's32[1]{0}', space=sflag, size = 0x4, scoped, tag = 'scoped memory for vote_qn2_forward.2']
    #allocation10 [shape = 'u8[512]{0}', space=vmem, size = 0x400, scoped, tag = 'input window, operand 4, single buffered']
    #allocation11 [shape = 'u8[65536]{0}', space=vmem, size = 0x10000, scoped, tag = 'output window, operand 0, single buffered']
    %10 = vsyncpa [#allocation3], 0
    %11 = vsyncpa [#allocation6], 0
    %12 = vsyncpa [#allocation9], 0
    %13 = vsyncpa [#allocation4], 0
    // Predicated region
    $region2: #{vote_qn2_forward.2} parent=1 // pred_check
      _
    $region3: #{vote_qn2_forward.2} parent=1 // pred_check_branch
      %15 = sbr.rel (0) target = $region5
    $region4: #{vote_qn2_forward.2} parent=1 // pred_region
      %s17 = ssub.s32 16384, 16384
      %18 = vsyncadd [#allocation3], %s17
      %s19 = sshll.u32 [#allocation2], 4
      %s20 = int_to_ptr.vmem [resolvable:$true] %s19
      %25 = dma.hbm_to_vmem [thread:$0]  %s0, 16384, %s20, [#allocation3], 64, 64, 4
    $region5: #{vote_qn2_forward.2} parent=1 // pred_fallthru
      _
    // Predicated region
    $region6: #{vote_qn2_forward.2} parent=1 // pred_check
      _
    $region7: #{vote_qn2_forward.2} parent=1 // pred_check_branch
      %27 = sbr.rel (0) target = $region9
    $region8: #{vote_qn2_forward.2} parent=1 // pred_region
      %s29 = ssub.s32 512, 512
      %30 = vsyncadd [#allocation6], %s29
      %s31 = sshll.u32 [#allocation5], 4
      %s32 = int_to_ptr.vmem [resolvable:$true] %s31
      %37 = dma.hbm_to_vmem [thread:$0]  %s1, 512, %s32, [#allocation6], 64, 64, 4
    $region9: #{vote_qn2_forward.2} parent=1 // pred_fallthru
      _
    // Predicated region
    $region10: #{vote_qn2_forward.2} parent=1 // pred_check
      _
    $region11: #{vote_qn2_forward.2} parent=1 // pred_check_branch
      %39 = sbr.rel (0) target = $region13
    $region12: #{vote_qn2_forward.2} parent=1 // pred_region
      %s41 = ssub.s32 16, 16
      %42 = vsyncadd [#allocation6], %s41
      %s44 = sshll.u32 [#allocation7], 4
      %s45 = int_to_ptr.vmem [resolvable:$true] %s44
      %47 = dma.hbm_to_vmem [thread:$0]  %s2, 16, %s45, [#allocation6]
    $region13: #{vote_qn2_forward.2} parent=1 // pred_fallthru
      _
    // Predicated region
    $region14: #{vote_qn2_forward.2} parent=1 // pred_check
      _
    $region15: #{vote_qn2_forward.2} parent=1 // pred_check_branch
      %49 = sbr.rel (0) target = $region17
    $region16: #{vote_qn2_forward.2} parent=1 // pred_region
      %s51 = ssub.s32 512, 512
      %52 = vsyncadd [#allocation9], %s51
      %s53 = sshll.u32 [#allocation8], 4
      %s54 = int_to_ptr.vmem [resolvable:$true] %s53
      %59 = dma.hbm_to_vmem [thread:$0]  %s3, 512, %s54, [#allocation9], 64, 64, 4
    $region17: #{vote_qn2_forward.2} parent=1 // pred_fallthru
      _
    // Predicated region
    $region18: #{vote_qn2_forward.2} parent=1 // pred_check
      _
    $region19: #{vote_qn2_forward.2} parent=1 // pred_check_branch
      %61 = sbr.rel (0) target = $region21
    $region20: #{vote_qn2_forward.2} parent=1 // pred_region
      %s63 = ssub.s32 16, 16
      %64 = vsyncadd [#allocation9], %s63
      %s66 = sshll.u32 [#allocation10], 4
      %s67 = int_to_ptr.vmem [resolvable:$true] %s66
      %69 = dma.hbm_to_vmem [thread:$0]  %s4, 16, %s67, [#allocation9]
    $region21: #{vote_qn2_forward.2} parent=1 // pred_fallthru
      _
    // Predicated region
    $region22: #{vote_qn2_forward.2} parent=1 // pred_check
      _
    $region23: #{vote_qn2_forward.2} parent=1 // pred_check_branch
      %71 = sbr.rel (0) target = $region25
    $region24: #{vote_qn2_forward.2} parent=1 // pred_region
      %72 = dma.done [#allocation3], 16384
    $region25: #{vote_qn2_forward.2} parent=1 // pred_fallthru
      _
    // Predicated region
    $region26: #{vote_qn2_forward.2} parent=1 // pred_check
      _
    $region27: #{vote_qn2_forward.2} parent=1 // pred_check_branch
      %74 = sbr.rel (0) target = $region29
    $region28: #{vote_qn2_forward.2} parent=1 // pred_region
      %75 = dma.done [#allocation6], 512
    $region29: #{vote_qn2_forward.2} parent=1 // pred_fallthru
      _
    // Predicated region
    $region30: #{vote_qn2_forward.2} parent=1 // pred_check
      _
    $region31: #{vote_qn2_forward.2} parent=1 // pred_check_branch
      %77 = sbr.rel (0) target = $region33
    $region32: #{vote_qn2_forward.2} parent=1 // pred_region
      %78 = dma.done [#allocation6], 16
    $region33: #{vote_qn2_forward.2} parent=1 // pred_fallthru
      _
    // Predicated region
    $region34: #{vote_qn2_forward.2} parent=1 // pred_check
      _
    $region35: #{vote_qn2_forward.2} parent=1 // pred_check_branch
      %80 = sbr.rel (0) target = $region37
    $region36: #{vote_qn2_forward.2} parent=1 // pred_region
      %81 = dma.done [#allocation9], 512
    $region37: #{vote_qn2_forward.2} parent=1 // pred_fallthru
      _
    // Predicated region
    $region38: #{vote_qn2_forward.2} parent=1 // pred_check
      _
    $region39: #{vote_qn2_forward.2} parent=1 // pred_check_branch
      %83 = sbr.rel (0) target = $region41
    $region40: #{vote_qn2_forward.2} parent=1 // pred_region
      %84 = dma.done [#allocation9], 16
    $region41: #{vote_qn2_forward.2} parent=1 // pred_fallthru
      _
    %v86 = vld [vmem:[#allocation2] sm:$0xf]
    %v87 = vld [vmem:[#allocation2 + $0x4] sm:$0xf]
    %v88 = vld [vmem:[#allocation2 + $0x8] sm:$0xf]
    %v89 = vld [vmem:[#allocation2 + $0xc] sm:$0xf]
    %v90 = vld [vmem:[#allocation2 + $0x10] sm:$0xf]
    %v91 = vld [vmem:[#allocation2 + $0x14] sm:$0xf]
    %v92 = vld [vmem:[#allocation2 + $0x18] sm:$0xf]
    %v93 = vld [vmem:[#allocation2 + $0x1c] sm:$0xf]
    %v94 = vld [vmem:[#allocation2 + $0x20] sm:$0xf]
    %v95 = vld [vmem:[#allocation2 + $0x24] sm:$0xf]
    %v96 = vld [vmem:[#allocation2 + $0x28] sm:$0xf]
    %v97 = vld [vmem:[#allocation2 + $0x2c] sm:$0xf]
    %v98 = vld [vmem:[#allocation2 + $0x30] sm:$0xf]
    %v99 = vld [vmem:[#allocation2 + $0x34] sm:$0xf]
    %v100 = vld [vmem:[#allocation2 + $0x38] sm:$0xf]
    %v101 = vld [vmem:[#allocation2 + $0x3c] sm:$0xf]
    %v102 = vld [vmem:[#allocation2 + $0x40] sm:$0xf]
    %v103 = vld [vmem:[#allocation2 + $0x44] sm:$0xf]
    %v104 = vld [vmem:[#allocation2 + $0x48] sm:$0xf]
    %v105 = vld [vmem:[#allocation2 + $0x4c] sm:$0xf]
    %v106 = vld [vmem:[#allocation2 + $0x50] sm:$0xf]
    %v107 = vld [vmem:[#allocation2 + $0x54] sm:$0xf]
    %v108 = vld [vmem:[#allocation2 + $0x58] sm:$0xf]
    %v109 = vld [vmem:[#allocation2 + $0x5c] sm:$0xf]
    %v110 = vld [vmem:[#allocation2 + $0x60] sm:$0xf]
    %v111 = vld [vmem:[#allocation2 + $0x64] sm:$0xf]
    %v112 = vld [vmem:[#allocation2 + $0x68] sm:$0xf]
    %v113 = vld [vmem:[#allocation2 + $0x6c] sm:$0xf]
    %v114 = vld [vmem:[#allocation2 + $0x70] sm:$0xf]
    %v115 = vld [vmem:[#allocation2 + $0x74] sm:$0xf]
    %v116 = vld [vmem:[#allocation2 + $0x78] sm:$0xf]
    %v117 = vld [vmem:[#allocation2 + $0x7c] sm:$0xf]
    %v118 = vld [vmem:[#allocation2 + $0x80] sm:$0xf]
    %v119 = vld [vmem:[#allocation2 + $0x84] sm:$0xf]
    %v120 = vld [vmem:[#allocation2 + $0x88] sm:$0xf]
    %v121 = vld [vmem:[#allocation2 + $0x8c] sm:$0xf]
    %v122 = vld [vmem:[#allocation2 + $0x90] sm:$0xf]
    %v123 = vld [vmem:[#allocation2 + $0x94] sm:$0xf]
    %v124 = vld [vmem:[#allocation2 + $0x98] sm:$0xf]
    %v125 = vld [vmem:[#allocation2 + $0x9c] sm:$0xf]
    %v126 = vld [vmem:[#allocation2 + $0xa0] sm:$0xf]
    %v127 = vld [vmem:[#allocation2 + $0xa4] sm:$0xf]
    %v128 = vld [vmem:[#allocation2 + $0xa8] sm:$0xf]
    %v129 = vld [vmem:[#allocation2 + $0xac] sm:$0xf]
    %v130 = vld [vmem:[#allocation2 + $0xb0] sm:$0xf]
    %v131 = vld [vmem:[#allocation2 + $0xb4] sm:$0xf]
    %v132 = vld [vmem:[#allocation2 + $0xb8] sm:$0xf]
    %v133 = vld [vmem:[#allocation2 + $0xbc] sm:$0xf]
    %v134 = vld [vmem:[#allocation2 + $0xc0] sm:$0xf]
    %v135 = vld [vmem:[#allocation2 + $0xc4] sm:$0xf]
    %v136 = vld [vmem:[#allocation2 + $0xc8] sm:$0xf]
    %v137 = vld [vmem:[#allocation2 + $0xcc] sm:$0xf]
    %v138 = vld [vmem:[#allocation2 + $0xd0] sm:$0xf]
    %v139 = vld [vmem:[#allocation2 + $0xd4] sm:$0xf]
    %v140 = vld [vmem:[#allocation2 + $0xd8] sm:$0xf]
    %v141 = vld [vmem:[#allocation2 + $0xdc] sm:$0xf]
    %v142 = vld [vmem:[#allocation2 + $0xe0] sm:$0xf]
    %v143 = vld [vmem:[#allocation2 + $0xe4] sm:$0xf]
    %v144 = vld [vmem:[#allocation2 + $0xe8] sm:$0xf]
    %v145 = vld [vmem:[#allocation2 + $0xec] sm:$0xf]
    %v146 = vld [vmem:[#allocation2 + $0xf0] sm:$0xf]
    %v147 = vld [vmem:[#allocation2 + $0xf4] sm:$0xf]
    %v148 = vld [vmem:[#allocation2 + $0xf8] sm:$0xf]
    %v149 = vld [vmem:[#allocation2 + $0xfc] sm:$0xf]
    %v150 = vld [vmem:[#allocation2 + $0x100] sm:$0xf]
    %v151 = vld [vmem:[#allocation2 + $0x104] sm:$0xf]
    %v152 = vld [vmem:[#allocation2 + $0x108] sm:$0xf]
    %v153 = vld [vmem:[#allocation2 + $0x10c] sm:$0xf]
    %v154 = vld [vmem:[#allocation2 + $0x110] sm:$0xf]
    %v155 = vld [vmem:[#allocation2 + $0x114] sm:$0xf]
    %v156 = vld [vmem:[#allocation2 + $0x118] sm:$0xf]
    %v157 = vld [vmem:[#allocation2 + $0x11c] sm:$0xf]
    %v158 = vld [vmem:[#allocation2 + $0x120] sm:$0xf]
    %v159 = vld [vmem:[#allocation2 + $0x124] sm:$0xf]
    %v160 = vld [vmem:[#allocation2 + $0x128] sm:$0xf]
    %v161 = vld [vmem:[#allocation2 + $0x12c] sm:$0xf]
    %v162 = vld [vmem:[#allocation2 + $0x130] sm:$0xf]
    %v163 = vld [vmem:[#allocation2 + $0x134] sm:$0xf]
    %v164 = vld [vmem:[#allocation2 + $0x138] sm:$0xf]
    %v165 = vld [vmem:[#allocation2 + $0x13c] sm:$0xf]
    %v166 = vld [vmem:[#allocation2 + $0x140] sm:$0xf]
    %v167 = vld [vmem:[#allocation2 + $0x144] sm:$0xf]
    %v168 = vld [vmem:[#allocation2 + $0x148] sm:$0xf]
    %v169 = vld [vmem:[#allocation2 + $0x14c] sm:$0xf]
    %v170 = vld [vmem:[#allocation2 + $0x150] sm:$0xf]
    %v171 = vld [vmem:[#allocation2 + $0x154] sm:$0xf]
    %v172 = vld [vmem:[#allocation2 + $0x158] sm:$0xf]
    %v173 = vld [vmem:[#allocation2 + $0x15c] sm:$0xf]
    %v174 = vld [vmem:[#allocation2 + $0x160] sm:$0xf]
    %v175 = vld [vmem:[#allocation2 + $0x164] sm:$0xf]
    %v176 = vld [vmem:[#allocation2 + $0x168] sm:$0xf]
    %v177 = vld [vmem:[#allocation2 + $0x16c] sm:$0xf]
    %v178 = vld [vmem:[#allocation2 + $0x170] sm:$0xf]
    %v179 = vld [vmem:[#allocation2 + $0x174] sm:$0xf]
    %v180 = vld [vmem:[#allocation2 + $0x178] sm:$0xf]
    %v181 = vld [vmem:[#allocation2 + $0x17c] sm:$0xf]
    %v182 = vld [vmem:[#allocation2 + $0x180] sm:$0xf]
    %v183 = vld [vmem:[#allocation2 + $0x184] sm:$0xf]
    %v184 = vld [vmem:[#allocation2 + $0x188] sm:$0xf]
    %v185 = vld [vmem:[#allocation2 + $0x18c] sm:$0xf]
    %v186 = vld [vmem:[#allocation2 + $0x190] sm:$0xf]
    %v187 = vld [vmem:[#allocation2 + $0x194] sm:$0xf]
    %v188 = vld [vmem:[#allocation2 + $0x198] sm:$0xf]
    %v189 = vld [vmem:[#allocation2 + $0x19c] sm:$0xf]
    %v190 = vld [vmem:[#allocation2 + $0x1a0] sm:$0xf]
    %v191 = vld [vmem:[#allocation2 + $0x1a4] sm:$0xf]
    %v192 = vld [vmem:[#allocation2 + $0x1a8] sm:$0xf]
    %v193 = vld [vmem:[#allocation2 + $0x1ac] sm:$0xf]
    %v194 = vld [vmem:[#allocation2 + $0x1b0] sm:$0xf]
    %v195 = vld [vmem:[#allocation2 + $0x1b4] sm:$0xf]
    %v196 = vld [vmem:[#allocation2 + $0x1b8] sm:$0xf]
    %v197 = vld [vmem:[#allocation2 + $0x1bc] sm:$0xf]
    %v198 = vld [vmem:[#allocation2 + $0x1c0] sm:$0xf]
    %v199 = vld [vmem:[#allocation2 + $0x1c4] sm:$0xf]
    %v200 = vld [vmem:[#allocation2 + $0x1c8] sm:$0xf]
    %v201 = vld [vmem:[#allocation2 + $0x1cc] sm:$0xf]
    %v202 = vld [vmem:[#allocation2 + $0x1d0] sm:$0xf]
    %v203 = vld [vmem:[#allocation2 + $0x1d4] sm:$0xf]
    %v204 = vld [vmem:[#allocation2 + $0x1d8] sm:$0xf]
    %v205 = vld [vmem:[#allocation2 + $0x1dc] sm:$0xf]
    %v206 = vld [vmem:[#allocation2 + $0x1e0] sm:$0xf]
    %v207 = vld [vmem:[#allocation2 + $0x1e4] sm:$0xf]
    %v208 = vld [vmem:[#allocation2 + $0x1e8] sm:$0xf]
    %v209 = vld [vmem:[#allocation2 + $0x1ec] sm:$0xf]
    %v210 = vld [vmem:[#allocation2 + $0x1f0] sm:$0xf]
    %v211 = vld [vmem:[#allocation2 + $0x1f4] sm:$0xf]
    %v212 = vld [vmem:[#allocation2 + $0x1f8] sm:$0xf]
    %v213 = vld [vmem:[#allocation2 + $0x1fc] sm:$0xf]
    %v214 = vld [vmem:[#allocation2 + $0x200] sm:$0xf]
    %v215 = vld [vmem:[#allocation2 + $0x204] sm:$0xf]
    %v216 = vld [vmem:[#allocation2 + $0x208] sm:$0xf]
    %v217 = vld [vmem:[#allocation2 + $0x20c] sm:$0xf]
    %v218 = vld [vmem:[#allocation2 + $0x210] sm:$0xf]
    %v219 = vld [vmem:[#allocation2 + $0x214] sm:$0xf]
    %v220 = vld [vmem:[#allocation2 + $0x218] sm:$0xf]
    %v221 = vld [vmem:[#allocation2 + $0x21c] sm:$0xf]
    %v222 = vld [vmem:[#allocation2 + $0x220] sm:$0xf]
    %v223 = vld [vmem:[#allocation2 + $0x224] sm:$0xf]
    %v224 = vld [vmem:[#allocation2 + $0x228] sm:$0xf]
    %v225 = vld [vmem:[#allocation2 + $0x22c] sm:$0xf]
    %v226 = vld [vmem:[#allocation2 + $0x230] sm:$0xf]
    %v227 = vld [vmem:[#allocation2 + $0x234] sm:$0xf]
    %v228 = vld [vmem:[#allocation2 + $0x238] sm:$0xf]
    %v229 = vld [vmem:[#allocation2 + $0x23c] sm:$0xf]
    %v230 = vld [vmem:[#allocation2 + $0x240] sm:$0xf]
    %v231 = vld [vmem:[#allocation2 + $0x244] sm:$0xf]
    %v232 = vld [vmem:[#allocation2 + $0x248] sm:$0xf]
    %v233 = vld [vmem:[#allocation2 + $0x24c] sm:$0xf]
    %v234 = vld [vmem:[#allocation2 + $0x250] sm:$0xf]
    %v235 = vld [vmem:[#allocation2 + $0x254] sm:$0xf]
    %v236 = vld [vmem:[#allocation2 + $0x258] sm:$0xf]
    %v237 = vld [vmem:[#allocation2 + $0x25c] sm:$0xf]
    %v238 = vld [vmem:[#allocation2 + $0x260] sm:$0xf]
    %v239 = vld [vmem:[#allocation2 + $0x264] sm:$0xf]
    %v240 = vld [vmem:[#allocation2 + $0x268] sm:$0xf]
    %v241 = vld [vmem:[#allocation2 + $0x26c] sm:$0xf]
    %v242 = vld [vmem:[#allocation2 + $0x270] sm:$0xf]
    %v243 = vld [vmem:[#allocation2 + $0x274] sm:$0xf]
    %v244 = vld [vmem:[#allocation2 + $0x278] sm:$0xf]
    %v245 = vld [vmem:[#allocation2 + $0x27c] sm:$0xf]
    %v246 = vld [vmem:[#allocation2 + $0x280] sm:$0xf]
    %v247 = vld [vmem:[#allocation2 + $0x284] sm:$0xf]
    %v248 = vld [vmem:[#allocation2 + $0x288] sm:$0xf]
    %v249 = vld [vmem:[#allocation2 + $0x28c] sm:$0xf]
    %v250 = vld [vmem:[#allocation2 + $0x290] sm:$0xf]
    %v251 = vld [vmem:[#allocation2 + $0x294] sm:$0xf]
    %v252 = vld [vmem:[#allocation2 + $0x298] sm:$0xf]
    %v253 = vld [vmem:[#allocation2 + $0x29c] sm:$0xf]
    %v254 = vld [vmem:[#allocation2 + $0x2a0] sm:$0xf]
    %v255 = vld [vmem:[#allocation2 + $0x2a4] sm:$0xf]
    %v256 = vld [vmem:[#allocation2 + $0x2a8] sm:$0xf]
    %v257 = vld [vmem:[#allocation2 + $0x2ac] sm:$0xf]
    %v258 = vld [vmem:[#allocation2 + $0x2b0] sm:$0xf]
    %v259 = vld [vmem:[#allocation2 + $0x2b4] sm:$0xf]
    %v260 = vld [vmem:[#allocation2 + $0x2b8] sm:$0xf]
    %v261 = vld [vmem:[#allocation2 + $0x2bc] sm:$0xf]
    %v262 = vld [vmem:[#allocation2 + $0x2c0] sm:$0xf]
    %v263 = vld [vmem:[#allocation2 + $0x2c4] sm:$0xf]
    %v264 = vld [vmem:[#allocation2 + $0x2c8] sm:$0xf]
    %v265 = vld [vmem:[#allocation2 + $0x2cc] sm:$0xf]
    %v266 = vld [vmem:[#allocation2 + $0x2d0] sm:$0xf]
    %v267 = vld [vmem:[#allocation2 + $0x2d4] sm:$0xf]
    %v268 = vld [vmem:[#allocation2 + $0x2d8] sm:$0xf]
    %v269 = vld [vmem:[#allocation2 + $0x2dc] sm:$0xf]
    %v270 = vld [vmem:[#allocation2 + $0x2e0] sm:$0xf]
    %v271 = vld [vmem:[#allocation2 + $0x2e4] sm:$0xf]
    %v272 = vld [vmem:[#allocation2 + $0x2e8] sm:$0xf]
    %v273 = vld [vmem:[#allocation2 + $0x2ec] sm:$0xf]
    %v274 = vld [vmem:[#allocation2 + $0x2f0] sm:$0xf]
    %v275 = vld [vmem:[#allocation2 + $0x2f4] sm:$0xf]
    %v276 = vld [vmem:[#allocation2 + $0x2f8] sm:$0xf]
    %v277 = vld [vmem:[#allocation2 + $0x2fc] sm:$0xf]
    %v278 = vld [vmem:[#allocation2 + $0x300] sm:$0xf]
    %v279 = vld [vmem:[#allocation2 + $0x304] sm:$0xf]
    %v280 = vld [vmem:[#allocation2 + $0x308] sm:$0xf]
    %v281 = vld [vmem:[#allocation2 + $0x30c] sm:$0xf]
    %v282 = vld [vmem:[#allocation2 + $0x310] sm:$0xf]
    %v283 = vld [vmem:[#allocation2 + $0x314] sm:$0xf]
    %v284 = vld [vmem:[#allocation2 + $0x318] sm:$0xf]
    %v285 = vld [vmem:[#allocation2 + $0x31c] sm:$0xf]
    %v286 = vld [vmem:[#allocation2 + $0x320] sm:$0xf]
    %v287 = vld [vmem:[#allocation2 + $0x324] sm:$0xf]
    %v288 = vld [vmem:[#allocation2 + $0x328] sm:$0xf]
    %v289 = vld [vmem:[#allocation2 + $0x32c] sm:$0xf]
    %v290 = vld [vmem:[#allocation2 + $0x330] sm:$0xf]
    %v291 = vld [vmem:[#allocation2 + $0x334] sm:$0xf]
    %v292 = vld [vmem:[#allocation2 + $0x338] sm:$0xf]
    %v293 = vld [vmem:[#allocation2 + $0x33c] sm:$0xf]
    %v294 = vld [vmem:[#allocation2 + $0x340] sm:$0xf]
    %v295 = vld [vmem:[#allocation2 + $0x344] sm:$0xf]
    %v296 = vld [vmem:[#allocation2 + $0x348] sm:$0xf]
    %v297 = vld [vmem:[#allocation2 + $0x34c] sm:$0xf]
    %v298 = vld [vmem:[#allocation2 + $0x350] sm:$0xf]
    %v299 = vld [vmem:[#allocation2 + $0x354] sm:$0xf]
    %v300 = vld [vmem:[#allocation2 + $0x358] sm:$0xf]
    %v301 = vld [vmem:[#allocation2 + $0x35c] sm:$0xf]
    %v302 = vld [vmem:[#allocation2 + $0x360] sm:$0xf]
    %v303 = vld [vmem:[#allocation2 + $0x364] sm:$0xf]
    %v304 = vld [vmem:[#allocation2 + $0x368] sm:$0xf]
    %v305 = vld [vmem:[#allocation2 + $0x36c] sm:$0xf]
    %v306 = vld [vmem:[#allocation2 + $0x370] sm:$0xf]
    %v307 = vld [vmem:[#allocation2 + $0x374] sm:$0xf]
    %v308 = vld [vmem:[#allocation2 + $0x378] sm:$0xf]
    %v309 = vld [vmem:[#allocation2 + $0x37c] sm:$0xf]
    %v310 = vld [vmem:[#allocation2 + $0x380] sm:$0xf]
    %v311 = vld [vmem:[#allocation2 + $0x384] sm:$0xf]
    %v312 = vld [vmem:[#allocation2 + $0x388] sm:$0xf]
    %v313 = vld [vmem:[#allocation2 + $0x38c] sm:$0xf]
    %v314 = vld [vmem:[#allocation2 + $0x390] sm:$0xf]
    %v315 = vld [vmem:[#allocation2 + $0x394] sm:$0xf]
    %v316 = vld [vmem:[#allocation2 + $0x398] sm:$0xf]
    %v317 = vld [vmem:[#allocation2 + $0x39c] sm:$0xf]
    %v318 = vld [vmem:[#allocation2 + $0x3a0] sm:$0xf]
    %v319 = vld [vmem:[#allocation2 + $0x3a4] sm:$0xf]
    %v320 = vld [vmem:[#allocation2 + $0x3a8] sm:$0xf]
    %v321 = vld [vmem:[#allocation2 + $0x3ac] sm:$0xf]
    %v322 = vld [vmem:[#allocation2 + $0x3b0] sm:$0xf]
    %v323 = vld [vmem:[#allocation2 + $0x3b4] sm:$0xf]
    %v324 = vld [vmem:[#allocation2 + $0x3b8] sm:$0xf]
    %v325 = vld [vmem:[#allocation2 + $0x3bc] sm:$0xf]
    %v326 = vld [vmem:[#allocation2 + $0x3c0] sm:$0xf]
    %v327 = vld [vmem:[#allocation2 + $0x3c4] sm:$0xf]
    %v328 = vld [vmem:[#allocation2 + $0x3c8] sm:$0xf]
    %v329 = vld [vmem:[#allocation2 + $0x3cc] sm:$0xf]
    %v330 = vld [vmem:[#allocation2 + $0x3d0] sm:$0xf]
    %v331 = vld [vmem:[#allocation2 + $0x3d4] sm:$0xf]
    %v332 = vld [vmem:[#allocation2 + $0x3d8] sm:$0xf]
    %v333 = vld [vmem:[#allocation2 + $0x3dc] sm:$0xf]
    %v334 = vld [vmem:[#allocation2 + $0x3e0] sm:$0xf]
    %v335 = vld [vmem:[#allocation2 + $0x3e4] sm:$0xf]
    %v336 = vld [vmem:[#allocation2 + $0x3e8] sm:$0xf]
    %v337 = vld [vmem:[#allocation2 + $0x3ec] sm:$0xf]
    %v338 = vld [vmem:[#allocation2 + $0x3f0] sm:$0xf]
    %v339 = vld [vmem:[#allocation2 + $0x3f4] sm:$0xf]
    %v340 = vld [vmem:[#allocation2 + $0x3f8] sm:$0xf]
    %v341 = vld [vmem:[#allocation2 + $0x3fc] sm:$0xf]
    %v342 = vld [vmem:[#allocation5] sm:$0xf]
    %v343 = vld [vmem:[#allocation5 + $0x4] sm:$0xf]
    %v344 = vld [vmem:[#allocation5 + $0x8] sm:$0xf]
    %v345 = vld [vmem:[#allocation5 + $0xc] sm:$0xf]
    %v346 = vld [vmem:[#allocation5 + $0x10] sm:$0xf]
    %v347 = vld [vmem:[#allocation5 + $0x14] sm:$0xf]
    %v348 = vld [vmem:[#allocation5 + $0x18] sm:$0xf]
    %v349 = vld [vmem:[#allocation5 + $0x1c] sm:$0xf]
    %v350 = vld [vmem:[#allocation7] sm:$0x1]
    %v352 = vlaneseq
    %v353 = vshrl.u32 %v352, 7
    %v354 = vsub.s32 0, %v353
    %v355 = vrot.slane %v350, %v354
    %v613 = vunpack.c.l.b16 %v86
    %v614 = vunpack.c.l.b16 %v87
    %v615 = vunpack.c.l.b16 %v88
    %v616 = vunpack.c.l.b16 %v89
    %v617 = vunpack.c.l.b16 %v90
    %v618 = vunpack.c.l.b16 %v91
    %v619 = vunpack.c.l.b16 %v92
    %v620 = vunpack.c.l.b16 %v93
    %v621 = vunpack.c.l.b16 %v94
    %v622 = vunpack.c.l.b16 %v95
    %v623 = vunpack.c.l.b16 %v96
    %v624 = vunpack.c.l.b16 %v97
    %v625 = vunpack.c.l.b16 %v98
    %v626 = vunpack.c.l.b16 %v99
    %v627 = vunpack.c.l.b16 %v100
    %v628 = vunpack.c.l.b16 %v101
    %v629 = vunpack.c.l.b16 %v102
    %v630 = vunpack.c.l.b16 %v103
    %v631 = vunpack.c.l.b16 %v104
    %v632 = vunpack.c.l.b16 %v105
    %v633 = vunpack.c.l.b16 %v106
    %v634 = vunpack.c.l.b16 %v107
    %v635 = vunpack.c.l.b16 %v108
    %v636 = vunpack.c.l.b16 %v109
    %v637 = vunpack.c.l.b16 %v110
    %v638 = vunpack.c.l.b16 %v111
    %v639 = vunpack.c.l.b16 %v112
    %v640 = vunpack.c.l.b16 %v113
    %v641 = vunpack.c.l.b16 %v114
    %v642 = vunpack.c.l.b16 %v115
    %v643 = vunpack.c.l.b16 %v116
    %v644 = vunpack.c.l.b16 %v117
    %v645 = vunpack.c.l.b16 %v118
    %v646 = vunpack.c.l.b16 %v119
    %v647 = vunpack.c.l.b16 %v120
    %v648 = vunpack.c.l.b16 %v121
    %v649 = vunpack.c.l.b16 %v122
    %v650 = vunpack.c.l.b16 %v123
    %v651 = vunpack.c.l.b16 %v124
    %v652 = vunpack.c.l.b16 %v125
    %v653 = vunpack.c.l.b16 %v126
    %v654 = vunpack.c.l.b16 %v127
    %v655 = vunpack.c.l.b16 %v128
    %v656 = vunpack.c.l.b16 %v129
    %v657 = vunpack.c.l.b16 %v130
    %v658 = vunpack.c.l.b16 %v131
    %v659 = vunpack.c.l.b16 %v132
    %v660 = vunpack.c.l.b16 %v133
    %v661 = vunpack.c.l.b16 %v134
    %v662 = vunpack.c.l.b16 %v135
    %v663 = vunpack.c.l.b16 %v136
    %v664 = vunpack.c.l.b16 %v137
    %v665 = vunpack.c.l.b16 %v138
    %v666 = vunpack.c.l.b16 %v139
    %v667 = vunpack.c.l.b16 %v140
    %v668 = vunpack.c.l.b16 %v141
    %v669 = vunpack.c.l.b16 %v142
    %v670 = vunpack.c.l.b16 %v143
    %v671 = vunpack.c.l.b16 %v144
    %v672 = vunpack.c.l.b16 %v145
    %v673 = vunpack.c.l.b16 %v146
    %v674 = vunpack.c.l.b16 %v147
    %v675 = vunpack.c.l.b16 %v148
    %v676 = vunpack.c.l.b16 %v149
    %v677 = vunpack.c.l.b16 %v150
    %v678 = vunpack.c.l.b16 %v151
    %v679 = vunpack.c.l.b16 %v152
    %v680 = vunpack.c.l.b16 %v153
    %v681 = vunpack.c.l.b16 %v154
    %v682 = vunpack.c.l.b16 %v155
    %v683 = vunpack.c.l.b16 %v156
    %v684 = vunpack.c.l.b16 %v157
    %v685 = vunpack.c.l.b16 %v158
    %v686 = vunpack.c.l.b16 %v159
    %v687 = vunpack.c.l.b16 %v160
    %v688 = vunpack.c.l.b16 %v161
    %v689 = vunpack.c.l.b16 %v162
    %v690 = vunpack.c.l.b16 %v163
    %v691 = vunpack.c.l.b16 %v164
    %v692 = vunpack.c.l.b16 %v165
    %v693 = vunpack.c.l.b16 %v166
    %v694 = vunpack.c.l.b16 %v167
    %v695 = vunpack.c.l.b16 %v168
    %v696 = vunpack.c.l.b16 %v169
    %v697 = vunpack.c.l.b16 %v170
    %v698 = vunpack.c.l.b16 %v171
    %v699 = vunpack.c.l.b16 %v172
    %v700 = vunpack.c.l.b16 %v173
    %v701 = vunpack.c.l.b16 %v174
    %v702 = vunpack.c.l.b16 %v175
    %v703 = vunpack.c.l.b16 %v176
    %v704 = vunpack.c.l.b16 %v177
    %v705 = vunpack.c.l.b16 %v178
    %v706 = vunpack.c.l.b16 %v179
    %v707 = vunpack.c.l.b16 %v180
    %v708 = vunpack.c.l.b16 %v181
    %v709 = vunpack.c.l.b16 %v182
    %v710 = vunpack.c.l.b16 %v183
    %v711 = vunpack.c.l.b16 %v184
    %v712 = vunpack.c.l.b16 %v185
    %v713 = vunpack.c.l.b16 %v186
    %v714 = vunpack.c.l.b16 %v187
    %v715 = vunpack.c.l.b16 %v188
    %v716 = vunpack.c.l.b16 %v189
    %v717 = vunpack.c.l.b16 %v190
    %v718 = vunpack.c.l.b16 %v191
    %v719 = vunpack.c.l.b16 %v192
    %v720 = vunpack.c.l.b16 %v193
    %v721 = vunpack.c.l.b16 %v194
    %v722 = vunpack.c.l.b16 %v195
    %v723 = vunpack.c.l.b16 %v196
    %v724 = vunpack.c.l.b16 %v197
    %v725 = vunpack.c.l.b16 %v198
    %v726 = vunpack.c.l.b16 %v199
    %v727 = vunpack.c.l.b16 %v200
    %v728 = vunpack.c.l.b16 %v201
    %v729 = vunpack.c.l.b16 %v202
    %v730 = vunpack.c.l.b16 %v203
    %v731 = vunpack.c.l.b16 %v204
    %v732 = vunpack.c.l.b16 %v205
    %v733 = vunpack.c.l.b16 %v206
    %v734 = vunpack.c.l.b16 %v207
    %v735 = vunpack.c.l.b16 %v208
    %v736 = vunpack.c.l.b16 %v209
    %v737 = vunpack.c.l.b16 %v210
    %v738 = vunpack.c.l.b16 %v211
    %v739 = vunpack.c.l.b16 %v212
    %v740 = vunpack.c.l.b16 %v213
    %v741 = vunpack.c.l.b16 %v214
    %v742 = vunpack.c.l.b16 %v215
    %v743 = vunpack.c.l.b16 %v216
    %v744 = vunpack.c.l.b16 %v217
    %v745 = vunpack.c.l.b16 %v218
    %v746 = vunpack.c.l.b16 %v219
    %v747 = vunpack.c.l.b16 %v220
    %v748 = vunpack.c.l.b16 %v221
    %v749 = vunpack.c.l.b16 %v222
    %v750 = vunpack.c.l.b16 %v223
    %v751 = vunpack.c.l.b16 %v224
    %v752 = vunpack.c.l.b16 %v225
    %v753 = vunpack.c.l.b16 %v226
    %v754 = vunpack.c.l.b16 %v227
    %v755 = vunpack.c.l.b16 %v228
    %v756 = vunpack.c.l.b16 %v229
    %v757 = vunpack.c.l.b16 %v230
    %v758 = vunpack.c.l.b16 %v231
    %v759 = vunpack.c.l.b16 %v232
    %v760 = vunpack.c.l.b16 %v233
    %v761 = vunpack.c.l.b16 %v234
    %v762 = vunpack.c.l.b16 %v235
    %v763 = vunpack.c.l.b16 %v236
    %v764 = vunpack.c.l.b16 %v237
    %v765 = vunpack.c.l.b16 %v238
    %v766 = vunpack.c.l.b16 %v239
    %v767 = vunpack.c.l.b16 %v240
    %v768 = vunpack.c.l.b16 %v241
    %v769 = vunpack.c.l.b16 %v242
    %v770 = vunpack.c.l.b16 %v243
    %v771 = vunpack.c.l.b16 %v244
    %v772 = vunpack.c.l.b16 %v245
    %v773 = vunpack.c.l.b16 %v246
    %v774 = vunpack.c.l.b16 %v247
    %v775 = vunpack.c.l.b16 %v248
    %v776 = vunpack.c.l.b16 %v249
    %v777 = vunpack.c.l.b16 %v250
    %v778 = vunpack.c.l.b16 %v251
    %v779 = vunpack.c.l.b16 %v252
    %v780 = vunpack.c.l.b16 %v253
    %v781 = vunpack.c.l.b16 %v254
    %v782 = vunpack.c.l.b16 %v255
    %v783 = vunpack.c.l.b16 %v256
    %v784 = vunpack.c.l.b16 %v257
    %v785 = vunpack.c.l.b16 %v258
    %v786 = vunpack.c.l.b16 %v259
    %v787 = vunpack.c.l.b16 %v260
    %v788 = vunpack.c.l.b16 %v261
    %v789 = vunpack.c.l.b16 %v262
    %v790 = vunpack.c.l.b16 %v263
    %v791 = vunpack.c.l.b16 %v264
    %v792 = vunpack.c.l.b16 %v265
    %v793 = vunpack.c.l.b16 %v266
    %v794 = vunpack.c.l.b16 %v267
    %v795 = vunpack.c.l.b16 %v268
    %v796 = vunpack.c.l.b16 %v269
    %v797 = vunpack.c.l.b16 %v270
    %v798 = vunpack.c.l.b16 %v271
    %v799 = vunpack.c.l.b16 %v272
    %v800 = vunpack.c.l.b16 %v273
    %v801 = vunpack.c.l.b16 %v274
    %v802 = vunpack.c.l.b16 %v275
    %v803 = vunpack.c.l.b16 %v276
    %v804 = vunpack.c.l.b16 %v277
    %v805 = vunpack.c.l.b16 %v278
    %v806 = vunpack.c.l.b16 %v279
    %v807 = vunpack.c.l.b16 %v280
    %v808 = vunpack.c.l.b16 %v281
    %v809 = vunpack.c.l.b16 %v282
    %v810 = vunpack.c.l.b16 %v283
    %v811 = vunpack.c.l.b16 %v284
    %v812 = vunpack.c.l.b16 %v285
    %v813 = vunpack.c.l.b16 %v286
    %v814 = vunpack.c.l.b16 %v287
    %v815 = vunpack.c.l.b16 %v288
    %v816 = vunpack.c.l.b16 %v289
    %v817 = vunpack.c.l.b16 %v290
    %v818 = vunpack.c.l.b16 %v291
    %v819 = vunpack.c.l.b16 %v292
    %v820 = vunpack.c.l.b16 %v293
    %v821 = vunpack.c.l.b16 %v294
    %v822 = vunpack.c.l.b16 %v295
    %v823 = vunpack.c.l.b16 %v296
    %v824 = vunpack.c.l.b16 %v297
    %v825 = vunpack.c.l.b16 %v298
    %v826 = vunpack.c.l.b16 %v299
    %v827 = vunpack.c.l.b16 %v300
    %v828 = vunpack.c.l.b16 %v301
    %v829 = vunpack.c.l.b16 %v302
    %v830 = vunpack.c.l.b16 %v303
    %v831 = vunpack.c.l.b16 %v304
    %v832 = vunpack.c.l.b16 %v305
    %v833 = vunpack.c.l.b16 %v306
    %v834 = vunpack.c.l.b16 %v307
    %v835 = vunpack.c.l.b16 %v308
    %v836 = vunpack.c.l.b16 %v309
    %v837 = vunpack.c.l.b16 %v310
    %v838 = vunpack.c.l.b16 %v311
    %v839 = vunpack.c.l.b16 %v312
    %v840 = vunpack.c.l.b16 %v313
    %v841 = vunpack.c.l.b16 %v314
    %v842 = vunpack.c.l.b16 %v315
    %v843 = vunpack.c.l.b16 %v316
    %v844 = vunpack.c.l.b16 %v317
    %v845 = vunpack.c.l.b16 %v318
    %v846 = vunpack.c.l.b16 %v319
    %v847 = vunpack.c.l.b16 %v320
    %v848 = vunpack.c.l.b16 %v321
    %v849 = vunpack.c.l.b16 %v322
    %v850 = vunpack.c.l.b16 %v323
    %v851 = vunpack.c.l.b16 %v324
    %v852 = vunpack.c.l.b16 %v325
    %v853 = vunpack.c.l.b16 %v326
    %v854 = vunpack.c.l.b16 %v327
    %v855 = vunpack.c.l.b16 %v328
    %v856 = vunpack.c.l.b16 %v329
    %v857 = vunpack.c.l.b16 %v330
    %v858 = vunpack.c.l.b16 %v331
    %v859 = vunpack.c.l.b16 %v332
    %v860 = vunpack.c.l.b16 %v333
    %v861 = vunpack.c.l.b16 %v334
    %v862 = vunpack.c.l.b16 %v335
    %v863 = vunpack.c.l.b16 %v336
    %v864 = vunpack.c.l.b16 %v337
    %v865 = vunpack.c.l.b16 %v338
    %v866 = vunpack.c.l.b16 %v339
    %v867 = vunpack.c.l.b16 %v340
    %v868 = vunpack.c.l.b16 %v341
    %v869 = vpack.c.b16 %v614, %v613
    %v870 = vpack.c.b16 %v616, %v615
    %v871 = vpack.c.b16 %v618, %v617
    %v872 = vpack.c.b16 %v620, %v619
    %v873 = vpack.c.b16 %v622, %v621
    %v874 = vpack.c.b16 %v624, %v623
    %v875 = vpack.c.b16 %v626, %v625
    %v876 = vpack.c.b16 %v628, %v627
    %v877 = vpack.c.b16 %v630, %v629
    %v878 = vpack.c.b16 %v632, %v631
    %v879 = vpack.c.b16 %v634, %v633
    %v880 = vpack.c.b16 %v636, %v635
    %v881 = vpack.c.b16 %v638, %v637
    %v882 = vpack.c.b16 %v640, %v639
    %v883 = vpack.c.b16 %v642, %v641
    %v884 = vpack.c.b16 %v644, %v643
    %v885 = vpack.c.b16 %v646, %v645
    %v886 = vpack.c.b16 %v648, %v647
    %v887 = vpack.c.b16 %v650, %v649
    %v888 = vpack.c.b16 %v652, %v651
    %v889 = vpack.c.b16 %v654, %v653
    %v890 = vpack.c.b16 %v656, %v655
    %v891 = vpack.c.b16 %v658, %v657
    %v892 = vpack.c.b16 %v660, %v659
    %v893 = vpack.c.b16 %v662, %v661
    %v894 = vpack.c.b16 %v664, %v663
    %v895 = vpack.c.b16 %v666, %v665
    %v896 = vpack.c.b16 %v668, %v667
    %v897 = vpack.c.b16 %v670, %v669
    %v898 = vpack.c.b16 %v672, %v671
    %v899 = vpack.c.b16 %v674, %v673
    %v900 = vpack.c.b16 %v676, %v675
    %v901 = vpack.c.b16 %v678, %v677
    %v902 = vpack.c.b16 %v680, %v679
    %v903 = vpack.c.b16 %v682, %v681
    %v904 = vpack.c.b16 %v684, %v683
    %v905 = vpack.c.b16 %v686, %v685
    %v906 = vpack.c.b16 %v688, %v687
    %v907 = vpack.c.b16 %v690, %v689
    %v908 = vpack.c.b16 %v692, %v691
    %v909 = vpack.c.b16 %v694, %v693
    %v910 = vpack.c.b16 %v696, %v695
    %v911 = vpack.c.b16 %v698, %v697
    %v912 = vpack.c.b16 %v700, %v699
    %v913 = vpack.c.b16 %v702, %v701
    %v914 = vpack.c.b16 %v704, %v703
    %v915 = vpack.c.b16 %v706, %v705
    %v916 = vpack.c.b16 %v708, %v707
    %v917 = vpack.c.b16 %v710, %v709
    %v918 = vpack.c.b16 %v712, %v711
    %v919 = vpack.c.b16 %v714, %v713
    %v920 = vpack.c.b16 %v716, %v715
    %v921 = vpack.c.b16 %v718, %v717
    %v922 = vpack.c.b16 %v720, %v719
    %v923 = vpack.c.b16 %v722, %v721
    %v924 = vpack.c.b16 %v724, %v723
    %v925 = vpack.c.b16 %v726, %v725
    %v926 = vpack.c.b16 %v728, %v727
    %v927 = vpack.c.b16 %v730, %v729
    %v928 = vpack.c.b16 %v732, %v731
    %v929 = vpack.c.b16 %v734, %v733
    %v930 = vpack.c.b16 %v736, %v735
    %v931 = vpack.c.b16 %v738, %v737
    %v932 = vpack.c.b16 %v740, %v739
    %v933 = vpack.c.b16 %v742, %v741
    %v934 = vpack.c.b16 %v744, %v743
    %v935 = vpack.c.b16 %v746, %v745
    %v936 = vpack.c.b16 %v748, %v747
    %v937 = vpack.c.b16 %v750, %v749
    %v938 = vpack.c.b16 %v752, %v751
    %v939 = vpack.c.b16 %v754, %v753
    %v940 = vpack.c.b16 %v756, %v755
    %v941 = vpack.c.b16 %v758, %v757
    %v942 = vpack.c.b16 %v760, %v759
    %v943 = vpack.c.b16 %v762, %v761
    %v944 = vpack.c.b16 %v764, %v763
    %v945 = vpack.c.b16 %v766, %v765
    %v946 = vpack.c.b16 %v768, %v767
    %v947 = vpack.c.b16 %v770, %v769
    %v948 = vpack.c.b16 %v772, %v771
    %v949 = vpack.c.b16 %v774, %v773
    %v950 = vpack.c.b16 %v776, %v775
    %v951 = vpack.c.b16 %v778, %v777
    %v952 = vpack.c.b16 %v780, %v779
    %v953 = vpack.c.b16 %v782, %v781
    %v954 = vpack.c.b16 %v784, %v783
    %v955 = vpack.c.b16 %v786, %v785
    %v956 = vpack.c.b16 %v788, %v787
    %v957 = vpack.c.b16 %v790, %v789
    %v958 = vpack.c.b16 %v792, %v791
    %v959 = vpack.c.b16 %v794, %v793
    %v960 = vpack.c.b16 %v796, %v795
    %v961 = vpack.c.b16 %v798, %v797
    %v962 = vpack.c.b16 %v800, %v799
    %v963 = vpack.c.b16 %v802, %v801
    %v964 = vpack.c.b16 %v804, %v803
    %v965 = vpack.c.b16 %v806, %v805
    %v966 = vpack.c.b16 %v808, %v807
    %v967 = vpack.c.b16 %v810, %v809
    %v968 = vpack.c.b16 %v812, %v811
    %v969 = vpack.c.b16 %v814, %v813
    %v970 = vpack.c.b16 %v816, %v815
    %v971 = vpack.c.b16 %v818, %v817
    %v972 = vpack.c.b16 %v820, %v819
    %v973 = vpack.c.b16 %v822, %v821
    %v974 = vpack.c.b16 %v824, %v823
    %v975 = vpack.c.b16 %v826, %v825
    %v976 = vpack.c.b16 %v828, %v827
    %v977 = vpack.c.b16 %v830, %v829
    %v978 = vpack.c.b16 %v832, %v831
    %v979 = vpack.c.b16 %v834, %v833
    %v980 = vpack.c.b16 %v836, %v835
    %v981 = vpack.c.b16 %v838, %v837
    %v982 = vpack.c.b16 %v840, %v839
    %v983 = vpack.c.b16 %v842, %v841
    %v984 = vpack.c.b16 %v844, %v843
    %v985 = vpack.c.b16 %v846, %v845
    %v986 = vpack.c.b16 %v848, %v847
    %v987 = vpack.c.b16 %v850, %v849
    %v988 = vpack.c.b16 %v852, %v851
    %v989 = vpack.c.b16 %v854, %v853
    %v990 = vpack.c.b16 %v856, %v855
    %v991 = vpack.c.b16 %v858, %v857
    %v992 = vpack.c.b16 %v860, %v859
    %v993 = vpack.c.b16 %v862, %v861
    %v994 = vpack.c.b16 %v864, %v863
    %v995 = vpack.c.b16 %v866, %v865
    %v996 = vpack.c.b16 %v868, %v867
    %v1005 = vunpack.c.l.b16 %v342
    %v1006 = vunpack.c.l.b16 %v343
    %v1007 = vunpack.c.l.b16 %v344
    %v1008 = vunpack.c.l.b16 %v345
    %v1009 = vunpack.c.l.b16 %v346
    %v1010 = vunpack.c.l.b16 %v347
    %v1011 = vunpack.c.l.b16 %v348
    %v1012 = vunpack.c.l.b16 %v349
    %v1013 = vpack.c.b16 %v1006, %v1005
    %v1014 = vpack.c.b16 %v1008, %v1007
    %v1015 = vpack.c.b16 %v1010, %v1009
    %v1016 = vpack.c.b16 %v1012, %v1011
    %vm1021 = vcmask 523264
    %v1023 = vsel %vm1021, %v869, 0
    %v1026 = vsel %vm1021, %v870, 0
    %v1029 = vsel %vm1021, %v871, 0
    %v1032 = vsel %vm1021, %v872, 0
    %v1035 = vsel %vm1021, %v873, 0
    %v1038 = vsel %vm1021, %v874, 0
    %v1041 = vsel %vm1021, %v875, 0
    %v1044 = vsel %vm1021, %v876, 0
    %v1047 = vsel %vm1021, %v877, 0
    %v1050 = vsel %vm1021, %v878, 0
    %v1053 = vsel %vm1021, %v879, 0
    %v1056 = vsel %vm1021, %v880, 0
    %v1059 = vsel %vm1021, %v881, 0
    %v1062 = vsel %vm1021, %v882, 0
    %v1065 = vsel %vm1021, %v883, 0
    %v1068 = vsel %vm1021, %v884, 0
    %v1071 = vsel %vm1021, %v885, 0
    %v1074 = vsel %vm1021, %v886, 0
    %v1077 = vsel %vm1021, %v887, 0
    %v1080 = vsel %vm1021, %v888, 0
    %v1083 = vsel %vm1021, %v889, 0
    %v1086 = vsel %vm1021, %v890, 0
    %v1089 = vsel %vm1021, %v891, 0
    %v1092 = vsel %vm1021, %v892, 0
    %v1095 = vsel %vm1021, %v893, 0
    %v1098 = vsel %vm1021, %v894, 0
    %v1101 = vsel %vm1021, %v895, 0
    %v1104 = vsel %vm1021, %v896, 0
    %v1107 = vsel %vm1021, %v897, 0
    %v1110 = vsel %vm1021, %v898, 0
    %v1113 = vsel %vm1021, %v899, 0
    %v1116 = vsel %vm1021, %v900, 0
    %v1119 = vsel %vm1021, %v901, 0
    %v1122 = vsel %vm1021, %v902, 0
    %v1125 = vsel %vm1021, %v903, 0
    %v1128 = vsel %vm1021, %v904, 0
    %v1131 = vsel %vm1021, %v905, 0
    %v1134 = vsel %vm1021, %v906, 0
    %v1137 = vsel %vm1021, %v907, 0
    %v1140 = vsel %vm1021, %v908, 0
    %v1143 = vsel %vm1021, %v909, 0
    %v1146 = vsel %vm1021, %v910, 0
    %v1149 = vsel %vm1021, %v911, 0
    %v1152 = vsel %vm1021, %v912, 0
    %v1155 = vsel %vm1021, %v913, 0
    %v1158 = vsel %vm1021, %v914, 0
    %v1161 = vsel %vm1021, %v915, 0
    %v1164 = vsel %vm1021, %v916, 0
    %v1167 = vsel %vm1021, %v917, 0
    %v1170 = vsel %vm1021, %v918, 0
    %v1173 = vsel %vm1021, %v919, 0
    %v1176 = vsel %vm1021, %v920, 0
    %v1179 = vsel %vm1021, %v921, 0
    %v1182 = vsel %vm1021, %v922, 0
    %v1185 = vsel %vm1021, %v923, 0
    %v1188 = vsel %vm1021, %v924, 0
    %v1191 = vsel %vm1021, %v925, 0
    %v1194 = vsel %vm1021, %v926, 0
    %v1197 = vsel %vm1021, %v927, 0
    %v1200 = vsel %vm1021, %v928, 0
    %v1203 = vsel %vm1021, %v929, 0
    %v1206 = vsel %vm1021, %v930, 0
    %v1209 = vsel %vm1021, %v931, 0
    %v1212 = vsel %vm1021, %v932, 0
    %v1215 = vsel %vm1021, %v933, 0
    %v1218 = vsel %vm1021, %v934, 0
    %v1221 = vsel %vm1021, %v935, 0
    %v1224 = vsel %vm1021, %v936, 0
    %v1227 = vsel %vm1021, %v937, 0
    %v1230 = vsel %vm1021, %v938, 0
    %v1233 = vsel %vm1021, %v939, 0
    %v1236 = vsel %vm1021, %v940, 0
    %v1239 = vsel %vm1021, %v941, 0
    %v1242 = vsel %vm1021, %v942, 0
    %v1245 = vsel %vm1021, %v943, 0
    %v1248 = vsel %vm1021, %v944, 0
    %v1251 = vsel %vm1021, %v945, 0
    %v1254 = vsel %vm1021, %v946, 0
    %v1257 = vsel %vm1021, %v947, 0
    %v1260 = vsel %vm1021, %v948, 0
    %v1263 = vsel %vm1021, %v949, 0
    %v1266 = vsel %vm1021, %v950, 0
    %v1269 = vsel %vm1021, %v951, 0
    %v1272 = vsel %vm1021, %v952, 0
    %v1275 = vsel %vm1021, %v953, 0
    %v1278 = vsel %vm1021, %v954, 0
    %v1281 = vsel %vm1021, %v955, 0
    %v1284 = vsel %vm1021, %v956, 0
    %v1287 = vsel %vm1021, %v957, 0
    %v1290 = vsel %vm1021, %v958, 0
    %v1293 = vsel %vm1021, %v959, 0
    %v1296 = vsel %vm1021, %v960, 0
    %v1299 = vsel %vm1021, %v961, 0
    %v1302 = vsel %vm1021, %v962, 0
    %v1305 = vsel %vm1021, %v963, 0
    %v1308 = vsel %vm1021, %v964, 0
    %v1311 = vsel %vm1021, %v965, 0
    %v1314 = vsel %vm1021, %v966, 0
    %v1317 = vsel %vm1021, %v967, 0
    %v1320 = vsel %vm1021, %v968, 0
    %v1323 = vsel %vm1021, %v969, 0
    %v1326 = vsel %vm1021, %v970, 0
    %v1329 = vsel %vm1021, %v971, 0
    %v1332 = vsel %vm1021, %v972, 0
    %v1335 = vsel %vm1021, %v973, 0
    %v1338 = vsel %vm1021, %v974, 0
    %v1341 = vsel %vm1021, %v975, 0
    %v1344 = vsel %vm1021, %v976, 0
    %v1347 = vsel %vm1021, %v977, 0
    %v1350 = vsel %vm1021, %v978, 0
    %v1353 = vsel %vm1021, %v979, 0
    %v1356 = vsel %vm1021, %v980, 0
    %v1359 = vsel %vm1021, %v981, 0
    %v1362 = vsel %vm1021, %v982, 0
    %v1365 = vsel %vm1021, %v983, 0
    %v1368 = vsel %vm1021, %v984, 0
    %v1371 = vsel %vm1021, %v985, 0
    %v1374 = vsel %vm1021, %v986, 0
    %v1377 = vsel %vm1021, %v987, 0
    %v1380 = vsel %vm1021, %v988, 0
    %v1383 = vsel %vm1021, %v989, 0
    %v1386 = vsel %vm1021, %v990, 0
    %v1389 = vsel %vm1021, %v991, 0
    %v1392 = vsel %vm1021, %v992, 0
    %v1395 = vsel %vm1021, %v993, 0
    %v1398 = vsel %vm1021, %v994, 0
    %v1401 = vsel %vm1021, %v995, 0
    %v1404 = vsel %vm1021, %v996, 0
    %1406 = vmatprep.subr.bf16.mxu0 0
    %1407 = vmatpush1.bf16.msra.mxu0 %v1013
    %1408 = vmatprep.subr.bf16.mxu0 0
    %1409 = vmatpush1.bf16.msra.mxu0 %v1014
    %1410 = vmatprep.subr.bf16.mxu0 0
    %1411 = vmatpush1.bf16.msra.mxu0 %v1015
    %1412 = vmatprep.subr.bf16.mxu0 0
    %1413 = vmatpush1.bf16.msra.mxu0 %v1016
    %1414 = vmatprep.subr.bf16.mxu0 0
    %1415 = vmatpush1.bf16.msra.mxu0 0
    %1416 = vmatprep.subr.bf16.mxu0 0
    %1417 = vmatpush1.bf16.msra.mxu0 0
    %1418 = vmatprep.subr.bf16.mxu0 0
    %1419 = vmatpush1.bf16.msra.mxu0 0
    %1420 = vmatprep.subr.bf16.mxu0 0
    %1421 = vmatpush1.bf16.msra.mxu0 0
    %1422 = vmatprep.subr.bf16.mxu0 0
    %1423 = vmatpush1.bf16.msra.mxu0 0
    %1424 = vmatprep.subr.bf16.mxu0 0
    %1425 = vmatpush1.bf16.msra.mxu0 0
    %1426 = vmatprep.subr.bf16.mxu0 0
    %1427 = vmatpush1.bf16.msra.mxu0 0
    %1428 = vmatprep.subr.bf16.mxu0 0
    %1429 = vmatpush1.bf16.msra.mxu0 0
    %1430 = vmatprep.subr.bf16.mxu0 0
    %1431 = vmatpush1.bf16.msra.mxu0 0
    %1432 = vmatprep.subr.bf16.mxu0 0
    %1433 = vmatpush1.bf16.msra.mxu0 0
    %1434 = vmatprep.subr.bf16.mxu0 0
    %1435 = vmatpush1.bf16.msra.mxu0 0
    %1436 = vmatprep.subr.bf16.mxu0 0
    %1437 = vmatpush1.bf16.msra.mxu0 0
    %1438 = vmatprep.mubr.bf16.mxu0 0
    %1439 = vmatmul.mubr.bf16.gmra.mrb[0].mxu0 %v1023
    %v1440 = vpop.f32.mrb[0].mxu0
    %v1441 = vadd.f32 %v355, %v1440
    %v1442 = vpop.f32.mrb[0].mxu0
    %v1443 = vpop.f32.mrb[0].mxu0
    %v1444 = vadd.f32 %v355, %v1443
    %v1445 = vpop.f32.mrb[0].mxu0
    %1446 = vmatprep.mubr.bf16.mxu0 0
    %1447 = vmatmul.mubr.bf16.gmra.mrb[0].mxu0 %v1026
    %v1448 = vpop.f32.mrb[0].mxu0
    %v1449 = vadd.f32 %v355, %v1448
    %v1450 = vpop.f32.mrb[0].mxu0
    %v1451 = vpop.f32.mrb[0].mxu0
    %v1452 = vadd.f32 %v355, %v1451
    %v1453 = vpop.f32.mrb[0].mxu0
    %1454 = vmatprep.mubr.bf16.mxu0 0
    %1455 = vmatmul.mubr.bf16.gmra.mrb[0].mxu0 %v1029
    %v1456 = vpop.f32.mrb[0].mxu0
    %v1457 = vadd.f32 %v355, %v1456
    %v1458 = vpop.f32.mrb[0].mxu0
    %v1459 = vpop.f32.mrb[0].mxu0
    %v1460 = vadd.f32 %v355, %v1459
    %v1461 = vpop.f32.mrb[0].mxu0
    %1462 = vmatprep.mubr.bf16.mxu0 0
    %1463 = vmatmul.mubr.bf16.gmra.mrb[0].mxu0 %v1032
    %v1464 = vpop.f32.mrb[0].mxu0
    %v1465 = vadd.f32 %v355, %v1464
    %v1466 = vpop.f32.mrb[0].mxu0
    %v1467 = vpop.f32.mrb[0].mxu0
    %v1468 = vadd.f32 %v355, %v1467
    %v1469 = vpop.f32.mrb[0].mxu0
    %1470 = vmatprep.mubr.bf16.mxu0 0
    %1471 = vmatmul.mubr.bf16.gmra.mrb[0].mxu0 %v1035
    %v1472 = vpop.f32.mrb[0].mxu0
    %v1473 = vadd.f32 %v355, %v1472
    %v1474 = vpop.f32.mrb[0].mxu0
    %v1475 = vpop.f32.mrb[0].mxu0
    %v1476 = vadd.f32 %v355, %v1475
    %v1477 = vpop.f32.mrb[0].mxu0
    %1478 = vmatprep.mubr.bf16.mxu0 0
    %1479 = vmatmul.mubr.bf16.gmra.mrb[0].mxu0 %v1038
    %v1480 = vpop.f32.mrb[0].mxu0
    %v1481 = vadd.f32 %v355, %v1480
    %v1482 = vpop.f32.mrb[0].mxu0
    %v1483 = vpop.f32.mrb[0].mxu0
    %v1484 = vadd.f32 %v355, %v1483
    %v1485 = vpop.f32.mrb[0].mxu0
    %1486 = vmatprep.mubr.bf16.mxu0 0
    %1487 = vmatmul.mubr.bf16.gmra.mrb[0].mxu0 %v1041
    %v1488 = vpop.f32.mrb[0].mxu0
    %v1489 = vadd.f32 %v355, %v1488
    %v1490 = vpop.f32.mrb[0].mxu0
    %v1491 = vpop.f32.mrb[0].mxu0
    %v1492 = vadd.f32 %v355, %v1491
    %v1493 = vpop.f32.mrb[0].mxu0
    %1494 = vmatprep.mubr.bf16.mxu0 0
    %1495 = vmatmul.mubr.bf16.gmra.mrb[0].mxu0 %v1044
    %v1496 = vpop.f32.mrb[0].mxu0
    %v1497 = vadd.f32 %v355, %v1496
    %v1498 = vpop.f32.mrb[0].mxu0
    %v1499 = vpop.f32.mrb[0].mxu0
    %v1500 = vadd.f32 %v355, %v1499
    %v1501 = vpop.f32.mrb[0].mxu0
    %1502 = vmatprep.mubr.bf16.mxu0 0
    %1503 = vmatmul.mubr.bf16.gmra.mrb[0].mxu0 %v1047
    %v1504 = vpop.f32.mrb[0].mxu0
    %v1505 = vadd.f32 %v355, %v1504
    %v1506 = vpop.f32.mrb[0].mxu0
    %v1507 = vpop.f32.mrb[0].mxu0
    %v1508 = vadd.f32 %v355, %v1507
    %v1509 = vpop.f32.mrb[0].mxu0
    %1510 = vmatprep.mubr.bf16.mxu0 0
    %1511 = vmatmul.mubr.bf16.gmra.mrb[0].mxu0 %v1050
    %v1512 = vpop.f32.mrb[0].mxu0
    %v1513 = vadd.f32 %v355, %v1512
    %v1514 = vpop.f32.mrb[0].mxu0
    %v1515 = vpop.f32.mrb[0].mxu0
    %v1516 = vadd.f32 %v355, %v1515
    %v1517 = vpop.f32.mrb[0].mxu0
    %1518 = vmatprep.mubr.bf16.mxu0 0
    %1519 = vmatmul.mubr.bf16.gmra.mrb[0].mxu0 %v1053
    %v1520 = vpop.f32.mrb[0].mxu0
    %v1521 = vadd.f32 %v355, %v1520
    %v1522 = vpop.f32.mrb[0].mxu0
    %v1523 = vpop.f32.mrb[0].mxu0
    %v1524 = vadd.f32 %v355, %v1523
    %v1525 = vpop.f32.mrb[0].mxu0
    %1526 = vmatprep.mubr.bf16.mxu0 0
    %1527 = vmatmul.mubr.bf16.gmra.mrb[0].mxu0 %v1056
    %v1528 = vpop.f32.mrb[0].mxu0
    %v1529 = vadd.f32 %v355, %v1528
    %v1530 = vpop.f32.mrb[0].mxu0
    %v1531 = vpop.f32.mrb[0].mxu0
    %v1532 = vadd.f32 %v355, %v1531
    %v1533 = vpop.f32.mrb[0].mxu0
    %1534 = vmatprep.mubr.bf16.mxu0 0
    %1535 = vmatmul.mubr.bf16.gmra.mrb[0].mxu0 %v1059
    %v1536 = vpop.f32.mrb[0].mxu0
    %v1537 = vadd.f32 %v355, %v1536
    %v1538 = vpop.f32.mrb[0].mxu0
    %v1539 = vpop.f32.mrb[0].mxu0
    %v1540 = vadd.f32 %v355, %v1539
    %v1541 = vpop.f32.mrb[0].mxu0
    %1542 = vmatprep.mubr.bf16.mxu0 0
    %1543 = vmatmul.mubr.bf16.gmra.mrb[0].mxu0 %v1062
    %v1544 = vpop.f32.mrb[0].mxu0
    %v1545 = vadd.f32 %v355, %v1544
    %v1546 = vpop.f32.mrb[0].mxu0
    %v1547 = vpop.f32.mrb[0].mxu0
    %v1548 = vadd.f32 %v355, %v1547
    %v1549 = vpop.f32.mrb[0].mxu0
    %1550 = vmatprep.mubr.bf16.mxu0 0
    %1551 = vmatmul.mubr.bf16.gmra.mrb[0].mxu0 %v1065
    %v1552 = vpop.f32.mrb[0].mxu0
    %v1553 = vadd.f32 %v355, %v1552
    %v1554 = vpop.f32.mrb[0].mxu0
    %v1555 = vpop.f32.mrb[0].mxu0
    %v1556 = vadd.f32 %v355, %v1555
    %v1557 = vpop.f32.mrb[0].mxu0
    %1558 = vmatprep.mubr.bf16.mxu0 0
    %1559 = vmatmul.mubr.bf16.gmra.mrb[0].mxu0 %v1068
    %v1560 = vpop.f32.mrb[0].mxu0
    %v1561 = vadd.f32 %v355, %v1560
    %v1562 = vpop.f32.mrb[0].mxu0
    %v1563 = vpop.f32.mrb[0].mxu0
    %v1564 = vadd.f32 %v355, %v1563
    %v1565 = vpop.f32.mrb[0].mxu0
    %1566 = vmatprep.mubr.bf16.mxu0 0
    %1567 = vmatmul.mubr.bf16.gmra.mrb[0].mxu0 %v1071
    %v1568 = vpop.f32.mrb[0].mxu0
    %v1569 = vadd.f32 %v355, %v1568
    %v1570 = vpop.f32.mrb[0].mxu0
    %v1571 = vpop.f32.mrb[0].mxu0
    %v1572 = vadd.f32 %v355, %v1571
    %v1573 = vpop.f32.mrb[0].mxu0
    %1574 = vmatprep.mubr.bf16.mxu0 0
    %1575 = vmatmul.mubr.bf16.gmra.mrb[0].mxu0 %v1074
    %v1576 = vpop.f32.mrb[0].mxu0
    %v1577 = vadd.f32 %v355, %v1576
    %v1578 = vpop.f32.mrb[0].mxu0
    %v1579 = vpop.f32.mrb[0].mxu0
    %v1580 = vadd.f32 %v355, %v1579
    %v1581 = vpop.f32.mrb[0].mxu0
    %1582 = vmatprep.mubr.bf16.mxu0 0
    %1583 = vmatmul.mubr.bf16.gmra.mrb[0].mxu0 %v1077
    %v1584 = vpop.f32.mrb[0].mxu0
    %v1585 = vadd.f32 %v355, %v1584
    %v1586 = vpop.f32.mrb[0].mxu0
    %v1587 = vpop.f32.mrb[0].mxu0
    %v1588 = vadd.f32 %v355, %v1587
    %v1589 = vpop.f32.mrb[0].mxu0
    %1590 = vmatprep.mubr.bf16.mxu0 0
    %1591 = vmatmul.mubr.bf16.gmra.mrb[0].mxu0 %v1080
    %v1592 = vpop.f32.mrb[0].mxu0
    %v1593 = vadd.f32 %v355, %v1592
    %v1594 = vpop.f32.mrb[0].mxu0
    %v1595 = vpop.f32.mrb[0].mxu0
    %v1596 = vadd.f32 %v355, %v1595
    %v1597 = vpop.f32.mrb[0].mxu0
    %1598 = vmatprep.mubr.bf16.mxu0 0
    %1599 = vmatmul.mubr.bf16.gmra.mrb[0].mxu0 %v1083
    %v1600 = vpop.f32.mrb[0].mxu0
    %v1601 = vadd.f32 %v355, %v1600
    %v1602 = vpop.f32.mrb[0].mxu0
    %v1603 = vpop.f32.mrb[0].mxu0
    %v1604 = vadd.f32 %v355, %v1603
    %v1605 = vpop.f32.mrb[0].mxu0
    %1606 = vmatprep.mubr.bf16.mxu0 0
    %1607 = vmatmul.mubr.bf16.gmra.mrb[0].mxu0 %v1086
    %v1608 = vpop.f32.mrb[0].mxu0
    %v1609 = vadd.f32 %v355, %v1608
    %v1610 = vpop.f32.mrb[0].mxu0
    %v1611 = vpop.f32.mrb[0].mxu0
    %v1612 = vadd.f32 %v355, %v1611
    %v1613 = vpop.f32.mrb[0].mxu0
    %1614 = vmatprep.mubr.bf16.mxu0 0
    %1615 = vmatmul.mubr.bf16.gmra.mrb[0].mxu0 %v1089
    %v1616 = vpop.f32.mrb[0].mxu0
    %v1617 = vadd.f32 %v355, %v1616
    %v1618 = vpop.f32.mrb[0].mxu0
    %v1619 = vpop.f32.mrb[0].mxu0
    %v1620 = vadd.f32 %v355, %v1619
    %v1621 = vpop.f32.mrb[0].mxu0
    %1622 = vmatprep.mubr.bf16.mxu0 0
    %1623 = vmatmul.mubr.bf16.gmra.mrb[0].mxu0 %v1092
    %v1624 = vpop.f32.mrb[0].mxu0
    %v1625 = vadd.f32 %v355, %v1624
    %v1626 = vpop.f32.mrb[0].mxu0
    %v1627 = vpop.f32.mrb[0].mxu0
    %v1628 = vadd.f32 %v355, %v1627
    %v1629 = vpop.f32.mrb[0].mxu0
    %1630 = vmatprep.mubr.bf16.mxu0 0
    %1631 = vmatmul.mubr.bf16.gmra.mrb[0].mxu0 %v1095
    %v1632 = vpop.f32.mrb[0].mxu0
    %v1633 = vadd.f32 %v355, %v1632
    %v1634 = vpop.f32.mrb[0].mxu0
    %v1635 = vpop.f32.mrb[0].mxu0
    %v1636 = vadd.f32 %v355, %v1635
    %v1637 = vpop.f32.mrb[0].mxu0
    %1638 = vmatprep.mubr.bf16.mxu0 0
    %1639 = vmatmul.mubr.bf16.gmra.mrb[0].mxu0 %v1098
    %v1640 = vpop.f32.mrb[0].mxu0
    %v1641 = vadd.f32 %v355, %v1640
    %v1642 = vpop.f32.mrb[0].mxu0
    %v1643 = vpop.f32.mrb[0].mxu0
    %v1644 = vadd.f32 %v355, %v1643
    %v1645 = vpop.f32.mrb[0].mxu0
    %1646 = vmatprep.mubr.bf16.mxu0 0
    %1647 = vmatmul.mubr.bf16.gmra.mrb[0].mxu0 %v1101
    %v1648 = vpop.f32.mrb[0].mxu0
    %v1649 = vadd.f32 %v355, %v1648
    %v1650 = vpop.f32.mrb[0].mxu0
    %v1651 = vpop.f32.mrb[0].mxu0
    %v1652 = vadd.f32 %v355, %v1651
    %v1653 = vpop.f32.mrb[0].mxu0
    %1654 = vmatprep.mubr.bf16.mxu0 0
    %1655 = vmatmul.mubr.bf16.gmra.mrb[0].mxu0 %v1104
    %v1656 = vpop.f32.mrb[0].mxu0
    %v1657 = vadd.f32 %v355, %v1656
    %v1658 = vpop.f32.mrb[0].mxu0
    %v1659 = vpop.f32.mrb[0].mxu0
    %v1660 = vadd.f32 %v355, %v1659
    %v1661 = vpop.f32.mrb[0].mxu0
    %1662 = vmatprep.mubr.bf16.mxu0 0
    %1663 = vmatmul.mubr.bf16.gmra.mrb[0].mxu0 %v1107
    %v1664 = vpop.f32.mrb[0].mxu0
    %v1665 = vadd.f32 %v355, %v1664
    %v1666 = vpop.f32.mrb[0].mxu0
    %v1667 = vpop.f32.mrb[0].mxu0
    %v1668 = vadd.f32 %v355, %v1667
    %v1669 = vpop.f32.mrb[0].mxu0
    %1670 = vmatprep.mubr.bf16.mxu0 0
    %1671 = vmatmul.mubr.bf16.gmra.mrb[0].mxu0 %v1110
    %v1672 = vpop.f32.mrb[0].mxu0
    %v1673 = vadd.f32 %v355, %v1672
    %v1674 = vpop.f32.mrb[0].mxu0
    %v1675 = vpop.f32.mrb[0].mxu0
    %v1676 = vadd.f32 %v355, %v1675
    %v1677 = vpop.f32.mrb[0].mxu0
    %1678 = vmatprep.mubr.bf16.mxu0 0
    %1679 = vmatmul.mubr.bf16.gmra.mrb[0].mxu0 %v1113
    %v1680 = vpop.f32.mrb[0].mxu0
    %v1681 = vadd.f32 %v355, %v1680
    %v1682 = vpop.f32.mrb[0].mxu0
    %v1683 = vpop.f32.mrb[0].mxu0
    %v1684 = vadd.f32 %v355, %v1683
    %v1685 = vpop.f32.mrb[0].mxu0
    %1686 = vmatprep.mubr.bf16.mxu0 0
    %1687 = vmatmul.mubr.bf16.gmra.mrb[0].mxu0 %v1116
    %v1688 = vpop.f32.mrb[0].mxu0
    %v1689 = vadd.f32 %v355, %v1688
    %v1690 = vpop.f32.mrb[0].mxu0
    %v1691 = vpop.f32.mrb[0].mxu0
    %v1692 = vadd.f32 %v355, %v1691
    %v1693 = vpop.f32.mrb[0].mxu0
    %1694 = vmatprep.mubr.bf16.mxu0 0
    %1695 = vmatmul.mubr.bf16.gmra.mrb[0].mxu0 %v1119
    %v1696 = vpop.f32.mrb[0].mxu0
    %v1697 = vadd.f32 %v355, %v1696
    %v1698 = vpop.f32.mrb[0].mxu0
    %v1699 = vpop.f32.mrb[0].mxu0
    %v1700 = vadd.f32 %v355, %v1699
    %v1701 = vpop.f32.mrb[0].mxu0
    %1702 = vmatprep.mubr.bf16.mxu0 0
    %1703 = vmatmul.mubr.bf16.gmra.mrb[0].mxu0 %v1122
    %v1704 = vpop.f32.mrb[0].mxu0
    %v1705 = vadd.f32 %v355, %v1704
    %v1706 = vpop.f32.mrb[0].mxu0
    %v1707 = vpop.f32.mrb[0].mxu0
    %v1708 = vadd.f32 %v355, %v1707
    %v1709 = vpop.f32.mrb[0].mxu0
    %1710 = vmatprep.mubr.bf16.mxu0 0
    %1711 = vmatmul.mubr.bf16.gmra.mrb[0].mxu0 %v1125
    %v1712 = vpop.f32.mrb[0].mxu0
    %v1713 = vadd.f32 %v355, %v1712
    %v1714 = vpop.f32.mrb[0].mxu0
    %v1715 = vpop.f32.mrb[0].mxu0
    %v1716 = vadd.f32 %v355, %v1715
    %v1717 = vpop.f32.mrb[0].mxu0
    %1718 = vmatprep.mubr.bf16.mxu0 0
    %1719 = vmatmul.mubr.bf16.gmra.mrb[0].mxu0 %v1128
    %v1720 = vpop.f32.mrb[0].mxu0
    %v1721 = vadd.f32 %v355, %v1720
    %v1722 = vpop.f32.mrb[0].mxu0
    %v1723 = vpop.f32.mrb[0].mxu0
    %v1724 = vadd.f32 %v355, %v1723
    %v1725 = vpop.f32.mrb[0].mxu0
    %1726 = vmatprep.mubr.bf16.mxu0 0
    %1727 = vmatmul.mubr.bf16.gmra.mrb[0].mxu0 %v1131
    %v1728 = vpop.f32.mrb[0].mxu0
    %v1729 = vadd.f32 %v355, %v1728
    %v1730 = vpop.f32.mrb[0].mxu0
    %v1731 = vpop.f32.mrb[0].mxu0
    %v1732 = vadd.f32 %v355, %v1731
    %v1733 = vpop.f32.mrb[0].mxu0
    %1734 = vmatprep.mubr.bf16.mxu0 0
    %1735 = vmatmul.mubr.bf16.gmra.mrb[0].mxu0 %v1134
    %v1736 = vpop.f32.mrb[0].mxu0
    %v1737 = vadd.f32 %v355, %v1736
    %v1738 = vpop.f32.mrb[0].mxu0
    %v1739 = vpop.f32.mrb[0].mxu0
    %v1740 = vadd.f32 %v355, %v1739
    %v1741 = vpop.f32.mrb[0].mxu0
    %1742 = vmatprep.mubr.bf16.mxu0 0
    %1743 = vmatmul.mubr.bf16.gmra.mrb[0].mxu0 %v1137
    %v1744 = vpop.f32.mrb[0].mxu0
    %v1745 = vadd.f32 %v355, %v1744
    %v1746 = vpop.f32.mrb[0].mxu0
    %v1747 = vpop.f32.mrb[0].mxu0
    %v1748 = vadd.f32 %v355, %v1747
    %v1749 = vpop.f32.mrb[0].mxu0
    %1750 = vmatprep.mubr.bf16.mxu0 0
    %1751 = vmatmul.mubr.bf16.gmra.mrb[0].mxu0 %v1140
    %v1752 = vpop.f32.mrb[0].mxu0
    %v1753 = vadd.f32 %v355, %v1752
    %v1754 = vpop.f32.mrb[0].mxu0
    %v1755 = vpop.f32.mrb[0].mxu0
    %v1756 = vadd.f32 %v355, %v1755
    %v1757 = vpop.f32.mrb[0].mxu0
    %1758 = vmatprep.mubr.bf16.mxu0 0
    %1759 = vmatmul.mubr.bf16.gmra.mrb[0].mxu0 %v1143
    %v1760 = vpop.f32.mrb[0].mxu0
    %v1761 = vadd.f32 %v355, %v1760
    %v1762 = vpop.f32.mrb[0].mxu0
    %v1763 = vpop.f32.mrb[0].mxu0
    %v1764 = vadd.f32 %v355, %v1763
    %v1765 = vpop.f32.mrb[0].mxu0
    %1766 = vmatprep.mubr.bf16.mxu0 0
    %1767 = vmatmul.mubr.bf16.gmra.mrb[0].mxu0 %v1146
    %v1768 = vpop.f32.mrb[0].mxu0
    %v1769 = vadd.f32 %v355, %v1768
    %v1770 = vpop.f32.mrb[0].mxu0
    %v1771 = vpop.f32.mrb[0].mxu0
    %v1772 = vadd.f32 %v355, %v1771
    %v1773 = vpop.f32.mrb[0].mxu0
    %1774 = vmatprep.mubr.bf16.mxu0 0
    %1775 = vmatmul.mubr.bf16.gmra.mrb[0].mxu0 %v1149
    %v1776 = vpop.f32.mrb[0].mxu0
    %v1777 = vadd.f32 %v355, %v1776
    %v1778 = vpop.f32.mrb[0].mxu0
    %v1779 = vpop.f32.mrb[0].mxu0
    %v1780 = vadd.f32 %v355, %v1779
    %v1781 = vpop.f32.mrb[0].mxu0
    %1782 = vmatprep.mubr.bf16.mxu0 0
    %1783 = vmatmul.mubr.bf16.gmra.mrb[0].mxu0 %v1152
    %v1784 = vpop.f32.mrb[0].mxu0
    %v1785 = vadd.f32 %v355, %v1784
    %v1786 = vpop.f32.mrb[0].mxu0
    %v1787 = vpop.f32.mrb[0].mxu0
    %v1788 = vadd.f32 %v355, %v1787
    %v1789 = vpop.f32.mrb[0].mxu0
    %1790 = vmatprep.mubr.bf16.mxu0 0
    %1791 = vmatmul.mubr.bf16.gmra.mrb[0].mxu0 %v1155
    %v1792 = vpop.f32.mrb[0].mxu0
    %v1793 = vadd.f32 %v355, %v1792
    %v1794 = vpop.f32.mrb[0].mxu0
    %v1795 = vpop.f32.mrb[0].mxu0
    %v1796 = vadd.f32 %v355, %v1795
    %v1797 = vpop.f32.mrb[0].mxu0
    %1798 = vmatprep.mubr.bf16.mxu0 0
    %1799 = vmatmul.mubr.bf16.gmra.mrb[0].mxu0 %v1158
    %v1800 = vpop.f32.mrb[0].mxu0
    %v1801 = vadd.f32 %v355, %v1800
    %v1802 = vpop.f32.mrb[0].mxu0
    %v1803 = vpop.f32.mrb[0].mxu0
    %v1804 = vadd.f32 %v355, %v1803
    %v1805 = vpop.f32.mrb[0].mxu0
    %1806 = vmatprep.mubr.bf16.mxu0 0
    %1807 = vmatmul.mubr.bf16.gmra.mrb[0].mxu0 %v1161
    %v1808 = vpop.f32.mrb[0].mxu0
    %v1809 = vadd.f32 %v355, %v1808
    %v1810 = vpop.f32.mrb[0].mxu0
    %v1811 = vpop.f32.mrb[0].mxu0
    %v1812 = vadd.f32 %v355, %v1811
    %v1813 = vpop.f32.mrb[0].mxu0
    %1814 = vmatprep.mubr.bf16.mxu0 0
    %1815 = vmatmul.mubr.bf16.gmra.mrb[0].mxu0 %v1164
    %v1816 = vpop.f32.mrb[0].mxu0
    %v1817 = vadd.f32 %v355, %v1816
    %v1818 = vpop.f32.mrb[0].mxu0
    %v1819 = vpop.f32.mrb[0].mxu0
    %v1820 = vadd.f32 %v355, %v1819
    %v1821 = vpop.f32.mrb[0].mxu0
    %1822 = vmatprep.mubr.bf16.mxu0 0
    %1823 = vmatmul.mubr.bf16.gmra.mrb[0].mxu0 %v1167
    %v1824 = vpop.f32.mrb[0].mxu0
    %v1825 = vadd.f32 %v355, %v1824
    %v1826 = vpop.f32.mrb[0].mxu0
    %v1827 = vpop.f32.mrb[0].mxu0
    %v1828 = vadd.f32 %v355, %v1827
    %v1829 = vpop.f32.mrb[0].mxu0
    %1830 = vmatprep.mubr.bf16.mxu0 0
    %1831 = vmatmul.mubr.bf16.gmra.mrb[0].mxu0 %v1170
    %v1832 = vpop.f32.mrb[0].mxu0
    %v1833 = vadd.f32 %v355, %v1832
    %v1834 = vpop.f32.mrb[0].mxu0
    %v1835 = vpop.f32.mrb[0].mxu0
    %v1836 = vadd.f32 %v355, %v1835
    %v1837 = vpop.f32.mrb[0].mxu0
    %1838 = vmatprep.mubr.bf16.mxu0 0
    %1839 = vmatmul.mubr.bf16.gmra.mrb[0].mxu0 %v1173
    %v1840 = vpop.f32.mrb[0].mxu0
    %v1841 = vadd.f32 %v355, %v1840
    %v1842 = vpop.f32.mrb[0].mxu0
    %v1843 = vpop.f32.mrb[0].mxu0
    %v1844 = vadd.f32 %v355, %v1843
    %v1845 = vpop.f32.mrb[0].mxu0
    %1846 = vmatprep.mubr.bf16.mxu0 0
    %1847 = vmatmul.mubr.bf16.gmra.mrb[0].mxu0 %v1176
    %v1848 = vpop.f32.mrb[0].mxu0
    %v1849 = vadd.f32 %v355, %v1848
    %v1850 = vpop.f32.mrb[0].mxu0
    %v1851 = vpop.f32.mrb[0].mxu0
    %v1852 = vadd.f32 %v355, %v1851
    %v1853 = vpop.f32.mrb[0].mxu0
    %1854 = vmatprep.mubr.bf16.mxu0 0
    %1855 = vmatmul.mubr.bf16.gmra.mrb[0].mxu0 %v1179
    %v1856 = vpop.f32.mrb[0].mxu0
    %v1857 = vadd.f32 %v355, %v1856
    %v1858 = vpop.f32.mrb[0].mxu0
    %v1859 = vpop.f32.mrb[0].mxu0
    %v1860 = vadd.f32 %v355, %v1859
    %v1861 = vpop.f32.mrb[0].mxu0
    %1862 = vmatprep.mubr.bf16.mxu0 0
    %1863 = vmatmul.mubr.bf16.gmra.mrb[0].mxu0 %v1182
    %v1864 = vpop.f32.mrb[0].mxu0
    %v1865 = vadd.f32 %v355, %v1864
    %v1866 = vpop.f32.mrb[0].mxu0
    %v1867 = vpop.f32.mrb[0].mxu0
    %v1868 = vadd.f32 %v355, %v1867
    %v1869 = vpop.f32.mrb[0].mxu0
    %1870 = vmatprep.mubr.bf16.mxu0 0
    %1871 = vmatmul.mubr.bf16.gmra.mrb[0].mxu0 %v1185
    %v1872 = vpop.f32.mrb[0].mxu0
    %v1873 = vadd.f32 %v355, %v1872
    %v1874 = vpop.f32.mrb[0].mxu0
    %v1875 = vpop.f32.mrb[0].mxu0
    %v1876 = vadd.f32 %v355, %v1875
    %v1877 = vpop.f32.mrb[0].mxu0
    %1878 = vmatprep.mubr.bf16.mxu0 0
    %1879 = vmatmul.mubr.bf16.gmra.mrb[0].mxu0 %v1188
    %v1880 = vpop.f32.mrb[0].mxu0
    %v1881 = vadd.f32 %v355, %v1880
    %v1882 = vpop.f32.mrb[0].mxu0
    %v1883 = vpop.f32.mrb[0].mxu0
    %v1884 = vadd.f32 %v355, %v1883
    %v1885 = vpop.f32.mrb[0].mxu0
    %1886 = vmatprep.mubr.bf16.mxu0 0
    %1887 = vmatmul.mubr.bf16.gmra.mrb[0].mxu0 %v1191
    %v1888 = vpop.f32.mrb[0].mxu0
    %v1889 = vadd.f32 %v355, %v1888
    %v1890 = vpop.f32.mrb[0].mxu0
    %v1891 = vpop.f32.mrb[0].mxu0
    %v1892 = vadd.f32 %v355, %v1891
    %v1893 = vpop.f32.mrb[0].mxu0
    %1894 = vmatprep.mubr.bf16.mxu0 0
    %1895 = vmatmul.mubr.bf16.gmra.mrb[0].mxu0 %v1194
    %v1896 = vpop.f32.mrb[0].mxu0
    %v1897 = vadd.f32 %v355, %v1896
    %v1898 = vpop.f32.mrb[0].mxu0
    %v1899 = vpop.f32.mrb[0].mxu0
    %v1900 = vadd.f32 %v355, %v1899
    %v1901 = vpop.f32.mrb[0].mxu0
    %1902 = vmatprep.mubr.bf16.mxu0 0
    %1903 = vmatmul.mubr.bf16.gmra.mrb[0].mxu0 %v1197
    %v1904 = vpop.f32.mrb[0].mxu0
    %v1905 = vadd.f32 %v355, %v1904
    %v1906 = vpop.f32.mrb[0].mxu0
    %v1907 = vpop.f32.mrb[0].mxu0
    %v1908 = vadd.f32 %v355, %v1907
    %v1909 = vpop.f32.mrb[0].mxu0
    %1910 = vmatprep.mubr.bf16.mxu0 0
    %1911 = vmatmul.mubr.bf16.gmra.mrb[0].mxu0 %v1200
    %v1912 = vpop.f32.mrb[0].mxu0
    %v1913 = vadd.f32 %v355, %v1912
    %v1914 = vpop.f32.mrb[0].mxu0
    %v1915 = vpop.f32.mrb[0].mxu0
    %v1916 = vadd.f32 %v355, %v1915
    %v1917 = vpop.f32.mrb[0].mxu0
    %1918 = vmatprep.mubr.bf16.mxu0 0
    %1919 = vmatmul.mubr.bf16.gmra.mrb[0].mxu0 %v1203
    %v1920 = vpop.f32.mrb[0].mxu0
    %v1921 = vadd.f32 %v355, %v1920
    %v1922 = vpop.f32.mrb[0].mxu0
    %v1923 = vpop.f32.mrb[0].mxu0
    %v1924 = vadd.f32 %v355, %v1923
    %v1925 = vpop.f32.mrb[0].mxu0
    %1926 = vmatprep.mubr.bf16.mxu0 0
    %1927 = vmatmul.mubr.bf16.gmra.mrb[0].mxu0 %v1206
    %v1928 = vpop.f32.mrb[0].mxu0
    %v1929 = vadd.f32 %v355, %v1928
    %v1930 = vpop.f32.mrb[0].mxu0
    %v1931 = vpop.f32.mrb[0].mxu0
    %v1932 = vadd.f32 %v355, %v1931
    %v1933 = vpop.f32.mrb[0].mxu0
    %1934 = vmatprep.mubr.bf16.mxu0 0
    %1935 = vmatmul.mubr.bf16.gmra.mrb[0].mxu0 %v1209
    %v1936 = vpop.f32.mrb[0].mxu0
    %v1937 = vadd.f32 %v355, %v1936
    %v1938 = vpop.f32.mrb[0].mxu0
    %v1939 = vpop.f32.mrb[0].mxu0
    %v1940 = vadd.f32 %v355, %v1939
    %v1941 = vpop.f32.mrb[0].mxu0
    %1942 = vmatprep.mubr.bf16.mxu0 0
    %1943 = vmatmul.mubr.bf16.gmra.mrb[0].mxu0 %v1212
    %v1944 = vpop.f32.mrb[0].mxu0
    %v1945 = vadd.f32 %v355, %v1944
    %v1946 = vpop.f32.mrb[0].mxu0
    %v1947 = vpop.f32.mrb[0].mxu0
    %v1948 = vadd.f32 %v355, %v1947
    %v1949 = vpop.f32.mrb[0].mxu0
    %1950 = vmatprep.mubr.bf16.mxu0 0
    %1951 = vmatmul.mubr.bf16.gmra.mrb[0].mxu0 %v1215
    %v1952 = vpop.f32.mrb[0].mxu0
    %v1953 = vadd.f32 %v355, %v1952
    %v1954 = vpop.f32.mrb[0].mxu0
    %v1955 = vpop.f32.mrb[0].mxu0
    %v1956 = vadd.f32 %v355, %v1955
    %v1957 = vpop.f32.mrb[0].mxu0
    %1958 = vmatprep.mubr.bf16.mxu0 0
    %1959 = vmatmul.mubr.bf16.gmra.mrb[0].mxu0 %v1218
    %v1960 = vpop.f32.mrb[0].mxu0
    %v1961 = vadd.f32 %v355, %v1960
    %v1962 = vpop.f32.mrb[0].mxu0
    %v1963 = vpop.f32.mrb[0].mxu0
    %v1964 = vadd.f32 %v355, %v1963
    %v1965 = vpop.f32.mrb[0].mxu0
    %1966 = vmatprep.mubr.bf16.mxu0 0
    %1967 = vmatmul.mubr.bf16.gmra.mrb[0].mxu0 %v1221
    %v1968 = vpop.f32.mrb[0].mxu0
    %v1969 = vadd.f32 %v355, %v1968
    %v1970 = vpop.f32.mrb[0].mxu0
    %v1971 = vpop.f32.mrb[0].mxu0
    %v1972 = vadd.f32 %v355, %v1971
    %v1973 = vpop.f32.mrb[0].mxu0
    %1974 = vmatprep.mubr.bf16.mxu0 0
    %1975 = vmatmul.mubr.bf16.gmra.mrb[0].mxu0 %v1224
    %v1976 = vpop.f32.mrb[0].mxu0
    %v1977 = vadd.f32 %v355, %v1976
    %v1978 = vpop.f32.mrb[0].mxu0
    %v1979 = vpop.f32.mrb[0].mxu0
    %v1980 = vadd.f32 %v355, %v1979
    %v1981 = vpop.f32.mrb[0].mxu0
    %1982 = vmatprep.mubr.bf16.mxu0 0
    %1983 = vmatmul.mubr.bf16.gmra.mrb[0].mxu0 %v1227
    %v1984 = vpop.f32.mrb[0].mxu0
    %v1985 = vadd.f32 %v355, %v1984
    %v1986 = vpop.f32.mrb[0].mxu0
    %v1987 = vpop.f32.mrb[0].mxu0
    %v1988 = vadd.f32 %v355, %v1987
    %v1989 = vpop.f32.mrb[0].mxu0
    %1990 = vmatprep.mubr.bf16.mxu0 0
    %1991 = vmatmul.mubr.bf16.gmra.mrb[0].mxu0 %v1230
    %v1992 = vpop.f32.mrb[0].mxu0
    %v1993 = vadd.f32 %v355, %v1992
    %v1994 = vpop.f32.mrb[0].mxu0
    %v1995 = vpop.f32.mrb[0].mxu0
    %v1996 = vadd.f32 %v355, %v1995
    %v1997 = vpop.f32.mrb[0].mxu0
    %1998 = vmatprep.mubr.bf16.mxu0 0
    %1999 = vmatmul.mubr.bf16.gmra.mrb[0].mxu0 %v1233
    %v2000 = vpop.f32.mrb[0].mxu0
    %v2001 = vadd.f32 %v355, %v2000
    %v2002 = vpop.f32.mrb[0].mxu0
    %v2003 = vpop.f32.mrb[0].mxu0
    %v2004 = vadd.f32 %v355, %v2003
    %v2005 = vpop.f32.mrb[0].mxu0
    %2006 = vmatprep.mubr.bf16.mxu0 0
    %2007 = vmatmul.mubr.bf16.gmra.mrb[0].mxu0 %v1236
    %v2008 = vpop.f32.mrb[0].mxu0
    %v2009 = vadd.f32 %v355, %v2008
    %v2010 = vpop.f32.mrb[0].mxu0
    %v2011 = vpop.f32.mrb[0].mxu0
    %v2012 = vadd.f32 %v355, %v2011
    %v2013 = vpop.f32.mrb[0].mxu0
    %2014 = vmatprep.mubr.bf16.mxu0 0
    %2015 = vmatmul.mubr.bf16.gmra.mrb[0].mxu0 %v1239
    %v2016 = vpop.f32.mrb[0].mxu0
    %v2017 = vadd.f32 %v355, %v2016
    %v2018 = vpop.f32.mrb[0].mxu0
    %v2019 = vpop.f32.mrb[0].mxu0
    %v2020 = vadd.f32 %v355, %v2019
    %v2021 = vpop.f32.mrb[0].mxu0
    %2022 = vmatprep.mubr.bf16.mxu0 0
    %2023 = vmatmul.mubr.bf16.gmra.mrb[0].mxu0 %v1242
    %v2024 = vpop.f32.mrb[0].mxu0
    %v2025 = vadd.f32 %v355, %v2024
    %v2026 = vpop.f32.mrb[0].mxu0
    %v2027 = vpop.f32.mrb[0].mxu0
    %v2028 = vadd.f32 %v355, %v2027
    %v2029 = vpop.f32.mrb[0].mxu0
    %2030 = vmatprep.mubr.bf16.mxu0 0
    %2031 = vmatmul.mubr.bf16.gmra.mrb[0].mxu0 %v1245
    %v2032 = vpop.f32.mrb[0].mxu0
    %v2033 = vadd.f32 %v355, %v2032
    %v2034 = vpop.f32.mrb[0].mxu0
    %v2035 = vpop.f32.mrb[0].mxu0
    %v2036 = vadd.f32 %v355, %v2035
    %v2037 = vpop.f32.mrb[0].mxu0
    %2038 = vmatprep.mubr.bf16.mxu0 0
    %2039 = vmatmul.mubr.bf16.gmra.mrb[0].mxu0 %v1248
    %v2040 = vpop.f32.mrb[0].mxu0
    %v2041 = vadd.f32 %v355, %v2040
    %v2042 = vpop.f32.mrb[0].mxu0
    %v2043 = vpop.f32.mrb[0].mxu0
    %v2044 = vadd.f32 %v355, %v2043
    %v2045 = vpop.f32.mrb[0].mxu0
    %2046 = vmatprep.mubr.bf16.mxu0 0
    %2047 = vmatmul.mubr.bf16.gmra.mrb[0].mxu0 %v1251
    %v2048 = vpop.f32.mrb[0].mxu0
    %v2049 = vadd.f32 %v355, %v2048
    %v2050 = vpop.f32.mrb[0].mxu0
    %v2051 = vpop.f32.mrb[0].mxu0
    %v2052 = vadd.f32 %v355, %v2051
    %v2053 = vpop.f32.mrb[0].mxu0
    %2054 = vmatprep.mubr.bf16.mxu0 0
    %2055 = vmatmul.mubr.bf16.gmra.mrb[0].mxu0 %v1254
    %v2056 = vpop.f32.mrb[0].mxu0
    %v2057 = vadd.f32 %v355, %v2056
    %v2058 = vpop.f32.mrb[0].mxu0
    %v2059 = vpop.f32.mrb[0].mxu0
    %v2060 = vadd.f32 %v355, %v2059
    %v2061 = vpop.f32.mrb[0].mxu0
    %2062 = vmatprep.mubr.bf16.mxu0 0
    %2063 = vmatmul.mubr.bf16.gmra.mrb[0].mxu0 %v1257
    %v2064 = vpop.f32.mrb[0].mxu0
    %v2065 = vadd.f32 %v355, %v2064
    %v2066 = vpop.f32.mrb[0].mxu0
    %v2067 = vpop.f32.mrb[0].mxu0
    %v2068 = vadd.f32 %v355, %v2067
    %v2069 = vpop.f32.mrb[0].mxu0
    %2070 = vmatprep.mubr.bf16.mxu0 0
    %2071 = vmatmul.mubr.bf16.gmra.mrb[0].mxu0 %v1260
    %v2072 = vpop.f32.mrb[0].mxu0
    %v2073 = vadd.f32 %v355, %v2072
    %v2074 = vpop.f32.mrb[0].mxu0
    %v2075 = vpop.f32.mrb[0].mxu0
    %v2076 = vadd.f32 %v355, %v2075
    %v2077 = vpop.f32.mrb[0].mxu0
    %2078 = vmatprep.mubr.bf16.mxu0 0
    %2079 = vmatmul.mubr.bf16.gmra.mrb[0].mxu0 %v1263
    %v2080 = vpop.f32.mrb[0].mxu0
    %v2081 = vadd.f32 %v355, %v2080
    %v2082 = vpop.f32.mrb[0].mxu0
    %v2083 = vpop.f32.mrb[0].mxu0
    %v2084 = vadd.f32 %v355, %v2083
    %v2085 = vpop.f32.mrb[0].mxu0
    %2086 = vmatprep.mubr.bf16.mxu0 0
    %2087 = vmatmul.mubr.bf16.gmra.mrb[0].mxu0 %v1266
    %v2088 = vpop.f32.mrb[0].mxu0
    %v2089 = vadd.f32 %v355, %v2088
    %v2090 = vpop.f32.mrb[0].mxu0
    %v2091 = vpop.f32.mrb[0].mxu0
    %v2092 = vadd.f32 %v355, %v2091
    %v2093 = vpop.f32.mrb[0].mxu0
    %2094 = vmatprep.mubr.bf16.mxu0 0
    %2095 = vmatmul.mubr.bf16.gmra.mrb[0].mxu0 %v1269
    %v2096 = vpop.f32.mrb[0].mxu0
    %v2097 = vadd.f32 %v355, %v2096
    %v2098 = vpop.f32.mrb[0].mxu0
    %v2099 = vpop.f32.mrb[0].mxu0
    %v2100 = vadd.f32 %v355, %v2099
    %v2101 = vpop.f32.mrb[0].mxu0
    %2102 = vmatprep.mubr.bf16.mxu0 0
    %2103 = vmatmul.mubr.bf16.gmra.mrb[0].mxu0 %v1272
    %v2104 = vpop.f32.mrb[0].mxu0
    %v2105 = vadd.f32 %v355, %v2104
    %v2106 = vpop.f32.mrb[0].mxu0
    %v2107 = vpop.f32.mrb[0].mxu0
    %v2108 = vadd.f32 %v355, %v2107
    %v2109 = vpop.f32.mrb[0].mxu0
    %2110 = vmatprep.mubr.bf16.mxu0 0
    %2111 = vmatmul.mubr.bf16.gmra.mrb[0].mxu0 %v1275
    %v2112 = vpop.f32.mrb[0].mxu0
    %v2113 = vadd.f32 %v355, %v2112
    %v2114 = vpop.f32.mrb[0].mxu0
    %v2115 = vpop.f32.mrb[0].mxu0
    %v2116 = vadd.f32 %v355, %v2115
    %v2117 = vpop.f32.mrb[0].mxu0
    %2118 = vmatprep.mubr.bf16.mxu0 0
    %2119 = vmatmul.mubr.bf16.gmra.mrb[0].mxu0 %v1278
    %v2120 = vpop.f32.mrb[0].mxu0
    %v2121 = vadd.f32 %v355, %v2120
    %v2122 = vpop.f32.mrb[0].mxu0
    %v2123 = vpop.f32.mrb[0].mxu0
    %v2124 = vadd.f32 %v355, %v2123
    %v2125 = vpop.f32.mrb[0].mxu0
    %2126 = vmatprep.mubr.bf16.mxu0 0
    %2127 = vmatmul.mubr.bf16.gmra.mrb[0].mxu0 %v1281
    %v2128 = vpop.f32.mrb[0].mxu0
    %v2129 = vadd.f32 %v355, %v2128
    %v2130 = vpop.f32.mrb[0].mxu0
    %v2131 = vpop.f32.mrb[0].mxu0
    %v2132 = vadd.f32 %v355, %v2131
    %v2133 = vpop.f32.mrb[0].mxu0
    %2134 = vmatprep.mubr.bf16.mxu0 0
    %2135 = vmatmul.mubr.bf16.gmra.mrb[0].mxu0 %v1284
    %v2136 = vpop.f32.mrb[0].mxu0
    %v2137 = vadd.f32 %v355, %v2136
    %v2138 = vpop.f32.mrb[0].mxu0
    %v2139 = vpop.f32.mrb[0].mxu0
    %v2140 = vadd.f32 %v355, %v2139
    %v2141 = vpop.f32.mrb[0].mxu0
    %2142 = vmatprep.mubr.bf16.mxu0 0
    %2143 = vmatmul.mubr.bf16.gmra.mrb[0].mxu0 %v1287
    %v2144 = vpop.f32.mrb[0].mxu0
    %v2145 = vadd.f32 %v355, %v2144
    %v2146 = vpop.f32.mrb[0].mxu0
    %v2147 = vpop.f32.mrb[0].mxu0
    %v2148 = vadd.f32 %v355, %v2147
    %v2149 = vpop.f32.mrb[0].mxu0
    %2150 = vmatprep.mubr.bf16.mxu0 0
    %2151 = vmatmul.mubr.bf16.gmra.mrb[0].mxu0 %v1290
    %v2152 = vpop.f32.mrb[0].mxu0
    %v2153 = vadd.f32 %v355, %v2152
    %v2154 = vpop.f32.mrb[0].mxu0
    %v2155 = vpop.f32.mrb[0].mxu0
    %v2156 = vadd.f32 %v355, %v2155
    %v2157 = vpop.f32.mrb[0].mxu0
    %2158 = vmatprep.mubr.bf16.mxu0 0
    %2159 = vmatmul.mubr.bf16.gmra.mrb[0].mxu0 %v1293
    %v2160 = vpop.f32.mrb[0].mxu0
    %v2161 = vadd.f32 %v355, %v2160
    %v2162 = vpop.f32.mrb[0].mxu0
    %v2163 = vpop.f32.mrb[0].mxu0
    %v2164 = vadd.f32 %v355, %v2163
    %v2165 = vpop.f32.mrb[0].mxu0
    %2166 = vmatprep.mubr.bf16.mxu0 0
    %2167 = vmatmul.mubr.bf16.gmra.mrb[0].mxu0 %v1296
    %v2168 = vpop.f32.mrb[0].mxu0
    %v2169 = vadd.f32 %v355, %v2168
    %v2170 = vpop.f32.mrb[0].mxu0
    %v2171 = vpop.f32.mrb[0].mxu0
    %v2172 = vadd.f32 %v355, %v2171
    %v2173 = vpop.f32.mrb[0].mxu0
    %2174 = vmatprep.mubr.bf16.mxu0 0
    %2175 = vmatmul.mubr.bf16.gmra.mrb[0].mxu0 %v1299
    %v2176 = vpop.f32.mrb[0].mxu0
    %v2177 = vadd.f32 %v355, %v2176
    %v2178 = vpop.f32.mrb[0].mxu0
    %v2179 = vpop.f32.mrb[0].mxu0
    %v2180 = vadd.f32 %v355, %v2179
    %v2181 = vpop.f32.mrb[0].mxu0
    %2182 = vmatprep.mubr.bf16.mxu0 0
    %2183 = vmatmul.mubr.bf16.gmra.mrb[0].mxu0 %v1302
    %v2184 = vpop.f32.mrb[0].mxu0
    %v2185 = vadd.f32 %v355, %v2184
    %v2186 = vpop.f32.mrb[0].mxu0
    %v2187 = vpop.f32.mrb[0].mxu0
    %v2188 = vadd.f32 %v355, %v2187
    %v2189 = vpop.f32.mrb[0].mxu0
    %2190 = vmatprep.mubr.bf16.mxu0 0
    %2191 = vmatmul.mubr.bf16.gmra.mrb[0].mxu0 %v1305
    %v2192 = vpop.f32.mrb[0].mxu0
    %v2193 = vadd.f32 %v355, %v2192
    %v2194 = vpop.f32.mrb[0].mxu0
    %v2195 = vpop.f32.mrb[0].mxu0
    %v2196 = vadd.f32 %v355, %v2195
    %v2197 = vpop.f32.mrb[0].mxu0
    %2198 = vmatprep.mubr.bf16.mxu0 0
    %2199 = vmatmul.mubr.bf16.gmra.mrb[0].mxu0 %v1308
    %v2200 = vpop.f32.mrb[0].mxu0
    %v2201 = vadd.f32 %v355, %v2200
    %v2202 = vpop.f32.mrb[0].mxu0
    %v2203 = vpop.f32.mrb[0].mxu0
    %v2204 = vadd.f32 %v355, %v2203
    %v2205 = vpop.f32.mrb[0].mxu0
    %2206 = vmatprep.mubr.bf16.mxu0 0
    %2207 = vmatmul.mubr.bf16.gmra.mrb[0].mxu0 %v1311
    %v2208 = vpop.f32.mrb[0].mxu0
    %v2209 = vadd.f32 %v355, %v2208
    %v2210 = vpop.f32.mrb[0].mxu0
    %v2211 = vpop.f32.mrb[0].mxu0
    %v2212 = vadd.f32 %v355, %v2211
    %v2213 = vpop.f32.mrb[0].mxu0
    %2214 = vmatprep.mubr.bf16.mxu0 0
    %2215 = vmatmul.mubr.bf16.gmra.mrb[0].mxu0 %v1314
    %v2216 = vpop.f32.mrb[0].mxu0
    %v2217 = vadd.f32 %v355, %v2216
    %v2218 = vpop.f32.mrb[0].mxu0
    %v2219 = vpop.f32.mrb[0].mxu0
    %v2220 = vadd.f32 %v355, %v2219
    %v2221 = vpop.f32.mrb[0].mxu0
    %2222 = vmatprep.mubr.bf16.mxu0 0
    %2223 = vmatmul.mubr.bf16.gmra.mrb[0].mxu0 %v1317
    %v2224 = vpop.f32.mrb[0].mxu0
    %v2225 = vadd.f32 %v355, %v2224
    %v2226 = vpop.f32.mrb[0].mxu0
    %v2227 = vpop.f32.mrb[0].mxu0
    %v2228 = vadd.f32 %v355, %v2227
    %v2229 = vpop.f32.mrb[0].mxu0
    %2230 = vmatprep.mubr.bf16.mxu0 0
    %2231 = vmatmul.mubr.bf16.gmra.mrb[0].mxu0 %v1320
    %v2232 = vpop.f32.mrb[0].mxu0
    %v2233 = vadd.f32 %v355, %v2232
    %v2234 = vpop.f32.mrb[0].mxu0
    %v2235 = vpop.f32.mrb[0].mxu0
    %v2236 = vadd.f32 %v355, %v2235
    %v2237 = vpop.f32.mrb[0].mxu0
    %2238 = vmatprep.mubr.bf16.mxu0 0
    %2239 = vmatmul.mubr.bf16.gmra.mrb[0].mxu0 %v1323
    %v2240 = vpop.f32.mrb[0].mxu0
    %v2241 = vadd.f32 %v355, %v2240
    %v2242 = vpop.f32.mrb[0].mxu0
    %v2243 = vpop.f32.mrb[0].mxu0
    %v2244 = vadd.f32 %v355, %v2243
    %v2245 = vpop.f32.mrb[0].mxu0
    %2246 = vmatprep.mubr.bf16.mxu0 0
    %2247 = vmatmul.mubr.bf16.gmra.mrb[0].mxu0 %v1326
    %v2248 = vpop.f32.mrb[0].mxu0
    %v2249 = vadd.f32 %v355, %v2248
    %v2250 = vpop.f32.mrb[0].mxu0
    %v2251 = vpop.f32.mrb[0].mxu0
    %v2252 = vadd.f32 %v355, %v2251
    %v2253 = vpop.f32.mrb[0].mxu0
    %2254 = vmatprep.mubr.bf16.mxu0 0
    %2255 = vmatmul.mubr.bf16.gmra.mrb[0].mxu0 %v1329
    %v2256 = vpop.f32.mrb[0].mxu0
    %v2257 = vadd.f32 %v355, %v2256
    %v2258 = vpop.f32.mrb[0].mxu0
    %v2259 = vpop.f32.mrb[0].mxu0
    %v2260 = vadd.f32 %v355, %v2259
    %v2261 = vpop.f32.mrb[0].mxu0
    %2262 = vmatprep.mubr.bf16.mxu0 0
    %2263 = vmatmul.mubr.bf16.gmra.mrb[0].mxu0 %v1332
    %v2264 = vpop.f32.mrb[0].mxu0
    %v2265 = vadd.f32 %v355, %v2264
    %v2266 = vpop.f32.mrb[0].mxu0
    %v2267 = vpop.f32.mrb[0].mxu0
    %v2268 = vadd.f32 %v355, %v2267
    %v2269 = vpop.f32.mrb[0].mxu0
    %2270 = vmatprep.mubr.bf16.mxu0 0
    %2271 = vmatmul.mubr.bf16.gmra.mrb[0].mxu0 %v1335
    %v2272 = vpop.f32.mrb[0].mxu0
    %v2273 = vadd.f32 %v355, %v2272
    %v2274 = vpop.f32.mrb[0].mxu0
    %v2275 = vpop.f32.mrb[0].mxu0
    %v2276 = vadd.f32 %v355, %v2275
    %v2277 = vpop.f32.mrb[0].mxu0
    %2278 = vmatprep.mubr.bf16.mxu0 0
    %2279 = vmatmul.mubr.bf16.gmra.mrb[0].mxu0 %v1338
    %v2280 = vpop.f32.mrb[0].mxu0
    %v2281 = vadd.f32 %v355, %v2280
    %v2282 = vpop.f32.mrb[0].mxu0
    %v2283 = vpop.f32.mrb[0].mxu0
    %v2284 = vadd.f32 %v355, %v2283
    %v2285 = vpop.f32.mrb[0].mxu0
    %2286 = vmatprep.mubr.bf16.mxu0 0
    %2287 = vmatmul.mubr.bf16.gmra.mrb[0].mxu0 %v1341
    %v2288 = vpop.f32.mrb[0].mxu0
    %v2289 = vadd.f32 %v355, %v2288
    %v2290 = vpop.f32.mrb[0].mxu0
    %v2291 = vpop.f32.mrb[0].mxu0
    %v2292 = vadd.f32 %v355, %v2291
    %v2293 = vpop.f32.mrb[0].mxu0
    %2294 = vmatprep.mubr.bf16.mxu0 0
    %2295 = vmatmul.mubr.bf16.gmra.mrb[0].mxu0 %v1344
    %v2296 = vpop.f32.mrb[0].mxu0
    %v2297 = vadd.f32 %v355, %v2296
    %v2298 = vpop.f32.mrb[0].mxu0
    %v2299 = vpop.f32.mrb[0].mxu0
    %v2300 = vadd.f32 %v355, %v2299
    %v2301 = vpop.f32.mrb[0].mxu0
    %2302 = vmatprep.mubr.bf16.mxu0 0
    %2303 = vmatmul.mubr.bf16.gmra.mrb[0].mxu0 %v1347
    %v2304 = vpop.f32.mrb[0].mxu0
    %v2305 = vadd.f32 %v355, %v2304
    %v2306 = vpop.f32.mrb[0].mxu0
    %v2307 = vpop.f32.mrb[0].mxu0
    %v2308 = vadd.f32 %v355, %v2307
    %v2309 = vpop.f32.mrb[0].mxu0
    %2310 = vmatprep.mubr.bf16.mxu0 0
    %2311 = vmatmul.mubr.bf16.gmra.mrb[0].mxu0 %v1350
    %v2312 = vpop.f32.mrb[0].mxu0
    %v2313 = vadd.f32 %v355, %v2312
    %v2314 = vpop.f32.mrb[0].mxu0
    %v2315 = vpop.f32.mrb[0].mxu0
    %v2316 = vadd.f32 %v355, %v2315
    %v2317 = vpop.f32.mrb[0].mxu0
    %2318 = vmatprep.mubr.bf16.mxu0 0
    %2319 = vmatmul.mubr.bf16.gmra.mrb[0].mxu0 %v1353
    %v2320 = vpop.f32.mrb[0].mxu0
    %v2321 = vadd.f32 %v355, %v2320
    %v2322 = vpop.f32.mrb[0].mxu0
    %v2323 = vpop.f32.mrb[0].mxu0
    %v2324 = vadd.f32 %v355, %v2323
    %v2325 = vpop.f32.mrb[0].mxu0
    %2326 = vmatprep.mubr.bf16.mxu0 0
    %2327 = vmatmul.mubr.bf16.gmra.mrb[0].mxu0 %v1356
    %v2328 = vpop.f32.mrb[0].mxu0
    %v2329 = vadd.f32 %v355, %v2328
    %v2330 = vpop.f32.mrb[0].mxu0
    %v2331 = vpop.f32.mrb[0].mxu0
    %v2332 = vadd.f32 %v355, %v2331
    %v2333 = vpop.f32.mrb[0].mxu0
    %2334 = vmatprep.mubr.bf16.mxu0 0
    %2335 = vmatmul.mubr.bf16.gmra.mrb[0].mxu0 %v1359
    %v2336 = vpop.f32.mrb[0].mxu0
    %v2337 = vadd.f32 %v355, %v2336
    %v2338 = vpop.f32.mrb[0].mxu0
    %v2339 = vpop.f32.mrb[0].mxu0
    %v2340 = vadd.f32 %v355, %v2339
    %v2341 = vpop.f32.mrb[0].mxu0
    %2342 = vmatprep.mubr.bf16.mxu0 0
    %2343 = vmatmul.mubr.bf16.gmra.mrb[0].mxu0 %v1362
    %v2344 = vpop.f32.mrb[0].mxu0
    %v2345 = vadd.f32 %v355, %v2344
    %v2346 = vpop.f32.mrb[0].mxu0
    %v2347 = vpop.f32.mrb[0].mxu0
    %v2348 = vadd.f32 %v355, %v2347
    %v2349 = vpop.f32.mrb[0].mxu0
    %2350 = vmatprep.mubr.bf16.mxu0 0
    %2351 = vmatmul.mubr.bf16.gmra.mrb[0].mxu0 %v1365
    %v2352 = vpop.f32.mrb[0].mxu0
    %v2353 = vadd.f32 %v355, %v2352
    %v2354 = vpop.f32.mrb[0].mxu0
    %v2355 = vpop.f32.mrb[0].mxu0
    %v2356 = vadd.f32 %v355, %v2355
    %v2357 = vpop.f32.mrb[0].mxu0
    %2358 = vmatprep.mubr.bf16.mxu0 0
    %2359 = vmatmul.mubr.bf16.gmra.mrb[0].mxu0 %v1368
    %v2360 = vpop.f32.mrb[0].mxu0
    %v2361 = vadd.f32 %v355, %v2360
    %v2362 = vpop.f32.mrb[0].mxu0
    %v2363 = vpop.f32.mrb[0].mxu0
    %v2364 = vadd.f32 %v355, %v2363
    %v2365 = vpop.f32.mrb[0].mxu0
    %2366 = vmatprep.mubr.bf16.mxu0 0
    %2367 = vmatmul.mubr.bf16.gmra.mrb[0].mxu0 %v1371
    %v2368 = vpop.f32.mrb[0].mxu0
    %v2369 = vadd.f32 %v355, %v2368
    %v2370 = vpop.f32.mrb[0].mxu0
    %v2371 = vpop.f32.mrb[0].mxu0
    %v2372 = vadd.f32 %v355, %v2371
    %v2373 = vpop.f32.mrb[0].mxu0
    %2374 = vmatprep.mubr.bf16.mxu0 0
    %2375 = vmatmul.mubr.bf16.gmra.mrb[0].mxu0 %v1374
    %v2376 = vpop.f32.mrb[0].mxu0
    %v2377 = vadd.f32 %v355, %v2376
    %v2378 = vpop.f32.mrb[0].mxu0
    %v2379 = vpop.f32.mrb[0].mxu0
    %v2380 = vadd.f32 %v355, %v2379
    %v2381 = vpop.f32.mrb[0].mxu0
    %2382 = vmatprep.mubr.bf16.mxu0 0
    %2383 = vmatmul.mubr.bf16.gmra.mrb[0].mxu0 %v1377
    %v2384 = vpop.f32.mrb[0].mxu0
    %v2385 = vadd.f32 %v355, %v2384
    %v2386 = vpop.f32.mrb[0].mxu0
    %v2387 = vpop.f32.mrb[0].mxu0
    %v2388 = vadd.f32 %v355, %v2387
    %v2389 = vpop.f32.mrb[0].mxu0
    %2390 = vmatprep.mubr.bf16.mxu0 0
    %2391 = vmatmul.mubr.bf16.gmra.mrb[0].mxu0 %v1380
    %v2392 = vpop.f32.mrb[0].mxu0
    %v2393 = vadd.f32 %v355, %v2392
    %v2394 = vpop.f32.mrb[0].mxu0
    %v2395 = vpop.f32.mrb[0].mxu0
    %v2396 = vadd.f32 %v355, %v2395
    %v2397 = vpop.f32.mrb[0].mxu0
    %2398 = vmatprep.mubr.bf16.mxu0 0
    %2399 = vmatmul.mubr.bf16.gmra.mrb[0].mxu0 %v1383
    %v2400 = vpop.f32.mrb[0].mxu0
    %v2401 = vadd.f32 %v355, %v2400
    %v2402 = vpop.f32.mrb[0].mxu0
    %v2403 = vpop.f32.mrb[0].mxu0
    %v2404 = vadd.f32 %v355, %v2403
    %v2405 = vpop.f32.mrb[0].mxu0
    %2406 = vmatprep.mubr.bf16.mxu0 0
    %2407 = vmatmul.mubr.bf16.gmra.mrb[0].mxu0 %v1386
    %v2408 = vpop.f32.mrb[0].mxu0
    %v2409 = vadd.f32 %v355, %v2408
    %v2410 = vpop.f32.mrb[0].mxu0
    %v2411 = vpop.f32.mrb[0].mxu0
    %v2412 = vadd.f32 %v355, %v2411
    %v2413 = vpop.f32.mrb[0].mxu0
    %2414 = vmatprep.mubr.bf16.mxu0 0
    %2415 = vmatmul.mubr.bf16.gmra.mrb[0].mxu0 %v1389
    %v2416 = vpop.f32.mrb[0].mxu0
    %v2417 = vadd.f32 %v355, %v2416
    %v2418 = vpop.f32.mrb[0].mxu0
    %v2419 = vpop.f32.mrb[0].mxu0
    %v2420 = vadd.f32 %v355, %v2419
    %v2421 = vpop.f32.mrb[0].mxu0
    %2422 = vmatprep.mubr.bf16.mxu0 0
    %2423 = vmatmul.mubr.bf16.gmra.mrb[0].mxu0 %v1392
    %v2424 = vpop.f32.mrb[0].mxu0
    %v2425 = vadd.f32 %v355, %v2424
    %v2426 = vpop.f32.mrb[0].mxu0
    %v2427 = vpop.f32.mrb[0].mxu0
    %v2428 = vadd.f32 %v355, %v2427
    %v2429 = vpop.f32.mrb[0].mxu0
    %2430 = vmatprep.mubr.bf16.mxu0 0
    %2431 = vmatmul.mubr.bf16.gmra.mrb[0].mxu0 %v1395
    %v2432 = vpop.f32.mrb[0].mxu0
    %v2433 = vadd.f32 %v355, %v2432
    %v2434 = vpop.f32.mrb[0].mxu0
    %v2435 = vpop.f32.mrb[0].mxu0
    %v2436 = vadd.f32 %v355, %v2435
    %v2437 = vpop.f32.mrb[0].mxu0
    %2438 = vmatprep.mubr.bf16.mxu0 0
    %2439 = vmatmul.mubr.bf16.gmra.mrb[0].mxu0 %v1398
    %v2440 = vpop.f32.mrb[0].mxu0
    %v2441 = vadd.f32 %v355, %v2440
    %v2442 = vpop.f32.mrb[0].mxu0
    %v2443 = vpop.f32.mrb[0].mxu0
    %v2444 = vadd.f32 %v355, %v2443
    %v2445 = vpop.f32.mrb[0].mxu0
    %2446 = vmatprep.mubr.bf16.mxu0 0
    %2447 = vmatmul.mubr.bf16.gmra.mrb[0].mxu0 %v1401
    %v2448 = vpop.f32.mrb[0].mxu0
    %v2449 = vadd.f32 %v355, %v2448
    %v2450 = vpop.f32.mrb[0].mxu0
    %v2451 = vpop.f32.mrb[0].mxu0
    %v2452 = vadd.f32 %v355, %v2451
    %v2453 = vpop.f32.mrb[0].mxu0
    %2454 = vmatprep.mubr.bf16.mxu0 0
    %2455 = vmatmul.mubr.bf16.gmra.mrb[0].mxu0 %v1404
    %v2456 = vpop.f32.mrb[0].mxu0
    %v2457 = vadd.f32 %v355, %v2456
    %v2458 = vpop.f32.mrb[0].mxu0
    %v2459 = vpop.f32.mrb[0].mxu0
    %v2460 = vadd.f32 %v355, %v2459
    %v2461 = vpop.f32.mrb[0].mxu0
    %2462 = vdwg.mxu0
    %v2463 = vmax.f32 %v1441, 0.0
    %v2464 = vmax.f32 %v1444, 0.0
    %v2465 = vmax.f32 %v1449, 0.0
    %v2466 = vmax.f32 %v1452, 0.0
    %v2467 = vmax.f32 %v1457, 0.0
    %v2468 = vmax.f32 %v1460, 0.0
    %v2469 = vmax.f32 %v1465, 0.0
    %v2470 = vmax.f32 %v1468, 0.0
    %v2471 = vmax.f32 %v1473, 0.0
    %v2472 = vmax.f32 %v1476, 0.0
    %v2473 = vmax.f32 %v1481, 0.0
    %v2474 = vmax.f32 %v1484, 0.0
    %v2475 = vmax.f32 %v1489, 0.0
    %v2476 = vmax.f32 %v1492, 0.0
    %v2477 = vmax.f32 %v1497, 0.0
    %v2478 = vmax.f32 %v1500, 0.0
    %v2479 = vmax.f32 %v1505, 0.0
    %v2480 = vmax.f32 %v1508, 0.0
    %v2481 = vmax.f32 %v1513, 0.0
    %v2482 = vmax.f32 %v1516, 0.0
    %v2483 = vmax.f32 %v1521, 0.0
    %v2484 = vmax.f32 %v1524, 0.0
    %v2485 = vmax.f32 %v1529, 0.0
    %v2486 = vmax.f32 %v1532, 0.0
    %v2487 = vmax.f32 %v1537, 0.0
    %v2488 = vmax.f32 %v1540, 0.0
    %v2489 = vmax.f32 %v1545, 0.0
    %v2490 = vmax.f32 %v1548, 0.0
    %v2491 = vmax.f32 %v1553, 0.0
    %v2492 = vmax.f32 %v1556, 0.0
    %v2493 = vmax.f32 %v1561, 0.0
    %v2494 = vmax.f32 %v1564, 0.0
    %v2495 = vmax.f32 %v1569, 0.0
    %v2496 = vmax.f32 %v1572, 0.0
    %v2497 = vmax.f32 %v1577, 0.0
    %v2498 = vmax.f32 %v1580, 0.0
    %v2499 = vmax.f32 %v1585, 0.0
    %v2500 = vmax.f32 %v1588, 0.0
    %v2501 = vmax.f32 %v1593, 0.0
    %v2502 = vmax.f32 %v1596, 0.0
    %v2503 = vmax.f32 %v1601, 0.0
    %v2504 = vmax.f32 %v1604, 0.0
    %v2505 = vmax.f32 %v1609, 0.0
    %v2506 = vmax.f32 %v1612, 0.0
    %v2507 = vmax.f32 %v1617, 0.0
    %v2508 = vmax.f32 %v1620, 0.0
    %v2509 = vmax.f32 %v1625, 0.0
    %v2510 = vmax.f32 %v1628, 0.0
    %v2511 = vmax.f32 %v1633, 0.0
    %v2512 = vmax.f32 %v1636, 0.0
    %v2513 = vmax.f32 %v1641, 0.0
    %v2514 = vmax.f32 %v1644, 0.0
    %v2515 = vmax.f32 %v1649, 0.0
    %v2516 = vmax.f32 %v1652, 0.0
    %v2517 = vmax.f32 %v1657, 0.0
    %v2518 = vmax.f32 %v1660, 0.0
    %v2519 = vmax.f32 %v1665, 0.0
    %v2520 = vmax.f32 %v1668, 0.0
    %v2521 = vmax.f32 %v1673, 0.0
    %v2522 = vmax.f32 %v1676, 0.0
    %v2523 = vmax.f32 %v1681, 0.0
    %v2524 = vmax.f32 %v1684, 0.0
    %v2525 = vmax.f32 %v1689, 0.0
    %v2526 = vmax.f32 %v1692, 0.0
    %v2527 = vmax.f32 %v1697, 0.0
    %v2528 = vmax.f32 %v1700, 0.0
    %v2529 = vmax.f32 %v1705, 0.0
    %v2530 = vmax.f32 %v1708, 0.0
    %v2531 = vmax.f32 %v1713, 0.0
    %v2532 = vmax.f32 %v1716, 0.0
    %v2533 = vmax.f32 %v1721, 0.0
    %v2534 = vmax.f32 %v1724, 0.0
    %v2535 = vmax.f32 %v1729, 0.0
    %v2536 = vmax.f32 %v1732, 0.0
    %v2537 = vmax.f32 %v1737, 0.0
    %v2538 = vmax.f32 %v1740, 0.0
    %v2539 = vmax.f32 %v1745, 0.0
    %v2540 = vmax.f32 %v1748, 0.0
    %v2541 = vmax.f32 %v1753, 0.0
    %v2542 = vmax.f32 %v1756, 0.0
    %v2543 = vmax.f32 %v1761, 0.0
    %v2544 = vmax.f32 %v1764, 0.0
    %v2545 = vmax.f32 %v1769, 0.0
    %v2546 = vmax.f32 %v1772, 0.0
    %v2547 = vmax.f32 %v1777, 0.0
    %v2548 = vmax.f32 %v1780, 0.0
    %v2549 = vmax.f32 %v1785, 0.0
    %v2550 = vmax.f32 %v1788, 0.0
    %v2551 = vmax.f32 %v1793, 0.0
    %v2552 = vmax.f32 %v1796, 0.0
    %v2553 = vmax.f32 %v1801, 0.0
    %v2554 = vmax.f32 %v1804, 0.0
    %v2555 = vmax.f32 %v1809, 0.0
    %v2556 = vmax.f32 %v1812, 0.0
    %v2557 = vmax.f32 %v1817, 0.0
    %v2558 = vmax.f32 %v1820, 0.0
    %v2559 = vmax.f32 %v1825, 0.0
    %v2560 = vmax.f32 %v1828, 0.0
    %v2561 = vmax.f32 %v1833, 0.0
    %v2562 = vmax.f32 %v1836, 0.0
    %v2563 = vmax.f32 %v1841, 0.0
    %v2564 = vmax.f32 %v1844, 0.0
    %v2565 = vmax.f32 %v1849, 0.0
    %v2566 = vmax.f32 %v1852, 0.0
    %v2567 = vmax.f32 %v1857, 0.0
    %v2568 = vmax.f32 %v1860, 0.0
    %v2569 = vmax.f32 %v1865, 0.0
    %v2570 = vmax.f32 %v1868, 0.0
    %v2571 = vmax.f32 %v1873, 0.0
    %v2572 = vmax.f32 %v1876, 0.0
    %v2573 = vmax.f32 %v1881, 0.0
    %v2574 = vmax.f32 %v1884, 0.0
    %v2575 = vmax.f32 %v1889, 0.0
    %v2576 = vmax.f32 %v1892, 0.0
    %v2577 = vmax.f32 %v1897, 0.0
    %v2578 = vmax.f32 %v1900, 0.0
    %v2579 = vmax.f32 %v1905, 0.0
    %v2580 = vmax.f32 %v1908, 0.0
    %v2581 = vmax.f32 %v1913, 0.0
    %v2582 = vmax.f32 %v1916, 0.0
    %v2583 = vmax.f32 %v1921, 0.0
    %v2584 = vmax.f32 %v1924, 0.0
    %v2585 = vmax.f32 %v1929, 0.0
    %v2586 = vmax.f32 %v1932, 0.0
    %v2587 = vmax.f32 %v1937, 0.0
    %v2588 = vmax.f32 %v1940, 0.0
    %v2589 = vmax.f32 %v1945, 0.0
    %v2590 = vmax.f32 %v1948, 0.0
    %v2591 = vmax.f32 %v1953, 0.0
    %v2592 = vmax.f32 %v1956, 0.0
    %v2593 = vmax.f32 %v1961, 0.0
    %v2594 = vmax.f32 %v1964, 0.0
    %v2595 = vmax.f32 %v1969, 0.0
    %v2596 = vmax.f32 %v1972, 0.0
    %v2597 = vmax.f32 %v1977, 0.0
    %v2598 = vmax.f32 %v1980, 0.0
    %v2599 = vmax.f32 %v1985, 0.0
    %v2600 = vmax.f32 %v1988, 0.0
    %v2601 = vmax.f32 %v1993, 0.0
    %v2602 = vmax.f32 %v1996, 0.0
    %v2603 = vmax.f32 %v2001, 0.0
    %v2604 = vmax.f32 %v2004, 0.0
    %v2605 = vmax.f32 %v2009, 0.0
    %v2606 = vmax.f32 %v2012, 0.0
    %v2607 = vmax.f32 %v2017, 0.0
    %v2608 = vmax.f32 %v2020, 0.0
    %v2609 = vmax.f32 %v2025, 0.0
    %v2610 = vmax.f32 %v2028, 0.0
    %v2611 = vmax.f32 %v2033, 0.0
    %v2612 = vmax.f32 %v2036, 0.0
    %v2613 = vmax.f32 %v2041, 0.0
    %v2614 = vmax.f32 %v2044, 0.0
    %v2615 = vmax.f32 %v2049, 0.0
    %v2616 = vmax.f32 %v2052, 0.0
    %v2617 = vmax.f32 %v2057, 0.0
    %v2618 = vmax.f32 %v2060, 0.0
    %v2619 = vmax.f32 %v2065, 0.0
    %v2620 = vmax.f32 %v2068, 0.0
    %v2621 = vmax.f32 %v2073, 0.0
    %v2622 = vmax.f32 %v2076, 0.0
    %v2623 = vmax.f32 %v2081, 0.0
    %v2624 = vmax.f32 %v2084, 0.0
    %v2625 = vmax.f32 %v2089, 0.0
    %v2626 = vmax.f32 %v2092, 0.0
    %v2627 = vmax.f32 %v2097, 0.0
    %v2628 = vmax.f32 %v2100, 0.0
    %v2629 = vmax.f32 %v2105, 0.0
    %v2630 = vmax.f32 %v2108, 0.0
    %v2631 = vmax.f32 %v2113, 0.0
    %v2632 = vmax.f32 %v2116, 0.0
    %v2633 = vmax.f32 %v2121, 0.0
    %v2634 = vmax.f32 %v2124, 0.0
    %v2635 = vmax.f32 %v2129, 0.0
    %v2636 = vmax.f32 %v2132, 0.0
    %v2637 = vmax.f32 %v2137, 0.0
    %v2638 = vmax.f32 %v2140, 0.0
    %v2639 = vmax.f32 %v2145, 0.0
    %v2640 = vmax.f32 %v2148, 0.0
    %v2641 = vmax.f32 %v2153, 0.0
    %v2642 = vmax.f32 %v2156, 0.0
    %v2643 = vmax.f32 %v2161, 0.0
    %v2644 = vmax.f32 %v2164, 0.0
    %v2645 = vmax.f32 %v2169, 0.0
    %v2646 = vmax.f32 %v2172, 0.0
    %v2647 = vmax.f32 %v2177, 0.0
    %v2648 = vmax.f32 %v2180, 0.0
    %v2649 = vmax.f32 %v2185, 0.0
    %v2650 = vmax.f32 %v2188, 0.0
    %v2651 = vmax.f32 %v2193, 0.0
    %v2652 = vmax.f32 %v2196, 0.0
    %v2653 = vmax.f32 %v2201, 0.0
    %v2654 = vmax.f32 %v2204, 0.0
    %v2655 = vmax.f32 %v2209, 0.0
    %v2656 = vmax.f32 %v2212, 0.0
    %v2657 = vmax.f32 %v2217, 0.0
    %v2658 = vmax.f32 %v2220, 0.0
    %v2659 = vmax.f32 %v2225, 0.0
    %v2660 = vmax.f32 %v2228, 0.0
    %v2661 = vmax.f32 %v2233, 0.0
    %v2662 = vmax.f32 %v2236, 0.0
    %v2663 = vmax.f32 %v2241, 0.0
    %v2664 = vmax.f32 %v2244, 0.0
    %v2665 = vmax.f32 %v2249, 0.0
    %v2666 = vmax.f32 %v2252, 0.0
    %v2667 = vmax.f32 %v2257, 0.0
    %v2668 = vmax.f32 %v2260, 0.0
    %v2669 = vmax.f32 %v2265, 0.0
    %v2670 = vmax.f32 %v2268, 0.0
    %v2671 = vmax.f32 %v2273, 0.0
    %v2672 = vmax.f32 %v2276, 0.0
    %v2673 = vmax.f32 %v2281, 0.0
    %v2674 = vmax.f32 %v2284, 0.0
    %v2675 = vmax.f32 %v2289, 0.0
    %v2676 = vmax.f32 %v2292, 0.0
    %v2677 = vmax.f32 %v2297, 0.0
    %v2678 = vmax.f32 %v2300, 0.0
    %v2679 = vmax.f32 %v2305, 0.0
    %v2680 = vmax.f32 %v2308, 0.0
    %v2681 = vmax.f32 %v2313, 0.0
    %v2682 = vmax.f32 %v2316, 0.0
    %v2683 = vmax.f32 %v2321, 0.0
    %v2684 = vmax.f32 %v2324, 0.0
    %v2685 = vmax.f32 %v2329, 0.0
    %v2686 = vmax.f32 %v2332, 0.0
    %v2687 = vmax.f32 %v2337, 0.0
    %v2688 = vmax.f32 %v2340, 0.0
    %v2689 = vmax.f32 %v2345, 0.0
    %v2690 = vmax.f32 %v2348, 0.0
    %v2691 = vmax.f32 %v2353, 0.0
    %v2692 = vmax.f32 %v2356, 0.0
    %v2693 = vmax.f32 %v2361, 0.0
    %v2694 = vmax.f32 %v2364, 0.0
    %v2695 = vmax.f32 %v2369, 0.0
    %v2696 = vmax.f32 %v2372, 0.0
    %v2697 = vmax.f32 %v2377, 0.0
    %v2698 = vmax.f32 %v2380, 0.0
    %v2699 = vmax.f32 %v2385, 0.0
    %v2700 = vmax.f32 %v2388, 0.0
    %v2701 = vmax.f32 %v2393, 0.0
    %v2702 = vmax.f32 %v2396, 0.0
    %v2703 = vmax.f32 %v2401, 0.0
    %v2704 = vmax.f32 %v2404, 0.0
    %v2705 = vmax.f32 %v2409, 0.0
    %v2706 = vmax.f32 %v2412, 0.0
    %v2707 = vmax.f32 %v2417, 0.0
    %v2708 = vmax.f32 %v2420, 0.0
    %v2709 = vmax.f32 %v2425, 0.0
    %v2710 = vmax.f32 %v2428, 0.0
    %v2711 = vmax.f32 %v2433, 0.0
    %v2712 = vmax.f32 %v2436, 0.0
    %v2713 = vmax.f32 %v2441, 0.0
    %v2714 = vmax.f32 %v2444, 0.0
    %v2715 = vmax.f32 %v2449, 0.0
    %v2716 = vmax.f32 %v2452, 0.0
    %v2717 = vmax.f32 %v2457, 0.0
    %v2718 = vmax.f32 %v2460, 0.0
    %v2719 = vpack.c.bf16 %v2464, %v2463
    %v2720 = vpack.c.bf16 %v2466, %v2465
    %v2721 = vpack.c.bf16 %v2468, %v2467
    %v2722 = vpack.c.bf16 %v2470, %v2469
    %v2723 = vpack.c.bf16 %v2472, %v2471
    %v2724 = vpack.c.bf16 %v2474, %v2473
    %v2725 = vpack.c.bf16 %v2476, %v2475
    %v2726 = vpack.c.bf16 %v2478, %v2477
    %v2727 = vpack.c.bf16 %v2480, %v2479
    %v2728 = vpack.c.bf16 %v2482, %v2481
    %v2729 = vpack.c.bf16 %v2484, %v2483
    %v2730 = vpack.c.bf16 %v2486, %v2485
    %v2731 = vpack.c.bf16 %v2488, %v2487
    %v2732 = vpack.c.bf16 %v2490, %v2489
    %v2733 = vpack.c.bf16 %v2492, %v2491
    %v2734 = vpack.c.bf16 %v2494, %v2493
    %v2735 = vpack.c.bf16 %v2496, %v2495
    %v2736 = vpack.c.bf16 %v2498, %v2497
    %v2737 = vpack.c.bf16 %v2500, %v2499
    %v2738 = vpack.c.bf16 %v2502, %v2501
    %v2739 = vpack.c.bf16 %v2504, %v2503
    %v2740 = vpack.c.bf16 %v2506, %v2505
    %v2741 = vpack.c.bf16 %v2508, %v2507
    %v2742 = vpack.c.bf16 %v2510, %v2509
    %v2743 = vpack.c.bf16 %v2512, %v2511
    %v2744 = vpack.c.bf16 %v2514, %v2513
    %v2745 = vpack.c.bf16 %v2516, %v2515
    %v2746 = vpack.c.bf16 %v2518, %v2517
    %v2747 = vpack.c.bf16 %v2520, %v2519
    %v2748 = vpack.c.bf16 %v2522, %v2521
    %v2749 = vpack.c.bf16 %v2524, %v2523
    %v2750 = vpack.c.bf16 %v2526, %v2525
    %v2751 = vpack.c.bf16 %v2528, %v2527
    %v2752 = vpack.c.bf16 %v2530, %v2529
    %v2753 = vpack.c.bf16 %v2532, %v2531
    %v2754 = vpack.c.bf16 %v2534, %v2533
    %v2755 = vpack.c.bf16 %v2536, %v2535
    %v2756 = vpack.c.bf16 %v2538, %v2537
    %v2757 = vpack.c.bf16 %v2540, %v2539
    %v2758 = vpack.c.bf16 %v2542, %v2541
    %v2759 = vpack.c.bf16 %v2544, %v2543
    %v2760 = vpack.c.bf16 %v2546, %v2545
    %v2761 = vpack.c.bf16 %v2548, %v2547
    %v2762 = vpack.c.bf16 %v2550, %v2549
    %v2763 = vpack.c.bf16 %v2552, %v2551
    %v2764 = vpack.c.bf16 %v2554, %v2553
    %v2765 = vpack.c.bf16 %v2556, %v2555
    %v2766 = vpack.c.bf16 %v2558, %v2557
    %v2767 = vpack.c.bf16 %v2560, %v2559
    %v2768 = vpack.c.bf16 %v2562, %v2561
    %v2769 = vpack.c.bf16 %v2564, %v2563
    %v2770 = vpack.c.bf16 %v2566, %v2565
    %v2771 = vpack.c.bf16 %v2568, %v2567
    %v2772 = vpack.c.bf16 %v2570, %v2569
    %v2773 = vpack.c.bf16 %v2572, %v2571
    %v2774 = vpack.c.bf16 %v2574, %v2573
    %v2775 = vpack.c.bf16 %v2576, %v2575
    %v2776 = vpack.c.bf16 %v2578, %v2577
    %v2777 = vpack.c.bf16 %v2580, %v2579
    %v2778 = vpack.c.bf16 %v2582, %v2581
    %v2779 = vpack.c.bf16 %v2584, %v2583
    %v2780 = vpack.c.bf16 %v2586, %v2585
    %v2781 = vpack.c.bf16 %v2588, %v2587
    %v2782 = vpack.c.bf16 %v2590, %v2589
    %v2783 = vpack.c.bf16 %v2592, %v2591
    %v2784 = vpack.c.bf16 %v2594, %v2593
    %v2785 = vpack.c.bf16 %v2596, %v2595
    %v2786 = vpack.c.bf16 %v2598, %v2597
    %v2787 = vpack.c.bf16 %v2600, %v2599
    %v2788 = vpack.c.bf16 %v2602, %v2601
    %v2789 = vpack.c.bf16 %v2604, %v2603
    %v2790 = vpack.c.bf16 %v2606, %v2605
    %v2791 = vpack.c.bf16 %v2608, %v2607
    %v2792 = vpack.c.bf16 %v2610, %v2609
    %v2793 = vpack.c.bf16 %v2612, %v2611
    %v2794 = vpack.c.bf16 %v2614, %v2613
    %v2795 = vpack.c.bf16 %v2616, %v2615
    %v2796 = vpack.c.bf16 %v2618, %v2617
    %v2797 = vpack.c.bf16 %v2620, %v2619
    %v2798 = vpack.c.bf16 %v2622, %v2621
    %v2799 = vpack.c.bf16 %v2624, %v2623
    %v2800 = vpack.c.bf16 %v2626, %v2625
    %v2801 = vpack.c.bf16 %v2628, %v2627
    %v2802 = vpack.c.bf16 %v2630, %v2629
    %v2803 = vpack.c.bf16 %v2632, %v2631
    %v2804 = vpack.c.bf16 %v2634, %v2633
    %v2805 = vpack.c.bf16 %v2636, %v2635
    %v2806 = vpack.c.bf16 %v2638, %v2637
    %v2807 = vpack.c.bf16 %v2640, %v2639
    %v2808 = vpack.c.bf16 %v2642, %v2641
    %v2809 = vpack.c.bf16 %v2644, %v2643
    %v2810 = vpack.c.bf16 %v2646, %v2645
    %v2811 = vpack.c.bf16 %v2648, %v2647
    %v2812 = vpack.c.bf16 %v2650, %v2649
    %v2813 = vpack.c.bf16 %v2652, %v2651
    %v2814 = vpack.c.bf16 %v2654, %v2653
    %v2815 = vpack.c.bf16 %v2656, %v2655
    %v2816 = vpack.c.bf16 %v2658, %v2657
    %v2817 = vpack.c.bf16 %v2660, %v2659
    %v2818 = vpack.c.bf16 %v2662, %v2661
    %v2819 = vpack.c.bf16 %v2664, %v2663
    %v2820 = vpack.c.bf16 %v2666, %v2665
    %v2821 = vpack.c.bf16 %v2668, %v2667
    %v2822 = vpack.c.bf16 %v2670, %v2669
    %v2823 = vpack.c.bf16 %v2672, %v2671
    %v2824 = vpack.c.bf16 %v2674, %v2673
    %v2825 = vpack.c.bf16 %v2676, %v2675
    %v2826 = vpack.c.bf16 %v2678, %v2677
    %v2827 = vpack.c.bf16 %v2680, %v2679
    %v2828 = vpack.c.bf16 %v2682, %v2681
    %v2829 = vpack.c.bf16 %v2684, %v2683
    %v2830 = vpack.c.bf16 %v2686, %v2685
    %v2831 = vpack.c.bf16 %v2688, %v2687
    %v2832 = vpack.c.bf16 %v2690, %v2689
    %v2833 = vpack.c.bf16 %v2692, %v2691
    %v2834 = vpack.c.bf16 %v2694, %v2693
    %v2835 = vpack.c.bf16 %v2696, %v2695
    %v2836 = vpack.c.bf16 %v2698, %v2697
    %v2837 = vpack.c.bf16 %v2700, %v2699
    %v2838 = vpack.c.bf16 %v2702, %v2701
    %v2839 = vpack.c.bf16 %v2704, %v2703
    %v2840 = vpack.c.bf16 %v2706, %v2705
    %v2841 = vpack.c.bf16 %v2708, %v2707
    %v2842 = vpack.c.bf16 %v2710, %v2709
    %v2843 = vpack.c.bf16 %v2712, %v2711
    %v2844 = vpack.c.bf16 %v2714, %v2713
    %v2845 = vpack.c.bf16 %v2716, %v2715
    %v2846 = vpack.c.bf16 %v2718, %v2717
    %v2847 = vld [vmem:[#allocation8] sm:$0xf]
    %v2848 = vld [vmem:[#allocation8 + $0x4] sm:$0xf]
    %v2849 = vld [vmem:[#allocation8 + $0x8] sm:$0xf]
    %v2850 = vld [vmem:[#allocation8 + $0xc] sm:$0xf]
    %v2851 = vld [vmem:[#allocation8 + $0x10] sm:$0xf]
    %v2852 = vld [vmem:[#allocation8 + $0x14] sm:$0xf]
    %v2853 = vld [vmem:[#allocation8 + $0x18] sm:$0xf]
    %v2854 = vld [vmem:[#allocation8 + $0x1c] sm:$0xf]
    %v2855 = vld [vmem:[#allocation10] sm:$0x1]
    %v2857 = vlaneseq
    %v2858 = vshrl.u32 %v2857, 7
    %v2859 = vsub.s32 0, %v2858
    %v2860 = vrot.slane %v2855, %v2859
    %v2870 = vunpack.c.l.b16 %v2847
    %v2871 = vunpack.c.l.b16 %v2848
    %v2872 = vunpack.c.l.b16 %v2849
    %v2873 = vunpack.c.l.b16 %v2850
    %v2874 = vunpack.c.l.b16 %v2851
    %v2875 = vunpack.c.l.b16 %v2852
    %v2876 = vunpack.c.l.b16 %v2853
    %v2877 = vunpack.c.l.b16 %v2854
    %v2878 = vpack.c.b16 %v2871, %v2870
    %v2879 = vpack.c.b16 %v2873, %v2872
    %v2880 = vpack.c.b16 %v2875, %v2874
    %v2881 = vpack.c.b16 %v2877, %v2876
    %v2887 = vsel %vm1021, %v2719, 0
    %v2890 = vsel %vm1021, %v2720, 0
    %v2893 = vsel %vm1021, %v2721, 0
    %v2896 = vsel %vm1021, %v2722, 0
    %v2899 = vsel %vm1021, %v2723, 0
    %v2902 = vsel %vm1021, %v2724, 0
    %v2905 = vsel %vm1021, %v2725, 0
    %v2908 = vsel %vm1021, %v2726, 0
    %v2911 = vsel %vm1021, %v2727, 0
    %v2914 = vsel %vm1021, %v2728, 0
    %v2917 = vsel %vm1021, %v2729, 0
    %v2920 = vsel %vm1021, %v2730, 0
    %v2923 = vsel %vm1021, %v2731, 0
    %v2926 = vsel %vm1021, %v2732, 0
    %v2929 = vsel %vm1021, %v2733, 0
    %v2932 = vsel %vm1021, %v2734, 0
    %v2935 = vsel %vm1021, %v2735, 0
    %v2938 = vsel %vm1021, %v2736, 0
    %v2941 = vsel %vm1021, %v2737, 0
    %v2944 = vsel %vm1021, %v2738, 0
    %v2947 = vsel %vm1021, %v2739, 0
    %v2950 = vsel %vm1021, %v2740, 0
    %v2953 = vsel %vm1021, %v2741, 0
    %v2956 = vsel %vm1021, %v2742, 0
    %v2959 = vsel %vm1021, %v2743, 0
    %v2962 = vsel %vm1021, %v2744, 0
    %v2965 = vsel %vm1021, %v2745, 0
    %v2968 = vsel %vm1021, %v2746, 0
    %v2971 = vsel %vm1021, %v2747, 0
    %v2974 = vsel %vm1021, %v2748, 0
    %v2977 = vsel %vm1021, %v2749, 0
    %v2980 = vsel %vm1021, %v2750, 0
    %v2983 = vsel %vm1021, %v2751, 0
    %v2986 = vsel %vm1021, %v2752, 0
    %v2989 = vsel %vm1021, %v2753, 0
    %v2992 = vsel %vm1021, %v2754, 0
    %v2995 = vsel %vm1021, %v2755, 0
    %v2998 = vsel %vm1021, %v2756, 0
    %v3001 = vsel %vm1021, %v2757, 0
    %v3004 = vsel %vm1021, %v2758, 0
    %v3007 = vsel %vm1021, %v2759, 0
    %v3010 = vsel %vm1021, %v2760, 0
    %v3013 = vsel %vm1021, %v2761, 0
    %v3016 = vsel %vm1021, %v2762, 0
    %v3019 = vsel %vm1021, %v2763, 0
    %v3022 = vsel %vm1021, %v2764, 0
    %v3025 = vsel %vm1021, %v2765, 0
    %v3028 = vsel %vm1021, %v2766, 0
    %v3031 = vsel %vm1021, %v2767, 0
    %v3034 = vsel %vm1021, %v2768, 0
    %v3037 = vsel %vm1021, %v2769, 0
    %v3040 = vsel %vm1021, %v2770, 0
    %v3043 = vsel %vm1021, %v2771, 0
    %v3046 = vsel %vm1021, %v2772, 0
    %v3049 = vsel %vm1021, %v2773, 0
    %v3052 = vsel %vm1021, %v2774, 0
    %v3055 = vsel %vm1021, %v2775, 0
    %v3058 = vsel %vm1021, %v2776, 0
    %v3061 = vsel %vm1021, %v2777, 0
    %v3064 = vsel %vm1021, %v2778, 0
    %v3067 = vsel %vm1021, %v2779, 0
    %v3070 = vsel %vm1021, %v2780, 0
    %v3073 = vsel %vm1021, %v2781, 0
    %v3076 = vsel %vm1021, %v2782, 0
    %v3079 = vsel %vm1021, %v2783, 0
    %v3082 = vsel %vm1021, %v2784, 0
    %v3085 = vsel %vm1021, %v2785, 0
    %v3088 = vsel %vm1021, %v2786, 0
    %v3091 = vsel %vm1021, %v2787, 0
    %v3094 = vsel %vm1021, %v2788, 0
    %v3097 = vsel %vm1021, %v2789, 0
    %v3100 = vsel %vm1021, %v2790, 0
    %v3103 = vsel %vm1021, %v2791, 0
    %v3106 = vsel %vm1021, %v2792, 0
    %v3109 = vsel %vm1021, %v2793, 0
    %v3112 = vsel %vm1021, %v2794, 0
    %v3115 = vsel %vm1021, %v2795, 0
    %v3118 = vsel %vm1021, %v2796, 0
    %v3121 = vsel %vm1021, %v2797, 0
    %v3124 = vsel %vm1021, %v2798, 0
    %v3127 = vsel %vm1021, %v2799, 0
    %v3130 = vsel %vm1021, %v2800, 0
    %v3133 = vsel %vm1021, %v2801, 0
    %v3136 = vsel %vm1021, %v2802, 0
    %v3139 = vsel %vm1021, %v2803, 0
    %v3142 = vsel %vm1021, %v2804, 0
    %v3145 = vsel %vm1021, %v2805, 0
    %v3148 = vsel %vm1021, %v2806, 0
    %v3151 = vsel %vm1021, %v2807, 0
    %v3154 = vsel %vm1021, %v2808, 0
    %v3157 = vsel %vm1021, %v2809, 0
    %v3160 = vsel %vm1021, %v2810, 0
    %v3163 = vsel %vm1021, %v2811, 0
    %v3166 = vsel %vm1021, %v2812, 0
    %v3169 = vsel %vm1021, %v2813, 0
    %v3172 = vsel %vm1021, %v2814, 0
    %v3175 = vsel %vm1021, %v2815, 0
    %v3178 = vsel %vm1021, %v2816, 0
    %v3181 = vsel %vm1021, %v2817, 0
    %v3184 = vsel %vm1021, %v2818, 0
    %v3187 = vsel %vm1021, %v2819, 0
    %v3190 = vsel %vm1021, %v2820, 0
    %v3193 = vsel %vm1021, %v2821, 0
    %v3196 = vsel %vm1021, %v2822, 0
    %v3199 = vsel %vm1021, %v2823, 0
    %v3202 = vsel %vm1021, %v2824, 0
    %v3205 = vsel %vm1021, %v2825, 0
    %v3208 = vsel %vm1021, %v2826, 0
    %v3211 = vsel %vm1021, %v2827, 0
    %v3214 = vsel %vm1021, %v2828, 0
    %v3217 = vsel %vm1021, %v2829, 0
    %v3220 = vsel %vm1021, %v2830, 0
    %v3223 = vsel %vm1021, %v2831, 0
    %v3226 = vsel %vm1021, %v2832, 0
    %v3229 = vsel %vm1021, %v2833, 0
    %v3232 = vsel %vm1021, %v2834, 0
    %v3235 = vsel %vm1021, %v2835, 0
    %v3238 = vsel %vm1021, %v2836, 0
    %v3241 = vsel %vm1021, %v2837, 0
    %v3244 = vsel %vm1021, %v2838, 0
    %v3247 = vsel %vm1021, %v2839, 0
    %v3250 = vsel %vm1021, %v2840, 0
    %v3253 = vsel %vm1021, %v2841, 0
    %v3256 = vsel %vm1021, %v2842, 0
    %v3259 = vsel %vm1021, %v2843, 0
    %v3262 = vsel %vm1021, %v2844, 0
    %v3265 = vsel %vm1021, %v2845, 0
    %v3268 = vsel %vm1021, %v2846, 0
    %3270 = vmatprep.subr.bf16.mxu0 0
    %3271 = vmatpush1.bf16.msra.mxu0 %v2878
    %3272 = vmatprep.subr.bf16.mxu0 0
    %3273 = vmatpush1.bf16.msra.mxu0 %v2879
    %3274 = vmatprep.subr.bf16.mxu0 0
    %3275 = vmatpush1.bf16.msra.mxu0 %v2880
    %3276 = vmatprep.subr.bf16.mxu0 0
    %3277 = vmatpush1.bf16.msra.mxu0 %v2881
    %3278 = vmatprep.subr.bf16.mxu0 0
    %3279 = vmatpush1.bf16.msra.mxu0 0
    %3280 = vmatprep.subr.bf16.mxu0 0
    %3281 = vmatpush1.bf16.msra.mxu0 0
    %3282 = vmatprep.subr.bf16.mxu0 0
    %3283 = vmatpush1.bf16.msra.mxu0 0
    %3284 = vmatprep.subr.bf16.mxu0 0
    %3285 = vmatpush1.bf16.msra.mxu0 0
    %3286 = vmatprep.subr.bf16.mxu0 0
    %3287 = vmatpush1.bf16.msra.mxu0 0
    %3288 = vmatprep.subr.bf16.mxu0 0
    %3289 = vmatpush1.bf16.msra.mxu0 0
    %3290 = vmatprep.subr.bf16.mxu0 0
    %3291 = vmatpush1.bf16.msra.mxu0 0
    %3292 = vmatprep.subr.bf16.mxu0 0
    %3293 = vmatpush1.bf16.msra.mxu0 0
    %3294 = vmatprep.subr.bf16.mxu0 0
    %3295 = vmatpush1.bf16.msra.mxu0 0
    %3296 = vmatprep.subr.bf16.mxu0 0
    %3297 = vmatpush1.bf16.msra.mxu0 0
    %3298 = vmatprep.subr.bf16.mxu0 0
    %3299 = vmatpush1.bf16.msra.mxu0 0
    %3300 = vmatprep.subr.bf16.mxu0 0
    %3301 = vmatpush1.bf16.msra.mxu0 0
    %3302 = vmatprep.mubr.bf16.mxu0 0
    %3303 = vmatmul.mubr.bf16.gmra.mrb[0].mxu0 %v2887
    %v3304 = vpop.f32.mrb[0].mxu0
    %v3305 = vadd.f32 %v2860, %v3304
    %v3306 = vpop.f32.mrb[0].mxu0
    %v3307 = vpop.f32.mrb[0].mxu0
    %v3308 = vadd.f32 %v2860, %v3307
    %v3309 = vpop.f32.mrb[0].mxu0
    %3310 = vmatprep.mubr.bf16.mxu0 0
    %3311 = vmatmul.mubr.bf16.gmra.mrb[0].mxu0 %v2890
    %v3312 = vpop.f32.mrb[0].mxu0
    %v3313 = vadd.f32 %v2860, %v3312
    %v3314 = vpop.f32.mrb[0].mxu0
    %v3315 = vpop.f32.mrb[0].mxu0
    %v3316 = vadd.f32 %v2860, %v3315
    %v3317 = vpop.f32.mrb[0].mxu0
    %3318 = vmatprep.mubr.bf16.mxu0 0
    %3319 = vmatmul.mubr.bf16.gmra.mrb[0].mxu0 %v2893
    %v3320 = vpop.f32.mrb[0].mxu0
    %v3321 = vadd.f32 %v2860, %v3320
    %v3322 = vpop.f32.mrb[0].mxu0
    %v3323 = vpop.f32.mrb[0].mxu0
    %v3324 = vadd.f32 %v2860, %v3323
    %v3325 = vpop.f32.mrb[0].mxu0
    %3326 = vmatprep.mubr.bf16.mxu0 0
    %3327 = vmatmul.mubr.bf16.gmra.mrb[0].mxu0 %v2896
    %v3328 = vpop.f32.mrb[0].mxu0
    %v3329 = vadd.f32 %v2860, %v3328
    %v3330 = vpop.f32.mrb[0].mxu0
    %v3331 = vpop.f32.mrb[0].mxu0
    %v3332 = vadd.f32 %v2860, %v3331
    %v3333 = vpop.f32.mrb[0].mxu0
    %3334 = vmatprep.mubr.bf16.mxu0 0
    %3335 = vmatmul.mubr.bf16.gmra.mrb[0].mxu0 %v2899
    %v3336 = vpop.f32.mrb[0].mxu0
    %v3337 = vadd.f32 %v2860, %v3336
    %v3338 = vpop.f32.mrb[0].mxu0
    %v3339 = vpop.f32.mrb[0].mxu0
    %v3340 = vadd.f32 %v2860, %v3339
    %v3341 = vpop.f32.mrb[0].mxu0
    %3342 = vmatprep.mubr.bf16.mxu0 0
    %3343 = vmatmul.mubr.bf16.gmra.mrb[0].mxu0 %v2902
    %v3344 = vpop.f32.mrb[0].mxu0
    %v3345 = vadd.f32 %v2860, %v3344
    %v3346 = vpop.f32.mrb[0].mxu0
    %v3347 = vpop.f32.mrb[0].mxu0
    %v3348 = vadd.f32 %v2860, %v3347
    %v3349 = vpop.f32.mrb[0].mxu0
    %3350 = vmatprep.mubr.bf16.mxu0 0
    %3351 = vmatmul.mubr.bf16.gmra.mrb[0].mxu0 %v2905
    %v3352 = vpop.f32.mrb[0].mxu0
    %v3353 = vadd.f32 %v2860, %v3352
    %v3354 = vpop.f32.mrb[0].mxu0
    %v3355 = vpop.f32.mrb[0].mxu0
    %v3356 = vadd.f32 %v2860, %v3355
    %v3357 = vpop.f32.mrb[0].mxu0
    %3358 = vmatprep.mubr.bf16.mxu0 0
    %3359 = vmatmul.mubr.bf16.gmra.mrb[0].mxu0 %v2908
    %v3360 = vpop.f32.mrb[0].mxu0
    %v3361 = vadd.f32 %v2860, %v3360
    %v3362 = vpop.f32.mrb[0].mxu0
    %v3363 = vpop.f32.mrb[0].mxu0
    %v3364 = vadd.f32 %v2860, %v3363
    %v3365 = vpop.f32.mrb[0].mxu0
    %3366 = vmatprep.mubr.bf16.mxu0 0
    %3367 = vmatmul.mubr.bf16.gmra.mrb[0].mxu0 %v2911
    %v3368 = vpop.f32.mrb[0].mxu0
    %v3369 = vadd.f32 %v2860, %v3368
    %v3370 = vpop.f32.mrb[0].mxu0
    %v3371 = vpop.f32.mrb[0].mxu0
    %v3372 = vadd.f32 %v2860, %v3371
    %v3373 = vpop.f32.mrb[0].mxu0
    %3374 = vmatprep.mubr.bf16.mxu0 0
    %3375 = vmatmul.mubr.bf16.gmra.mrb[0].mxu0 %v2914
    %v3376 = vpop.f32.mrb[0].mxu0
    %v3377 = vadd.f32 %v2860, %v3376
    %v3378 = vpop.f32.mrb[0].mxu0
    %v3379 = vpop.f32.mrb[0].mxu0
    %v3380 = vadd.f32 %v2860, %v3379
    %v3381 = vpop.f32.mrb[0].mxu0
    %3382 = vmatprep.mubr.bf16.mxu0 0
    %3383 = vmatmul.mubr.bf16.gmra.mrb[0].mxu0 %v2917
    %v3384 = vpop.f32.mrb[0].mxu0
    %v3385 = vadd.f32 %v2860, %v3384
    %v3386 = vpop.f32.mrb[0].mxu0
    %v3387 = vpop.f32.mrb[0].mxu0
    %v3388 = vadd.f32 %v2860, %v3387
    %v3389 = vpop.f32.mrb[0].mxu0
    %3390 = vmatprep.mubr.bf16.mxu0 0
    %3391 = vmatmul.mubr.bf16.gmra.mrb[0].mxu0 %v2920
    %v3392 = vpop.f32.mrb[0].mxu0
    %v3393 = vadd.f32 %v2860, %v3392
    %v3394 = vpop.f32.mrb[0].mxu0
    %v3395 = vpop.f32.mrb[0].mxu0
    %v3396 = vadd.f32 %v2860, %v3395
    %v3397 = vpop.f32.mrb[0].mxu0
    %3398 = vmatprep.mubr.bf16.mxu0 0
    %3399 = vmatmul.mubr.bf16.gmra.mrb[0].mxu0 %v2923
    %v3400 = vpop.f32.mrb[0].mxu0
    %v3401 = vadd.f32 %v2860, %v3400
    %v3402 = vpop.f32.mrb[0].mxu0
    %v3403 = vpop.f32.mrb[0].mxu0
    %v3404 = vadd.f32 %v2860, %v3403
    %v3405 = vpop.f32.mrb[0].mxu0
    %3406 = vmatprep.mubr.bf16.mxu0 0
    %3407 = vmatmul.mubr.bf16.gmra.mrb[0].mxu0 %v2926
    %v3408 = vpop.f32.mrb[0].mxu0
    %v3409 = vadd.f32 %v2860, %v3408
    %v3410 = vpop.f32.mrb[0].mxu0
    %v3411 = vpop.f32.mrb[0].mxu0
    %v3412 = vadd.f32 %v2860, %v3411
    %v3413 = vpop.f32.mrb[0].mxu0
    %3414 = vmatprep.mubr.bf16.mxu0 0
    %3415 = vmatmul.mubr.bf16.gmra.mrb[0].mxu0 %v2929
    %v3416 = vpop.f32.mrb[0].mxu0
    %v3417 = vadd.f32 %v2860, %v3416
    %v3418 = vpop.f32.mrb[0].mxu0
    %v3419 = vpop.f32.mrb[0].mxu0
    %v3420 = vadd.f32 %v2860, %v3419
    %v3421 = vpop.f32.mrb[0].mxu0
    %3422 = vmatprep.mubr.bf16.mxu0 0
    %3423 = vmatmul.mubr.bf16.gmra.mrb[0].mxu0 %v2932
    %v3424 = vpop.f32.mrb[0].mxu0
    %v3425 = vadd.f32 %v2860, %v3424
    %v3426 = vpop.f32.mrb[0].mxu0
    %v3427 = vpop.f32.mrb[0].mxu0
    %v3428 = vadd.f32 %v2860, %v3427
    %v3429 = vpop.f32.mrb[0].mxu0
    %3430 = vmatprep.mubr.bf16.mxu0 0
    %3431 = vmatmul.mubr.bf16.gmra.mrb[0].mxu0 %v2935
    %v3432 = vpop.f32.mrb[0].mxu0
    %v3433 = vadd.f32 %v2860, %v3432
    %v3434 = vpop.f32.mrb[0].mxu0
    %v3435 = vpop.f32.mrb[0].mxu0
    %v3436 = vadd.f32 %v2860, %v3435
    %v3437 = vpop.f32.mrb[0].mxu0
    %3438 = vmatprep.mubr.bf16.mxu0 0
    %3439 = vmatmul.mubr.bf16.gmra.mrb[0].mxu0 %v2938
    %v3440 = vpop.f32.mrb[0].mxu0
    %v3441 = vadd.f32 %v2860, %v3440
    %v3442 = vpop.f32.mrb[0].mxu0
    %v3443 = vpop.f32.mrb[0].mxu0
    %v3444 = vadd.f32 %v2860, %v3443
    %v3445 = vpop.f32.mrb[0].mxu0
    %3446 = vmatprep.mubr.bf16.mxu0 0
    %3447 = vmatmul.mubr.bf16.gmra.mrb[0].mxu0 %v2941
    %v3448 = vpop.f32.mrb[0].mxu0
    %v3449 = vadd.f32 %v2860, %v3448
    %v3450 = vpop.f32.mrb[0].mxu0
    %v3451 = vpop.f32.mrb[0].mxu0
    %v3452 = vadd.f32 %v2860, %v3451
    %v3453 = vpop.f32.mrb[0].mxu0
    %3454 = vmatprep.mubr.bf16.mxu0 0
    %3455 = vmatmul.mubr.bf16.gmra.mrb[0].mxu0 %v2944
    %v3456 = vpop.f32.mrb[0].mxu0
    %v3457 = vadd.f32 %v2860, %v3456
    %v3458 = vpop.f32.mrb[0].mxu0
    %v3459 = vpop.f32.mrb[0].mxu0
    %v3460 = vadd.f32 %v2860, %v3459
    %v3461 = vpop.f32.mrb[0].mxu0
    %3462 = vmatprep.mubr.bf16.mxu0 0
    %3463 = vmatmul.mubr.bf16.gmra.mrb[0].mxu0 %v2947
    %v3464 = vpop.f32.mrb[0].mxu0
    %v3465 = vadd.f32 %v2860, %v3464
    %v3466 = vpop.f32.mrb[0].mxu0
    %v3467 = vpop.f32.mrb[0].mxu0
    %v3468 = vadd.f32 %v2860, %v3467
    %v3469 = vpop.f32.mrb[0].mxu0
    %3470 = vmatprep.mubr.bf16.mxu0 0
    %3471 = vmatmul.mubr.bf16.gmra.mrb[0].mxu0 %v2950
    %v3472 = vpop.f32.mrb[0].mxu0
    %v3473 = vadd.f32 %v2860, %v3472
    %v3474 = vpop.f32.mrb[0].mxu0
    %v3475 = vpop.f32.mrb[0].mxu0
    %v3476 = vadd.f32 %v2860, %v3475
    %v3477 = vpop.f32.mrb[0].mxu0
    %3478 = vmatprep.mubr.bf16.mxu0 0
    %3479 = vmatmul.mubr.bf16.gmra.mrb[0].mxu0 %v2953
    %v3480 = vpop.f32.mrb[0].mxu0
    %v3481 = vadd.f32 %v2860, %v3480
    %v3482 = vpop.f32.mrb[0].mxu0
    %v3483 = vpop.f32.mrb[0].mxu0
    %v3484 = vadd.f32 %v2860, %v3483
    %v3485 = vpop.f32.mrb[0].mxu0
    %3486 = vmatprep.mubr.bf16.mxu0 0
    %3487 = vmatmul.mubr.bf16.gmra.mrb[0].mxu0 %v2956
    %v3488 = vpop.f32.mrb[0].mxu0
    %v3489 = vadd.f32 %v2860, %v3488
    %v3490 = vpop.f32.mrb[0].mxu0
    %v3491 = vpop.f32.mrb[0].mxu0
    %v3492 = vadd.f32 %v2860, %v3491
    %v3493 = vpop.f32.mrb[0].mxu0
    %3494 = vmatprep.mubr.bf16.mxu0 0
    %3495 = vmatmul.mubr.bf16.gmra.mrb[0].mxu0 %v2959
    %v3496 = vpop.f32.mrb[0].mxu0
    %v3497 = vadd.f32 %v2860, %v3496
    %v3498 = vpop.f32.mrb[0].mxu0
    %v3499 = vpop.f32.mrb[0].mxu0
    %v3500 = vadd.f32 %v2860, %v3499
    %v3501 = vpop.f32.mrb[0].mxu0
    %3502 = vmatprep.mubr.bf16.mxu0 0
    %3503 = vmatmul.mubr.bf16.gmra.mrb[0].mxu0 %v2962
    %v3504 = vpop.f32.mrb[0].mxu0
    %v3505 = vadd.f32 %v2860, %v3504
    %v3506 = vpop.f32.mrb[0].mxu0
    %v3507 = vpop.f32.mrb[0].mxu0
    %v3508 = vadd.f32 %v2860, %v3507
    %v3509 = vpop.f32.mrb[0].mxu0
    %3510 = vmatprep.mubr.bf16.mxu0 0
    %3511 = vmatmul.mubr.bf16.gmra.mrb[0].mxu0 %v2965
    %v3512 = vpop.f32.mrb[0].mxu0
    %v3513 = vadd.f32 %v2860, %v3512
    %v3514 = vpop.f32.mrb[0].mxu0
    %v3515 = vpop.f32.mrb[0].mxu0
    %v3516 = vadd.f32 %v2860, %v3515
    %v3517 = vpop.f32.mrb[0].mxu0
    %3518 = vmatprep.mubr.bf16.mxu0 0
    %3519 = vmatmul.mubr.bf16.gmra.mrb[0].mxu0 %v2968
    %v3520 = vpop.f32.mrb[0].mxu0
    %v3521 = vadd.f32 %v2860, %v3520
    %v3522 = vpop.f32.mrb[0].mxu0
    %v3523 = vpop.f32.mrb[0].mxu0
    %v3524 = vadd.f32 %v2860, %v3523
    %v3525 = vpop.f32.mrb[0].mxu0
    %3526 = vmatprep.mubr.bf16.mxu0 0
    %3527 = vmatmul.mubr.bf16.gmra.mrb[0].mxu0 %v2971
    %v3528 = vpop.f32.mrb[0].mxu0
    %v3529 = vadd.f32 %v2860, %v3528
    %v3530 = vpop.f32.mrb[0].mxu0
    %v3531 = vpop.f32.mrb[0].mxu0
    %v3532 = vadd.f32 %v2860, %v3531
    %v3533 = vpop.f32.mrb[0].mxu0
    %3534 = vmatprep.mubr.bf16.mxu0 0
    %3535 = vmatmul.mubr.bf16.gmra.mrb[0].mxu0 %v2974
    %v3536 = vpop.f32.mrb[0].mxu0
    %v3537 = vadd.f32 %v2860, %v3536
    %v3538 = vpop.f32.mrb[0].mxu0
    %v3539 = vpop.f32.mrb[0].mxu0
    %v3540 = vadd.f32 %v2860, %v3539
    %v3541 = vpop.f32.mrb[0].mxu0
    %3542 = vmatprep.mubr.bf16.mxu0 0
    %3543 = vmatmul.mubr.bf16.gmra.mrb[0].mxu0 %v2977
    %v3544 = vpop.f32.mrb[0].mxu0
    %v3545 = vadd.f32 %v2860, %v3544
    %v3546 = vpop.f32.mrb[0].mxu0
    %v3547 = vpop.f32.mrb[0].mxu0
    %v3548 = vadd.f32 %v2860, %v3547
    %v3549 = vpop.f32.mrb[0].mxu0
    %3550 = vmatprep.mubr.bf16.mxu0 0
    %3551 = vmatmul.mubr.bf16.gmra.mrb[0].mxu0 %v2980
    %v3552 = vpop.f32.mrb[0].mxu0
    %v3553 = vadd.f32 %v2860, %v3552
    %v3554 = vpop.f32.mrb[0].mxu0
    %v3555 = vpop.f32.mrb[0].mxu0
    %v3556 = vadd.f32 %v2860, %v3555
    %v3557 = vpop.f32.mrb[0].mxu0
    %3558 = vmatprep.mubr.bf16.mxu0 0
    %3559 = vmatmul.mubr.bf16.gmra.mrb[0].mxu0 %v2983
    %v3560 = vpop.f32.mrb[0].mxu0
    %v3561 = vadd.f32 %v2860, %v3560
    %v3562 = vpop.f32.mrb[0].mxu0
    %v3563 = vpop.f32.mrb[0].mxu0
    %v3564 = vadd.f32 %v2860, %v3563
    %v3565 = vpop.f32.mrb[0].mxu0
    %3566 = vmatprep.mubr.bf16.mxu0 0
    %3567 = vmatmul.mubr.bf16.gmra.mrb[0].mxu0 %v2986
    %v3568 = vpop.f32.mrb[0].mxu0
    %v3569 = vadd.f32 %v2860, %v3568
    %v3570 = vpop.f32.mrb[0].mxu0
    %v3571 = vpop.f32.mrb[0].mxu0
    %v3572 = vadd.f32 %v2860, %v3571
    %v3573 = vpop.f32.mrb[0].mxu0
    %3574 = vmatprep.mubr.bf16.mxu0 0
    %3575 = vmatmul.mubr.bf16.gmra.mrb[0].mxu0 %v2989
    %v3576 = vpop.f32.mrb[0].mxu0
    %v3577 = vadd.f32 %v2860, %v3576
    %v3578 = vpop.f32.mrb[0].mxu0
    %v3579 = vpop.f32.mrb[0].mxu0
    %v3580 = vadd.f32 %v2860, %v3579
    %v3581 = vpop.f32.mrb[0].mxu0
    %3582 = vmatprep.mubr.bf16.mxu0 0
    %3583 = vmatmul.mubr.bf16.gmra.mrb[0].mxu0 %v2992
    %v3584 = vpop.f32.mrb[0].mxu0
    %v3585 = vadd.f32 %v2860, %v3584
    %v3586 = vpop.f32.mrb[0].mxu0
    %v3587 = vpop.f32.mrb[0].mxu0
    %v3588 = vadd.f32 %v2860, %v3587
    %v3589 = vpop.f32.mrb[0].mxu0
    %3590 = vmatprep.mubr.bf16.mxu0 0
    %3591 = vmatmul.mubr.bf16.gmra.mrb[0].mxu0 %v2995
    %v3592 = vpop.f32.mrb[0].mxu0
    %v3593 = vadd.f32 %v2860, %v3592
    %v3594 = vpop.f32.mrb[0].mxu0
    %v3595 = vpop.f32.mrb[0].mxu0
    %v3596 = vadd.f32 %v2860, %v3595
    %v3597 = vpop.f32.mrb[0].mxu0
    %3598 = vmatprep.mubr.bf16.mxu0 0
    %3599 = vmatmul.mubr.bf16.gmra.mrb[0].mxu0 %v2998
    %v3600 = vpop.f32.mrb[0].mxu0
    %v3601 = vadd.f32 %v2860, %v3600
    %v3602 = vpop.f32.mrb[0].mxu0
    %v3603 = vpop.f32.mrb[0].mxu0
    %v3604 = vadd.f32 %v2860, %v3603
    %v3605 = vpop.f32.mrb[0].mxu0
    %3606 = vmatprep.mubr.bf16.mxu0 0
    %3607 = vmatmul.mubr.bf16.gmra.mrb[0].mxu0 %v3001
    %v3608 = vpop.f32.mrb[0].mxu0
    %v3609 = vadd.f32 %v2860, %v3608
    %v3610 = vpop.f32.mrb[0].mxu0
    %v3611 = vpop.f32.mrb[0].mxu0
    %v3612 = vadd.f32 %v2860, %v3611
    %v3613 = vpop.f32.mrb[0].mxu0
    %3614 = vmatprep.mubr.bf16.mxu0 0
    %3615 = vmatmul.mubr.bf16.gmra.mrb[0].mxu0 %v3004
    %v3616 = vpop.f32.mrb[0].mxu0
    %v3617 = vadd.f32 %v2860, %v3616
    %v3618 = vpop.f32.mrb[0].mxu0
    %v3619 = vpop.f32.mrb[0].mxu0
    %v3620 = vadd.f32 %v2860, %v3619
    %v3621 = vpop.f32.mrb[0].mxu0
    %3622 = vmatprep.mubr.bf16.mxu0 0
    %3623 = vmatmul.mubr.bf16.gmra.mrb[0].mxu0 %v3007
    %v3624 = vpop.f32.mrb[0].mxu0
    %v3625 = vadd.f32 %v2860, %v3624
    %v3626 = vpop.f32.mrb[0].mxu0
    %v3627 = vpop.f32.mrb[0].mxu0
    %v3628 = vadd.f32 %v2860, %v3627
    %v3629 = vpop.f32.mrb[0].mxu0
    %3630 = vmatprep.mubr.bf16.mxu0 0
    %3631 = vmatmul.mubr.bf16.gmra.mrb[0].mxu0 %v3010
    %v3632 = vpop.f32.mrb[0].mxu0
    %v3633 = vadd.f32 %v2860, %v3632
    %v3634 = vpop.f32.mrb[0].mxu0
    %v3635 = vpop.f32.mrb[0].mxu0
    %v3636 = vadd.f32 %v2860, %v3635
    %v3637 = vpop.f32.mrb[0].mxu0
    %3638 = vmatprep.mubr.bf16.mxu0 0
    %3639 = vmatmul.mubr.bf16.gmra.mrb[0].mxu0 %v3013
    %v3640 = vpop.f32.mrb[0].mxu0
    %v3641 = vadd.f32 %v2860, %v3640
    %v3642 = vpop.f32.mrb[0].mxu0
    %v3643 = vpop.f32.mrb[0].mxu0
    %v3644 = vadd.f32 %v2860, %v3643
    %v3645 = vpop.f32.mrb[0].mxu0
    %3646 = vmatprep.mubr.bf16.mxu0 0
    %3647 = vmatmul.mubr.bf16.gmra.mrb[0].mxu0 %v3016
    %v3648 = vpop.f32.mrb[0].mxu0
    %v3649 = vadd.f32 %v2860, %v3648
    %v3650 = vpop.f32.mrb[0].mxu0
    %v3651 = vpop.f32.mrb[0].mxu0
    %v3652 = vadd.f32 %v2860, %v3651
    %v3653 = vpop.f32.mrb[0].mxu0
    %3654 = vmatprep.mubr.bf16.mxu0 0
    %3655 = vmatmul.mubr.bf16.gmra.mrb[0].mxu0 %v3019
    %v3656 = vpop.f32.mrb[0].mxu0
    %v3657 = vadd.f32 %v2860, %v3656
    %v3658 = vpop.f32.mrb[0].mxu0
    %v3659 = vpop.f32.mrb[0].mxu0
    %v3660 = vadd.f32 %v2860, %v3659
    %v3661 = vpop.f32.mrb[0].mxu0
    %3662 = vmatprep.mubr.bf16.mxu0 0
    %3663 = vmatmul.mubr.bf16.gmra.mrb[0].mxu0 %v3022
    %v3664 = vpop.f32.mrb[0].mxu0
    %v3665 = vadd.f32 %v2860, %v3664
    %v3666 = vpop.f32.mrb[0].mxu0
    %v3667 = vpop.f32.mrb[0].mxu0
    %v3668 = vadd.f32 %v2860, %v3667
    %v3669 = vpop.f32.mrb[0].mxu0
    %3670 = vmatprep.mubr.bf16.mxu0 0
    %3671 = vmatmul.mubr.bf16.gmra.mrb[0].mxu0 %v3025
    %v3672 = vpop.f32.mrb[0].mxu0
    %v3673 = vadd.f32 %v2860, %v3672
    %v3674 = vpop.f32.mrb[0].mxu0
    %v3675 = vpop.f32.mrb[0].mxu0
    %v3676 = vadd.f32 %v2860, %v3675
    %v3677 = vpop.f32.mrb[0].mxu0
    %3678 = vmatprep.mubr.bf16.mxu0 0
    %3679 = vmatmul.mubr.bf16.gmra.mrb[0].mxu0 %v3028
    %v3680 = vpop.f32.mrb[0].mxu0
    %v3681 = vadd.f32 %v2860, %v3680
    %v3682 = vpop.f32.mrb[0].mxu0
    %v3683 = vpop.f32.mrb[0].mxu0
    %v3684 = vadd.f32 %v2860, %v3683
    %v3685 = vpop.f32.mrb[0].mxu0
    %3686 = vmatprep.mubr.bf16.mxu0 0
    %3687 = vmatmul.mubr.bf16.gmra.mrb[0].mxu0 %v3031
    %v3688 = vpop.f32.mrb[0].mxu0
    %v3689 = vadd.f32 %v2860, %v3688
    %v3690 = vpop.f32.mrb[0].mxu0
    %v3691 = vpop.f32.mrb[0].mxu0
    %v3692 = vadd.f32 %v2860, %v3691
    %v3693 = vpop.f32.mrb[0].mxu0
    %3694 = vmatprep.mubr.bf16.mxu0 0
    %3695 = vmatmul.mubr.bf16.gmra.mrb[0].mxu0 %v3034
    %v3696 = vpop.f32.mrb[0].mxu0
    %v3697 = vadd.f32 %v2860, %v3696
    %v3698 = vpop.f32.mrb[0].mxu0
    %v3699 = vpop.f32.mrb[0].mxu0
    %v3700 = vadd.f32 %v2860, %v3699
    %v3701 = vpop.f32.mrb[0].mxu0
    %3702 = vmatprep.mubr.bf16.mxu0 0
    %3703 = vmatmul.mubr.bf16.gmra.mrb[0].mxu0 %v3037
    %v3704 = vpop.f32.mrb[0].mxu0
    %v3705 = vadd.f32 %v2860, %v3704
    %v3706 = vpop.f32.mrb[0].mxu0
    %v3707 = vpop.f32.mrb[0].mxu0
    %v3708 = vadd.f32 %v2860, %v3707
    %v3709 = vpop.f32.mrb[0].mxu0
    %3710 = vmatprep.mubr.bf16.mxu0 0
    %3711 = vmatmul.mubr.bf16.gmra.mrb[0].mxu0 %v3040
    %v3712 = vpop.f32.mrb[0].mxu0
    %v3713 = vadd.f32 %v2860, %v3712
    %v3714 = vpop.f32.mrb[0].mxu0
    %v3715 = vpop.f32.mrb[0].mxu0
    %v3716 = vadd.f32 %v2860, %v3715
    %v3717 = vpop.f32.mrb[0].mxu0
    %3718 = vmatprep.mubr.bf16.mxu0 0
    %3719 = vmatmul.mubr.bf16.gmra.mrb[0].mxu0 %v3043
    %v3720 = vpop.f32.mrb[0].mxu0
    %v3721 = vadd.f32 %v2860, %v3720
    %v3722 = vpop.f32.mrb[0].mxu0
    %v3723 = vpop.f32.mrb[0].mxu0
    %v3724 = vadd.f32 %v2860, %v3723
    %v3725 = vpop.f32.mrb[0].mxu0
    %3726 = vmatprep.mubr.bf16.mxu0 0
    %3727 = vmatmul.mubr.bf16.gmra.mrb[0].mxu0 %v3046
    %v3728 = vpop.f32.mrb[0].mxu0
    %v3729 = vadd.f32 %v2860, %v3728
    %v3730 = vpop.f32.mrb[0].mxu0
    %v3731 = vpop.f32.mrb[0].mxu0
    %v3732 = vadd.f32 %v2860, %v3731
    %v3733 = vpop.f32.mrb[0].mxu0
    %3734 = vmatprep.mubr.bf16.mxu0 0
    %3735 = vmatmul.mubr.bf16.gmra.mrb[0].mxu0 %v3049
    %v3736 = vpop.f32.mrb[0].mxu0
    %v3737 = vadd.f32 %v2860, %v3736
    %v3738 = vpop.f32.mrb[0].mxu0
    %v3739 = vpop.f32.mrb[0].mxu0
    %v3740 = vadd.f32 %v2860, %v3739
    %v3741 = vpop.f32.mrb[0].mxu0
    %3742 = vmatprep.mubr.bf16.mxu0 0
    %3743 = vmatmul.mubr.bf16.gmra.mrb[0].mxu0 %v3052
    %v3744 = vpop.f32.mrb[0].mxu0
    %v3745 = vadd.f32 %v2860, %v3744
    %v3746 = vpop.f32.mrb[0].mxu0
    %v3747 = vpop.f32.mrb[0].mxu0
    %v3748 = vadd.f32 %v2860, %v3747
    %v3749 = vpop.f32.mrb[0].mxu0
    %3750 = vmatprep.mubr.bf16.mxu0 0
    %3751 = vmatmul.mubr.bf16.gmra.mrb[0].mxu0 %v3055
    %v3752 = vpop.f32.mrb[0].mxu0
    %v3753 = vadd.f32 %v2860, %v3752
    %v3754 = vpop.f32.mrb[0].mxu0
    %v3755 = vpop.f32.mrb[0].mxu0
    %v3756 = vadd.f32 %v2860, %v3755
    %v3757 = vpop.f32.mrb[0].mxu0
    %3758 = vmatprep.mubr.bf16.mxu0 0
    %3759 = vmatmul.mubr.bf16.gmra.mrb[0].mxu0 %v3058
    %v3760 = vpop.f32.mrb[0].mxu0
    %v3761 = vadd.f32 %v2860, %v3760
    %v3762 = vpop.f32.mrb[0].mxu0
    %v3763 = vpop.f32.mrb[0].mxu0
    %v3764 = vadd.f32 %v2860, %v3763
    %v3765 = vpop.f32.mrb[0].mxu0
    %3766 = vmatprep.mubr.bf16.mxu0 0
    %3767 = vmatmul.mubr.bf16.gmra.mrb[0].mxu0 %v3061
    %v3768 = vpop.f32.mrb[0].mxu0
    %v3769 = vadd.f32 %v2860, %v3768
    %v3770 = vpop.f32.mrb[0].mxu0
    %v3771 = vpop.f32.mrb[0].mxu0
    %v3772 = vadd.f32 %v2860, %v3771
    %v3773 = vpop.f32.mrb[0].mxu0
    %3774 = vmatprep.mubr.bf16.mxu0 0
    %3775 = vmatmul.mubr.bf16.gmra.mrb[0].mxu0 %v3064
    %v3776 = vpop.f32.mrb[0].mxu0
    %v3777 = vadd.f32 %v2860, %v3776
    %v3778 = vpop.f32.mrb[0].mxu0
    %v3779 = vpop.f32.mrb[0].mxu0
    %v3780 = vadd.f32 %v2860, %v3779
    %v3781 = vpop.f32.mrb[0].mxu0
    %3782 = vmatprep.mubr.bf16.mxu0 0
    %3783 = vmatmul.mubr.bf16.gmra.mrb[0].mxu0 %v3067
    %v3784 = vpop.f32.mrb[0].mxu0
    %v3785 = vadd.f32 %v2860, %v3784
    %v3786 = vpop.f32.mrb[0].mxu0
    %v3787 = vpop.f32.mrb[0].mxu0
    %v3788 = vadd.f32 %v2860, %v3787
    %v3789 = vpop.f32.mrb[0].mxu0
    %3790 = vmatprep.mubr.bf16.mxu0 0
    %3791 = vmatmul.mubr.bf16.gmra.mrb[0].mxu0 %v3070
    %v3792 = vpop.f32.mrb[0].mxu0
    %v3793 = vadd.f32 %v2860, %v3792
    %v3794 = vpop.f32.mrb[0].mxu0
    %v3795 = vpop.f32.mrb[0].mxu0
    %v3796 = vadd.f32 %v2860, %v3795
    %v3797 = vpop.f32.mrb[0].mxu0
    %3798 = vmatprep.mubr.bf16.mxu0 0
    %3799 = vmatmul.mubr.bf16.gmra.mrb[0].mxu0 %v3073
    %v3800 = vpop.f32.mrb[0].mxu0
    %v3801 = vadd.f32 %v2860, %v3800
    %v3802 = vpop.f32.mrb[0].mxu0
    %v3803 = vpop.f32.mrb[0].mxu0
    %v3804 = vadd.f32 %v2860, %v3803
    %v3805 = vpop.f32.mrb[0].mxu0
    %3806 = vmatprep.mubr.bf16.mxu0 0
    %3807 = vmatmul.mubr.bf16.gmra.mrb[0].mxu0 %v3076
    %v3808 = vpop.f32.mrb[0].mxu0
    %v3809 = vadd.f32 %v2860, %v3808
    %v3810 = vpop.f32.mrb[0].mxu0
    %v3811 = vpop.f32.mrb[0].mxu0
    %v3812 = vadd.f32 %v2860, %v3811
    %v3813 = vpop.f32.mrb[0].mxu0
    %3814 = vmatprep.mubr.bf16.mxu0 0
    %3815 = vmatmul.mubr.bf16.gmra.mrb[0].mxu0 %v3079
    %v3816 = vpop.f32.mrb[0].mxu0
    %v3817 = vadd.f32 %v2860, %v3816
    %v3818 = vpop.f32.mrb[0].mxu0
    %v3819 = vpop.f32.mrb[0].mxu0
    %v3820 = vadd.f32 %v2860, %v3819
    %v3821 = vpop.f32.mrb[0].mxu0
    %3822 = vmatprep.mubr.bf16.mxu0 0
    %3823 = vmatmul.mubr.bf16.gmra.mrb[0].mxu0 %v3082
    %v3824 = vpop.f32.mrb[0].mxu0
    %v3825 = vadd.f32 %v2860, %v3824
    %v3826 = vpop.f32.mrb[0].mxu0
    %v3827 = vpop.f32.mrb[0].mxu0
    %v3828 = vadd.f32 %v2860, %v3827
    %v3829 = vpop.f32.mrb[0].mxu0
    %3830 = vmatprep.mubr.bf16.mxu0 0
    %3831 = vmatmul.mubr.bf16.gmra.mrb[0].mxu0 %v3085
    %v3832 = vpop.f32.mrb[0].mxu0
    %v3833 = vadd.f32 %v2860, %v3832
    %v3834 = vpop.f32.mrb[0].mxu0
    %v3835 = vpop.f32.mrb[0].mxu0
    %v3836 = vadd.f32 %v2860, %v3835
    %v3837 = vpop.f32.mrb[0].mxu0
    %3838 = vmatprep.mubr.bf16.mxu0 0
    %3839 = vmatmul.mubr.bf16.gmra.mrb[0].mxu0 %v3088
    %v3840 = vpop.f32.mrb[0].mxu0
    %v3841 = vadd.f32 %v2860, %v3840
    %v3842 = vpop.f32.mrb[0].mxu0
    %v3843 = vpop.f32.mrb[0].mxu0
    %v3844 = vadd.f32 %v2860, %v3843
    %v3845 = vpop.f32.mrb[0].mxu0
    %3846 = vmatprep.mubr.bf16.mxu0 0
    %3847 = vmatmul.mubr.bf16.gmra.mrb[0].mxu0 %v3091
    %v3848 = vpop.f32.mrb[0].mxu0
    %v3849 = vadd.f32 %v2860, %v3848
    %v3850 = vpop.f32.mrb[0].mxu0
    %v3851 = vpop.f32.mrb[0].mxu0
    %v3852 = vadd.f32 %v2860, %v3851
    %v3853 = vpop.f32.mrb[0].mxu0
    %3854 = vmatprep.mubr.bf16.mxu0 0
    %3855 = vmatmul.mubr.bf16.gmra.mrb[0].mxu0 %v3094
    %v3856 = vpop.f32.mrb[0].mxu0
    %v3857 = vadd.f32 %v2860, %v3856
    %v3858 = vpop.f32.mrb[0].mxu0
    %v3859 = vpop.f32.mrb[0].mxu0
    %v3860 = vadd.f32 %v2860, %v3859
    %v3861 = vpop.f32.mrb[0].mxu0
    %3862 = vmatprep.mubr.bf16.mxu0 0
    %3863 = vmatmul.mubr.bf16.gmra.mrb[0].mxu0 %v3097
    %v3864 = vpop.f32.mrb[0].mxu0
    %v3865 = vadd.f32 %v2860, %v3864
    %v3866 = vpop.f32.mrb[0].mxu0
    %v3867 = vpop.f32.mrb[0].mxu0
    %v3868 = vadd.f32 %v2860, %v3867
    %v3869 = vpop.f32.mrb[0].mxu0
    %3870 = vmatprep.mubr.bf16.mxu0 0
    %3871 = vmatmul.mubr.bf16.gmra.mrb[0].mxu0 %v3100
    %v3872 = vpop.f32.mrb[0].mxu0
    %v3873 = vadd.f32 %v2860, %v3872
    %v3874 = vpop.f32.mrb[0].mxu0
    %v3875 = vpop.f32.mrb[0].mxu0
    %v3876 = vadd.f32 %v2860, %v3875
    %v3877 = vpop.f32.mrb[0].mxu0
    %3878 = vmatprep.mubr.bf16.mxu0 0
    %3879 = vmatmul.mubr.bf16.gmra.mrb[0].mxu0 %v3103
    %v3880 = vpop.f32.mrb[0].mxu0
    %v3881 = vadd.f32 %v2860, %v3880
    %v3882 = vpop.f32.mrb[0].mxu0
    %v3883 = vpop.f32.mrb[0].mxu0
    %v3884 = vadd.f32 %v2860, %v3883
    %v3885 = vpop.f32.mrb[0].mxu0
    %3886 = vmatprep.mubr.bf16.mxu0 0
    %3887 = vmatmul.mubr.bf16.gmra.mrb[0].mxu0 %v3106
    %v3888 = vpop.f32.mrb[0].mxu0
    %v3889 = vadd.f32 %v2860, %v3888
    %v3890 = vpop.f32.mrb[0].mxu0
    %v3891 = vpop.f32.mrb[0].mxu0
    %v3892 = vadd.f32 %v2860, %v3891
    %v3893 = vpop.f32.mrb[0].mxu0
    %3894 = vmatprep.mubr.bf16.mxu0 0
    %3895 = vmatmul.mubr.bf16.gmra.mrb[0].mxu0 %v3109
    %v3896 = vpop.f32.mrb[0].mxu0
    %v3897 = vadd.f32 %v2860, %v3896
    %v3898 = vpop.f32.mrb[0].mxu0
    %v3899 = vpop.f32.mrb[0].mxu0
    %v3900 = vadd.f32 %v2860, %v3899
    %v3901 = vpop.f32.mrb[0].mxu0
    %3902 = vmatprep.mubr.bf16.mxu0 0
    %3903 = vmatmul.mubr.bf16.gmra.mrb[0].mxu0 %v3112
    %v3904 = vpop.f32.mrb[0].mxu0
    %v3905 = vadd.f32 %v2860, %v3904
    %v3906 = vpop.f32.mrb[0].mxu0
    %v3907 = vpop.f32.mrb[0].mxu0
    %v3908 = vadd.f32 %v2860, %v3907
    %v3909 = vpop.f32.mrb[0].mxu0
    %3910 = vmatprep.mubr.bf16.mxu0 0
    %3911 = vmatmul.mubr.bf16.gmra.mrb[0].mxu0 %v3115
    %v3912 = vpop.f32.mrb[0].mxu0
    %v3913 = vadd.f32 %v2860, %v3912
    %v3914 = vpop.f32.mrb[0].mxu0
    %v3915 = vpop.f32.mrb[0].mxu0
    %v3916 = vadd.f32 %v2860, %v3915
    %v3917 = vpop.f32.mrb[0].mxu0
    %3918 = vmatprep.mubr.bf16.mxu0 0
    %3919 = vmatmul.mubr.bf16.gmra.mrb[0].mxu0 %v3118
    %v3920 = vpop.f32.mrb[0].mxu0
    %v3921 = vadd.f32 %v2860, %v3920
    %v3922 = vpop.f32.mrb[0].mxu0
    %v3923 = vpop.f32.mrb[0].mxu0
    %v3924 = vadd.f32 %v2860, %v3923
    %v3925 = vpop.f32.mrb[0].mxu0
    %3926 = vmatprep.mubr.bf16.mxu0 0
    %3927 = vmatmul.mubr.bf16.gmra.mrb[0].mxu0 %v3121
    %v3928 = vpop.f32.mrb[0].mxu0
    %v3929 = vadd.f32 %v2860, %v3928
    %v3930 = vpop.f32.mrb[0].mxu0
    %v3931 = vpop.f32.mrb[0].mxu0
    %v3932 = vadd.f32 %v2860, %v3931
    %v3933 = vpop.f32.mrb[0].mxu0
    %3934 = vmatprep.mubr.bf16.mxu0 0
    %3935 = vmatmul.mubr.bf16.gmra.mrb[0].mxu0 %v3124
    %v3936 = vpop.f32.mrb[0].mxu0
    %v3937 = vadd.f32 %v2860, %v3936
    %v3938 = vpop.f32.mrb[0].mxu0
    %v3939 = vpop.f32.mrb[0].mxu0
    %v3940 = vadd.f32 %v2860, %v3939
    %v3941 = vpop.f32.mrb[0].mxu0
    %3942 = vmatprep.mubr.bf16.mxu0 0
    %3943 = vmatmul.mubr.bf16.gmra.mrb[0].mxu0 %v3127
    %v3944 = vpop.f32.mrb[0].mxu0
    %v3945 = vadd.f32 %v2860, %v3944
    %v3946 = vpop.f32.mrb[0].mxu0
    %v3947 = vpop.f32.mrb[0].mxu0
    %v3948 = vadd.f32 %v2860, %v3947
    %v3949 = vpop.f32.mrb[0].mxu0
    %3950 = vmatprep.mubr.bf16.mxu0 0
    %3951 = vmatmul.mubr.bf16.gmra.mrb[0].mxu0 %v3130
    %v3952 = vpop.f32.mrb[0].mxu0
    %v3953 = vadd.f32 %v2860, %v3952
    %v3954 = vpop.f32.mrb[0].mxu0
    %v3955 = vpop.f32.mrb[0].mxu0
    %v3956 = vadd.f32 %v2860, %v3955
    %v3957 = vpop.f32.mrb[0].mxu0
    %3958 = vmatprep.mubr.bf16.mxu0 0
    %3959 = vmatmul.mubr.bf16.gmra.mrb[0].mxu0 %v3133
    %v3960 = vpop.f32.mrb[0].mxu0
    %v3961 = vadd.f32 %v2860, %v3960
    %v3962 = vpop.f32.mrb[0].mxu0
    %v3963 = vpop.f32.mrb[0].mxu0
    %v3964 = vadd.f32 %v2860, %v3963
    %v3965 = vpop.f32.mrb[0].mxu0
    %3966 = vmatprep.mubr.bf16.mxu0 0
    %3967 = vmatmul.mubr.bf16.gmra.mrb[0].mxu0 %v3136
    %v3968 = vpop.f32.mrb[0].mxu0
    %v3969 = vadd.f32 %v2860, %v3968
    %v3970 = vpop.f32.mrb[0].mxu0
    %v3971 = vpop.f32.mrb[0].mxu0
    %v3972 = vadd.f32 %v2860, %v3971
    %v3973 = vpop.f32.mrb[0].mxu0
    %3974 = vmatprep.mubr.bf16.mxu0 0
    %3975 = vmatmul.mubr.bf16.gmra.mrb[0].mxu0 %v3139
    %v3976 = vpop.f32.mrb[0].mxu0
    %v3977 = vadd.f32 %v2860, %v3976
    %v3978 = vpop.f32.mrb[0].mxu0
    %v3979 = vpop.f32.mrb[0].mxu0
    %v3980 = vadd.f32 %v2860, %v3979
    %v3981 = vpop.f32.mrb[0].mxu0
    %3982 = vmatprep.mubr.bf16.mxu0 0
    %3983 = vmatmul.mubr.bf16.gmra.mrb[0].mxu0 %v3142
    %v3984 = vpop.f32.mrb[0].mxu0
    %v3985 = vadd.f32 %v2860, %v3984
    %v3986 = vpop.f32.mrb[0].mxu0
    %v3987 = vpop.f32.mrb[0].mxu0
    %v3988 = vadd.f32 %v2860, %v3987
    %v3989 = vpop.f32.mrb[0].mxu0
    %3990 = vmatprep.mubr.bf16.mxu0 0
    %3991 = vmatmul.mubr.bf16.gmra.mrb[0].mxu0 %v3145
    %v3992 = vpop.f32.mrb[0].mxu0
    %v3993 = vadd.f32 %v2860, %v3992
    %v3994 = vpop.f32.mrb[0].mxu0
    %v3995 = vpop.f32.mrb[0].mxu0
    %v3996 = vadd.f32 %v2860, %v3995
    %v3997 = vpop.f32.mrb[0].mxu0
    %3998 = vmatprep.mubr.bf16.mxu0 0
    %3999 = vmatmul.mubr.bf16.gmra.mrb[0].mxu0 %v3148
    %v4000 = vpop.f32.mrb[0].mxu0
    %v4001 = vadd.f32 %v2860, %v4000
    %v4002 = vpop.f32.mrb[0].mxu0
    %v4003 = vpop.f32.mrb[0].mxu0
    %v4004 = vadd.f32 %v2860, %v4003
    %v4005 = vpop.f32.mrb[0].mxu0
    %4006 = vmatprep.mubr.bf16.mxu0 0
    %4007 = vmatmul.mubr.bf16.gmra.mrb[0].mxu0 %v3151
    %v4008 = vpop.f32.mrb[0].mxu0
    %v4009 = vadd.f32 %v2860, %v4008
    %v4010 = vpop.f32.mrb[0].mxu0
    %v4011 = vpop.f32.mrb[0].mxu0
    %v4012 = vadd.f32 %v2860, %v4011
    %v4013 = vpop.f32.mrb[0].mxu0
    %4014 = vmatprep.mubr.bf16.mxu0 0
    %4015 = vmatmul.mubr.bf16.gmra.mrb[0].mxu0 %v3154
    %v4016 = vpop.f32.mrb[0].mxu0
    %v4017 = vadd.f32 %v2860, %v4016
    %v4018 = vpop.f32.mrb[0].mxu0
    %v4019 = vpop.f32.mrb[0].mxu0
    %v4020 = vadd.f32 %v2860, %v4019
    %v4021 = vpop.f32.mrb[0].mxu0
    %4022 = vmatprep.mubr.bf16.mxu0 0
    %4023 = vmatmul.mubr.bf16.gmra.mrb[0].mxu0 %v3157
    %v4024 = vpop.f32.mrb[0].mxu0
    %v4025 = vadd.f32 %v2860, %v4024
    %v4026 = vpop.f32.mrb[0].mxu0
    %v4027 = vpop.f32.mrb[0].mxu0
    %v4028 = vadd.f32 %v2860, %v4027
    %v4029 = vpop.f32.mrb[0].mxu0
    %4030 = vmatprep.mubr.bf16.mxu0 0
    %4031 = vmatmul.mubr.bf16.gmra.mrb[0].mxu0 %v3160
    %v4032 = vpop.f32.mrb[0].mxu0
    %v4033 = vadd.f32 %v2860, %v4032
    %v4034 = vpop.f32.mrb[0].mxu0
    %v4035 = vpop.f32.mrb[0].mxu0
    %v4036 = vadd.f32 %v2860, %v4035
    %v4037 = vpop.f32.mrb[0].mxu0
    %4038 = vmatprep.mubr.bf16.mxu0 0
    %4039 = vmatmul.mubr.bf16.gmra.mrb[0].mxu0 %v3163
    %v4040 = vpop.f32.mrb[0].mxu0
    %v4041 = vadd.f32 %v2860, %v4040
    %v4042 = vpop.f32.mrb[0].mxu0
    %v4043 = vpop.f32.mrb[0].mxu0
    %v4044 = vadd.f32 %v2860, %v4043
    %v4045 = vpop.f32.mrb[0].mxu0
    %4046 = vmatprep.mubr.bf16.mxu0 0
    %4047 = vmatmul.mubr.bf16.gmra.mrb[0].mxu0 %v3166
    %v4048 = vpop.f32.mrb[0].mxu0
    %v4049 = vadd.f32 %v2860, %v4048
    %v4050 = vpop.f32.mrb[0].mxu0
    %v4051 = vpop.f32.mrb[0].mxu0
    %v4052 = vadd.f32 %v2860, %v4051
    %v4053 = vpop.f32.mrb[0].mxu0
    %4054 = vmatprep.mubr.bf16.mxu0 0
    %4055 = vmatmul.mubr.bf16.gmra.mrb[0].mxu0 %v3169
    %v4056 = vpop.f32.mrb[0].mxu0
    %v4057 = vadd.f32 %v2860, %v4056
    %v4058 = vpop.f32.mrb[0].mxu0
    %v4059 = vpop.f32.mrb[0].mxu0
    %v4060 = vadd.f32 %v2860, %v4059
    %v4061 = vpop.f32.mrb[0].mxu0
    %4062 = vmatprep.mubr.bf16.mxu0 0
    %4063 = vmatmul.mubr.bf16.gmra.mrb[0].mxu0 %v3172
    %v4064 = vpop.f32.mrb[0].mxu0
    %v4065 = vadd.f32 %v2860, %v4064
    %v4066 = vpop.f32.mrb[0].mxu0
    %v4067 = vpop.f32.mrb[0].mxu0
    %v4068 = vadd.f32 %v2860, %v4067
    %v4069 = vpop.f32.mrb[0].mxu0
    %4070 = vmatprep.mubr.bf16.mxu0 0
    %4071 = vmatmul.mubr.bf16.gmra.mrb[0].mxu0 %v3175
    %v4072 = vpop.f32.mrb[0].mxu0
    %v4073 = vadd.f32 %v2860, %v4072
    %v4074 = vpop.f32.mrb[0].mxu0
    %v4075 = vpop.f32.mrb[0].mxu0
    %v4076 = vadd.f32 %v2860, %v4075
    %v4077 = vpop.f32.mrb[0].mxu0
    %4078 = vmatprep.mubr.bf16.mxu0 0
    %4079 = vmatmul.mubr.bf16.gmra.mrb[0].mxu0 %v3178
    %v4080 = vpop.f32.mrb[0].mxu0
    %v4081 = vadd.f32 %v2860, %v4080
    %v4082 = vpop.f32.mrb[0].mxu0
    %v4083 = vpop.f32.mrb[0].mxu0
    %v4084 = vadd.f32 %v2860, %v4083
    %v4085 = vpop.f32.mrb[0].mxu0
    %4086 = vmatprep.mubr.bf16.mxu0 0
    %4087 = vmatmul.mubr.bf16.gmra.mrb[0].mxu0 %v3181
    %v4088 = vpop.f32.mrb[0].mxu0
    %v4089 = vadd.f32 %v2860, %v4088
    %v4090 = vpop.f32.mrb[0].mxu0
    %v4091 = vpop.f32.mrb[0].mxu0
    %v4092 = vadd.f32 %v2860, %v4091
    %v4093 = vpop.f32.mrb[0].mxu0
    %4094 = vmatprep.mubr.bf16.mxu0 0
    %4095 = vmatmul.mubr.bf16.gmra.mrb[0].mxu0 %v3184
    %v4096 = vpop.f32.mrb[0].mxu0
    %v4097 = vadd.f32 %v2860, %v4096
    %v4098 = vpop.f32.mrb[0].mxu0
    %v4099 = vpop.f32.mrb[0].mxu0
    %v4100 = vadd.f32 %v2860, %v4099
    %v4101 = vpop.f32.mrb[0].mxu0
    %4102 = vmatprep.mubr.bf16.mxu0 0
    %4103 = vmatmul.mubr.bf16.gmra.mrb[0].mxu0 %v3187
    %v4104 = vpop.f32.mrb[0].mxu0
    %v4105 = vadd.f32 %v2860, %v4104
    %v4106 = vpop.f32.mrb[0].mxu0
    %v4107 = vpop.f32.mrb[0].mxu0
    %v4108 = vadd.f32 %v2860, %v4107
    %v4109 = vpop.f32.mrb[0].mxu0
    %4110 = vmatprep.mubr.bf16.mxu0 0
    %4111 = vmatmul.mubr.bf16.gmra.mrb[0].mxu0 %v3190
    %v4112 = vpop.f32.mrb[0].mxu0
    %v4113 = vadd.f32 %v2860, %v4112
    %v4114 = vpop.f32.mrb[0].mxu0
    %v4115 = vpop.f32.mrb[0].mxu0
    %v4116 = vadd.f32 %v2860, %v4115
    %v4117 = vpop.f32.mrb[0].mxu0
    %4118 = vmatprep.mubr.bf16.mxu0 0
    %4119 = vmatmul.mubr.bf16.gmra.mrb[0].mxu0 %v3193
    %v4120 = vpop.f32.mrb[0].mxu0
    %v4121 = vadd.f32 %v2860, %v4120
    %v4122 = vpop.f32.mrb[0].mxu0
    %v4123 = vpop.f32.mrb[0].mxu0
    %v4124 = vadd.f32 %v2860, %v4123
    %v4125 = vpop.f32.mrb[0].mxu0
    %4126 = vmatprep.mubr.bf16.mxu0 0
    %4127 = vmatmul.mubr.bf16.gmra.mrb[0].mxu0 %v3196
    %v4128 = vpop.f32.mrb[0].mxu0
    %v4129 = vadd.f32 %v2860, %v4128
    %v4130 = vpop.f32.mrb[0].mxu0
    %v4131 = vpop.f32.mrb[0].mxu0
    %v4132 = vadd.f32 %v2860, %v4131
    %v4133 = vpop.f32.mrb[0].mxu0
    %4134 = vmatprep.mubr.bf16.mxu0 0
    %4135 = vmatmul.mubr.bf16.gmra.mrb[0].mxu0 %v3199
    %v4136 = vpop.f32.mrb[0].mxu0
    %v4137 = vadd.f32 %v2860, %v4136
    %v4138 = vpop.f32.mrb[0].mxu0
    %v4139 = vpop.f32.mrb[0].mxu0
    %v4140 = vadd.f32 %v2860, %v4139
    %v4141 = vpop.f32.mrb[0].mxu0
    %4142 = vmatprep.mubr.bf16.mxu0 0
    %4143 = vmatmul.mubr.bf16.gmra.mrb[0].mxu0 %v3202
    %v4144 = vpop.f32.mrb[0].mxu0
    %v4145 = vadd.f32 %v2860, %v4144
    %v4146 = vpop.f32.mrb[0].mxu0
    %v4147 = vpop.f32.mrb[0].mxu0
    %v4148 = vadd.f32 %v2860, %v4147
    %v4149 = vpop.f32.mrb[0].mxu0
    %4150 = vmatprep.mubr.bf16.mxu0 0
    %4151 = vmatmul.mubr.bf16.gmra.mrb[0].mxu0 %v3205
    %v4152 = vpop.f32.mrb[0].mxu0
    %v4153 = vadd.f32 %v2860, %v4152
    %v4154 = vpop.f32.mrb[0].mxu0
    %v4155 = vpop.f32.mrb[0].mxu0
    %v4156 = vadd.f32 %v2860, %v4155
    %v4157 = vpop.f32.mrb[0].mxu0
    %4158 = vmatprep.mubr.bf16.mxu0 0
    %4159 = vmatmul.mubr.bf16.gmra.mrb[0].mxu0 %v3208
    %v4160 = vpop.f32.mrb[0].mxu0
    %v4161 = vadd.f32 %v2860, %v4160
    %v4162 = vpop.f32.mrb[0].mxu0
    %v4163 = vpop.f32.mrb[0].mxu0
    %v4164 = vadd.f32 %v2860, %v4163
    %v4165 = vpop.f32.mrb[0].mxu0
    %4166 = vmatprep.mubr.bf16.mxu0 0
    %4167 = vmatmul.mubr.bf16.gmra.mrb[0].mxu0 %v3211
    %v4168 = vpop.f32.mrb[0].mxu0
    %v4169 = vadd.f32 %v2860, %v4168
    %v4170 = vpop.f32.mrb[0].mxu0
    %v4171 = vpop.f32.mrb[0].mxu0
    %v4172 = vadd.f32 %v2860, %v4171
    %v4173 = vpop.f32.mrb[0].mxu0
    %4174 = vmatprep.mubr.bf16.mxu0 0
    %4175 = vmatmul.mubr.bf16.gmra.mrb[0].mxu0 %v3214
    %v4176 = vpop.f32.mrb[0].mxu0
    %v4177 = vadd.f32 %v2860, %v4176
    %v4178 = vpop.f32.mrb[0].mxu0
    %v4179 = vpop.f32.mrb[0].mxu0
    %v4180 = vadd.f32 %v2860, %v4179
    %v4181 = vpop.f32.mrb[0].mxu0
    %4182 = vmatprep.mubr.bf16.mxu0 0
    %4183 = vmatmul.mubr.bf16.gmra.mrb[0].mxu0 %v3217
    %v4184 = vpop.f32.mrb[0].mxu0
    %v4185 = vadd.f32 %v2860, %v4184
    %v4186 = vpop.f32.mrb[0].mxu0
    %v4187 = vpop.f32.mrb[0].mxu0
    %v4188 = vadd.f32 %v2860, %v4187
    %v4189 = vpop.f32.mrb[0].mxu0
    %4190 = vmatprep.mubr.bf16.mxu0 0
    %4191 = vmatmul.mubr.bf16.gmra.mrb[0].mxu0 %v3220
    %v4192 = vpop.f32.mrb[0].mxu0
    %v4193 = vadd.f32 %v2860, %v4192
    %v4194 = vpop.f32.mrb[0].mxu0
    %v4195 = vpop.f32.mrb[0].mxu0
    %v4196 = vadd.f32 %v2860, %v4195
    %v4197 = vpop.f32.mrb[0].mxu0
    %4198 = vmatprep.mubr.bf16.mxu0 0
    %4199 = vmatmul.mubr.bf16.gmra.mrb[0].mxu0 %v3223
    %v4200 = vpop.f32.mrb[0].mxu0
    %v4201 = vadd.f32 %v2860, %v4200
    %v4202 = vpop.f32.mrb[0].mxu0
    %v4203 = vpop.f32.mrb[0].mxu0
    %v4204 = vadd.f32 %v2860, %v4203
    %v4205 = vpop.f32.mrb[0].mxu0
    %4206 = vmatprep.mubr.bf16.mxu0 0
    %4207 = vmatmul.mubr.bf16.gmra.mrb[0].mxu0 %v3226
    %v4208 = vpop.f32.mrb[0].mxu0
    %v4209 = vadd.f32 %v2860, %v4208
    %v4210 = vpop.f32.mrb[0].mxu0
    %v4211 = vpop.f32.mrb[0].mxu0
    %v4212 = vadd.f32 %v2860, %v4211
    %v4213 = vpop.f32.mrb[0].mxu0
    %4214 = vmatprep.mubr.bf16.mxu0 0
    %4215 = vmatmul.mubr.bf16.gmra.mrb[0].mxu0 %v3229
    %v4216 = vpop.f32.mrb[0].mxu0
    %v4217 = vadd.f32 %v2860, %v4216
    %v4218 = vpop.f32.mrb[0].mxu0
    %v4219 = vpop.f32.mrb[0].mxu0
    %v4220 = vadd.f32 %v2860, %v4219
    %v4221 = vpop.f32.mrb[0].mxu0
    %4222 = vmatprep.mubr.bf16.mxu0 0
    %4223 = vmatmul.mubr.bf16.gmra.mrb[0].mxu0 %v3232
    %v4224 = vpop.f32.mrb[0].mxu0
    %v4225 = vadd.f32 %v2860, %v4224
    %v4226 = vpop.f32.mrb[0].mxu0
    %v4227 = vpop.f32.mrb[0].mxu0
    %v4228 = vadd.f32 %v2860, %v4227
    %v4229 = vpop.f32.mrb[0].mxu0
    %4230 = vmatprep.mubr.bf16.mxu0 0
    %4231 = vmatmul.mubr.bf16.gmra.mrb[0].mxu0 %v3235
    %v4232 = vpop.f32.mrb[0].mxu0
    %v4233 = vadd.f32 %v2860, %v4232
    %v4234 = vpop.f32.mrb[0].mxu0
    %v4235 = vpop.f32.mrb[0].mxu0
    %v4236 = vadd.f32 %v2860, %v4235
    %v4237 = vpop.f32.mrb[0].mxu0
    %4238 = vmatprep.mubr.bf16.mxu0 0
    %4239 = vmatmul.mubr.bf16.gmra.mrb[0].mxu0 %v3238
    %v4240 = vpop.f32.mrb[0].mxu0
    %v4241 = vadd.f32 %v2860, %v4240
    %v4242 = vpop.f32.mrb[0].mxu0
    %v4243 = vpop.f32.mrb[0].mxu0
    %v4244 = vadd.f32 %v2860, %v4243
    %v4245 = vpop.f32.mrb[0].mxu0
    %4246 = vmatprep.mubr.bf16.mxu0 0
    %4247 = vmatmul.mubr.bf16.gmra.mrb[0].mxu0 %v3241
    %v4248 = vpop.f32.mrb[0].mxu0
    %v4249 = vadd.f32 %v2860, %v4248
    %v4250 = vpop.f32.mrb[0].mxu0
    %v4251 = vpop.f32.mrb[0].mxu0
    %v4252 = vadd.f32 %v2860, %v4251
    %v4253 = vpop.f32.mrb[0].mxu0
    %4254 = vmatprep.mubr.bf16.mxu0 0
    %4255 = vmatmul.mubr.bf16.gmra.mrb[0].mxu0 %v3244
    %v4256 = vpop.f32.mrb[0].mxu0
    %v4257 = vadd.f32 %v2860, %v4256
    %v4258 = vpop.f32.mrb[0].mxu0
    %v4259 = vpop.f32.mrb[0].mxu0
    %v4260 = vadd.f32 %v2860, %v4259
    %v4261 = vpop.f32.mrb[0].mxu0
    %4262 = vmatprep.mubr.bf16.mxu0 0
    %4263 = vmatmul.mubr.bf16.gmra.mrb[0].mxu0 %v3247
    %v4264 = vpop.f32.mrb[0].mxu0
    %v4265 = vadd.f32 %v2860, %v4264
    %v4266 = vpop.f32.mrb[0].mxu0
    %v4267 = vpop.f32.mrb[0].mxu0
    %v4268 = vadd.f32 %v2860, %v4267
    %v4269 = vpop.f32.mrb[0].mxu0
    %4270 = vmatprep.mubr.bf16.mxu0 0
    %4271 = vmatmul.mubr.bf16.gmra.mrb[0].mxu0 %v3250
    %v4272 = vpop.f32.mrb[0].mxu0
    %v4273 = vadd.f32 %v2860, %v4272
    %v4274 = vpop.f32.mrb[0].mxu0
    %v4275 = vpop.f32.mrb[0].mxu0
    %v4276 = vadd.f32 %v2860, %v4275
    %v4277 = vpop.f32.mrb[0].mxu0
    %4278 = vmatprep.mubr.bf16.mxu0 0
    %4279 = vmatmul.mubr.bf16.gmra.mrb[0].mxu0 %v3253
    %v4280 = vpop.f32.mrb[0].mxu0
    %v4281 = vadd.f32 %v2860, %v4280
    %v4282 = vpop.f32.mrb[0].mxu0
    %v4283 = vpop.f32.mrb[0].mxu0
    %v4284 = vadd.f32 %v2860, %v4283
    %v4285 = vpop.f32.mrb[0].mxu0
    %4286 = vmatprep.mubr.bf16.mxu0 0
    %4287 = vmatmul.mubr.bf16.gmra.mrb[0].mxu0 %v3256
    %v4288 = vpop.f32.mrb[0].mxu0
    %v4289 = vadd.f32 %v2860, %v4288
    %v4290 = vpop.f32.mrb[0].mxu0
    %v4291 = vpop.f32.mrb[0].mxu0
    %v4292 = vadd.f32 %v2860, %v4291
    %v4293 = vpop.f32.mrb[0].mxu0
    %4294 = vmatprep.mubr.bf16.mxu0 0
    %4295 = vmatmul.mubr.bf16.gmra.mrb[0].mxu0 %v3259
    %v4296 = vpop.f32.mrb[0].mxu0
    %v4297 = vadd.f32 %v2860, %v4296
    %v4298 = vpop.f32.mrb[0].mxu0
    %v4299 = vpop.f32.mrb[0].mxu0
    %v4300 = vadd.f32 %v2860, %v4299
    %v4301 = vpop.f32.mrb[0].mxu0
    %4302 = vmatprep.mubr.bf16.mxu0 0
    %4303 = vmatmul.mubr.bf16.gmra.mrb[0].mxu0 %v3262
    %v4304 = vpop.f32.mrb[0].mxu0
    %v4305 = vadd.f32 %v2860, %v4304
    %v4306 = vpop.f32.mrb[0].mxu0
    %v4307 = vpop.f32.mrb[0].mxu0
    %v4308 = vadd.f32 %v2860, %v4307
    %v4309 = vpop.f32.mrb[0].mxu0
    %4310 = vmatprep.mubr.bf16.mxu0 0
    %4311 = vmatmul.mubr.bf16.gmra.mrb[0].mxu0 %v3265
    %v4312 = vpop.f32.mrb[0].mxu0
    %v4313 = vadd.f32 %v2860, %v4312
    %v4314 = vpop.f32.mrb[0].mxu0
    %v4315 = vpop.f32.mrb[0].mxu0
    %v4316 = vadd.f32 %v2860, %v4315
    %v4317 = vpop.f32.mrb[0].mxu0
    %4318 = vmatprep.mubr.bf16.mxu0 0
    %4319 = vmatmul.mubr.bf16.gmra.mrb[0].mxu0 %v3268
    %v4320 = vpop.f32.mrb[0].mxu0
    %v4321 = vadd.f32 %v2860, %v4320
    %v4322 = vpop.f32.mrb[0].mxu0
    %v4323 = vpop.f32.mrb[0].mxu0
    %v4324 = vadd.f32 %v2860, %v4323
    %v4325 = vpop.f32.mrb[0].mxu0
    %4326 = vdwg.mxu0
    %v4327 = vmax.f32 %v3305, 0.0
    %v4328 = vmax.f32 %v3308, 0.0
    %v4329 = vmax.f32 %v3313, 0.0
    %v4330 = vmax.f32 %v3316, 0.0
    %v4331 = vmax.f32 %v3321, 0.0
    %v4332 = vmax.f32 %v3324, 0.0
    %v4333 = vmax.f32 %v3329, 0.0
    %v4334 = vmax.f32 %v3332, 0.0
    %v4335 = vmax.f32 %v3337, 0.0
    %v4336 = vmax.f32 %v3340, 0.0
    %v4337 = vmax.f32 %v3345, 0.0
    %v4338 = vmax.f32 %v3348, 0.0
    %v4339 = vmax.f32 %v3353, 0.0
    %v4340 = vmax.f32 %v3356, 0.0
    %v4341 = vmax.f32 %v3361, 0.0
    %v4342 = vmax.f32 %v3364, 0.0
    %v4343 = vmax.f32 %v3369, 0.0
    %v4344 = vmax.f32 %v3372, 0.0
    %v4345 = vmax.f32 %v3377, 0.0
    %v4346 = vmax.f32 %v3380, 0.0
    %v4347 = vmax.f32 %v3385, 0.0
    %v4348 = vmax.f32 %v3388, 0.0
    %v4349 = vmax.f32 %v3393, 0.0
    %v4350 = vmax.f32 %v3396, 0.0
    %v4351 = vmax.f32 %v3401, 0.0
    %v4352 = vmax.f32 %v3404, 0.0
    %v4353 = vmax.f32 %v3409, 0.0
    %v4354 = vmax.f32 %v3412, 0.0
    %v4355 = vmax.f32 %v3417, 0.0
    %v4356 = vmax.f32 %v3420, 0.0
    %v4357 = vmax.f32 %v3425, 0.0
    %v4358 = vmax.f32 %v3428, 0.0
    %v4359 = vmax.f32 %v3433, 0.0
    %v4360 = vmax.f32 %v3436, 0.0
    %v4361 = vmax.f32 %v3441, 0.0
    %v4362 = vmax.f32 %v3444, 0.0
    %v4363 = vmax.f32 %v3449, 0.0
    %v4364 = vmax.f32 %v3452, 0.0
    %v4365 = vmax.f32 %v3457, 0.0
    %v4366 = vmax.f32 %v3460, 0.0
    %v4367 = vmax.f32 %v3465, 0.0
    %v4368 = vmax.f32 %v3468, 0.0
    %v4369 = vmax.f32 %v3473, 0.0
    %v4370 = vmax.f32 %v3476, 0.0
    %v4371 = vmax.f32 %v3481, 0.0
    %v4372 = vmax.f32 %v3484, 0.0
    %v4373 = vmax.f32 %v3489, 0.0
    %v4374 = vmax.f32 %v3492, 0.0
    %v4375 = vmax.f32 %v3497, 0.0
    %v4376 = vmax.f32 %v3500, 0.0
    %v4377 = vmax.f32 %v3505, 0.0
    %v4378 = vmax.f32 %v3508, 0.0
    %v4379 = vmax.f32 %v3513, 0.0
    %v4380 = vmax.f32 %v3516, 0.0
    %v4381 = vmax.f32 %v3521, 0.0
    %v4382 = vmax.f32 %v3524, 0.0
    %v4383 = vmax.f32 %v3529, 0.0
    %v4384 = vmax.f32 %v3532, 0.0
    %v4385 = vmax.f32 %v3537, 0.0
    %v4386 = vmax.f32 %v3540, 0.0
    %v4387 = vmax.f32 %v3545, 0.0
    %v4388 = vmax.f32 %v3548, 0.0
    %v4389 = vmax.f32 %v3553, 0.0
    %v4390 = vmax.f32 %v3556, 0.0
    %v4391 = vmax.f32 %v3561, 0.0
    %v4392 = vmax.f32 %v3564, 0.0
    %v4393 = vmax.f32 %v3569, 0.0
    %v4394 = vmax.f32 %v3572, 0.0
    %v4395 = vmax.f32 %v3577, 0.0
    %v4396 = vmax.f32 %v3580, 0.0
    %v4397 = vmax.f32 %v3585, 0.0
    %v4398 = vmax.f32 %v3588, 0.0
    %v4399 = vmax.f32 %v3593, 0.0
    %v4400 = vmax.f32 %v3596, 0.0
    %v4401 = vmax.f32 %v3601, 0.0
    %v4402 = vmax.f32 %v3604, 0.0
    %v4403 = vmax.f32 %v3609, 0.0
    %v4404 = vmax.f32 %v3612, 0.0
    %v4405 = vmax.f32 %v3617, 0.0
    %v4406 = vmax.f32 %v3620, 0.0
    %v4407 = vmax.f32 %v3625, 0.0
    %v4408 = vmax.f32 %v3628, 0.0
    %v4409 = vmax.f32 %v3633, 0.0
    %v4410 = vmax.f32 %v3636, 0.0
    %v4411 = vmax.f32 %v3641, 0.0
    %v4412 = vmax.f32 %v3644, 0.0
    %v4413 = vmax.f32 %v3649, 0.0
    %v4414 = vmax.f32 %v3652, 0.0
    %v4415 = vmax.f32 %v3657, 0.0
    %v4416 = vmax.f32 %v3660, 0.0
    %v4417 = vmax.f32 %v3665, 0.0
    %v4418 = vmax.f32 %v3668, 0.0
    %v4419 = vmax.f32 %v3673, 0.0
    %v4420 = vmax.f32 %v3676, 0.0
    %v4421 = vmax.f32 %v3681, 0.0
    %v4422 = vmax.f32 %v3684, 0.0
    %v4423 = vmax.f32 %v3689, 0.0
    %v4424 = vmax.f32 %v3692, 0.0
    %v4425 = vmax.f32 %v3697, 0.0
    %v4426 = vmax.f32 %v3700, 0.0
    %v4427 = vmax.f32 %v3705, 0.0
    %v4428 = vmax.f32 %v3708, 0.0
    %v4429 = vmax.f32 %v3713, 0.0
    %v4430 = vmax.f32 %v3716, 0.0
    %v4431 = vmax.f32 %v3721, 0.0
    %v4432 = vmax.f32 %v3724, 0.0
    %v4433 = vmax.f32 %v3729, 0.0
    %v4434 = vmax.f32 %v3732, 0.0
    %v4435 = vmax.f32 %v3737, 0.0
    %v4436 = vmax.f32 %v3740, 0.0
    %v4437 = vmax.f32 %v3745, 0.0
    %v4438 = vmax.f32 %v3748, 0.0
    %v4439 = vmax.f32 %v3753, 0.0
    %v4440 = vmax.f32 %v3756, 0.0
    %v4441 = vmax.f32 %v3761, 0.0
    %v4442 = vmax.f32 %v3764, 0.0
    %v4443 = vmax.f32 %v3769, 0.0
    %v4444 = vmax.f32 %v3772, 0.0
    %v4445 = vmax.f32 %v3777, 0.0
    %v4446 = vmax.f32 %v3780, 0.0
    %v4447 = vmax.f32 %v3785, 0.0
    %v4448 = vmax.f32 %v3788, 0.0
    %v4449 = vmax.f32 %v3793, 0.0
    %v4450 = vmax.f32 %v3796, 0.0
    %v4451 = vmax.f32 %v3801, 0.0
    %v4452 = vmax.f32 %v3804, 0.0
    %v4453 = vmax.f32 %v3809, 0.0
    %v4454 = vmax.f32 %v3812, 0.0
    %v4455 = vmax.f32 %v3817, 0.0
    %v4456 = vmax.f32 %v3820, 0.0
    %v4457 = vmax.f32 %v3825, 0.0
    %v4458 = vmax.f32 %v3828, 0.0
    %v4459 = vmax.f32 %v3833, 0.0
    %v4460 = vmax.f32 %v3836, 0.0
    %v4461 = vmax.f32 %v3841, 0.0
    %v4462 = vmax.f32 %v3844, 0.0
    %v4463 = vmax.f32 %v3849, 0.0
    %v4464 = vmax.f32 %v3852, 0.0
    %v4465 = vmax.f32 %v3857, 0.0
    %v4466 = vmax.f32 %v3860, 0.0
    %v4467 = vmax.f32 %v3865, 0.0
    %v4468 = vmax.f32 %v3868, 0.0
    %v4469 = vmax.f32 %v3873, 0.0
    %v4470 = vmax.f32 %v3876, 0.0
    %v4471 = vmax.f32 %v3881, 0.0
    %v4472 = vmax.f32 %v3884, 0.0
    %v4473 = vmax.f32 %v3889, 0.0
    %v4474 = vmax.f32 %v3892, 0.0
    %v4475 = vmax.f32 %v3897, 0.0
    %v4476 = vmax.f32 %v3900, 0.0
    %v4477 = vmax.f32 %v3905, 0.0
    %v4478 = vmax.f32 %v3908, 0.0
    %v4479 = vmax.f32 %v3913, 0.0
    %v4480 = vmax.f32 %v3916, 0.0
    %v4481 = vmax.f32 %v3921, 0.0
    %v4482 = vmax.f32 %v3924, 0.0
    %v4483 = vmax.f32 %v3929, 0.0
    %v4484 = vmax.f32 %v3932, 0.0
    %v4485 = vmax.f32 %v3937, 0.0
    %v4486 = vmax.f32 %v3940, 0.0
    %v4487 = vmax.f32 %v3945, 0.0
    %v4488 = vmax.f32 %v3948, 0.0
    %v4489 = vmax.f32 %v3953, 0.0
    %v4490 = vmax.f32 %v3956, 0.0
    %v4491 = vmax.f32 %v3961, 0.0
    %v4492 = vmax.f32 %v3964, 0.0
    %v4493 = vmax.f32 %v3969, 0.0
    %v4494 = vmax.f32 %v3972, 0.0
    %v4495 = vmax.f32 %v3977, 0.0
    %v4496 = vmax.f32 %v3980, 0.0
    %v4497 = vmax.f32 %v3985, 0.0
    %v4498 = vmax.f32 %v3988, 0.0
    %v4499 = vmax.f32 %v3993, 0.0
    %v4500 = vmax.f32 %v3996, 0.0
    %v4501 = vmax.f32 %v4001, 0.0
    %v4502 = vmax.f32 %v4004, 0.0
    %v4503 = vmax.f32 %v4009, 0.0
    %v4504 = vmax.f32 %v4012, 0.0
    %v4505 = vmax.f32 %v4017, 0.0
    %v4506 = vmax.f32 %v4020, 0.0
    %v4507 = vmax.f32 %v4025, 0.0
    %v4508 = vmax.f32 %v4028, 0.0
    %v4509 = vmax.f32 %v4033, 0.0
    %v4510 = vmax.f32 %v4036, 0.0
    %v4511 = vmax.f32 %v4041, 0.0
    %v4512 = vmax.f32 %v4044, 0.0
    %v4513 = vmax.f32 %v4049, 0.0
    %v4514 = vmax.f32 %v4052, 0.0
    %v4515 = vmax.f32 %v4057, 0.0
    %v4516 = vmax.f32 %v4060, 0.0
    %v4517 = vmax.f32 %v4065, 0.0
    %v4518 = vmax.f32 %v4068, 0.0
    %v4519 = vmax.f32 %v4073, 0.0
    %v4520 = vmax.f32 %v4076, 0.0
    %v4521 = vmax.f32 %v4081, 0.0
    %v4522 = vmax.f32 %v4084, 0.0
    %v4523 = vmax.f32 %v4089, 0.0
    %v4524 = vmax.f32 %v4092, 0.0
    %v4525 = vmax.f32 %v4097, 0.0
    %v4526 = vmax.f32 %v4100, 0.0
    %v4527 = vmax.f32 %v4105, 0.0
    %v4528 = vmax.f32 %v4108, 0.0
    %v4529 = vmax.f32 %v4113, 0.0
    %v4530 = vmax.f32 %v4116, 0.0
    %v4531 = vmax.f32 %v4121, 0.0
    %v4532 = vmax.f32 %v4124, 0.0
    %v4533 = vmax.f32 %v4129, 0.0
    %v4534 = vmax.f32 %v4132, 0.0
    %v4535 = vmax.f32 %v4137, 0.0
    %v4536 = vmax.f32 %v4140, 0.0
    %v4537 = vmax.f32 %v4145, 0.0
    %v4538 = vmax.f32 %v4148, 0.0
    %v4539 = vmax.f32 %v4153, 0.0
    %v4540 = vmax.f32 %v4156, 0.0
    %v4541 = vmax.f32 %v4161, 0.0
    %v4542 = vmax.f32 %v4164, 0.0
    %v4543 = vmax.f32 %v4169, 0.0
    %v4544 = vmax.f32 %v4172, 0.0
    %v4545 = vmax.f32 %v4177, 0.0
    %v4546 = vmax.f32 %v4180, 0.0
    %v4547 = vmax.f32 %v4185, 0.0
    %v4548 = vmax.f32 %v4188, 0.0
    %v4549 = vmax.f32 %v4193, 0.0
    %v4550 = vmax.f32 %v4196, 0.0
    %v4551 = vmax.f32 %v4201, 0.0
    %v4552 = vmax.f32 %v4204, 0.0
    %v4553 = vmax.f32 %v4209, 0.0
    %v4554 = vmax.f32 %v4212, 0.0
    %v4555 = vmax.f32 %v4217, 0.0
    %v4556 = vmax.f32 %v4220, 0.0
    %v4557 = vmax.f32 %v4225, 0.0
    %v4558 = vmax.f32 %v4228, 0.0
    %v4559 = vmax.f32 %v4233, 0.0
    %v4560 = vmax.f32 %v4236, 0.0
    %v4561 = vmax.f32 %v4241, 0.0
    %v4562 = vmax.f32 %v4244, 0.0
    %v4563 = vmax.f32 %v4249, 0.0
    %v4564 = vmax.f32 %v4252, 0.0
    %v4565 = vmax.f32 %v4257, 0.0
    %v4566 = vmax.f32 %v4260, 0.0
    %v4567 = vmax.f32 %v4265, 0.0
    %v4568 = vmax.f32 %v4268, 0.0
    %v4569 = vmax.f32 %v4273, 0.0
    %v4570 = vmax.f32 %v4276, 0.0
    %v4571 = vmax.f32 %v4281, 0.0
    %v4572 = vmax.f32 %v4284, 0.0
    %v4573 = vmax.f32 %v4289, 0.0
    %v4574 = vmax.f32 %v4292, 0.0
    %v4575 = vmax.f32 %v4297, 0.0
    %v4576 = vmax.f32 %v4300, 0.0
    %v4577 = vmax.f32 %v4305, 0.0
    %v4578 = vmax.f32 %v4308, 0.0
    %v4579 = vmax.f32 %v4313, 0.0
    %v4580 = vmax.f32 %v4316, 0.0
    %v4581 = vmax.f32 %v4321, 0.0
    %v4582 = vmax.f32 %v4324, 0.0
    %v4583 = vmax.f32 %v4327, %v4328
    %v4584 = vrot.slane %v4583, 4
    %v4585 = vmax.f32 %v4583, %v4584
    %v4586 = vrot.slane %v4585, 2
    %v4587 = vmax.f32 %v4585, %v4586
    %v4588 = vrot.slane %v4587, 1
    %v4589 = vmax.f32 %v4587, %v4588
    %v4590 = vmax.f32 %v4329, %v4330
    %v4591 = vrot.slane %v4590, 4
    %v4592 = vmax.f32 %v4590, %v4591
    %v4593 = vrot.slane %v4592, 2
    %v4594 = vmax.f32 %v4592, %v4593
    %v4595 = vrot.slane %v4594, 1
    %v4596 = vmax.f32 %v4594, %v4595
    %v4597 = vmax.f32 %v4331, %v4332
    %v4598 = vrot.slane %v4597, 4
    %v4599 = vmax.f32 %v4597, %v4598
    %v4600 = vrot.slane %v4599, 2
    %v4601 = vmax.f32 %v4599, %v4600
    %v4602 = vrot.slane %v4601, 1
    %v4603 = vmax.f32 %v4601, %v4602
    %v4604 = vmax.f32 %v4333, %v4334
    %v4605 = vrot.slane %v4604, 4
    %v4606 = vmax.f32 %v4604, %v4605
    %v4607 = vrot.slane %v4606, 2
    %v4608 = vmax.f32 %v4606, %v4607
    %v4609 = vrot.slane %v4608, 1
    %v4610 = vmax.f32 %v4608, %v4609
    %v4611 = vmax.f32 %v4335, %v4336
    %v4612 = vrot.slane %v4611, 4
    %v4613 = vmax.f32 %v4611, %v4612
    %v4614 = vrot.slane %v4613, 2
    %v4615 = vmax.f32 %v4613, %v4614
    %v4616 = vrot.slane %v4615, 1
    %v4617 = vmax.f32 %v4615, %v4616
    %v4618 = vmax.f32 %v4337, %v4338
    %v4619 = vrot.slane %v4618, 4
    %v4620 = vmax.f32 %v4618, %v4619
    %v4621 = vrot.slane %v4620, 2
    %v4622 = vmax.f32 %v4620, %v4621
    %v4623 = vrot.slane %v4622, 1
    %v4624 = vmax.f32 %v4622, %v4623
    %v4625 = vmax.f32 %v4339, %v4340
    %v4626 = vrot.slane %v4625, 4
    %v4627 = vmax.f32 %v4625, %v4626
    %v4628 = vrot.slane %v4627, 2
    %v4629 = vmax.f32 %v4627, %v4628
    %v4630 = vrot.slane %v4629, 1
    %v4631 = vmax.f32 %v4629, %v4630
    %v4632 = vmax.f32 %v4341, %v4342
    %v4633 = vrot.slane %v4632, 4
    %v4634 = vmax.f32 %v4632, %v4633
    %v4635 = vrot.slane %v4634, 2
    %v4636 = vmax.f32 %v4634, %v4635
    %v4637 = vrot.slane %v4636, 1
    %v4638 = vmax.f32 %v4636, %v4637
    %v4639 = vmax.f32 %v4343, %v4344
    %v4640 = vrot.slane %v4639, 4
    %v4641 = vmax.f32 %v4639, %v4640
    %v4642 = vrot.slane %v4641, 2
    %v4643 = vmax.f32 %v4641, %v4642
    %v4644 = vrot.slane %v4643, 1
    %v4645 = vmax.f32 %v4643, %v4644
    %v4646 = vmax.f32 %v4345, %v4346
    %v4647 = vrot.slane %v4646, 4
    %v4648 = vmax.f32 %v4646, %v4647
    %v4649 = vrot.slane %v4648, 2
    %v4650 = vmax.f32 %v4648, %v4649
    %v4651 = vrot.slane %v4650, 1
    %v4652 = vmax.f32 %v4650, %v4651
    %v4653 = vmax.f32 %v4347, %v4348
    %v4654 = vrot.slane %v4653, 4
    %v4655 = vmax.f32 %v4653, %v4654
    %v4656 = vrot.slane %v4655, 2
    %v4657 = vmax.f32 %v4655, %v4656
    %v4658 = vrot.slane %v4657, 1
    %v4659 = vmax.f32 %v4657, %v4658
    %v4660 = vmax.f32 %v4349, %v4350
    %v4661 = vrot.slane %v4660, 4
    %v4662 = vmax.f32 %v4660, %v4661
    %v4663 = vrot.slane %v4662, 2
    %v4664 = vmax.f32 %v4662, %v4663
    %v4665 = vrot.slane %v4664, 1
    %v4666 = vmax.f32 %v4664, %v4665
    %v4667 = vmax.f32 %v4351, %v4352
    %v4668 = vrot.slane %v4667, 4
    %v4669 = vmax.f32 %v4667, %v4668
    %v4670 = vrot.slane %v4669, 2
    %v4671 = vmax.f32 %v4669, %v4670
    %v4672 = vrot.slane %v4671, 1
    %v4673 = vmax.f32 %v4671, %v4672
    %v4674 = vmax.f32 %v4353, %v4354
    %v4675 = vrot.slane %v4674, 4
    %v4676 = vmax.f32 %v4674, %v4675
    %v4677 = vrot.slane %v4676, 2
    %v4678 = vmax.f32 %v4676, %v4677
    %v4679 = vrot.slane %v4678, 1
    %v4680 = vmax.f32 %v4678, %v4679
    %v4681 = vmax.f32 %v4355, %v4356
    %v4682 = vrot.slane %v4681, 4
    %v4683 = vmax.f32 %v4681, %v4682
    %v4684 = vrot.slane %v4683, 2
    %v4685 = vmax.f32 %v4683, %v4684
    %v4686 = vrot.slane %v4685, 1
    %v4687 = vmax.f32 %v4685, %v4686
    %v4688 = vmax.f32 %v4357, %v4358
    %v4689 = vrot.slane %v4688, 4
    %v4690 = vmax.f32 %v4688, %v4689
    %v4691 = vrot.slane %v4690, 2
    %v4692 = vmax.f32 %v4690, %v4691
    %v4693 = vrot.slane %v4692, 1
    %v4694 = vmax.f32 %v4692, %v4693
    %v4695 = vmax.f32 %v4359, %v4360
    %v4696 = vrot.slane %v4695, 4
    %v4697 = vmax.f32 %v4695, %v4696
    %v4698 = vrot.slane %v4697, 2
    %v4699 = vmax.f32 %v4697, %v4698
    %v4700 = vrot.slane %v4699, 1
    %v4701 = vmax.f32 %v4699, %v4700
    %v4702 = vmax.f32 %v4361, %v4362
    %v4703 = vrot.slane %v4702, 4
    %v4704 = vmax.f32 %v4702, %v4703
    %v4705 = vrot.slane %v4704, 2
    %v4706 = vmax.f32 %v4704, %v4705
    %v4707 = vrot.slane %v4706, 1
    %v4708 = vmax.f32 %v4706, %v4707
    %v4709 = vmax.f32 %v4363, %v4364
    %v4710 = vrot.slane %v4709, 4
    %v4711 = vmax.f32 %v4709, %v4710
    %v4712 = vrot.slane %v4711, 2
    %v4713 = vmax.f32 %v4711, %v4712
    %v4714 = vrot.slane %v4713, 1
    %v4715 = vmax.f32 %v4713, %v4714
    %v4716 = vmax.f32 %v4365, %v4366
    %v4717 = vrot.slane %v4716, 4
    %v4718 = vmax.f32 %v4716, %v4717
    %v4719 = vrot.slane %v4718, 2
    %v4720 = vmax.f32 %v4718, %v4719
    %v4721 = vrot.slane %v4720, 1
    %v4722 = vmax.f32 %v4720, %v4721
    %v4723 = vmax.f32 %v4367, %v4368
    %v4724 = vrot.slane %v4723, 4
    %v4725 = vmax.f32 %v4723, %v4724
    %v4726 = vrot.slane %v4725, 2
    %v4727 = vmax.f32 %v4725, %v4726
    %v4728 = vrot.slane %v4727, 1
    %v4729 = vmax.f32 %v4727, %v4728
    %v4730 = vmax.f32 %v4369, %v4370
    %v4731 = vrot.slane %v4730, 4
    %v4732 = vmax.f32 %v4730, %v4731
    %v4733 = vrot.slane %v4732, 2
    %v4734 = vmax.f32 %v4732, %v4733
    %v4735 = vrot.slane %v4734, 1
    %v4736 = vmax.f32 %v4734, %v4735
    %v4737 = vmax.f32 %v4371, %v4372
    %v4738 = vrot.slane %v4737, 4
    %v4739 = vmax.f32 %v4737, %v4738
    %v4740 = vrot.slane %v4739, 2
    %v4741 = vmax.f32 %v4739, %v4740
    %v4742 = vrot.slane %v4741, 1
    %v4743 = vmax.f32 %v4741, %v4742
    %v4744 = vmax.f32 %v4373, %v4374
    %v4745 = vrot.slane %v4744, 4
    %v4746 = vmax.f32 %v4744, %v4745
    %v4747 = vrot.slane %v4746, 2
    %v4748 = vmax.f32 %v4746, %v4747
    %v4749 = vrot.slane %v4748, 1
    %v4750 = vmax.f32 %v4748, %v4749
    %v4751 = vmax.f32 %v4375, %v4376
    %v4752 = vrot.slane %v4751, 4
    %v4753 = vmax.f32 %v4751, %v4752
    %v4754 = vrot.slane %v4753, 2
    %v4755 = vmax.f32 %v4753, %v4754
    %v4756 = vrot.slane %v4755, 1
    %v4757 = vmax.f32 %v4755, %v4756
    %v4758 = vmax.f32 %v4377, %v4378
    %v4759 = vrot.slane %v4758, 4
    %v4760 = vmax.f32 %v4758, %v4759
    %v4761 = vrot.slane %v4760, 2
    %v4762 = vmax.f32 %v4760, %v4761
    %v4763 = vrot.slane %v4762, 1
    %v4764 = vmax.f32 %v4762, %v4763
    %v4765 = vmax.f32 %v4379, %v4380
    %v4766 = vrot.slane %v4765, 4
    %v4767 = vmax.f32 %v4765, %v4766
    %v4768 = vrot.slane %v4767, 2
    %v4769 = vmax.f32 %v4767, %v4768
    %v4770 = vrot.slane %v4769, 1
    %v4771 = vmax.f32 %v4769, %v4770
    %v4772 = vmax.f32 %v4381, %v4382
    %v4773 = vrot.slane %v4772, 4
    %v4774 = vmax.f32 %v4772, %v4773
    %v4775 = vrot.slane %v4774, 2
    %v4776 = vmax.f32 %v4774, %v4775
    %v4777 = vrot.slane %v4776, 1
    %v4778 = vmax.f32 %v4776, %v4777
    %v4779 = vmax.f32 %v4383, %v4384
    %v4780 = vrot.slane %v4779, 4
    %v4781 = vmax.f32 %v4779, %v4780
    %v4782 = vrot.slane %v4781, 2
    %v4783 = vmax.f32 %v4781, %v4782
    %v4784 = vrot.slane %v4783, 1
    %v4785 = vmax.f32 %v4783, %v4784
    %v4786 = vmax.f32 %v4385, %v4386
    %v4787 = vrot.slane %v4786, 4
    %v4788 = vmax.f32 %v4786, %v4787
    %v4789 = vrot.slane %v4788, 2
    %v4790 = vmax.f32 %v4788, %v4789
    %v4791 = vrot.slane %v4790, 1
    %v4792 = vmax.f32 %v4790, %v4791
    %v4793 = vmax.f32 %v4387, %v4388
    %v4794 = vrot.slane %v4793, 4
    %v4795 = vmax.f32 %v4793, %v4794
    %v4796 = vrot.slane %v4795, 2
    %v4797 = vmax.f32 %v4795, %v4796
    %v4798 = vrot.slane %v4797, 1
    %v4799 = vmax.f32 %v4797, %v4798
    %v4800 = vmax.f32 %v4389, %v4390
    %v4801 = vrot.slane %v4800, 4
    %v4802 = vmax.f32 %v4800, %v4801
    %v4803 = vrot.slane %v4802, 2
    %v4804 = vmax.f32 %v4802, %v4803
    %v4805 = vrot.slane %v4804, 1
    %v4806 = vmax.f32 %v4804, %v4805
    %v4807 = vmax.f32 %v4391, %v4392
    %v4808 = vrot.slane %v4807, 4
    %v4809 = vmax.f32 %v4807, %v4808
    %v4810 = vrot.slane %v4809, 2
    %v4811 = vmax.f32 %v4809, %v4810
    %v4812 = vrot.slane %v4811, 1
    %v4813 = vmax.f32 %v4811, %v4812
    %v4814 = vmax.f32 %v4393, %v4394
    %v4815 = vrot.slane %v4814, 4
    %v4816 = vmax.f32 %v4814, %v4815
    %v4817 = vrot.slane %v4816, 2
    %v4818 = vmax.f32 %v4816, %v4817
    %v4819 = vrot.slane %v4818, 1
    %v4820 = vmax.f32 %v4818, %v4819
    %v4821 = vmax.f32 %v4395, %v4396
    %v4822 = vrot.slane %v4821, 4
    %v4823 = vmax.f32 %v4821, %v4822
    %v4824 = vrot.slane %v4823, 2
    %v4825 = vmax.f32 %v4823, %v4824
    %v4826 = vrot.slane %v4825, 1
    %v4827 = vmax.f32 %v4825, %v4826
    %v4828 = vmax.f32 %v4397, %v4398
    %v4829 = vrot.slane %v4828, 4
    %v4830 = vmax.f32 %v4828, %v4829
    %v4831 = vrot.slane %v4830, 2
    %v4832 = vmax.f32 %v4830, %v4831
    %v4833 = vrot.slane %v4832, 1
    %v4834 = vmax.f32 %v4832, %v4833
    %v4835 = vmax.f32 %v4399, %v4400
    %v4836 = vrot.slane %v4835, 4
    %v4837 = vmax.f32 %v4835, %v4836
    %v4838 = vrot.slane %v4837, 2
    %v4839 = vmax.f32 %v4837, %v4838
    %v4840 = vrot.slane %v4839, 1
    %v4841 = vmax.f32 %v4839, %v4840
    %v4842 = vmax.f32 %v4401, %v4402
    %v4843 = vrot.slane %v4842, 4
    %v4844 = vmax.f32 %v4842, %v4843
    %v4845 = vrot.slane %v4844, 2
    %v4846 = vmax.f32 %v4844, %v4845
    %v4847 = vrot.slane %v4846, 1
    %v4848 = vmax.f32 %v4846, %v4847
    %v4849 = vmax.f32 %v4403, %v4404
    %v4850 = vrot.slane %v4849, 4
    %v4851 = vmax.f32 %v4849, %v4850
    %v4852 = vrot.slane %v4851, 2
    %v4853 = vmax.f32 %v4851, %v4852
    %v4854 = vrot.slane %v4853, 1
    %v4855 = vmax.f32 %v4853, %v4854
    %v4856 = vmax.f32 %v4405, %v4406
    %v4857 = vrot.slane %v4856, 4
    %v4858 = vmax.f32 %v4856, %v4857
    %v4859 = vrot.slane %v4858, 2
    %v4860 = vmax.f32 %v4858, %v4859
    %v4861 = vrot.slane %v4860, 1
    %v4862 = vmax.f32 %v4860, %v4861
    %v4863 = vmax.f32 %v4407, %v4408
    %v4864 = vrot.slane %v4863, 4
    %v4865 = vmax.f32 %v4863, %v4864
    %v4866 = vrot.slane %v4865, 2
    %v4867 = vmax.f32 %v4865, %v4866
    %v4868 = vrot.slane %v4867, 1
    %v4869 = vmax.f32 %v4867, %v4868
    %v4870 = vmax.f32 %v4409, %v4410
    %v4871 = vrot.slane %v4870, 4
    %v4872 = vmax.f32 %v4870, %v4871
    %v4873 = vrot.slane %v4872, 2
    %v4874 = vmax.f32 %v4872, %v4873
    %v4875 = vrot.slane %v4874, 1
    %v4876 = vmax.f32 %v4874, %v4875
    %v4877 = vmax.f32 %v4411, %v4412
    %v4878 = vrot.slane %v4877, 4
    %v4879 = vmax.f32 %v4877, %v4878
    %v4880 = vrot.slane %v4879, 2
    %v4881 = vmax.f32 %v4879, %v4880
    %v4882 = vrot.slane %v4881, 1
    %v4883 = vmax.f32 %v4881, %v4882
    %v4884 = vmax.f32 %v4413, %v4414
    %v4885 = vrot.slane %v4884, 4
    %v4886 = vmax.f32 %v4884, %v4885
    %v4887 = vrot.slane %v4886, 2
    %v4888 = vmax.f32 %v4886, %v4887
    %v4889 = vrot.slane %v4888, 1
    %v4890 = vmax.f32 %v4888, %v4889
    %v4891 = vmax.f32 %v4415, %v4416
    %v4892 = vrot.slane %v4891, 4
    %v4893 = vmax.f32 %v4891, %v4892
    %v4894 = vrot.slane %v4893, 2
    %v4895 = vmax.f32 %v4893, %v4894
    %v4896 = vrot.slane %v4895, 1
    %v4897 = vmax.f32 %v4895, %v4896
    %v4898 = vmax.f32 %v4417, %v4418
    %v4899 = vrot.slane %v4898, 4
    %v4900 = vmax.f32 %v4898, %v4899
    %v4901 = vrot.slane %v4900, 2
    %v4902 = vmax.f32 %v4900, %v4901
    %v4903 = vrot.slane %v4902, 1
    %v4904 = vmax.f32 %v4902, %v4903
    %v4905 = vmax.f32 %v4419, %v4420
    %v4906 = vrot.slane %v4905, 4
    %v4907 = vmax.f32 %v4905, %v4906
    %v4908 = vrot.slane %v4907, 2
    %v4909 = vmax.f32 %v4907, %v4908
    %v4910 = vrot.slane %v4909, 1
    %v4911 = vmax.f32 %v4909, %v4910
    %v4912 = vmax.f32 %v4421, %v4422
    %v4913 = vrot.slane %v4912, 4
    %v4914 = vmax.f32 %v4912, %v4913
    %v4915 = vrot.slane %v4914, 2
    %v4916 = vmax.f32 %v4914, %v4915
    %v4917 = vrot.slane %v4916, 1
    %v4918 = vmax.f32 %v4916, %v4917
    %v4919 = vmax.f32 %v4423, %v4424
    %v4920 = vrot.slane %v4919, 4
    %v4921 = vmax.f32 %v4919, %v4920
    %v4922 = vrot.slane %v4921, 2
    %v4923 = vmax.f32 %v4921, %v4922
    %v4924 = vrot.slane %v4923, 1
    %v4925 = vmax.f32 %v4923, %v4924
    %v4926 = vmax.f32 %v4425, %v4426
    %v4927 = vrot.slane %v4926, 4
    %v4928 = vmax.f32 %v4926, %v4927
    %v4929 = vrot.slane %v4928, 2
    %v4930 = vmax.f32 %v4928, %v4929
    %v4931 = vrot.slane %v4930, 1
    %v4932 = vmax.f32 %v4930, %v4931
    %v4933 = vmax.f32 %v4427, %v4428
    %v4934 = vrot.slane %v4933, 4
    %v4935 = vmax.f32 %v4933, %v4934
    %v4936 = vrot.slane %v4935, 2
    %v4937 = vmax.f32 %v4935, %v4936
    %v4938 = vrot.slane %v4937, 1
    %v4939 = vmax.f32 %v4937, %v4938
    %v4940 = vmax.f32 %v4429, %v4430
    %v4941 = vrot.slane %v4940, 4
    %v4942 = vmax.f32 %v4940, %v4941
    %v4943 = vrot.slane %v4942, 2
    %v4944 = vmax.f32 %v4942, %v4943
    %v4945 = vrot.slane %v4944, 1
    %v4946 = vmax.f32 %v4944, %v4945
    %v4947 = vmax.f32 %v4431, %v4432
    %v4948 = vrot.slane %v4947, 4
    %v4949 = vmax.f32 %v4947, %v4948
    %v4950 = vrot.slane %v4949, 2
    %v4951 = vmax.f32 %v4949, %v4950
    %v4952 = vrot.slane %v4951, 1
    %v4953 = vmax.f32 %v4951, %v4952
    %v4954 = vmax.f32 %v4433, %v4434
    %v4955 = vrot.slane %v4954, 4
    %v4956 = vmax.f32 %v4954, %v4955
    %v4957 = vrot.slane %v4956, 2
    %v4958 = vmax.f32 %v4956, %v4957
    %v4959 = vrot.slane %v4958, 1
    %v4960 = vmax.f32 %v4958, %v4959
    %v4961 = vmax.f32 %v4435, %v4436
    %v4962 = vrot.slane %v4961, 4
    %v4963 = vmax.f32 %v4961, %v4962
    %v4964 = vrot.slane %v4963, 2
    %v4965 = vmax.f32 %v4963, %v4964
    %v4966 = vrot.slane %v4965, 1
    %v4967 = vmax.f32 %v4965, %v4966
    %v4968 = vmax.f32 %v4437, %v4438
    %v4969 = vrot.slane %v4968, 4
    %v4970 = vmax.f32 %v4968, %v4969
    %v4971 = vrot.slane %v4970, 2
    %v4972 = vmax.f32 %v4970, %v4971
    %v4973 = vrot.slane %v4972, 1
    %v4974 = vmax.f32 %v4972, %v4973
    %v4975 = vmax.f32 %v4439, %v4440
    %v4976 = vrot.slane %v4975, 4
    %v4977 = vmax.f32 %v4975, %v4976
    %v4978 = vrot.slane %v4977, 2
    %v4979 = vmax.f32 %v4977, %v4978
    %v4980 = vrot.slane %v4979, 1
    %v4981 = vmax.f32 %v4979, %v4980
    %v4982 = vmax.f32 %v4441, %v4442
    %v4983 = vrot.slane %v4982, 4
    %v4984 = vmax.f32 %v4982, %v4983
    %v4985 = vrot.slane %v4984, 2
    %v4986 = vmax.f32 %v4984, %v4985
    %v4987 = vrot.slane %v4986, 1
    %v4988 = vmax.f32 %v4986, %v4987
    %v4989 = vmax.f32 %v4443, %v4444
    %v4990 = vrot.slane %v4989, 4
    %v4991 = vmax.f32 %v4989, %v4990
    %v4992 = vrot.slane %v4991, 2
    %v4993 = vmax.f32 %v4991, %v4992
    %v4994 = vrot.slane %v4993, 1
    %v4995 = vmax.f32 %v4993, %v4994
    %v4996 = vmax.f32 %v4445, %v4446
    %v4997 = vrot.slane %v4996, 4
    %v4998 = vmax.f32 %v4996, %v4997
    %v4999 = vrot.slane %v4998, 2
    %v5000 = vmax.f32 %v4998, %v4999
    %v5001 = vrot.slane %v5000, 1
    %v5002 = vmax.f32 %v5000, %v5001
    %v5003 = vmax.f32 %v4447, %v4448
    %v5004 = vrot.slane %v5003, 4
    %v5005 = vmax.f32 %v5003, %v5004
    %v5006 = vrot.slane %v5005, 2
    %v5007 = vmax.f32 %v5005, %v5006
    %v5008 = vrot.slane %v5007, 1
    %v5009 = vmax.f32 %v5007, %v5008
    %v5010 = vmax.f32 %v4449, %v4450
    %v5011 = vrot.slane %v5010, 4
    %v5012 = vmax.f32 %v5010, %v5011
    %v5013 = vrot.slane %v5012, 2
    %v5014 = vmax.f32 %v5012, %v5013
    %v5015 = vrot.slane %v5014, 1
    %v5016 = vmax.f32 %v5014, %v5015
    %v5017 = vmax.f32 %v4451, %v4452
    %v5018 = vrot.slane %v5017, 4
    %v5019 = vmax.f32 %v5017, %v5018
    %v5020 = vrot.slane %v5019, 2
    %v5021 = vmax.f32 %v5019, %v5020
    %v5022 = vrot.slane %v5021, 1
    %v5023 = vmax.f32 %v5021, %v5022
    %v5024 = vmax.f32 %v4453, %v4454
    %v5025 = vrot.slane %v5024, 4
    %v5026 = vmax.f32 %v5024, %v5025
    %v5027 = vrot.slane %v5026, 2
    %v5028 = vmax.f32 %v5026, %v5027
    %v5029 = vrot.slane %v5028, 1
    %v5030 = vmax.f32 %v5028, %v5029
    %v5031 = vmax.f32 %v4455, %v4456
    %v5032 = vrot.slane %v5031, 4
    %v5033 = vmax.f32 %v5031, %v5032
    %v5034 = vrot.slane %v5033, 2
    %v5035 = vmax.f32 %v5033, %v5034
    %v5036 = vrot.slane %v5035, 1
    %v5037 = vmax.f32 %v5035, %v5036
    %v5038 = vmax.f32 %v4457, %v4458
    %v5039 = vrot.slane %v5038, 4
    %v5040 = vmax.f32 %v5038, %v5039
    %v5041 = vrot.slane %v5040, 2
    %v5042 = vmax.f32 %v5040, %v5041
    %v5043 = vrot.slane %v5042, 1
    %v5044 = vmax.f32 %v5042, %v5043
    %v5045 = vmax.f32 %v4459, %v4460
    %v5046 = vrot.slane %v5045, 4
    %v5047 = vmax.f32 %v5045, %v5046
    %v5048 = vrot.slane %v5047, 2
    %v5049 = vmax.f32 %v5047, %v5048
    %v5050 = vrot.slane %v5049, 1
    %v5051 = vmax.f32 %v5049, %v5050
    %v5052 = vmax.f32 %v4461, %v4462
    %v5053 = vrot.slane %v5052, 4
    %v5054 = vmax.f32 %v5052, %v5053
    %v5055 = vrot.slane %v5054, 2
    %v5056 = vmax.f32 %v5054, %v5055
    %v5057 = vrot.slane %v5056, 1
    %v5058 = vmax.f32 %v5056, %v5057
    %v5059 = vmax.f32 %v4463, %v4464
    %v5060 = vrot.slane %v5059, 4
    %v5061 = vmax.f32 %v5059, %v5060
    %v5062 = vrot.slane %v5061, 2
    %v5063 = vmax.f32 %v5061, %v5062
    %v5064 = vrot.slane %v5063, 1
    %v5065 = vmax.f32 %v5063, %v5064
    %v5066 = vmax.f32 %v4465, %v4466
    %v5067 = vrot.slane %v5066, 4
    %v5068 = vmax.f32 %v5066, %v5067
    %v5069 = vrot.slane %v5068, 2
    %v5070 = vmax.f32 %v5068, %v5069
    %v5071 = vrot.slane %v5070, 1
    %v5072 = vmax.f32 %v5070, %v5071
    %v5073 = vmax.f32 %v4467, %v4468
    %v5074 = vrot.slane %v5073, 4
    %v5075 = vmax.f32 %v5073, %v5074
    %v5076 = vrot.slane %v5075, 2
    %v5077 = vmax.f32 %v5075, %v5076
    %v5078 = vrot.slane %v5077, 1
    %v5079 = vmax.f32 %v5077, %v5078
    %v5080 = vmax.f32 %v4469, %v4470
    %v5081 = vrot.slane %v5080, 4
    %v5082 = vmax.f32 %v5080, %v5081
    %v5083 = vrot.slane %v5082, 2
    %v5084 = vmax.f32 %v5082, %v5083
    %v5085 = vrot.slane %v5084, 1
    %v5086 = vmax.f32 %v5084, %v5085
    %v5087 = vmax.f32 %v4471, %v4472
    %v5088 = vrot.slane %v5087, 4
    %v5089 = vmax.f32 %v5087, %v5088
    %v5090 = vrot.slane %v5089, 2
    %v5091 = vmax.f32 %v5089, %v5090
    %v5092 = vrot.slane %v5091, 1
    %v5093 = vmax.f32 %v5091, %v5092
    %v5094 = vmax.f32 %v4473, %v4474
    %v5095 = vrot.slane %v5094, 4
    %v5096 = vmax.f32 %v5094, %v5095
    %v5097 = vrot.slane %v5096, 2
    %v5098 = vmax.f32 %v5096, %v5097
    %v5099 = vrot.slane %v5098, 1
    %v5100 = vmax.f32 %v5098, %v5099
    %v5101 = vmax.f32 %v4475, %v4476
    %v5102 = vrot.slane %v5101, 4
    %v5103 = vmax.f32 %v5101, %v5102
    %v5104 = vrot.slane %v5103, 2
    %v5105 = vmax.f32 %v5103, %v5104
    %v5106 = vrot.slane %v5105, 1
    %v5107 = vmax.f32 %v5105, %v5106
    %v5108 = vmax.f32 %v4477, %v4478
    %v5109 = vrot.slane %v5108, 4
    %v5110 = vmax.f32 %v5108, %v5109
    %v5111 = vrot.slane %v5110, 2
    %v5112 = vmax.f32 %v5110, %v5111
    %v5113 = vrot.slane %v5112, 1
    %v5114 = vmax.f32 %v5112, %v5113
    %v5115 = vmax.f32 %v4479, %v4480
    %v5116 = vrot.slane %v5115, 4
    %v5117 = vmax.f32 %v5115, %v5116
    %v5118 = vrot.slane %v5117, 2
    %v5119 = vmax.f32 %v5117, %v5118
    %v5120 = vrot.slane %v5119, 1
    %v5121 = vmax.f32 %v5119, %v5120
    %v5122 = vmax.f32 %v4481, %v4482
    %v5123 = vrot.slane %v5122, 4
    %v5124 = vmax.f32 %v5122, %v5123
    %v5125 = vrot.slane %v5124, 2
    %v5126 = vmax.f32 %v5124, %v5125
    %v5127 = vrot.slane %v5126, 1
    %v5128 = vmax.f32 %v5126, %v5127
    %v5129 = vmax.f32 %v4483, %v4484
    %v5130 = vrot.slane %v5129, 4
    %v5131 = vmax.f32 %v5129, %v5130
    %v5132 = vrot.slane %v5131, 2
    %v5133 = vmax.f32 %v5131, %v5132
    %v5134 = vrot.slane %v5133, 1
    %v5135 = vmax.f32 %v5133, %v5134
    %v5136 = vmax.f32 %v4485, %v4486
    %v5137 = vrot.slane %v5136, 4
    %v5138 = vmax.f32 %v5136, %v5137
    %v5139 = vrot.slane %v5138, 2
    %v5140 = vmax.f32 %v5138, %v5139
    %v5141 = vrot.slane %v5140, 1
    %v5142 = vmax.f32 %v5140, %v5141
    %v5143 = vmax.f32 %v4487, %v4488
    %v5144 = vrot.slane %v5143, 4
    %v5145 = vmax.f32 %v5143, %v5144
    %v5146 = vrot.slane %v5145, 2
    %v5147 = vmax.f32 %v5145, %v5146
    %v5148 = vrot.slane %v5147, 1
    %v5149 = vmax.f32 %v5147, %v5148
    %v5150 = vmax.f32 %v4489, %v4490
    %v5151 = vrot.slane %v5150, 4
    %v5152 = vmax.f32 %v5150, %v5151
    %v5153 = vrot.slane %v5152, 2
    %v5154 = vmax.f32 %v5152, %v5153
    %v5155 = vrot.slane %v5154, 1
    %v5156 = vmax.f32 %v5154, %v5155
    %v5157 = vmax.f32 %v4491, %v4492
    %v5158 = vrot.slane %v5157, 4
    %v5159 = vmax.f32 %v5157, %v5158
    %v5160 = vrot.slane %v5159, 2
    %v5161 = vmax.f32 %v5159, %v5160
    %v5162 = vrot.slane %v5161, 1
    %v5163 = vmax.f32 %v5161, %v5162
    %v5164 = vmax.f32 %v4493, %v4494
    %v5165 = vrot.slane %v5164, 4
    %v5166 = vmax.f32 %v5164, %v5165
    %v5167 = vrot.slane %v5166, 2
    %v5168 = vmax.f32 %v5166, %v5167
    %v5169 = vrot.slane %v5168, 1
    %v5170 = vmax.f32 %v5168, %v5169
    %v5171 = vmax.f32 %v4495, %v4496
    %v5172 = vrot.slane %v5171, 4
    %v5173 = vmax.f32 %v5171, %v5172
    %v5174 = vrot.slane %v5173, 2
    %v5175 = vmax.f32 %v5173, %v5174
    %v5176 = vrot.slane %v5175, 1
    %v5177 = vmax.f32 %v5175, %v5176
    %v5178 = vmax.f32 %v4497, %v4498
    %v5179 = vrot.slane %v5178, 4
    %v5180 = vmax.f32 %v5178, %v5179
    %v5181 = vrot.slane %v5180, 2
    %v5182 = vmax.f32 %v5180, %v5181
    %v5183 = vrot.slane %v5182, 1
    %v5184 = vmax.f32 %v5182, %v5183
    %v5185 = vmax.f32 %v4499, %v4500
    %v5186 = vrot.slane %v5185, 4
    %v5187 = vmax.f32 %v5185, %v5186
    %v5188 = vrot.slane %v5187, 2
    %v5189 = vmax.f32 %v5187, %v5188
    %v5190 = vrot.slane %v5189, 1
    %v5191 = vmax.f32 %v5189, %v5190
    %v5192 = vmax.f32 %v4501, %v4502
    %v5193 = vrot.slane %v5192, 4
    %v5194 = vmax.f32 %v5192, %v5193
    %v5195 = vrot.slane %v5194, 2
    %v5196 = vmax.f32 %v5194, %v5195
    %v5197 = vrot.slane %v5196, 1
    %v5198 = vmax.f32 %v5196, %v5197
    %v5199 = vmax.f32 %v4503, %v4504
    %v5200 = vrot.slane %v5199, 4
    %v5201 = vmax.f32 %v5199, %v5200
    %v5202 = vrot.slane %v5201, 2
    %v5203 = vmax.f32 %v5201, %v5202
    %v5204 = vrot.slane %v5203, 1
    %v5205 = vmax.f32 %v5203, %v5204
    %v5206 = vmax.f32 %v4505, %v4506
    %v5207 = vrot.slane %v5206, 4
    %v5208 = vmax.f32 %v5206, %v5207
    %v5209 = vrot.slane %v5208, 2
    %v5210 = vmax.f32 %v5208, %v5209
    %v5211 = vrot.slane %v5210, 1
    %v5212 = vmax.f32 %v5210, %v5211
    %v5213 = vmax.f32 %v4507, %v4508
    %v5214 = vrot.slane %v5213, 4
    %v5215 = vmax.f32 %v5213, %v5214
    %v5216 = vrot.slane %v5215, 2
    %v5217 = vmax.f32 %v5215, %v5216
    %v5218 = vrot.slane %v5217, 1
    %v5219 = vmax.f32 %v5217, %v5218
    %v5220 = vmax.f32 %v4509, %v4510
    %v5221 = vrot.slane %v5220, 4
    %v5222 = vmax.f32 %v5220, %v5221
    %v5223 = vrot.slane %v5222, 2
    %v5224 = vmax.f32 %v5222, %v5223
    %v5225 = vrot.slane %v5224, 1
    %v5226 = vmax.f32 %v5224, %v5225
    %v5227 = vmax.f32 %v4511, %v4512
    %v5228 = vrot.slane %v5227, 4
    %v5229 = vmax.f32 %v5227, %v5228
    %v5230 = vrot.slane %v5229, 2
    %v5231 = vmax.f32 %v5229, %v5230
    %v5232 = vrot.slane %v5231, 1
    %v5233 = vmax.f32 %v5231, %v5232
    %v5234 = vmax.f32 %v4513, %v4514
    %v5235 = vrot.slane %v5234, 4
    %v5236 = vmax.f32 %v5234, %v5235
    %v5237 = vrot.slane %v5236, 2
    %v5238 = vmax.f32 %v5236, %v5237
    %v5239 = vrot.slane %v5238, 1
    %v5240 = vmax.f32 %v5238, %v5239
    %v5241 = vmax.f32 %v4515, %v4516
    %v5242 = vrot.slane %v5241, 4
    %v5243 = vmax.f32 %v5241, %v5242
    %v5244 = vrot.slane %v5243, 2
    %v5245 = vmax.f32 %v5243, %v5244
    %v5246 = vrot.slane %v5245, 1
    %v5247 = vmax.f32 %v5245, %v5246
    %v5248 = vmax.f32 %v4517, %v4518
    %v5249 = vrot.slane %v5248, 4
    %v5250 = vmax.f32 %v5248, %v5249
    %v5251 = vrot.slane %v5250, 2
    %v5252 = vmax.f32 %v5250, %v5251
    %v5253 = vrot.slane %v5252, 1
    %v5254 = vmax.f32 %v5252, %v5253
    %v5255 = vmax.f32 %v4519, %v4520
    %v5256 = vrot.slane %v5255, 4
    %v5257 = vmax.f32 %v5255, %v5256
    %v5258 = vrot.slane %v5257, 2
    %v5259 = vmax.f32 %v5257, %v5258
    %v5260 = vrot.slane %v5259, 1
    %v5261 = vmax.f32 %v5259, %v5260
    %v5262 = vmax.f32 %v4521, %v4522
    %v5263 = vrot.slane %v5262, 4
    %v5264 = vmax.f32 %v5262, %v5263
    %v5265 = vrot.slane %v5264, 2
    %v5266 = vmax.f32 %v5264, %v5265
    %v5267 = vrot.slane %v5266, 1
    %v5268 = vmax.f32 %v5266, %v5267
    %v5269 = vmax.f32 %v4523, %v4524
    %v5270 = vrot.slane %v5269, 4
    %v5271 = vmax.f32 %v5269, %v5270
    %v5272 = vrot.slane %v5271, 2
    %v5273 = vmax.f32 %v5271, %v5272
    %v5274 = vrot.slane %v5273, 1
    %v5275 = vmax.f32 %v5273, %v5274
    %v5276 = vmax.f32 %v4525, %v4526
    %v5277 = vrot.slane %v5276, 4
    %v5278 = vmax.f32 %v5276, %v5277
    %v5279 = vrot.slane %v5278, 2
    %v5280 = vmax.f32 %v5278, %v5279
    %v5281 = vrot.slane %v5280, 1
    %v5282 = vmax.f32 %v5280, %v5281
    %v5283 = vmax.f32 %v4527, %v4528
    %v5284 = vrot.slane %v5283, 4
    %v5285 = vmax.f32 %v5283, %v5284
    %v5286 = vrot.slane %v5285, 2
    %v5287 = vmax.f32 %v5285, %v5286
    %v5288 = vrot.slane %v5287, 1
    %v5289 = vmax.f32 %v5287, %v5288
    %v5290 = vmax.f32 %v4529, %v4530
    %v5291 = vrot.slane %v5290, 4
    %v5292 = vmax.f32 %v5290, %v5291
    %v5293 = vrot.slane %v5292, 2
    %v5294 = vmax.f32 %v5292, %v5293
    %v5295 = vrot.slane %v5294, 1
    %v5296 = vmax.f32 %v5294, %v5295
    %v5297 = vmax.f32 %v4531, %v4532
    %v5298 = vrot.slane %v5297, 4
    %v5299 = vmax.f32 %v5297, %v5298
    %v5300 = vrot.slane %v5299, 2
    %v5301 = vmax.f32 %v5299, %v5300
    %v5302 = vrot.slane %v5301, 1
    %v5303 = vmax.f32 %v5301, %v5302
    %v5304 = vmax.f32 %v4533, %v4534
    %v5305 = vrot.slane %v5304, 4
    %v5306 = vmax.f32 %v5304, %v5305
    %v5307 = vrot.slane %v5306, 2
    %v5308 = vmax.f32 %v5306, %v5307
    %v5309 = vrot.slane %v5308, 1
    %v5310 = vmax.f32 %v5308, %v5309
    %v5311 = vmax.f32 %v4535, %v4536
    %v5312 = vrot.slane %v5311, 4
    %v5313 = vmax.f32 %v5311, %v5312
    %v5314 = vrot.slane %v5313, 2
    %v5315 = vmax.f32 %v5313, %v5314
    %v5316 = vrot.slane %v5315, 1
    %v5317 = vmax.f32 %v5315, %v5316
    %v5318 = vmax.f32 %v4537, %v4538
    %v5319 = vrot.slane %v5318, 4
    %v5320 = vmax.f32 %v5318, %v5319
    %v5321 = vrot.slane %v5320, 2
    %v5322 = vmax.f32 %v5320, %v5321
    %v5323 = vrot.slane %v5322, 1
    %v5324 = vmax.f32 %v5322, %v5323
    %v5325 = vmax.f32 %v4539, %v4540
    %v5326 = vrot.slane %v5325, 4
    %v5327 = vmax.f32 %v5325, %v5326
    %v5328 = vrot.slane %v5327, 2
    %v5329 = vmax.f32 %v5327, %v5328
    %v5330 = vrot.slane %v5329, 1
    %v5331 = vmax.f32 %v5329, %v5330
    %v5332 = vmax.f32 %v4541, %v4542
    %v5333 = vrot.slane %v5332, 4
    %v5334 = vmax.f32 %v5332, %v5333
    %v5335 = vrot.slane %v5334, 2
    %v5336 = vmax.f32 %v5334, %v5335
    %v5337 = vrot.slane %v5336, 1
    %v5338 = vmax.f32 %v5336, %v5337
    %v5339 = vmax.f32 %v4543, %v4544
    %v5340 = vrot.slane %v5339, 4
    %v5341 = vmax.f32 %v5339, %v5340
    %v5342 = vrot.slane %v5341, 2
    %v5343 = vmax.f32 %v5341, %v5342
    %v5344 = vrot.slane %v5343, 1
    %v5345 = vmax.f32 %v5343, %v5344
    %v5346 = vmax.f32 %v4545, %v4546
    %v5347 = vrot.slane %v5346, 4
    %v5348 = vmax.f32 %v5346, %v5347
    %v5349 = vrot.slane %v5348, 2
    %v5350 = vmax.f32 %v5348, %v5349
    %v5351 = vrot.slane %v5350, 1
    %v5352 = vmax.f32 %v5350, %v5351
    %v5353 = vmax.f32 %v4547, %v4548
    %v5354 = vrot.slane %v5353, 4
    %v5355 = vmax.f32 %v5353, %v5354
    %v5356 = vrot.slane %v5355, 2
    %v5357 = vmax.f32 %v5355, %v5356
    %v5358 = vrot.slane %v5357, 1
    %v5359 = vmax.f32 %v5357, %v5358
    %v5360 = vmax.f32 %v4549, %v4550
    %v5361 = vrot.slane %v5360, 4
    %v5362 = vmax.f32 %v5360, %v5361
    %v5363 = vrot.slane %v5362, 2
    %v5364 = vmax.f32 %v5362, %v5363
    %v5365 = vrot.slane %v5364, 1
    %v5366 = vmax.f32 %v5364, %v5365
    %v5367 = vmax.f32 %v4551, %v4552
    %v5368 = vrot.slane %v5367, 4
    %v5369 = vmax.f32 %v5367, %v5368
    %v5370 = vrot.slane %v5369, 2
    %v5371 = vmax.f32 %v5369, %v5370
    %v5372 = vrot.slane %v5371, 1
    %v5373 = vmax.f32 %v5371, %v5372
    %v5374 = vmax.f32 %v4553, %v4554
    %v5375 = vrot.slane %v5374, 4
    %v5376 = vmax.f32 %v5374, %v5375
    %v5377 = vrot.slane %v5376, 2
    %v5378 = vmax.f32 %v5376, %v5377
    %v5379 = vrot.slane %v5378, 1
    %v5380 = vmax.f32 %v5378, %v5379
    %v5381 = vmax.f32 %v4555, %v4556
    %v5382 = vrot.slane %v5381, 4
    %v5383 = vmax.f32 %v5381, %v5382
    %v5384 = vrot.slane %v5383, 2
    %v5385 = vmax.f32 %v5383, %v5384
    %v5386 = vrot.slane %v5385, 1
    %v5387 = vmax.f32 %v5385, %v5386
    %v5388 = vmax.f32 %v4557, %v4558
    %v5389 = vrot.slane %v5388, 4
    %v5390 = vmax.f32 %v5388, %v5389
    %v5391 = vrot.slane %v5390, 2
    %v5392 = vmax.f32 %v5390, %v5391
    %v5393 = vrot.slane %v5392, 1
    %v5394 = vmax.f32 %v5392, %v5393
    %v5395 = vmax.f32 %v4559, %v4560
    %v5396 = vrot.slane %v5395, 4
    %v5397 = vmax.f32 %v5395, %v5396
    %v5398 = vrot.slane %v5397, 2
    %v5399 = vmax.f32 %v5397, %v5398
    %v5400 = vrot.slane %v5399, 1
    %v5401 = vmax.f32 %v5399, %v5400
    %v5402 = vmax.f32 %v4561, %v4562
    %v5403 = vrot.slane %v5402, 4
    %v5404 = vmax.f32 %v5402, %v5403
    %v5405 = vrot.slane %v5404, 2
    %v5406 = vmax.f32 %v5404, %v5405
    %v5407 = vrot.slane %v5406, 1
    %v5408 = vmax.f32 %v5406, %v5407
    %v5409 = vmax.f32 %v4563, %v4564
    %v5410 = vrot.slane %v5409, 4
    %v5411 = vmax.f32 %v5409, %v5410
    %v5412 = vrot.slane %v5411, 2
    %v5413 = vmax.f32 %v5411, %v5412
    %v5414 = vrot.slane %v5413, 1
    %v5415 = vmax.f32 %v5413, %v5414
    %v5416 = vmax.f32 %v4565, %v4566
    %v5417 = vrot.slane %v5416, 4
    %v5418 = vmax.f32 %v5416, %v5417
    %v5419 = vrot.slane %v5418, 2
    %v5420 = vmax.f32 %v5418, %v5419
    %v5421 = vrot.slane %v5420, 1
    %v5422 = vmax.f32 %v5420, %v5421
    %v5423 = vmax.f32 %v4567, %v4568
    %v5424 = vrot.slane %v5423, 4
    %v5425 = vmax.f32 %v5423, %v5424
    %v5426 = vrot.slane %v5425, 2
    %v5427 = vmax.f32 %v5425, %v5426
    %v5428 = vrot.slane %v5427, 1
    %v5429 = vmax.f32 %v5427, %v5428
    %v5430 = vmax.f32 %v4569, %v4570
    %v5431 = vrot.slane %v5430, 4
    %v5432 = vmax.f32 %v5430, %v5431
    %v5433 = vrot.slane %v5432, 2
    %v5434 = vmax.f32 %v5432, %v5433
    %v5435 = vrot.slane %v5434, 1
    %v5436 = vmax.f32 %v5434, %v5435
    %v5437 = vmax.f32 %v4571, %v4572
    %v5438 = vrot.slane %v5437, 4
    %v5439 = vmax.f32 %v5437, %v5438
    %v5440 = vrot.slane %v5439, 2
    %v5441 = vmax.f32 %v5439, %v5440
    %v5442 = vrot.slane %v5441, 1
    %v5443 = vmax.f32 %v5441, %v5442
    %v5444 = vmax.f32 %v4573, %v4574
    %v5445 = vrot.slane %v5444, 4
    %v5446 = vmax.f32 %v5444, %v5445
    %v5447 = vrot.slane %v5446, 2
    %v5448 = vmax.f32 %v5446, %v5447
    %v5449 = vrot.slane %v5448, 1
    %v5450 = vmax.f32 %v5448, %v5449
    %v5451 = vmax.f32 %v4575, %v4576
    %v5452 = vrot.slane %v5451, 4
    %v5453 = vmax.f32 %v5451, %v5452
    %v5454 = vrot.slane %v5453, 2
    %v5455 = vmax.f32 %v5453, %v5454
    %v5456 = vrot.slane %v5455, 1
    %v5457 = vmax.f32 %v5455, %v5456
    %v5458 = vmax.f32 %v4577, %v4578
    %v5459 = vrot.slane %v5458, 4
    %v5460 = vmax.f32 %v5458, %v5459
    %v5461 = vrot.slane %v5460, 2
    %v5462 = vmax.f32 %v5460, %v5461
    %v5463 = vrot.slane %v5462, 1
    %v5464 = vmax.f32 %v5462, %v5463
    %v5465 = vmax.f32 %v4579, %v4580
    %v5466 = vrot.slane %v5465, 4
    %v5467 = vmax.f32 %v5465, %v5466
    %v5468 = vrot.slane %v5467, 2
    %v5469 = vmax.f32 %v5467, %v5468
    %v5470 = vrot.slane %v5469, 1
    %v5471 = vmax.f32 %v5469, %v5470
    %v5472 = vmax.f32 %v4581, %v4582
    %v5473 = vrot.slane %v5472, 4
    %v5474 = vmax.f32 %v5472, %v5473
    %v5475 = vrot.slane %v5474, 2
    %v5476 = vmax.f32 %v5474, %v5475
    %v5477 = vrot.slane %v5476, 1
    %v5478 = vmax.f32 %v5476, %v5477
    %vm5607 = vcmask 1041409
    %v5608 = vsel %vm5607, %v4596, %v4589
    %vm5609 = vcmask 1042434
    %v5610 = vsel %vm5609, %v4603, %v5608
    %vm5611 = vcmask 1043459
    %v5612 = vsel %vm5611, %v4610, %v5610
    %vm5613 = vcmask 1044484
    %v5614 = vsel %vm5613, %v4617, %v5612
    %vm5615 = vcmask 1045509
    %v5616 = vsel %vm5615, %v4624, %v5614
    %vm5617 = vcmask 1046534
    %v5618 = vsel %vm5617, %v4631, %v5616
    %vm5619 = vcmask 1047559
    %v5620 = vsel %vm5619, %v4638, %v5618
    %v5621 = vsel %vm5607, %v4652, %v4645
    %v5622 = vsel %vm5609, %v4659, %v5621
    %v5623 = vsel %vm5611, %v4666, %v5622
    %v5624 = vsel %vm5613, %v4673, %v5623
    %v5625 = vsel %vm5615, %v4680, %v5624
    %v5626 = vsel %vm5617, %v4687, %v5625
    %v5627 = vsel %vm5619, %v4694, %v5626
    %v5628 = vsel %vm5607, %v4708, %v4701
    %v5629 = vsel %vm5609, %v4715, %v5628
    %v5630 = vsel %vm5611, %v4722, %v5629
    %v5631 = vsel %vm5613, %v4729, %v5630
    %v5632 = vsel %vm5615, %v4736, %v5631
    %v5633 = vsel %vm5617, %v4743, %v5632
    %v5634 = vsel %vm5619, %v4750, %v5633
    %v5635 = vsel %vm5607, %v4764, %v4757
    %v5636 = vsel %vm5609, %v4771, %v5635
    %v5637 = vsel %vm5611, %v4778, %v5636
    %v5638 = vsel %vm5613, %v4785, %v5637
    %v5639 = vsel %vm5615, %v4792, %v5638
    %v5640 = vsel %vm5617, %v4799, %v5639
    %v5641 = vsel %vm5619, %v4806, %v5640
    %v5642 = vsel %vm5607, %v4820, %v4813
    %v5643 = vsel %vm5609, %v4827, %v5642
    %v5644 = vsel %vm5611, %v4834, %v5643
    %v5645 = vsel %vm5613, %v4841, %v5644
    %v5646 = vsel %vm5615, %v4848, %v5645
    %v5647 = vsel %vm5617, %v4855, %v5646
    %v5648 = vsel %vm5619, %v4862, %v5647
    %v5649 = vsel %vm5607, %v4876, %v4869
    %v5650 = vsel %vm5609, %v4883, %v5649
    %v5651 = vsel %vm5611, %v4890, %v5650
    %v5652 = vsel %vm5613, %v4897, %v5651
    %v5653 = vsel %vm5615, %v4904, %v5652
    %v5654 = vsel %vm5617, %v4911, %v5653
    %v5655 = vsel %vm5619, %v4918, %v5654
    %v5656 = vsel %vm5607, %v4932, %v4925
    %v5657 = vsel %vm5609, %v4939, %v5656
    %v5658 = vsel %vm5611, %v4946, %v5657
    %v5659 = vsel %vm5613, %v4953, %v5658
    %v5660 = vsel %vm5615, %v4960, %v5659
    %v5661 = vsel %vm5617, %v4967, %v5660
    %v5662 = vsel %vm5619, %v4974, %v5661
    %v5663 = vsel %vm5607, %v4988, %v4981
    %v5664 = vsel %vm5609, %v4995, %v5663
    %v5665 = vsel %vm5611, %v5002, %v5664
    %v5666 = vsel %vm5613, %v5009, %v5665
    %v5667 = vsel %vm5615, %v5016, %v5666
    %v5668 = vsel %vm5617, %v5023, %v5667
    %v5669 = vsel %vm5619, %v5030, %v5668
    %v5670 = vsel %vm5607, %v5044, %v5037
    %v5671 = vsel %vm5609, %v5051, %v5670
    %v5672 = vsel %vm5611, %v5058, %v5671
    %v5673 = vsel %vm5613, %v5065, %v5672
    %v5674 = vsel %vm5615, %v5072, %v5673
    %v5675 = vsel %vm5617, %v5079, %v5674
    %v5676 = vsel %vm5619, %v5086, %v5675
    %v5677 = vsel %vm5607, %v5100, %v5093
    %v5678 = vsel %vm5609, %v5107, %v5677
    %v5679 = vsel %vm5611, %v5114, %v5678
    %v5680 = vsel %vm5613, %v5121, %v5679
    %v5681 = vsel %vm5615, %v5128, %v5680
    %v5682 = vsel %vm5617, %v5135, %v5681
    %v5683 = vsel %vm5619, %v5142, %v5682
    %v5684 = vsel %vm5607, %v5156, %v5149
    %v5685 = vsel %vm5609, %v5163, %v5684
    %v5686 = vsel %vm5611, %v5170, %v5685
    %v5687 = vsel %vm5613, %v5177, %v5686
    %v5688 = vsel %vm5615, %v5184, %v5687
    %v5689 = vsel %vm5617, %v5191, %v5688
    %v5690 = vsel %vm5619, %v5198, %v5689
    %v5691 = vsel %vm5607, %v5212, %v5205
    %v5692 = vsel %vm5609, %v5219, %v5691
    %v5693 = vsel %vm5611, %v5226, %v5692
    %v5694 = vsel %vm5613, %v5233, %v5693
    %v5695 = vsel %vm5615, %v5240, %v5694
    %v5696 = vsel %vm5617, %v5247, %v5695
    %v5697 = vsel %vm5619, %v5254, %v5696
    %v5698 = vsel %vm5607, %v5268, %v5261
    %v5699 = vsel %vm5609, %v5275, %v5698
    %v5700 = vsel %vm5611, %v5282, %v5699
    %v5701 = vsel %vm5613, %v5289, %v5700
    %v5702 = vsel %vm5615, %v5296, %v5701
    %v5703 = vsel %vm5617, %v5303, %v5702
    %v5704 = vsel %vm5619, %v5310, %v5703
    %v5705 = vsel %vm5607, %v5324, %v5317
    %v5706 = vsel %vm5609, %v5331, %v5705
    %v5707 = vsel %vm5611, %v5338, %v5706
    %v5708 = vsel %vm5613, %v5345, %v5707
    %v5709 = vsel %vm5615, %v5352, %v5708
    %v5710 = vsel %vm5617, %v5359, %v5709
    %v5711 = vsel %vm5619, %v5366, %v5710
    %v5712 = vsel %vm5607, %v5380, %v5373
    %v5713 = vsel %vm5609, %v5387, %v5712
    %v5714 = vsel %vm5611, %v5394, %v5713
    %v5715 = vsel %vm5613, %v5401, %v5714
    %v5716 = vsel %vm5615, %v5408, %v5715
    %v5717 = vsel %vm5617, %v5415, %v5716
    %v5718 = vsel %vm5619, %v5422, %v5717
    %v5719 = vsel %vm5607, %v5436, %v5429
    %v5720 = vsel %vm5609, %v5443, %v5719
    %v5721 = vsel %vm5611, %v5450, %v5720
    %v5722 = vsel %vm5613, %v5457, %v5721
    %v5723 = vsel %vm5615, %v5464, %v5722
    %v5724 = vsel %vm5617, %v5471, %v5723
    %v5725 = vsel %vm5619, %v5478, %v5724
    %5742 = vst [vmem:[#allocation11] sm:$0xff] %v5620
    %5743 = vst [vmem:[#allocation11 + $0x8] sm:$0xff] %v5627
    %5744 = vst [vmem:[#allocation11 + $0x10] sm:$0xff] %v5634
    %5745 = vst [vmem:[#allocation11 + $0x18] sm:$0xff] %v5641
    %5746 = vst [vmem:[#allocation11 + $0x20] sm:$0xff] %v5648
    %5747 = vst [vmem:[#allocation11 + $0x28] sm:$0xff] %v5655
    %5748 = vst [vmem:[#allocation11 + $0x30] sm:$0xff] %v5662
    %5749 = vst [vmem:[#allocation11 + $0x38] sm:$0xff] %v5669
    %5750 = vst [vmem:[#allocation11 + $0x40] sm:$0xff] %v5676
    %5751 = vst [vmem:[#allocation11 + $0x48] sm:$0xff] %v5683
    %5752 = vst [vmem:[#allocation11 + $0x50] sm:$0xff] %v5690
    %5753 = vst [vmem:[#allocation11 + $0x58] sm:$0xff] %v5697
    %5754 = vst [vmem:[#allocation11 + $0x60] sm:$0xff] %v5704
    %5755 = vst [vmem:[#allocation11 + $0x68] sm:$0xff] %v5711
    %5756 = vst [vmem:[#allocation11 + $0x70] sm:$0xff] %v5718
    %5757 = vst [vmem:[#allocation11 + $0x78] sm:$0xff] %v5725
    // Predicated region
    $region42: #{vote_qn2_forward.2} parent=1 // pred_check
      _
    $region43: #{vote_qn2_forward.2} parent=1 // pred_check_branch
      %5759 = sbr.rel (0) target = $region45
    $region44: #{vote_qn2_forward.2} parent=1 // pred_region
      %s5761 = ssub.s32 2048, 2048
      %5762 = vsyncadd [#allocation4], %s5761
      %s5763 = sshll.u32 [#allocation11], 4
      %s5764 = int_to_ptr.vmem [resolvable:$true] %s5763
      %5769 = dma.vmem_to_hbm [thread:$0]  %s5764, 2048, %s5, [#allocation4], 128, 128, 8
    $region45: #{vote_qn2_forward.2} parent=1 // pred_fallthru
      _
    // Predicated region
    $region46: #{vote_qn2_forward.2} parent=1 // pred_check
      _
    $region47: #{vote_qn2_forward.2} parent=1 // pred_check_branch
      %5771 = sbr.rel (0) target = $region49
    $region48: #{vote_qn2_forward.2} parent=1 // pred_region
      %5772 = dma.done [#allocation4], 2048
    $region49: #{vote_qn2_forward.2} parent=1 // pred_fallthru
      _
    %5773 = vsyncpa [#allocation3], 1
    %5774 = vsyncpa [#allocation6], 1
    %5775 = vsyncpa [#allocation9], 1
    %5776 = vsyncpa [#allocation4], 1

// kernel: mul.1
$region0: #{mul.1}
  #allocation0 [shape = 's32[1]{0}', space=sflag, size = 0x4, scoped, tag = 'scoped memory for mul.1']
  %s0 = inlined_call_operand.vmem [shape: f32[2,8], index: 0, kind: input, shape index: {}]
  %s1 = inlined_call_operand.vmem [shape: f32[2,8], index: 1, kind: input, shape index: {}]
  %s2 = inlined_call_operand.vmem [shape: f32[2,8], index: 2, kind: output, shape index: {}]
  %v3 = vld [vmem:[%s0] sm:$0x3]
  %v4 = vld [vmem:[%s1] sm:$0x3]
  %5 = xla_tuple %v3, %v4
  %6 = xla_tuple %5
  %v7 = vmul.f32 %v3, %v4
  %8 = xla_tuple %v7
  %9 = vst [vmem:[%s2] sm:$0x3] %v7

// kernel: vote_qn2_forward.3
$region0: #{vote_qn2_forward.3}
  #allocation0 [shape = 'u32[]', space=smem, size = 0x4, offset = 0x4, fixed_abs, tag = 'smem constant byte address 0x4 - core index']
  #allocation1 [shape = 'u32[144,128]{1,0:T(1,128)}', space=vmem, size = 0x12000, scoped, tag = 'internal scratch']
  %s0 = inlined_call_operand.hbm [shape: bf16[32,16,128], index: 0, kind: input, shape index: {}]
  %s1 = inlined_call_operand.hbm [shape: bf16[128,128], index: 1, kind: input, shape index: {}]
  %s2 = inlined_call_operand.hbm [shape: f32[1,128], index: 2, kind: input, shape index: {}]
  %s3 = inlined_call_operand.hbm [shape: bf16[128,256], index: 3, kind: input, shape index: {}]
  %s4 = inlined_call_operand.hbm [shape: f32[1,256], index: 4, kind: input, shape index: {}]
  %s5 = inlined_call_operand.hbm [shape: f32[32,256], index: 5, kind: output, shape index: {}]
  %s6 = sld [smem:[#allocation0]]
  $region50: #{vote_qn2_forward.3} parent=0
    _
  %s8 = ssub.s32 1, %s6
  %s9 = scalar_select 0, %s8, %s6
  $region1: #{vote_qn2_forward.3} parent=0
    #allocation2 [shape = 'u8[131072]{0}', space=vmem, size = 0x20000, scoped, tag = 'input window, operand 0, single buffered']
    #allocation3 [shape = 's32[1]{0}', space=sflag, size = 0x4, scoped, tag = 'scoped memory for vote_qn2_forward.3']
    #allocation4 [shape = 's32[1]{0}', space=sflag, size = 0x4, scoped, tag = 'scoped memory for vote_qn2_forward.3']
    #allocation5 [shape = 'u8[32768]{0}', space=vmem, size = 0x8000, scoped, tag = 'input window, operand 1, single buffered']
    #allocation6 [shape = 's32[1]{0}', space=sflag, size = 0x4, scoped, tag = 'scoped memory for vote_qn2_forward.3']
    #allocation7 [shape = 'u8[512]{0}', space=vmem, size = 0x400, scoped, tag = 'input window, operand 2, single buffered']
    #allocation8 [shape = 'u8[65536]{0}', space=vmem, size = 0x10000, scoped, tag = 'input window, operand 3, single buffered']
    #allocation9 [shape = 's32[1]{0}', space=sflag, size = 0x4, scoped, tag = 'scoped memory for vote_qn2_forward.3']
    #allocation10 [shape = 'u8[1024]{0}', space=vmem, size = 0x400, scoped, tag = 'input window, operand 4, single buffered']
    #allocation11 [shape = 'u8[32768]{0}', space=vmem, size = 0x8000, scoped, tag = 'output window, operand 0, single buffered']
    %10 = vsyncpa [#allocation3], 0
    %11 = vsyncpa [#allocation6], 0
    %12 = vsyncpa [#allocation9], 0
    %13 = vsyncpa [#allocation4], 0
    // Predicated region
    $region2: #{vote_qn2_forward.3} parent=1 // pred_check
      _
    $region3: #{vote_qn2_forward.3} parent=1 // pred_check_branch
      %15 = sbr.rel (0) target = $region5
    $region4: #{vote_qn2_forward.3} parent=1 // pred_region
      %s17 = ssub.s32 4096, 4096
      %18 = vsyncadd [#allocation3], %s17
      %s19 = sshll.u32 [#allocation2], 4
      %s20 = int_to_ptr.vmem [resolvable:$true] %s19
      %25 = dma.hbm_to_vmem [thread:$0]  %s0, 4096, %s20, [#allocation3], 64, 64, 4
    $region5: #{vote_qn2_forward.3} parent=1 // pred_fallthru
      _
    // Predicated region
    $region6: #{vote_qn2_forward.3} parent=1 // pred_check
      _
    $region7: #{vote_qn2_forward.3} parent=1 // pred_check_branch
      %27 = sbr.rel (0) target = $region9
    $region8: #{vote_qn2_forward.3} parent=1 // pred_region
      %s29 = ssub.s32 1024, 1024
      %30 = vsyncadd [#allocation6], %s29
      %s31 = sshll.u32 [#allocation5], 4
      %s32 = int_to_ptr.vmem [resolvable:$true] %s31
      %37 = dma.hbm_to_vmem [thread:$0]  %s1, 1024, %s32, [#allocation6], 64, 64, 4
    $region9: #{vote_qn2_forward.3} parent=1 // pred_fallthru
      _
    // Predicated region
    $region10: #{vote_qn2_forward.3} parent=1 // pred_check
      _
    $region11: #{vote_qn2_forward.3} parent=1 // pred_check_branch
      %39 = sbr.rel (0) target = $region13
    $region12: #{vote_qn2_forward.3} parent=1 // pred_region
      %s41 = ssub.s32 16, 16
      %42 = vsyncadd [#allocation6], %s41
      %s44 = sshll.u32 [#allocation7], 4
      %s45 = int_to_ptr.vmem [resolvable:$true] %s44
      %47 = dma.hbm_to_vmem [thread:$0]  %s2, 16, %s45, [#allocation6]
    $region13: #{vote_qn2_forward.3} parent=1 // pred_fallthru
      _
    // Predicated region
    $region14: #{vote_qn2_forward.3} parent=1 // pred_check
      _
    $region15: #{vote_qn2_forward.3} parent=1 // pred_check_branch
      %49 = sbr.rel (0) target = $region17
    $region16: #{vote_qn2_forward.3} parent=1 // pred_region
      %s51 = ssub.s32 2048, 2048
      %52 = vsyncadd [#allocation9], %s51
      %s53 = sshll.u32 [#allocation8], 4
      %s54 = int_to_ptr.vmem [resolvable:$true] %s53
      %59 = dma.hbm_to_vmem [thread:$0]  %s3, 2048, %s54, [#allocation9], 128, 128, 8
    $region17: #{vote_qn2_forward.3} parent=1 // pred_fallthru
      _
    // Predicated region
    $region18: #{vote_qn2_forward.3} parent=1 // pred_check
      _
    $region19: #{vote_qn2_forward.3} parent=1 // pred_check_branch
      %61 = sbr.rel (0) target = $region21
    $region20: #{vote_qn2_forward.3} parent=1 // pred_region
      %s63 = ssub.s32 32, 32
      %64 = vsyncadd [#allocation9], %s63
      %s66 = sshll.u32 [#allocation10], 4
      %s67 = int_to_ptr.vmem [resolvable:$true] %s66
      %69 = dma.hbm_to_vmem [thread:$0]  %s4, 32, %s67, [#allocation9]
    $region21: #{vote_qn2_forward.3} parent=1 // pred_fallthru
      _
    // Predicated region
    $region22: #{vote_qn2_forward.3} parent=1 // pred_check
      _
    $region23: #{vote_qn2_forward.3} parent=1 // pred_check_branch
      %71 = sbr.rel (0) target = $region25
    $region24: #{vote_qn2_forward.3} parent=1 // pred_region
      %72 = dma.done [#allocation3], 4096
    $region25: #{vote_qn2_forward.3} parent=1 // pred_fallthru
      _
    // Predicated region
    $region26: #{vote_qn2_forward.3} parent=1 // pred_check
      _
    $region27: #{vote_qn2_forward.3} parent=1 // pred_check_branch
      %74 = sbr.rel (0) target = $region29
    $region28: #{vote_qn2_forward.3} parent=1 // pred_region
      %75 = dma.done [#allocation6], 1024
    $region29: #{vote_qn2_forward.3} parent=1 // pred_fallthru
      _
    // Predicated region
    $region30: #{vote_qn2_forward.3} parent=1 // pred_check
      _
    $region31: #{vote_qn2_forward.3} parent=1 // pred_check_branch
      %77 = sbr.rel (0) target = $region33
    $region32: #{vote_qn2_forward.3} parent=1 // pred_region
      %78 = dma.done [#allocation6], 16
    $region33: #{vote_qn2_forward.3} parent=1 // pred_fallthru
      _
    // Predicated region
    $region34: #{vote_qn2_forward.3} parent=1 // pred_check
      _
    $region35: #{vote_qn2_forward.3} parent=1 // pred_check_branch
      %80 = sbr.rel (0) target = $region37
    $region36: #{vote_qn2_forward.3} parent=1 // pred_region
      %81 = dma.done [#allocation9], 2048
    $region37: #{vote_qn2_forward.3} parent=1 // pred_fallthru
      _
    // Predicated region
    $region38: #{vote_qn2_forward.3} parent=1 // pred_check
      _
    $region39: #{vote_qn2_forward.3} parent=1 // pred_check_branch
      %83 = sbr.rel (0) target = $region41
    $region40: #{vote_qn2_forward.3} parent=1 // pred_region
      %84 = dma.done [#allocation9], 32
    $region41: #{vote_qn2_forward.3} parent=1 // pred_fallthru
      _
    %v86 = vld [vmem:[#allocation2] sm:$0xf]
    %v87 = vld [vmem:[#allocation2 + $0x4] sm:$0xf]
    %v88 = vld [vmem:[#allocation2 + $0x8] sm:$0xf]
    %v89 = vld [vmem:[#allocation2 + $0xc] sm:$0xf]
    %v90 = vld [vmem:[#allocation2 + $0x10] sm:$0xf]
    %v91 = vld [vmem:[#allocation2 + $0x14] sm:$0xf]
    %v92 = vld [vmem:[#allocation2 + $0x18] sm:$0xf]
    %v93 = vld [vmem:[#allocation2 + $0x1c] sm:$0xf]
    %v94 = vld [vmem:[#allocation2 + $0x20] sm:$0xf]
    %v95 = vld [vmem:[#allocation2 + $0x24] sm:$0xf]
    %v96 = vld [vmem:[#allocation2 + $0x28] sm:$0xf]
    %v97 = vld [vmem:[#allocation2 + $0x2c] sm:$0xf]
    %v98 = vld [vmem:[#allocation2 + $0x30] sm:$0xf]
    %v99 = vld [vmem:[#allocation2 + $0x34] sm:$0xf]
    %v100 = vld [vmem:[#allocation2 + $0x38] sm:$0xf]
    %v101 = vld [vmem:[#allocation2 + $0x3c] sm:$0xf]
    %v102 = vld [vmem:[#allocation2 + $0x40] sm:$0xf]
    %v103 = vld [vmem:[#allocation2 + $0x44] sm:$0xf]
    %v104 = vld [vmem:[#allocation2 + $0x48] sm:$0xf]
    %v105 = vld [vmem:[#allocation2 + $0x4c] sm:$0xf]
    %v106 = vld [vmem:[#allocation2 + $0x50] sm:$0xf]
    %v107 = vld [vmem:[#allocation2 + $0x54] sm:$0xf]
    %v108 = vld [vmem:[#allocation2 + $0x58] sm:$0xf]
    %v109 = vld [vmem:[#allocation2 + $0x5c] sm:$0xf]
    %v110 = vld [vmem:[#allocation2 + $0x60] sm:$0xf]
    %v111 = vld [vmem:[#allocation2 + $0x64] sm:$0xf]
    %v112 = vld [vmem:[#allocation2 + $0x68] sm:$0xf]
    %v113 = vld [vmem:[#allocation2 + $0x6c] sm:$0xf]
    %v114 = vld [vmem:[#allocation2 + $0x70] sm:$0xf]
    %v115 = vld [vmem:[#allocation2 + $0x74] sm:$0xf]
    %v116 = vld [vmem:[#allocation2 + $0x78] sm:$0xf]
    %v117 = vld [vmem:[#allocation2 + $0x7c] sm:$0xf]
    %v118 = vld [vmem:[#allocation2 + $0x80] sm:$0xf]
    %v119 = vld [vmem:[#allocation2 + $0x84] sm:$0xf]
    %v120 = vld [vmem:[#allocation2 + $0x88] sm:$0xf]
    %v121 = vld [vmem:[#allocation2 + $0x8c] sm:$0xf]
    %v122 = vld [vmem:[#allocation2 + $0x90] sm:$0xf]
    %v123 = vld [vmem:[#allocation2 + $0x94] sm:$0xf]
    %v124 = vld [vmem:[#allocation2 + $0x98] sm:$0xf]
    %v125 = vld [vmem:[#allocation2 + $0x9c] sm:$0xf]
    %v126 = vld [vmem:[#allocation2 + $0xa0] sm:$0xf]
    %v127 = vld [vmem:[#allocation2 + $0xa4] sm:$0xf]
    %v128 = vld [vmem:[#allocation2 + $0xa8] sm:$0xf]
    %v129 = vld [vmem:[#allocation2 + $0xac] sm:$0xf]
    %v130 = vld [vmem:[#allocation2 + $0xb0] sm:$0xf]
    %v131 = vld [vmem:[#allocation2 + $0xb4] sm:$0xf]
    %v132 = vld [vmem:[#allocation2 + $0xb8] sm:$0xf]
    %v133 = vld [vmem:[#allocation2 + $0xbc] sm:$0xf]
    %v134 = vld [vmem:[#allocation2 + $0xc0] sm:$0xf]
    %v135 = vld [vmem:[#allocation2 + $0xc4] sm:$0xf]
    %v136 = vld [vmem:[#allocation2 + $0xc8] sm:$0xf]
    %v137 = vld [vmem:[#allocation2 + $0xcc] sm:$0xf]
    %v138 = vld [vmem:[#allocation2 + $0xd0] sm:$0xf]
    %v139 = vld [vmem:[#allocation2 + $0xd4] sm:$0xf]
    %v140 = vld [vmem:[#allocation2 + $0xd8] sm:$0xf]
    %v141 = vld [vmem:[#allocation2 + $0xdc] sm:$0xf]
    %v142 = vld [vmem:[#allocation2 + $0xe0] sm:$0xf]
    %v143 = vld [vmem:[#allocation2 + $0xe4] sm:$0xf]
    %v144 = vld [vmem:[#allocation2 + $0xe8] sm:$0xf]
    %v145 = vld [vmem:[#allocation2 + $0xec] sm:$0xf]
    %v146 = vld [vmem:[#allocation2 + $0xf0] sm:$0xf]
    %v147 = vld [vmem:[#allocation2 + $0xf4] sm:$0xf]
    %v148 = vld [vmem:[#allocation2 + $0xf8] sm:$0xf]
    %v149 = vld [vmem:[#allocation2 + $0xfc] sm:$0xf]
    %v150 = vld [vmem:[#allocation5] sm:$0xf]
    %v151 = vld [vmem:[#allocation5 + $0x4] sm:$0xf]
    %v152 = vld [vmem:[#allocation5 + $0x8] sm:$0xf]
    %v153 = vld [vmem:[#allocation5 + $0xc] sm:$0xf]
    %v154 = vld [vmem:[#allocation5 + $0x10] sm:$0xf]
    %v155 = vld [vmem:[#allocation5 + $0x14] sm:$0xf]
    %v156 = vld [vmem:[#allocation5 + $0x18] sm:$0xf]
    %v157 = vld [vmem:[#allocation5 + $0x1c] sm:$0xf]
    %v158 = vld [vmem:[#allocation5 + $0x20] sm:$0xf]
    %v159 = vld [vmem:[#allocation5 + $0x24] sm:$0xf]
    %v160 = vld [vmem:[#allocation5 + $0x28] sm:$0xf]
    %v161 = vld [vmem:[#allocation5 + $0x2c] sm:$0xf]
    %v162 = vld [vmem:[#allocation5 + $0x30] sm:$0xf]
    %v163 = vld [vmem:[#allocation5 + $0x34] sm:$0xf]
    %v164 = vld [vmem:[#allocation5 + $0x38] sm:$0xf]
    %v165 = vld [vmem:[#allocation5 + $0x3c] sm:$0xf]
    %v166 = vld [vmem:[#allocation7] sm:$0x1]
    %v168 = vlaneseq
    %v169 = vshrl.u32 %v168, 7
    %v170 = vsub.s32 0, %v169
    %v171 = vrot.slane %v166, %v170
    %v237 = vunpack.c.l.b16 %v86
    %v238 = vunpack.c.l.b16 %v87
    %v239 = vunpack.c.l.b16 %v88
    %v240 = vunpack.c.l.b16 %v89
    %v241 = vunpack.c.l.b16 %v90
    %v242 = vunpack.c.l.b16 %v91
    %v243 = vunpack.c.l.b16 %v92
    %v244 = vunpack.c.l.b16 %v93
    %v245 = vunpack.c.l.b16 %v94
    %v246 = vunpack.c.l.b16 %v95
    %v247 = vunpack.c.l.b16 %v96
    %v248 = vunpack.c.l.b16 %v97
    %v249 = vunpack.c.l.b16 %v98
    %v250 = vunpack.c.l.b16 %v99
    %v251 = vunpack.c.l.b16 %v100
    %v252 = vunpack.c.l.b16 %v101
    %v253 = vunpack.c.l.b16 %v102
    %v254 = vunpack.c.l.b16 %v103
    %v255 = vunpack.c.l.b16 %v104
    %v256 = vunpack.c.l.b16 %v105
    %v257 = vunpack.c.l.b16 %v106
    %v258 = vunpack.c.l.b16 %v107
    %v259 = vunpack.c.l.b16 %v108
    %v260 = vunpack.c.l.b16 %v109
    %v261 = vunpack.c.l.b16 %v110
    %v262 = vunpack.c.l.b16 %v111
    %v263 = vunpack.c.l.b16 %v112
    %v264 = vunpack.c.l.b16 %v113
    %v265 = vunpack.c.l.b16 %v114
    %v266 = vunpack.c.l.b16 %v115
    %v267 = vunpack.c.l.b16 %v116
    %v268 = vunpack.c.l.b16 %v117
    %v269 = vunpack.c.l.b16 %v118
    %v270 = vunpack.c.l.b16 %v119
    %v271 = vunpack.c.l.b16 %v120
    %v272 = vunpack.c.l.b16 %v121
    %v273 = vunpack.c.l.b16 %v122
    %v274 = vunpack.c.l.b16 %v123
    %v275 = vunpack.c.l.b16 %v124
    %v276 = vunpack.c.l.b16 %v125
    %v277 = vunpack.c.l.b16 %v126
    %v278 = vunpack.c.l.b16 %v127
    %v279 = vunpack.c.l.b16 %v128
    %v280 = vunpack.c.l.b16 %v129
    %v281 = vunpack.c.l.b16 %v130
    %v282 = vunpack.c.l.b16 %v131
    %v283 = vunpack.c.l.b16 %v132
    %v284 = vunpack.c.l.b16 %v133
    %v285 = vunpack.c.l.b16 %v134
    %v286 = vunpack.c.l.b16 %v135
    %v287 = vunpack.c.l.b16 %v136
    %v288 = vunpack.c.l.b16 %v137
    %v289 = vunpack.c.l.b16 %v138
    %v290 = vunpack.c.l.b16 %v139
    %v291 = vunpack.c.l.b16 %v140
    %v292 = vunpack.c.l.b16 %v141
    %v293 = vunpack.c.l.b16 %v142
    %v294 = vunpack.c.l.b16 %v143
    %v295 = vunpack.c.l.b16 %v144
    %v296 = vunpack.c.l.b16 %v145
    %v297 = vunpack.c.l.b16 %v146
    %v298 = vunpack.c.l.b16 %v147
    %v299 = vunpack.c.l.b16 %v148
    %v300 = vunpack.c.l.b16 %v149
    %v301 = vpack.c.b16 %v238, %v237
    %v302 = vpack.c.b16 %v240, %v239
    %v303 = vpack.c.b16 %v242, %v241
    %v304 = vpack.c.b16 %v244, %v243
    %v305 = vpack.c.b16 %v246, %v245
    %v306 = vpack.c.b16 %v248, %v247
    %v307 = vpack.c.b16 %v250, %v249
    %v308 = vpack.c.b16 %v252, %v251
    %v309 = vpack.c.b16 %v254, %v253
    %v310 = vpack.c.b16 %v256, %v255
    %v311 = vpack.c.b16 %v258, %v257
    %v312 = vpack.c.b16 %v260, %v259
    %v313 = vpack.c.b16 %v262, %v261
    %v314 = vpack.c.b16 %v264, %v263
    %v315 = vpack.c.b16 %v266, %v265
    %v316 = vpack.c.b16 %v268, %v267
    %v317 = vpack.c.b16 %v270, %v269
    %v318 = vpack.c.b16 %v272, %v271
    %v319 = vpack.c.b16 %v274, %v273
    %v320 = vpack.c.b16 %v276, %v275
    %v321 = vpack.c.b16 %v278, %v277
    %v322 = vpack.c.b16 %v280, %v279
    %v323 = vpack.c.b16 %v282, %v281
    %v324 = vpack.c.b16 %v284, %v283
    %v325 = vpack.c.b16 %v286, %v285
    %v326 = vpack.c.b16 %v288, %v287
    %v327 = vpack.c.b16 %v290, %v289
    %v328 = vpack.c.b16 %v292, %v291
    %v329 = vpack.c.b16 %v294, %v293
    %v330 = vpack.c.b16 %v296, %v295
    %v331 = vpack.c.b16 %v298, %v297
    %v332 = vpack.c.b16 %v300, %v299
    %v381 = vunpack.c.l.b16 %v150
    %v382 = vunpack.c.l.b16 %v151
    %v383 = vunpack.c.l.b16 %v152
    %v384 = vunpack.c.l.b16 %v153
    %v385 = vunpack.c.l.b16 %v154
    %v386 = vunpack.c.l.b16 %v155
    %v387 = vunpack.c.l.b16 %v156
    %v388 = vunpack.c.l.b16 %v157
    %v389 = vunpack.c.l.b16 %v158
    %v390 = vunpack.c.l.b16 %v159
    %v391 = vunpack.c.l.b16 %v160
    %v392 = vunpack.c.l.b16 %v161
    %v393 = vunpack.c.l.b16 %v162
    %v394 = vunpack.c.l.b16 %v163
    %v395 = vunpack.c.l.b16 %v164
    %v396 = vunpack.c.l.b16 %v165
    %v397 = vpack.c.b16 %v382, %v381
    %v398 = vpack.c.b16 %v384, %v383
    %v399 = vpack.c.b16 %v386, %v385
    %v400 = vpack.c.b16 %v388, %v387
    %v401 = vpack.c.b16 %v390, %v389
    %v402 = vpack.c.b16 %v392, %v391
    %v403 = vpack.c.b16 %v394, %v393
    %v404 = vpack.c.b16 %v396, %v395
    %413 = vmatprep.subr.bf16.mxu0 0
    %414 = vmatpush1.bf16.msra.mxu0 %v397
    %415 = vmatprep.subr.bf16.mxu0 0
    %416 = vmatpush1.bf16.msra.mxu0 %v398
    %417 = vmatprep.subr.bf16.mxu0 0
    %418 = vmatpush1.bf16.msra.mxu0 %v399
    %419 = vmatprep.subr.bf16.mxu0 0
    %420 = vmatpush1.bf16.msra.mxu0 %v400
    %421 = vmatprep.subr.bf16.mxu0 0
    %422 = vmatpush1.bf16.msra.mxu0 %v401
    %423 = vmatprep.subr.bf16.mxu0 0
    %424 = vmatpush1.bf16.msra.mxu0 %v402
    %425 = vmatprep.subr.bf16.mxu0 0
    %426 = vmatpush1.bf16.msra.mxu0 %v403
    %427 = vmatprep.subr.bf16.mxu0 0
    %428 = vmatpush1.bf16.msra.mxu0 %v404
    %429 = vmatprep.subr.bf16.mxu0 0
    %430 = vmatpush1.bf16.msra.mxu0 0
    %431 = vmatprep.subr.bf16.mxu0 0
    %432 = vmatpush1.bf16.msra.mxu0 0
    %433 = vmatprep.subr.bf16.mxu0 0
    %434 = vmatpush1.bf16.msra.mxu0 0
    %435 = vmatprep.subr.bf16.mxu0 0
    %436 = vmatpush1.bf16.msra.mxu0 0
    %437 = vmatprep.subr.bf16.mxu0 0
    %438 = vmatpush1.bf16.msra.mxu0 0
    %439 = vmatprep.subr.bf16.mxu0 0
    %440 = vmatpush1.bf16.msra.mxu0 0
    %441 = vmatprep.subr.bf16.mxu0 0
    %442 = vmatpush1.bf16.msra.mxu0 0
    %443 = vmatprep.subr.bf16.mxu0 0
    %444 = vmatpush1.bf16.msra.mxu0 0
    %445 = vmatprep.mubr.bf16.mxu0 0
    %446 = vmatmul.mubr.bf16.gmra.mrb[0].mxu0 %v301
    %v447 = vpop.f32.mrb[0].mxu0
    %v448 = vadd.f32 %v171, %v447
    %v449 = vpop.f32.mrb[0].mxu0
    %v450 = vpop.f32.mrb[0].mxu0
    %v451 = vadd.f32 %v171, %v450
    %v452 = vpop.f32.mrb[0].mxu0
    %453 = vmatprep.mubr.bf16.mxu0 0
    %454 = vmatmul.mubr.bf16.gmra.mrb[0].mxu0 %v302
    %v455 = vpop.f32.mrb[0].mxu0
    %v456 = vadd.f32 %v171, %v455
    %v457 = vpop.f32.mrb[0].mxu0
    %v458 = vpop.f32.mrb[0].mxu0
    %v459 = vadd.f32 %v171, %v458
    %v460 = vpop.f32.mrb[0].mxu0
    %461 = vmatprep.mubr.bf16.mxu0 0
    %462 = vmatmul.mubr.bf16.gmra.mrb[0].mxu0 %v303
    %v463 = vpop.f32.mrb[0].mxu0
    %v464 = vadd.f32 %v171, %v463
    %v465 = vpop.f32.mrb[0].mxu0
    %v466 = vpop.f32.mrb[0].mxu0
    %v467 = vadd.f32 %v171, %v466
    %v468 = vpop.f32.mrb[0].mxu0
    %469 = vmatprep.mubr.bf16.mxu0 0
    %470 = vmatmul.mubr.bf16.gmra.mrb[0].mxu0 %v304
    %v471 = vpop.f32.mrb[0].mxu0
    %v472 = vadd.f32 %v171, %v471
    %v473 = vpop.f32.mrb[0].mxu0
    %v474 = vpop.f32.mrb[0].mxu0
    %v475 = vadd.f32 %v171, %v474
    %v476 = vpop.f32.mrb[0].mxu0
    %477 = vmatprep.mubr.bf16.mxu0 0
    %478 = vmatmul.mubr.bf16.gmra.mrb[0].mxu0 %v305
    %v479 = vpop.f32.mrb[0].mxu0
    %v480 = vadd.f32 %v171, %v479
    %v481 = vpop.f32.mrb[0].mxu0
    %v482 = vpop.f32.mrb[0].mxu0
    %v483 = vadd.f32 %v171, %v482
    %v484 = vpop.f32.mrb[0].mxu0
    %485 = vmatprep.mubr.bf16.mxu0 0
    %486 = vmatmul.mubr.bf16.gmra.mrb[0].mxu0 %v306
    %v487 = vpop.f32.mrb[0].mxu0
    %v488 = vadd.f32 %v171, %v487
    %v489 = vpop.f32.mrb[0].mxu0
    %v490 = vpop.f32.mrb[0].mxu0
    %v491 = vadd.f32 %v171, %v490
    %v492 = vpop.f32.mrb[0].mxu0
    %493 = vmatprep.mubr.bf16.mxu0 0
    %494 = vmatmul.mubr.bf16.gmra.mrb[0].mxu0 %v307
    %v495 = vpop.f32.mrb[0].mxu0
    %v496 = vadd.f32 %v171, %v495
    %v497 = vpop.f32.mrb[0].mxu0
    %v498 = vpop.f32.mrb[0].mxu0
    %v499 = vadd.f32 %v171, %v498
    %v500 = vpop.f32.mrb[0].mxu0
    %501 = vmatprep.mubr.bf16.mxu0 0
    %502 = vmatmul.mubr.bf16.gmra.mrb[0].mxu0 %v308
    %v503 = vpop.f32.mrb[0].mxu0
    %v504 = vadd.f32 %v171, %v503
    %v505 = vpop.f32.mrb[0].mxu0
    %v506 = vpop.f32.mrb[0].mxu0
    %v507 = vadd.f32 %v171, %v506
    %v508 = vpop.f32.mrb[0].mxu0
    %509 = vmatprep.mubr.bf16.mxu0 0
    %510 = vmatmul.mubr.bf16.gmra.mrb[0].mxu0 %v309
    %v511 = vpop.f32.mrb[0].mxu0
    %v512 = vadd.f32 %v171, %v511
    %v513 = vpop.f32.mrb[0].mxu0
    %v514 = vpop.f32.mrb[0].mxu0
    %v515 = vadd.f32 %v171, %v514
    %v516 = vpop.f32.mrb[0].mxu0
    %517 = vmatprep.mubr.bf16.mxu0 0
    %518 = vmatmul.mubr.bf16.gmra.mrb[0].mxu0 %v310
    %v519 = vpop.f32.mrb[0].mxu0
    %v520 = vadd.f32 %v171, %v519
    %v521 = vpop.f32.mrb[0].mxu0
    %v522 = vpop.f32.mrb[0].mxu0
    %v523 = vadd.f32 %v171, %v522
    %v524 = vpop.f32.mrb[0].mxu0
    %525 = vmatprep.mubr.bf16.mxu0 0
    %526 = vmatmul.mubr.bf16.gmra.mrb[0].mxu0 %v311
    %v527 = vpop.f32.mrb[0].mxu0
    %v528 = vadd.f32 %v171, %v527
    %v529 = vpop.f32.mrb[0].mxu0
    %v530 = vpop.f32.mrb[0].mxu0
    %v531 = vadd.f32 %v171, %v530
    %v532 = vpop.f32.mrb[0].mxu0
    %533 = vmatprep.mubr.bf16.mxu0 0
    %534 = vmatmul.mubr.bf16.gmra.mrb[0].mxu0 %v312
    %v535 = vpop.f32.mrb[0].mxu0
    %v536 = vadd.f32 %v171, %v535
    %v537 = vpop.f32.mrb[0].mxu0
    %v538 = vpop.f32.mrb[0].mxu0
    %v539 = vadd.f32 %v171, %v538
    %v540 = vpop.f32.mrb[0].mxu0
    %541 = vmatprep.mubr.bf16.mxu0 0
    %542 = vmatmul.mubr.bf16.gmra.mrb[0].mxu0 %v313
    %v543 = vpop.f32.mrb[0].mxu0
    %v544 = vadd.f32 %v171, %v543
    %v545 = vpop.f32.mrb[0].mxu0
    %v546 = vpop.f32.mrb[0].mxu0
    %v547 = vadd.f32 %v171, %v546
    %v548 = vpop.f32.mrb[0].mxu0
    %549 = vmatprep.mubr.bf16.mxu0 0
    %550 = vmatmul.mubr.bf16.gmra.mrb[0].mxu0 %v314
    %v551 = vpop.f32.mrb[0].mxu0
    %v552 = vadd.f32 %v171, %v551
    %v553 = vpop.f32.mrb[0].mxu0
    %v554 = vpop.f32.mrb[0].mxu0
    %v555 = vadd.f32 %v171, %v554
    %v556 = vpop.f32.mrb[0].mxu0
    %557 = vmatprep.mubr.bf16.mxu0 0
    %558 = vmatmul.mubr.bf16.gmra.mrb[0].mxu0 %v315
    %v559 = vpop.f32.mrb[0].mxu0
    %v560 = vadd.f32 %v171, %v559
    %v561 = vpop.f32.mrb[0].mxu0
    %v562 = vpop.f32.mrb[0].mxu0
    %v563 = vadd.f32 %v171, %v562
    %v564 = vpop.f32.mrb[0].mxu0
    %565 = vmatprep.mubr.bf16.mxu0 0
    %566 = vmatmul.mubr.bf16.gmra.mrb[0].mxu0 %v316
    %v567 = vpop.f32.mrb[0].mxu0
    %v568 = vadd.f32 %v171, %v567
    %v569 = vpop.f32.mrb[0].mxu0
    %v570 = vpop.f32.mrb[0].mxu0
    %v571 = vadd.f32 %v171, %v570
    %v572 = vpop.f32.mrb[0].mxu0
    %573 = vmatprep.mubr.bf16.mxu0 0
    %574 = vmatmul.mubr.bf16.gmra.mrb[0].mxu0 %v317
    %v575 = vpop.f32.mrb[0].mxu0
    %v576 = vadd.f32 %v171, %v575
    %v577 = vpop.f32.mrb[0].mxu0
    %v578 = vpop.f32.mrb[0].mxu0
    %v579 = vadd.f32 %v171, %v578
    %v580 = vpop.f32.mrb[0].mxu0
    %581 = vmatprep.mubr.bf16.mxu0 0
    %582 = vmatmul.mubr.bf16.gmra.mrb[0].mxu0 %v318
    %v583 = vpop.f32.mrb[0].mxu0
    %v584 = vadd.f32 %v171, %v583
    %v585 = vpop.f32.mrb[0].mxu0
    %v586 = vpop.f32.mrb[0].mxu0
    %v587 = vadd.f32 %v171, %v586
    %v588 = vpop.f32.mrb[0].mxu0
    %589 = vmatprep.mubr.bf16.mxu0 0
    %590 = vmatmul.mubr.bf16.gmra.mrb[0].mxu0 %v319
    %v591 = vpop.f32.mrb[0].mxu0
    %v592 = vadd.f32 %v171, %v591
    %v593 = vpop.f32.mrb[0].mxu0
    %v594 = vpop.f32.mrb[0].mxu0
    %v595 = vadd.f32 %v171, %v594
    %v596 = vpop.f32.mrb[0].mxu0
    %597 = vmatprep.mubr.bf16.mxu0 0
    %598 = vmatmul.mubr.bf16.gmra.mrb[0].mxu0 %v320
    %v599 = vpop.f32.mrb[0].mxu0
    %v600 = vadd.f32 %v171, %v599
    %v601 = vpop.f32.mrb[0].mxu0
    %v602 = vpop.f32.mrb[0].mxu0
    %v603 = vadd.f32 %v171, %v602
    %v604 = vpop.f32.mrb[0].mxu0
    %605 = vmatprep.mubr.bf16.mxu0 0
    %606 = vmatmul.mubr.bf16.gmra.mrb[0].mxu0 %v321
    %v607 = vpop.f32.mrb[0].mxu0
    %v608 = vadd.f32 %v171, %v607
    %v609 = vpop.f32.mrb[0].mxu0
    %v610 = vpop.f32.mrb[0].mxu0
    %v611 = vadd.f32 %v171, %v610
    %v612 = vpop.f32.mrb[0].mxu0
    %613 = vmatprep.mubr.bf16.mxu0 0
    %614 = vmatmul.mubr.bf16.gmra.mrb[0].mxu0 %v322
    %v615 = vpop.f32.mrb[0].mxu0
    %v616 = vadd.f32 %v171, %v615
    %v617 = vpop.f32.mrb[0].mxu0
    %v618 = vpop.f32.mrb[0].mxu0
    %v619 = vadd.f32 %v171, %v618
    %v620 = vpop.f32.mrb[0].mxu0
    %621 = vmatprep.mubr.bf16.mxu0 0
    %622 = vmatmul.mubr.bf16.gmra.mrb[0].mxu0 %v323
    %v623 = vpop.f32.mrb[0].mxu0
    %v624 = vadd.f32 %v171, %v623
    %v625 = vpop.f32.mrb[0].mxu0
    %v626 = vpop.f32.mrb[0].mxu0
    %v627 = vadd.f32 %v171, %v626
    %v628 = vpop.f32.mrb[0].mxu0
    %629 = vmatprep.mubr.bf16.mxu0 0
    %630 = vmatmul.mubr.bf16.gmra.mrb[0].mxu0 %v324
    %v631 = vpop.f32.mrb[0].mxu0
    %v632 = vadd.f32 %v171, %v631
    %v633 = vpop.f32.mrb[0].mxu0
    %v634 = vpop.f32.mrb[0].mxu0
    %v635 = vadd.f32 %v171, %v634
    %v636 = vpop.f32.mrb[0].mxu0
    %637 = vmatprep.mubr.bf16.mxu0 0
    %638 = vmatmul.mubr.bf16.gmra.mrb[0].mxu0 %v325
    %v639 = vpop.f32.mrb[0].mxu0
    %v640 = vadd.f32 %v171, %v639
    %v641 = vpop.f32.mrb[0].mxu0
    %v642 = vpop.f32.mrb[0].mxu0
    %v643 = vadd.f32 %v171, %v642
    %v644 = vpop.f32.mrb[0].mxu0
    %645 = vmatprep.mubr.bf16.mxu0 0
    %646 = vmatmul.mubr.bf16.gmra.mrb[0].mxu0 %v326
    %v647 = vpop.f32.mrb[0].mxu0
    %v648 = vadd.f32 %v171, %v647
    %v649 = vpop.f32.mrb[0].mxu0
    %v650 = vpop.f32.mrb[0].mxu0
    %v651 = vadd.f32 %v171, %v650
    %v652 = vpop.f32.mrb[0].mxu0
    %653 = vmatprep.mubr.bf16.mxu0 0
    %654 = vmatmul.mubr.bf16.gmra.mrb[0].mxu0 %v327
    %v655 = vpop.f32.mrb[0].mxu0
    %v656 = vadd.f32 %v171, %v655
    %v657 = vpop.f32.mrb[0].mxu0
    %v658 = vpop.f32.mrb[0].mxu0
    %v659 = vadd.f32 %v171, %v658
    %v660 = vpop.f32.mrb[0].mxu0
    %661 = vmatprep.mubr.bf16.mxu0 0
    %662 = vmatmul.mubr.bf16.gmra.mrb[0].mxu0 %v328
    %v663 = vpop.f32.mrb[0].mxu0
    %v664 = vadd.f32 %v171, %v663
    %v665 = vpop.f32.mrb[0].mxu0
    %v666 = vpop.f32.mrb[0].mxu0
    %v667 = vadd.f32 %v171, %v666
    %v668 = vpop.f32.mrb[0].mxu0
    %669 = vmatprep.mubr.bf16.mxu0 0
    %670 = vmatmul.mubr.bf16.gmra.mrb[0].mxu0 %v329
    %v671 = vpop.f32.mrb[0].mxu0
    %v672 = vadd.f32 %v171, %v671
    %v673 = vpop.f32.mrb[0].mxu0
    %v674 = vpop.f32.mrb[0].mxu0
    %v675 = vadd.f32 %v171, %v674
    %v676 = vpop.f32.mrb[0].mxu0
    %677 = vmatprep.mubr.bf16.mxu0 0
    %678 = vmatmul.mubr.bf16.gmra.mrb[0].mxu0 %v330
    %v679 = vpop.f32.mrb[0].mxu0
    %v680 = vadd.f32 %v171, %v679
    %v681 = vpop.f32.mrb[0].mxu0
    %v682 = vpop.f32.mrb[0].mxu0
    %v683 = vadd.f32 %v171, %v682
    %v684 = vpop.f32.mrb[0].mxu0
    %685 = vmatprep.mubr.bf16.mxu0 0
    %686 = vmatmul.mubr.bf16.gmra.mrb[0].mxu0 %v331
    %v687 = vpop.f32.mrb[0].mxu0
    %v688 = vadd.f32 %v171, %v687
    %v689 = vpop.f32.mrb[0].mxu0
    %v690 = vpop.f32.mrb[0].mxu0
    %v691 = vadd.f32 %v171, %v690
    %v692 = vpop.f32.mrb[0].mxu0
    %693 = vmatprep.mubr.bf16.mxu0 0
    %694 = vmatmul.mubr.bf16.gmra.mrb[0].mxu0 %v332
    %v695 = vpop.f32.mrb[0].mxu0
    %v696 = vadd.f32 %v171, %v695
    %v697 = vpop.f32.mrb[0].mxu0
    %v698 = vpop.f32.mrb[0].mxu0
    %v699 = vadd.f32 %v171, %v698
    %v700 = vpop.f32.mrb[0].mxu0
    %701 = vdwg.mxu0
    %v702 = vmax.f32 %v448, 0.0
    %v703 = vmax.f32 %v451, 0.0
    %v704 = vmax.f32 %v456, 0.0
    %v705 = vmax.f32 %v459, 0.0
    %v706 = vmax.f32 %v464, 0.0
    %v707 = vmax.f32 %v467, 0.0
    %v708 = vmax.f32 %v472, 0.0
    %v709 = vmax.f32 %v475, 0.0
    %v710 = vmax.f32 %v480, 0.0
    %v711 = vmax.f32 %v483, 0.0
    %v712 = vmax.f32 %v488, 0.0
    %v713 = vmax.f32 %v491, 0.0
    %v714 = vmax.f32 %v496, 0.0
    %v715 = vmax.f32 %v499, 0.0
    %v716 = vmax.f32 %v504, 0.0
    %v717 = vmax.f32 %v507, 0.0
    %v718 = vmax.f32 %v512, 0.0
    %v719 = vmax.f32 %v515, 0.0
    %v720 = vmax.f32 %v520, 0.0
    %v721 = vmax.f32 %v523, 0.0
    %v722 = vmax.f32 %v528, 0.0
    %v723 = vmax.f32 %v531, 0.0
    %v724 = vmax.f32 %v536, 0.0
    %v725 = vmax.f32 %v539, 0.0
    %v726 = vmax.f32 %v544, 0.0
    %v727 = vmax.f32 %v547, 0.0
    %v728 = vmax.f32 %v552, 0.0
    %v729 = vmax.f32 %v555, 0.0
    %v730 = vmax.f32 %v560, 0.0
    %v731 = vmax.f32 %v563, 0.0
    %v732 = vmax.f32 %v568, 0.0
    %v733 = vmax.f32 %v571, 0.0
    %v734 = vmax.f32 %v576, 0.0
    %v735 = vmax.f32 %v579, 0.0
    %v736 = vmax.f32 %v584, 0.0
    %v737 = vmax.f32 %v587, 0.0
    %v738 = vmax.f32 %v592, 0.0
    %v739 = vmax.f32 %v595, 0.0
    %v740 = vmax.f32 %v600, 0.0
    %v741 = vmax.f32 %v603, 0.0
    %v742 = vmax.f32 %v608, 0.0
    %v743 = vmax.f32 %v611, 0.0
    %v744 = vmax.f32 %v616, 0.0
    %v745 = vmax.f32 %v619, 0.0
    %v746 = vmax.f32 %v624, 0.0
    %v747 = vmax.f32 %v627, 0.0
    %v748 = vmax.f32 %v632, 0.0
    %v749 = vmax.f32 %v635, 0.0
    %v750 = vmax.f32 %v640, 0.0
    %v751 = vmax.f32 %v643, 0.0
    %v752 = vmax.f32 %v648, 0.0
    %v753 = vmax.f32 %v651, 0.0
    %v754 = vmax.f32 %v656, 0.0
    %v755 = vmax.f32 %v659, 0.0
    %v756 = vmax.f32 %v664, 0.0
    %v757 = vmax.f32 %v667, 0.0
    %v758 = vmax.f32 %v672, 0.0
    %v759 = vmax.f32 %v675, 0.0
    %v760 = vmax.f32 %v680, 0.0
    %v761 = vmax.f32 %v683, 0.0
    %v762 = vmax.f32 %v688, 0.0
    %v763 = vmax.f32 %v691, 0.0
    %v764 = vmax.f32 %v696, 0.0
    %v765 = vmax.f32 %v699, 0.0
    %v766 = vpack.c.bf16 %v703, %v702
    %v767 = vpack.c.bf16 %v705, %v704
    %v768 = vpack.c.bf16 %v707, %v706
    %v769 = vpack.c.bf16 %v709, %v708
    %v770 = vpack.c.bf16 %v711, %v710
    %v771 = vpack.c.bf16 %v713, %v712
    %v772 = vpack.c.bf16 %v715, %v714
    %v773 = vpack.c.bf16 %v717, %v716
    %v774 = vpack.c.bf16 %v719, %v718
    %v775 = vpack.c.bf16 %v721, %v720
    %v776 = vpack.c.bf16 %v723, %v722
    %v777 = vpack.c.bf16 %v725, %v724
    %v778 = vpack.c.bf16 %v727, %v726
    %v779 = vpack.c.bf16 %v729, %v728
    %v780 = vpack.c.bf16 %v731, %v730
    %v781 = vpack.c.bf16 %v733, %v732
    %v782 = vpack.c.bf16 %v735, %v734
    %v783 = vpack.c.bf16 %v737, %v736
    %v784 = vpack.c.bf16 %v739, %v738
    %v785 = vpack.c.bf16 %v741, %v740
    %v786 = vpack.c.bf16 %v743, %v742
    %v787 = vpack.c.bf16 %v745, %v744
    %v788 = vpack.c.bf16 %v747, %v746
    %v789 = vpack.c.bf16 %v749, %v748
    %v790 = vpack.c.bf16 %v751, %v750
    %v791 = vpack.c.bf16 %v753, %v752
    %v792 = vpack.c.bf16 %v755, %v754
    %v793 = vpack.c.bf16 %v757, %v756
    %v794 = vpack.c.bf16 %v759, %v758
    %v795 = vpack.c.bf16 %v761, %v760
    %v796 = vpack.c.bf16 %v763, %v762
    %v797 = vpack.c.bf16 %v765, %v764
    %v798 = vld [vmem:[#allocation8] sm:$0xff]
    %v799 = vld [vmem:[#allocation8 + $0x8] sm:$0xff]
    %v800 = vld [vmem:[#allocation8 + $0x10] sm:$0xff]
    %v801 = vld [vmem:[#allocation8 + $0x18] sm:$0xff]
    %v802 = vld [vmem:[#allocation8 + $0x20] sm:$0xff]
    %v803 = vld [vmem:[#allocation8 + $0x28] sm:$0xff]
    %v804 = vld [vmem:[#allocation8 + $0x30] sm:$0xff]
    %v805 = vld [vmem:[#allocation8 + $0x38] sm:$0xff]
    %v806 = vld [vmem:[#allocation8 + $0x40] sm:$0xff]
    %v807 = vld [vmem:[#allocation8 + $0x48] sm:$0xff]
    %v808 = vld [vmem:[#allocation8 + $0x50] sm:$0xff]
    %v809 = vld [vmem:[#allocation8 + $0x58] sm:$0xff]
    %v810 = vld [vmem:[#allocation8 + $0x60] sm:$0xff]
    %v811 = vld [vmem:[#allocation8 + $0x68] sm:$0xff]
    %v812 = vld [vmem:[#allocation8 + $0x70] sm:$0xff]
    %v813 = vld [vmem:[#allocation8 + $0x78] sm:$0xff]
    %v814 = vld [vmem:[#allocation10] sm:$0x3]
    %v816 = vlaneseq
    %v817 = vshrl.u32 %v816, 7
    %v818 = vsub.s32 0, %v817
    %v819 = vrot.slane %v814, %v818
    %v820 = vlaneseq
    %v821 = vshrl.u32 %v820, 7
    %v822 = vsub.s32 1, %v821
    %v823 = vrot.slane %v814, %v822
    %v842 = vunpack.c.l.b16 %v798
    %v843 = vunpack.c.h.b16 %v798
    %v844 = vunpack.c.l.b16 %v799
    %v845 = vunpack.c.h.b16 %v799
    %v846 = vunpack.c.l.b16 %v800
    %v847 = vunpack.c.h.b16 %v800
    %v848 = vunpack.c.l.b16 %v801
    %v849 = vunpack.c.h.b16 %v801
    %v850 = vunpack.c.l.b16 %v802
    %v851 = vunpack.c.h.b16 %v802
    %v852 = vunpack.c.l.b16 %v803
    %v853 = vunpack.c.h.b16 %v803
    %v854 = vunpack.c.l.b16 %v804
    %v855 = vunpack.c.h.b16 %v804
    %v856 = vunpack.c.l.b16 %v805
    %v857 = vunpack.c.h.b16 %v805
    %v858 = vunpack.c.l.b16 %v806
    %v859 = vunpack.c.h.b16 %v806
    %v860 = vunpack.c.l.b16 %v807
    %v861 = vunpack.c.h.b16 %v807
    %v862 = vunpack.c.l.b16 %v808
    %v863 = vunpack.c.h.b16 %v808
    %v864 = vunpack.c.l.b16 %v809
    %v865 = vunpack.c.h.b16 %v809
    %v866 = vunpack.c.l.b16 %v810
    %v867 = vunpack.c.h.b16 %v810
    %v868 = vunpack.c.l.b16 %v811
    %v869 = vunpack.c.h.b16 %v811
    %v870 = vunpack.c.l.b16 %v812
    %v871 = vunpack.c.h.b16 %v812
    %v872 = vunpack.c.l.b16 %v813
    %v873 = vunpack.c.h.b16 %v813
    %v874 = vpack.c.b16 %v844, %v842
    %v875 = vpack.c.b16 %v845, %v843
    %v876 = vpack.c.b16 %v848, %v846
    %v877 = vpack.c.b16 %v849, %v847
    %v878 = vpack.c.b16 %v852, %v850
    %v879 = vpack.c.b16 %v853, %v851
    %v880 = vpack.c.b16 %v856, %v854
    %v881 = vpack.c.b16 %v857, %v855
    %v882 = vpack.c.b16 %v860, %v858
    %v883 = vpack.c.b16 %v861, %v859
    %v884 = vpack.c.b16 %v864, %v862
    %v885 = vpack.c.b16 %v865, %v863
    %v886 = vpack.c.b16 %v868, %v866
    %v887 = vpack.c.b16 %v869, %v867
    %v888 = vpack.c.b16 %v872, %v870
    %v889 = vpack.c.b16 %v873, %v871
    %906 = vmatprep.subr.bf16.mxu0 %v875
    %907 = vmatpush1.bf16.msra.mxu0 %v874
    %908 = vmatprep.subr.bf16.mxu0 %v877
    %909 = vmatpush1.bf16.msra.mxu0 %v876
    %910 = vmatprep.subr.bf16.mxu0 %v879
    %911 = vmatpush1.bf16.msra.mxu0 %v878
    %912 = vmatprep.subr.bf16.mxu0 %v881
    %913 = vmatpush1.bf16.msra.mxu0 %v880
    %914 = vmatprep.subr.bf16.mxu0 %v883
    %915 = vmatpush1.bf16.msra.mxu0 %v882
    %916 = vmatprep.subr.bf16.mxu0 %v885
    %917 = vmatpush1.bf16.msra.mxu0 %v884
    %918 = vmatprep.subr.bf16.mxu0 %v887
    %919 = vmatpush1.bf16.msra.mxu0 %v886
    %920 = vmatprep.subr.bf16.mxu0 %v889
    %921 = vmatpush1.bf16.msra.mxu0 %v888
    %922 = vmatprep.subr.bf16.mxu0 0
    %923 = vmatpush1.bf16.msra.mxu0 0
    %924 = vmatprep.subr.bf16.mxu0 0
    %925 = vmatpush1.bf16.msra.mxu0 0
    %926 = vmatprep.subr.bf16.mxu0 0
    %927 = vmatpush1.bf16.msra.mxu0 0
    %928 = vmatprep.subr.bf16.mxu0 0
    %929 = vmatpush1.bf16.msra.mxu0 0
    %930 = vmatprep.subr.bf16.mxu0 0
    %931 = vmatpush1.bf16.msra.mxu0 0
    %932 = vmatprep.subr.bf16.mxu0 0
    %933 = vmatpush1.bf16.msra.mxu0 0
    %934 = vmatprep.subr.bf16.mxu0 0
    %935 = vmatpush1.bf16.msra.mxu0 0
    %936 = vmatprep.subr.bf16.mxu0 0
    %937 = vmatpush1.bf16.msra.mxu0 0
    %938 = vmatprep.mubr.bf16.mxu0 0
    %939 = vmatmul.mubr.bf16.gmra.mrb[0].mxu0 %v766
    %v940 = vpop.f32.mrb[0].mxu0
    %v941 = vadd.f32 %v819, %v940
    %v942 = vpop.f32.mrb[0].mxu0
    %v943 = vadd.f32 %v823, %v942
    %v944 = vpop.f32.mrb[0].mxu0
    %v945 = vadd.f32 %v819, %v944
    %v946 = vpop.f32.mrb[0].mxu0
    %v947 = vadd.f32 %v823, %v946
    %948 = vmatprep.mubr.bf16.mxu0 0
    %949 = vmatmul.mubr.bf16.gmra.mrb[0].mxu0 %v767
    %v950 = vpop.f32.mrb[0].mxu0
    %v951 = vadd.f32 %v819, %v950
    %v952 = vpop.f32.mrb[0].mxu0
    %v953 = vadd.f32 %v823, %v952
    %v954 = vpop.f32.mrb[0].mxu0
    %v955 = vadd.f32 %v819, %v954
    %v956 = vpop.f32.mrb[0].mxu0
    %v957 = vadd.f32 %v823, %v956
    %958 = vmatprep.mubr.bf16.mxu0 0
    %959 = vmatmul.mubr.bf16.gmra.mrb[0].mxu0 %v768
    %v960 = vpop.f32.mrb[0].mxu0
    %v961 = vadd.f32 %v819, %v960
    %v962 = vpop.f32.mrb[0].mxu0
    %v963 = vadd.f32 %v823, %v962
    %v964 = vpop.f32.mrb[0].mxu0
    %v965 = vadd.f32 %v819, %v964
    %v966 = vpop.f32.mrb[0].mxu0
    %v967 = vadd.f32 %v823, %v966
    %968 = vmatprep.mubr.bf16.mxu0 0
    %969 = vmatmul.mubr.bf16.gmra.mrb[0].mxu0 %v769
    %v970 = vpop.f32.mrb[0].mxu0
    %v971 = vadd.f32 %v819, %v970
    %v972 = vpop.f32.mrb[0].mxu0
    %v973 = vadd.f32 %v823, %v972
    %v974 = vpop.f32.mrb[0].mxu0
    %v975 = vadd.f32 %v819, %v974
    %v976 = vpop.f32.mrb[0].mxu0
    %v977 = vadd.f32 %v823, %v976
    %978 = vmatprep.mubr.bf16.mxu0 0
    %979 = vmatmul.mubr.bf16.gmra.mrb[0].mxu0 %v770
    %v980 = vpop.f32.mrb[0].mxu0
    %v981 = vadd.f32 %v819, %v980
    %v982 = vpop.f32.mrb[0].mxu0
    %v983 = vadd.f32 %v823, %v982
    %v984 = vpop.f32.mrb[0].mxu0
    %v985 = vadd.f32 %v819, %v984
    %v986 = vpop.f32.mrb[0].mxu0
    %v987 = vadd.f32 %v823, %v986
    %988 = vmatprep.mubr.bf16.mxu0 0
    %989 = vmatmul.mubr.bf16.gmra.mrb[0].mxu0 %v771
    %v990 = vpop.f32.mrb[0].mxu0
    %v991 = vadd.f32 %v819, %v990
    %v992 = vpop.f32.mrb[0].mxu0
    %v993 = vadd.f32 %v823, %v992
    %v994 = vpop.f32.mrb[0].mxu0
    %v995 = vadd.f32 %v819, %v994
    %v996 = vpop.f32.mrb[0].mxu0
    %v997 = vadd.f32 %v823, %v996
    %998 = vmatprep.mubr.bf16.mxu0 0
    %999 = vmatmul.mubr.bf16.gmra.mrb[0].mxu0 %v772
    %v1000 = vpop.f32.mrb[0].mxu0
    %v1001 = vadd.f32 %v819, %v1000
    %v1002 = vpop.f32.mrb[0].mxu0
    %v1003 = vadd.f32 %v823, %v1002
    %v1004 = vpop.f32.mrb[0].mxu0
    %v1005 = vadd.f32 %v819, %v1004
    %v1006 = vpop.f32.mrb[0].mxu0
    %v1007 = vadd.f32 %v823, %v1006
    %1008 = vmatprep.mubr.bf16.mxu0 0
    %1009 = vmatmul.mubr.bf16.gmra.mrb[0].mxu0 %v773
    %v1010 = vpop.f32.mrb[0].mxu0
    %v1011 = vadd.f32 %v819, %v1010
    %v1012 = vpop.f32.mrb[0].mxu0
    %v1013 = vadd.f32 %v823, %v1012
    %v1014 = vpop.f32.mrb[0].mxu0
    %v1015 = vadd.f32 %v819, %v1014
    %v1016 = vpop.f32.mrb[0].mxu0
    %v1017 = vadd.f32 %v823, %v1016
    %1018 = vmatprep.mubr.bf16.mxu0 0
    %1019 = vmatmul.mubr.bf16.gmra.mrb[0].mxu0 %v774
    %v1020 = vpop.f32.mrb[0].mxu0
    %v1021 = vadd.f32 %v819, %v1020
    %v1022 = vpop.f32.mrb[0].mxu0
    %v1023 = vadd.f32 %v823, %v1022
    %v1024 = vpop.f32.mrb[0].mxu0
    %v1025 = vadd.f32 %v819, %v1024
    %v1026 = vpop.f32.mrb[0].mxu0
    %v1027 = vadd.f32 %v823, %v1026
    %1028 = vmatprep.mubr.bf16.mxu0 0
    %1029 = vmatmul.mubr.bf16.gmra.mrb[0].mxu0 %v775
    %v1030 = vpop.f32.mrb[0].mxu0
    %v1031 = vadd.f32 %v819, %v1030
    %v1032 = vpop.f32.mrb[0].mxu0
    %v1033 = vadd.f32 %v823, %v1032
    %v1034 = vpop.f32.mrb[0].mxu0
    %v1035 = vadd.f32 %v819, %v1034
    %v1036 = vpop.f32.mrb[0].mxu0
    %v1037 = vadd.f32 %v823, %v1036
    %1038 = vmatprep.mubr.bf16.mxu0 0
    %1039 = vmatmul.mubr.bf16.gmra.mrb[0].mxu0 %v776
    %v1040 = vpop.f32.mrb[0].mxu0
    %v1041 = vadd.f32 %v819, %v1040
    %v1042 = vpop.f32.mrb[0].mxu0
    %v1043 = vadd.f32 %v823, %v1042
    %v1044 = vpop.f32.mrb[0].mxu0
    %v1045 = vadd.f32 %v819, %v1044
    %v1046 = vpop.f32.mrb[0].mxu0
    %v1047 = vadd.f32 %v823, %v1046
    %1048 = vmatprep.mubr.bf16.mxu0 0
    %1049 = vmatmul.mubr.bf16.gmra.mrb[0].mxu0 %v777
    %v1050 = vpop.f32.mrb[0].mxu0
    %v1051 = vadd.f32 %v819, %v1050
    %v1052 = vpop.f32.mrb[0].mxu0
    %v1053 = vadd.f32 %v823, %v1052
    %v1054 = vpop.f32.mrb[0].mxu0
    %v1055 = vadd.f32 %v819, %v1054
    %v1056 = vpop.f32.mrb[0].mxu0
    %v1057 = vadd.f32 %v823, %v1056
    %1058 = vmatprep.mubr.bf16.mxu0 0
    %1059 = vmatmul.mubr.bf16.gmra.mrb[0].mxu0 %v778
    %v1060 = vpop.f32.mrb[0].mxu0
    %v1061 = vadd.f32 %v819, %v1060
    %v1062 = vpop.f32.mrb[0].mxu0
    %v1063 = vadd.f32 %v823, %v1062
    %v1064 = vpop.f32.mrb[0].mxu0
    %v1065 = vadd.f32 %v819, %v1064
    %v1066 = vpop.f32.mrb[0].mxu0
    %v1067 = vadd.f32 %v823, %v1066
    %1068 = vmatprep.mubr.bf16.mxu0 0
    %1069 = vmatmul.mubr.bf16.gmra.mrb[0].mxu0 %v779
    %v1070 = vpop.f32.mrb[0].mxu0
    %v1071 = vadd.f32 %v819, %v1070
    %v1072 = vpop.f32.mrb[0].mxu0
    %v1073 = vadd.f32 %v823, %v1072
    %v1074 = vpop.f32.mrb[0].mxu0
    %v1075 = vadd.f32 %v819, %v1074
    %v1076 = vpop.f32.mrb[0].mxu0
    %v1077 = vadd.f32 %v823, %v1076
    %1078 = vmatprep.mubr.bf16.mxu0 0
    %1079 = vmatmul.mubr.bf16.gmra.mrb[0].mxu0 %v780
    %v1080 = vpop.f32.mrb[0].mxu0
    %v1081 = vadd.f32 %v819, %v1080
    %v1082 = vpop.f32.mrb[0].mxu0
    %v1083 = vadd.f32 %v823, %v1082
    %v1084 = vpop.f32.mrb[0].mxu0
    %v1085 = vadd.f32 %v819, %v1084
    %v1086 = vpop.f32.mrb[0].mxu0
    %v1087 = vadd.f32 %v823, %v1086
    %1088 = vmatprep.mubr.bf16.mxu0 0
    %1089 = vmatmul.mubr.bf16.gmra.mrb[0].mxu0 %v781
    %v1090 = vpop.f32.mrb[0].mxu0
    %v1091 = vadd.f32 %v819, %v1090
    %v1092 = vpop.f32.mrb[0].mxu0
    %v1093 = vadd.f32 %v823, %v1092
    %v1094 = vpop.f32.mrb[0].mxu0
    %v1095 = vadd.f32 %v819, %v1094
    %v1096 = vpop.f32.mrb[0].mxu0
    %v1097 = vadd.f32 %v823, %v1096
    %1098 = vmatprep.mubr.bf16.mxu0 0
    %1099 = vmatmul.mubr.bf16.gmra.mrb[0].mxu0 %v782
    %v1100 = vpop.f32.mrb[0].mxu0
    %v1101 = vadd.f32 %v819, %v1100
    %v1102 = vpop.f32.mrb[0].mxu0
    %v1103 = vadd.f32 %v823, %v1102
    %v1104 = vpop.f32.mrb[0].mxu0
    %v1105 = vadd.f32 %v819, %v1104
    %v1106 = vpop.f32.mrb[0].mxu0
    %v1107 = vadd.f32 %v823, %v1106
    %1108 = vmatprep.mubr.bf16.mxu0 0
    %1109 = vmatmul.mubr.bf16.gmra.mrb[0].mxu0 %v783
    %v1110 = vpop.f32.mrb[0].mxu0
    %v1111 = vadd.f32 %v819, %v1110
    %v1112 = vpop.f32.mrb[0].mxu0
    %v1113 = vadd.f32 %v823, %v1112
    %v1114 = vpop.f32.mrb[0].mxu0
    %v1115 = vadd.f32 %v819, %v1114
    %v1116 = vpop.f32.mrb[0].mxu0
    %v1117 = vadd.f32 %v823, %v1116
    %1118 = vmatprep.mubr.bf16.mxu0 0
    %1119 = vmatmul.mubr.bf16.gmra.mrb[0].mxu0 %v784
    %v1120 = vpop.f32.mrb[0].mxu0
    %v1121 = vadd.f32 %v819, %v1120
    %v1122 = vpop.f32.mrb[0].mxu0
    %v1123 = vadd.f32 %v823, %v1122
    %v1124 = vpop.f32.mrb[0].mxu0
    %v1125 = vadd.f32 %v819, %v1124
    %v1126 = vpop.f32.mrb[0].mxu0
    %v1127 = vadd.f32 %v823, %v1126
    %1128 = vmatprep.mubr.bf16.mxu0 0
    %1129 = vmatmul.mubr.bf16.gmra.mrb[0].mxu0 %v785
    %v1130 = vpop.f32.mrb[0].mxu0
    %v1131 = vadd.f32 %v819, %v1130
    %v1132 = vpop.f32.mrb[0].mxu0
    %v1133 = vadd.f32 %v823, %v1132
    %v1134 = vpop.f32.mrb[0].mxu0
    %v1135 = vadd.f32 %v819, %v1134
    %v1136 = vpop.f32.mrb[0].mxu0
    %v1137 = vadd.f32 %v823, %v1136
    %1138 = vmatprep.mubr.bf16.mxu0 0
    %1139 = vmatmul.mubr.bf16.gmra.mrb[0].mxu0 %v786
    %v1140 = vpop.f32.mrb[0].mxu0
    %v1141 = vadd.f32 %v819, %v1140
    %v1142 = vpop.f32.mrb[0].mxu0
    %v1143 = vadd.f32 %v823, %v1142
    %v1144 = vpop.f32.mrb[0].mxu0
    %v1145 = vadd.f32 %v819, %v1144
    %v1146 = vpop.f32.mrb[0].mxu0
    %v1147 = vadd.f32 %v823, %v1146
    %1148 = vmatprep.mubr.bf16.mxu0 0
    %1149 = vmatmul.mubr.bf16.gmra.mrb[0].mxu0 %v787
    %v1150 = vpop.f32.mrb[0].mxu0
    %v1151 = vadd.f32 %v819, %v1150
    %v1152 = vpop.f32.mrb[0].mxu0
    %v1153 = vadd.f32 %v823, %v1152
    %v1154 = vpop.f32.mrb[0].mxu0
    %v1155 = vadd.f32 %v819, %v1154
    %v1156 = vpop.f32.mrb[0].mxu0
    %v1157 = vadd.f32 %v823, %v1156
    %1158 = vmatprep.mubr.bf16.mxu0 0
    %1159 = vmatmul.mubr.bf16.gmra.mrb[0].mxu0 %v788
    %v1160 = vpop.f32.mrb[0].mxu0
    %v1161 = vadd.f32 %v819, %v1160
    %v1162 = vpop.f32.mrb[0].mxu0
    %v1163 = vadd.f32 %v823, %v1162
    %v1164 = vpop.f32.mrb[0].mxu0
    %v1165 = vadd.f32 %v819, %v1164
    %v1166 = vpop.f32.mrb[0].mxu0
    %v1167 = vadd.f32 %v823, %v1166
    %1168 = vmatprep.mubr.bf16.mxu0 0
    %1169 = vmatmul.mubr.bf16.gmra.mrb[0].mxu0 %v789
    %v1170 = vpop.f32.mrb[0].mxu0
    %v1171 = vadd.f32 %v819, %v1170
    %v1172 = vpop.f32.mrb[0].mxu0
    %v1173 = vadd.f32 %v823, %v1172
    %v1174 = vpop.f32.mrb[0].mxu0
    %v1175 = vadd.f32 %v819, %v1174
    %v1176 = vpop.f32.mrb[0].mxu0
    %v1177 = vadd.f32 %v823, %v1176
    %1178 = vmatprep.mubr.bf16.mxu0 0
    %1179 = vmatmul.mubr.bf16.gmra.mrb[0].mxu0 %v790
    %v1180 = vpop.f32.mrb[0].mxu0
    %v1181 = vadd.f32 %v819, %v1180
    %v1182 = vpop.f32.mrb[0].mxu0
    %v1183 = vadd.f32 %v823, %v1182
    %v1184 = vpop.f32.mrb[0].mxu0
    %v1185 = vadd.f32 %v819, %v1184
    %v1186 = vpop.f32.mrb[0].mxu0
    %v1187 = vadd.f32 %v823, %v1186
    %1188 = vmatprep.mubr.bf16.mxu0 0
    %1189 = vmatmul.mubr.bf16.gmra.mrb[0].mxu0 %v791
    %v1190 = vpop.f32.mrb[0].mxu0
    %v1191 = vadd.f32 %v819, %v1190
    %v1192 = vpop.f32.mrb[0].mxu0
    %v1193 = vadd.f32 %v823, %v1192
    %v1194 = vpop.f32.mrb[0].mxu0
    %v1195 = vadd.f32 %v819, %v1194
    %v1196 = vpop.f32.mrb[0].mxu0
    %v1197 = vadd.f32 %v823, %v1196
    %1198 = vmatprep.mubr.bf16.mxu0 0
    %1199 = vmatmul.mubr.bf16.gmra.mrb[0].mxu0 %v792
    %v1200 = vpop.f32.mrb[0].mxu0
    %v1201 = vadd.f32 %v819, %v1200
    %v1202 = vpop.f32.mrb[0].mxu0
    %v1203 = vadd.f32 %v823, %v1202
    %v1204 = vpop.f32.mrb[0].mxu0
    %v1205 = vadd.f32 %v819, %v1204
    %v1206 = vpop.f32.mrb[0].mxu0
    %v1207 = vadd.f32 %v823, %v1206
    %1208 = vmatprep.mubr.bf16.mxu0 0
    %1209 = vmatmul.mubr.bf16.gmra.mrb[0].mxu0 %v793
    %v1210 = vpop.f32.mrb[0].mxu0
    %v1211 = vadd.f32 %v819, %v1210
    %v1212 = vpop.f32.mrb[0].mxu0
    %v1213 = vadd.f32 %v823, %v1212
    %v1214 = vpop.f32.mrb[0].mxu0
    %v1215 = vadd.f32 %v819, %v1214
    %v1216 = vpop.f32.mrb[0].mxu0
    %v1217 = vadd.f32 %v823, %v1216
    %1218 = vmatprep.mubr.bf16.mxu0 0
    %1219 = vmatmul.mubr.bf16.gmra.mrb[0].mxu0 %v794
    %v1220 = vpop.f32.mrb[0].mxu0
    %v1221 = vadd.f32 %v819, %v1220
    %v1222 = vpop.f32.mrb[0].mxu0
    %v1223 = vadd.f32 %v823, %v1222
    %v1224 = vpop.f32.mrb[0].mxu0
    %v1225 = vadd.f32 %v819, %v1224
    %v1226 = vpop.f32.mrb[0].mxu0
    %v1227 = vadd.f32 %v823, %v1226
    %1228 = vmatprep.mubr.bf16.mxu0 0
    %1229 = vmatmul.mubr.bf16.gmra.mrb[0].mxu0 %v795
    %v1230 = vpop.f32.mrb[0].mxu0
    %v1231 = vadd.f32 %v819, %v1230
    %v1232 = vpop.f32.mrb[0].mxu0
    %v1233 = vadd.f32 %v823, %v1232
    %v1234 = vpop.f32.mrb[0].mxu0
    %v1235 = vadd.f32 %v819, %v1234
    %v1236 = vpop.f32.mrb[0].mxu0
    %v1237 = vadd.f32 %v823, %v1236
    %1238 = vmatprep.mubr.bf16.mxu0 0
    %1239 = vmatmul.mubr.bf16.gmra.mrb[0].mxu0 %v796
    %v1240 = vpop.f32.mrb[0].mxu0
    %v1241 = vadd.f32 %v819, %v1240
    %v1242 = vpop.f32.mrb[0].mxu0
    %v1243 = vadd.f32 %v823, %v1242
    %v1244 = vpop.f32.mrb[0].mxu0
    %v1245 = vadd.f32 %v819, %v1244
    %v1246 = vpop.f32.mrb[0].mxu0
    %v1247 = vadd.f32 %v823, %v1246
    %1248 = vmatprep.mubr.bf16.mxu0 0
    %1249 = vmatmul.mubr.bf16.gmra.mrb[0].mxu0 %v797
    %v1250 = vpop.f32.mrb[0].mxu0
    %v1251 = vadd.f32 %v819, %v1250
    %v1252 = vpop.f32.mrb[0].mxu0
    %v1253 = vadd.f32 %v823, %v1252
    %v1254 = vpop.f32.mrb[0].mxu0
    %v1255 = vadd.f32 %v819, %v1254
    %v1256 = vpop.f32.mrb[0].mxu0
    %v1257 = vadd.f32 %v823, %v1256
    %1258 = vdwg.mxu0
    %v1259 = vmax.f32 %v941, 0.0
    %v1260 = vmax.f32 %v943, 0.0
    %v1261 = vmax.f32 %v945, 0.0
    %v1262 = vmax.f32 %v947, 0.0
    %v1263 = vmax.f32 %v951, 0.0
    %v1264 = vmax.f32 %v953, 0.0
    %v1265 = vmax.f32 %v955, 0.0
    %v1266 = vmax.f32 %v957, 0.0
    %v1267 = vmax.f32 %v961, 0.0
    %v1268 = vmax.f32 %v963, 0.0
    %v1269 = vmax.f32 %v965, 0.0
    %v1270 = vmax.f32 %v967, 0.0
    %v1271 = vmax.f32 %v971, 0.0
    %v1272 = vmax.f32 %v973, 0.0
    %v1273 = vmax.f32 %v975, 0.0
    %v1274 = vmax.f32 %v977, 0.0
    %v1275 = vmax.f32 %v981, 0.0
    %v1276 = vmax.f32 %v983, 0.0
    %v1277 = vmax.f32 %v985, 0.0
    %v1278 = vmax.f32 %v987, 0.0
    %v1279 = vmax.f32 %v991, 0.0
    %v1280 = vmax.f32 %v993, 0.0
    %v1281 = vmax.f32 %v995, 0.0
    %v1282 = vmax.f32 %v997, 0.0
    %v1283 = vmax.f32 %v1001, 0.0
    %v1284 = vmax.f32 %v1003, 0.0
    %v1285 = vmax.f32 %v1005, 0.0
    %v1286 = vmax.f32 %v1007, 0.0
    %v1287 = vmax.f32 %v1011, 0.0
    %v1288 = vmax.f32 %v1013, 0.0
    %v1289 = vmax.f32 %v1015, 0.0
    %v1290 = vmax.f32 %v1017, 0.0
    %v1291 = vmax.f32 %v1021, 0.0
    %v1292 = vmax.f32 %v1023, 0.0
    %v1293 = vmax.f32 %v1025, 0.0
    %v1294 = vmax.f32 %v1027, 0.0
    %v1295 = vmax.f32 %v1031, 0.0
    %v1296 = vmax.f32 %v1033, 0.0
    %v1297 = vmax.f32 %v1035, 0.0
    %v1298 = vmax.f32 %v1037, 0.0
    %v1299 = vmax.f32 %v1041, 0.0
    %v1300 = vmax.f32 %v1043, 0.0
    %v1301 = vmax.f32 %v1045, 0.0
    %v1302 = vmax.f32 %v1047, 0.0
    %v1303 = vmax.f32 %v1051, 0.0
    %v1304 = vmax.f32 %v1053, 0.0
    %v1305 = vmax.f32 %v1055, 0.0
    %v1306 = vmax.f32 %v1057, 0.0
    %v1307 = vmax.f32 %v1061, 0.0
    %v1308 = vmax.f32 %v1063, 0.0
    %v1309 = vmax.f32 %v1065, 0.0
    %v1310 = vmax.f32 %v1067, 0.0
    %v1311 = vmax.f32 %v1071, 0.0
    %v1312 = vmax.f32 %v1073, 0.0
    %v1313 = vmax.f32 %v1075, 0.0
    %v1314 = vmax.f32 %v1077, 0.0
    %v1315 = vmax.f32 %v1081, 0.0
    %v1316 = vmax.f32 %v1083, 0.0
    %v1317 = vmax.f32 %v1085, 0.0
    %v1318 = vmax.f32 %v1087, 0.0
    %v1319 = vmax.f32 %v1091, 0.0
    %v1320 = vmax.f32 %v1093, 0.0
    %v1321 = vmax.f32 %v1095, 0.0
    %v1322 = vmax.f32 %v1097, 0.0
    %v1323 = vmax.f32 %v1101, 0.0
    %v1324 = vmax.f32 %v1103, 0.0
    %v1325 = vmax.f32 %v1105, 0.0
    %v1326 = vmax.f32 %v1107, 0.0
    %v1327 = vmax.f32 %v1111, 0.0
    %v1328 = vmax.f32 %v1113, 0.0
    %v1329 = vmax.f32 %v1115, 0.0
    %v1330 = vmax.f32 %v1117, 0.0
    %v1331 = vmax.f32 %v1121, 0.0
    %v1332 = vmax.f32 %v1123, 0.0
    %v1333 = vmax.f32 %v1125, 0.0
    %v1334 = vmax.f32 %v1127, 0.0
    %v1335 = vmax.f32 %v1131, 0.0
    %v1336 = vmax.f32 %v1133, 0.0
    %v1337 = vmax.f32 %v1135, 0.0
    %v1338 = vmax.f32 %v1137, 0.0
    %v1339 = vmax.f32 %v1141, 0.0
    %v1340 = vmax.f32 %v1143, 0.0
    %v1341 = vmax.f32 %v1145, 0.0
    %v1342 = vmax.f32 %v1147, 0.0
    %v1343 = vmax.f32 %v1151, 0.0
    %v1344 = vmax.f32 %v1153, 0.0
    %v1345 = vmax.f32 %v1155, 0.0
    %v1346 = vmax.f32 %v1157, 0.0
    %v1347 = vmax.f32 %v1161, 0.0
    %v1348 = vmax.f32 %v1163, 0.0
    %v1349 = vmax.f32 %v1165, 0.0
    %v1350 = vmax.f32 %v1167, 0.0
    %v1351 = vmax.f32 %v1171, 0.0
    %v1352 = vmax.f32 %v1173, 0.0
    %v1353 = vmax.f32 %v1175, 0.0
    %v1354 = vmax.f32 %v1177, 0.0
    %v1355 = vmax.f32 %v1181, 0.0
    %v1356 = vmax.f32 %v1183, 0.0
    %v1357 = vmax.f32 %v1185, 0.0
    %v1358 = vmax.f32 %v1187, 0.0
    %v1359 = vmax.f32 %v1191, 0.0
    %v1360 = vmax.f32 %v1193, 0.0
    %v1361 = vmax.f32 %v1195, 0.0
    %v1362 = vmax.f32 %v1197, 0.0
    %v1363 = vmax.f32 %v1201, 0.0
    %v1364 = vmax.f32 %v1203, 0.0
    %v1365 = vmax.f32 %v1205, 0.0
    %v1366 = vmax.f32 %v1207, 0.0
    %v1367 = vmax.f32 %v1211, 0.0
    %v1368 = vmax.f32 %v1213, 0.0
    %v1369 = vmax.f32 %v1215, 0.0
    %v1370 = vmax.f32 %v1217, 0.0
    %v1371 = vmax.f32 %v1221, 0.0
    %v1372 = vmax.f32 %v1223, 0.0
    %v1373 = vmax.f32 %v1225, 0.0
    %v1374 = vmax.f32 %v1227, 0.0
    %v1375 = vmax.f32 %v1231, 0.0
    %v1376 = vmax.f32 %v1233, 0.0
    %v1377 = vmax.f32 %v1235, 0.0
    %v1378 = vmax.f32 %v1237, 0.0
    %v1379 = vmax.f32 %v1241, 0.0
    %v1380 = vmax.f32 %v1243, 0.0
    %v1381 = vmax.f32 %v1245, 0.0
    %v1382 = vmax.f32 %v1247, 0.0
    %v1383 = vmax.f32 %v1251, 0.0
    %v1384 = vmax.f32 %v1253, 0.0
    %v1385 = vmax.f32 %v1255, 0.0
    %v1386 = vmax.f32 %v1257, 0.0
    %v1387 = vmax.f32 %v1259, %v1261
    %v1388 = vrot.slane %v1387, 4
    %v1389 = vmax.f32 %v1387, %v1388
    %v1390 = vrot.slane %v1389, 2
    %v1391 = vmax.f32 %v1389, %v1390
    %v1392 = vrot.slane %v1391, 1
    %v1393 = vmax.f32 %v1391, %v1392
    %v1394 = vmax.f32 %v1260, %v1262
    %v1395 = vrot.slane %v1394, 4
    %v1396 = vmax.f32 %v1394, %v1395
    %v1397 = vrot.slane %v1396, 2
    %v1398 = vmax.f32 %v1396, %v1397
    %v1399 = vrot.slane %v1398, 1
    %v1400 = vmax.f32 %v1398, %v1399
    %v1401 = vmax.f32 %v1263, %v1265
    %v1402 = vrot.slane %v1401, 4
    %v1403 = vmax.f32 %v1401, %v1402
    %v1404 = vrot.slane %v1403, 2
    %v1405 = vmax.f32 %v1403, %v1404
    %v1406 = vrot.slane %v1405, 1
    %v1407 = vmax.f32 %v1405, %v1406
    %v1408 = vmax.f32 %v1264, %v1266
    %v1409 = vrot.slane %v1408, 4
    %v1410 = vmax.f32 %v1408, %v1409
    %v1411 = vrot.slane %v1410, 2
    %v1412 = vmax.f32 %v1410, %v1411
    %v1413 = vrot.slane %v1412, 1
    %v1414 = vmax.f32 %v1412, %v1413
    %v1415 = vmax.f32 %v1267, %v1269
    %v1416 = vrot.slane %v1415, 4
    %v1417 = vmax.f32 %v1415, %v1416
    %v1418 = vrot.slane %v1417, 2
    %v1419 = vmax.f32 %v1417, %v1418
    %v1420 = vrot.slane %v1419, 1
    %v1421 = vmax.f32 %v1419, %v1420
    %v1422 = vmax.f32 %v1268, %v1270
    %v1423 = vrot.slane %v1422, 4
    %v1424 = vmax.f32 %v1422, %v1423
    %v1425 = vrot.slane %v1424, 2
    %v1426 = vmax.f32 %v1424, %v1425
    %v1427 = vrot.slane %v1426, 1
    %v1428 = vmax.f32 %v1426, %v1427
    %v1429 = vmax.f32 %v1271, %v1273
    %v1430 = vrot.slane %v1429, 4
    %v1431 = vmax.f32 %v1429, %v1430
    %v1432 = vrot.slane %v1431, 2
    %v1433 = vmax.f32 %v1431, %v1432
    %v1434 = vrot.slane %v1433, 1
    %v1435 = vmax.f32 %v1433, %v1434
    %v1436 = vmax.f32 %v1272, %v1274
    %v1437 = vrot.slane %v1436, 4
    %v1438 = vmax.f32 %v1436, %v1437
    %v1439 = vrot.slane %v1438, 2
    %v1440 = vmax.f32 %v1438, %v1439
    %v1441 = vrot.slane %v1440, 1
    %v1442 = vmax.f32 %v1440, %v1441
    %v1443 = vmax.f32 %v1275, %v1277
    %v1444 = vrot.slane %v1443, 4
    %v1445 = vmax.f32 %v1443, %v1444
    %v1446 = vrot.slane %v1445, 2
    %v1447 = vmax.f32 %v1445, %v1446
    %v1448 = vrot.slane %v1447, 1
    %v1449 = vmax.f32 %v1447, %v1448
    %v1450 = vmax.f32 %v1276, %v1278
    %v1451 = vrot.slane %v1450, 4
    %v1452 = vmax.f32 %v1450, %v1451
    %v1453 = vrot.slane %v1452, 2
    %v1454 = vmax.f32 %v1452, %v1453
    %v1455 = vrot.slane %v1454, 1
    %v1456 = vmax.f32 %v1454, %v1455
    %v1457 = vmax.f32 %v1279, %v1281
    %v1458 = vrot.slane %v1457, 4
    %v1459 = vmax.f32 %v1457, %v1458
    %v1460 = vrot.slane %v1459, 2
    %v1461 = vmax.f32 %v1459, %v1460
    %v1462 = vrot.slane %v1461, 1
    %v1463 = vmax.f32 %v1461, %v1462
    %v1464 = vmax.f32 %v1280, %v1282
    %v1465 = vrot.slane %v1464, 4
    %v1466 = vmax.f32 %v1464, %v1465
    %v1467 = vrot.slane %v1466, 2
    %v1468 = vmax.f32 %v1466, %v1467
    %v1469 = vrot.slane %v1468, 1
    %v1470 = vmax.f32 %v1468, %v1469
    %v1471 = vmax.f32 %v1283, %v1285
    %v1472 = vrot.slane %v1471, 4
    %v1473 = vmax.f32 %v1471, %v1472
    %v1474 = vrot.slane %v1473, 2
    %v1475 = vmax.f32 %v1473, %v1474
    %v1476 = vrot.slane %v1475, 1
    %v1477 = vmax.f32 %v1475, %v1476
    %v1478 = vmax.f32 %v1284, %v1286
    %v1479 = vrot.slane %v1478, 4
    %v1480 = vmax.f32 %v1478, %v1479
    %v1481 = vrot.slane %v1480, 2
    %v1482 = vmax.f32 %v1480, %v1481
    %v1483 = vrot.slane %v1482, 1
    %v1484 = vmax.f32 %v1482, %v1483
    %v1485 = vmax.f32 %v1287, %v1289
    %v1486 = vrot.slane %v1485, 4
    %v1487 = vmax.f32 %v1485, %v1486
    %v1488 = vrot.slane %v1487, 2
    %v1489 = vmax.f32 %v1487, %v1488
    %v1490 = vrot.slane %v1489, 1
    %v1491 = vmax.f32 %v1489, %v1490
    %v1492 = vmax.f32 %v1288, %v1290
    %v1493 = vrot.slane %v1492, 4
    %v1494 = vmax.f32 %v1492, %v1493
    %v1495 = vrot.slane %v1494, 2
    %v1496 = vmax.f32 %v1494, %v1495
    %v1497 = vrot.slane %v1496, 1
    %v1498 = vmax.f32 %v1496, %v1497
    %v1499 = vmax.f32 %v1291, %v1293
    %v1500 = vrot.slane %v1499, 4
    %v1501 = vmax.f32 %v1499, %v1500
    %v1502 = vrot.slane %v1501, 2
    %v1503 = vmax.f32 %v1501, %v1502
    %v1504 = vrot.slane %v1503, 1
    %v1505 = vmax.f32 %v1503, %v1504
    %v1506 = vmax.f32 %v1292, %v1294
    %v1507 = vrot.slane %v1506, 4
    %v1508 = vmax.f32 %v1506, %v1507
    %v1509 = vrot.slane %v1508, 2
    %v1510 = vmax.f32 %v1508, %v1509
    %v1511 = vrot.slane %v1510, 1
    %v1512 = vmax.f32 %v1510, %v1511
    %v1513 = vmax.f32 %v1295, %v1297
    %v1514 = vrot.slane %v1513, 4
    %v1515 = vmax.f32 %v1513, %v1514
    %v1516 = vrot.slane %v1515, 2
    %v1517 = vmax.f32 %v1515, %v1516
    %v1518 = vrot.slane %v1517, 1
    %v1519 = vmax.f32 %v1517, %v1518
    %v1520 = vmax.f32 %v1296, %v1298
    %v1521 = vrot.slane %v1520, 4
    %v1522 = vmax.f32 %v1520, %v1521
    %v1523 = vrot.slane %v1522, 2
    %v1524 = vmax.f32 %v1522, %v1523
    %v1525 = vrot.slane %v1524, 1
    %v1526 = vmax.f32 %v1524, %v1525
    %v1527 = vmax.f32 %v1299, %v1301
    %v1528 = vrot.slane %v1527, 4
    %v1529 = vmax.f32 %v1527, %v1528
    %v1530 = vrot.slane %v1529, 2
    %v1531 = vmax.f32 %v1529, %v1530
    %v1532 = vrot.slane %v1531, 1
    %v1533 = vmax.f32 %v1531, %v1532
    %v1534 = vmax.f32 %v1300, %v1302
    %v1535 = vrot.slane %v1534, 4
    %v1536 = vmax.f32 %v1534, %v1535
    %v1537 = vrot.slane %v1536, 2
    %v1538 = vmax.f32 %v1536, %v1537
    %v1539 = vrot.slane %v1538, 1
    %v1540 = vmax.f32 %v1538, %v1539
    %v1541 = vmax.f32 %v1303, %v1305
    %v1542 = vrot.slane %v1541, 4
    %v1543 = vmax.f32 %v1541, %v1542
    %v1544 = vrot.slane %v1543, 2
    %v1545 = vmax.f32 %v1543, %v1544
    %v1546 = vrot.slane %v1545, 1
    %v1547 = vmax.f32 %v1545, %v1546
    %v1548 = vmax.f32 %v1304, %v1306
    %v1549 = vrot.slane %v1548, 4
    %v1550 = vmax.f32 %v1548, %v1549
    %v1551 = vrot.slane %v1550, 2
    %v1552 = vmax.f32 %v1550, %v1551
    %v1553 = vrot.slane %v1552, 1
    %v1554 = vmax.f32 %v1552, %v1553
    %v1555 = vmax.f32 %v1307, %v1309
    %v1556 = vrot.slane %v1555, 4
    %v1557 = vmax.f32 %v1555, %v1556
    %v1558 = vrot.slane %v1557, 2
    %v1559 = vmax.f32 %v1557, %v1558
    %v1560 = vrot.slane %v1559, 1
    %v1561 = vmax.f32 %v1559, %v1560
    %v1562 = vmax.f32 %v1308, %v1310
    %v1563 = vrot.slane %v1562, 4
    %v1564 = vmax.f32 %v1562, %v1563
    %v1565 = vrot.slane %v1564, 2
    %v1566 = vmax.f32 %v1564, %v1565
    %v1567 = vrot.slane %v1566, 1
    %v1568 = vmax.f32 %v1566, %v1567
    %v1569 = vmax.f32 %v1311, %v1313
    %v1570 = vrot.slane %v1569, 4
    %v1571 = vmax.f32 %v1569, %v1570
    %v1572 = vrot.slane %v1571, 2
    %v1573 = vmax.f32 %v1571, %v1572
    %v1574 = vrot.slane %v1573, 1
    %v1575 = vmax.f32 %v1573, %v1574
    %v1576 = vmax.f32 %v1312, %v1314
    %v1577 = vrot.slane %v1576, 4
    %v1578 = vmax.f32 %v1576, %v1577
    %v1579 = vrot.slane %v1578, 2
    %v1580 = vmax.f32 %v1578, %v1579
    %v1581 = vrot.slane %v1580, 1
    %v1582 = vmax.f32 %v1580, %v1581
    %v1583 = vmax.f32 %v1315, %v1317
    %v1584 = vrot.slane %v1583, 4
    %v1585 = vmax.f32 %v1583, %v1584
    %v1586 = vrot.slane %v1585, 2
    %v1587 = vmax.f32 %v1585, %v1586
    %v1588 = vrot.slane %v1587, 1
    %v1589 = vmax.f32 %v1587, %v1588
    %v1590 = vmax.f32 %v1316, %v1318
    %v1591 = vrot.slane %v1590, 4
    %v1592 = vmax.f32 %v1590, %v1591
    %v1593 = vrot.slane %v1592, 2
    %v1594 = vmax.f32 %v1592, %v1593
    %v1595 = vrot.slane %v1594, 1
    %v1596 = vmax.f32 %v1594, %v1595
    %v1597 = vmax.f32 %v1319, %v1321
    %v1598 = vrot.slane %v1597, 4
    %v1599 = vmax.f32 %v1597, %v1598
    %v1600 = vrot.slane %v1599, 2
    %v1601 = vmax.f32 %v1599, %v1600
    %v1602 = vrot.slane %v1601, 1
    %v1603 = vmax.f32 %v1601, %v1602
    %v1604 = vmax.f32 %v1320, %v1322
    %v1605 = vrot.slane %v1604, 4
    %v1606 = vmax.f32 %v1604, %v1605
    %v1607 = vrot.slane %v1606, 2
    %v1608 = vmax.f32 %v1606, %v1607
    %v1609 = vrot.slane %v1608, 1
    %v1610 = vmax.f32 %v1608, %v1609
    %v1611 = vmax.f32 %v1323, %v1325
    %v1612 = vrot.slane %v1611, 4
    %v1613 = vmax.f32 %v1611, %v1612
    %v1614 = vrot.slane %v1613, 2
    %v1615 = vmax.f32 %v1613, %v1614
    %v1616 = vrot.slane %v1615, 1
    %v1617 = vmax.f32 %v1615, %v1616
    %v1618 = vmax.f32 %v1324, %v1326
    %v1619 = vrot.slane %v1618, 4
    %v1620 = vmax.f32 %v1618, %v1619
    %v1621 = vrot.slane %v1620, 2
    %v1622 = vmax.f32 %v1620, %v1621
    %v1623 = vrot.slane %v1622, 1
    %v1624 = vmax.f32 %v1622, %v1623
    %v1625 = vmax.f32 %v1327, %v1329
    %v1626 = vrot.slane %v1625, 4
    %v1627 = vmax.f32 %v1625, %v1626
    %v1628 = vrot.slane %v1627, 2
    %v1629 = vmax.f32 %v1627, %v1628
    %v1630 = vrot.slane %v1629, 1
    %v1631 = vmax.f32 %v1629, %v1630
    %v1632 = vmax.f32 %v1328, %v1330
    %v1633 = vrot.slane %v1632, 4
    %v1634 = vmax.f32 %v1632, %v1633
    %v1635 = vrot.slane %v1634, 2
    %v1636 = vmax.f32 %v1634, %v1635
    %v1637 = vrot.slane %v1636, 1
    %v1638 = vmax.f32 %v1636, %v1637
    %v1639 = vmax.f32 %v1331, %v1333
    %v1640 = vrot.slane %v1639, 4
    %v1641 = vmax.f32 %v1639, %v1640
    %v1642 = vrot.slane %v1641, 2
    %v1643 = vmax.f32 %v1641, %v1642
    %v1644 = vrot.slane %v1643, 1
    %v1645 = vmax.f32 %v1643, %v1644
    %v1646 = vmax.f32 %v1332, %v1334
    %v1647 = vrot.slane %v1646, 4
    %v1648 = vmax.f32 %v1646, %v1647
    %v1649 = vrot.slane %v1648, 2
    %v1650 = vmax.f32 %v1648, %v1649
    %v1651 = vrot.slane %v1650, 1
    %v1652 = vmax.f32 %v1650, %v1651
    %v1653 = vmax.f32 %v1335, %v1337
    %v1654 = vrot.slane %v1653, 4
    %v1655 = vmax.f32 %v1653, %v1654
    %v1656 = vrot.slane %v1655, 2
    %v1657 = vmax.f32 %v1655, %v1656
    %v1658 = vrot.slane %v1657, 1
    %v1659 = vmax.f32 %v1657, %v1658
    %v1660 = vmax.f32 %v1336, %v1338
    %v1661 = vrot.slane %v1660, 4
    %v1662 = vmax.f32 %v1660, %v1661
    %v1663 = vrot.slane %v1662, 2
    %v1664 = vmax.f32 %v1662, %v1663
    %v1665 = vrot.slane %v1664, 1
    %v1666 = vmax.f32 %v1664, %v1665
    %v1667 = vmax.f32 %v1339, %v1341
    %v1668 = vrot.slane %v1667, 4
    %v1669 = vmax.f32 %v1667, %v1668
    %v1670 = vrot.slane %v1669, 2
    %v1671 = vmax.f32 %v1669, %v1670
    %v1672 = vrot.slane %v1671, 1
    %v1673 = vmax.f32 %v1671, %v1672
    %v1674 = vmax.f32 %v1340, %v1342
    %v1675 = vrot.slane %v1674, 4
    %v1676 = vmax.f32 %v1674, %v1675
    %v1677 = vrot.slane %v1676, 2
    %v1678 = vmax.f32 %v1676, %v1677
    %v1679 = vrot.slane %v1678, 1
    %v1680 = vmax.f32 %v1678, %v1679
    %v1681 = vmax.f32 %v1343, %v1345
    %v1682 = vrot.slane %v1681, 4
    %v1683 = vmax.f32 %v1681, %v1682
    %v1684 = vrot.slane %v1683, 2
    %v1685 = vmax.f32 %v1683, %v1684
    %v1686 = vrot.slane %v1685, 1
    %v1687 = vmax.f32 %v1685, %v1686
    %v1688 = vmax.f32 %v1344, %v1346
    %v1689 = vrot.slane %v1688, 4
    %v1690 = vmax.f32 %v1688, %v1689
    %v1691 = vrot.slane %v1690, 2
    %v1692 = vmax.f32 %v1690, %v1691
    %v1693 = vrot.slane %v1692, 1
    %v1694 = vmax.f32 %v1692, %v1693
    %v1695 = vmax.f32 %v1347, %v1349
    %v1696 = vrot.slane %v1695, 4
    %v1697 = vmax.f32 %v1695, %v1696
    %v1698 = vrot.slane %v1697, 2
    %v1699 = vmax.f32 %v1697, %v1698
    %v1700 = vrot.slane %v1699, 1
    %v1701 = vmax.f32 %v1699, %v1700
    %v1702 = vmax.f32 %v1348, %v1350
    %v1703 = vrot.slane %v1702, 4
    %v1704 = vmax.f32 %v1702, %v1703
    %v1705 = vrot.slane %v1704, 2
    %v1706 = vmax.f32 %v1704, %v1705
    %v1707 = vrot.slane %v1706, 1
    %v1708 = vmax.f32 %v1706, %v1707
    %v1709 = vmax.f32 %v1351, %v1353
    %v1710 = vrot.slane %v1709, 4
    %v1711 = vmax.f32 %v1709, %v1710
    %v1712 = vrot.slane %v1711, 2
    %v1713 = vmax.f32 %v1711, %v1712
    %v1714 = vrot.slane %v1713, 1
    %v1715 = vmax.f32 %v1713, %v1714
    %v1716 = vmax.f32 %v1352, %v1354
    %v1717 = vrot.slane %v1716, 4
    %v1718 = vmax.f32 %v1716, %v1717
    %v1719 = vrot.slane %v1718, 2
    %v1720 = vmax.f32 %v1718, %v1719
    %v1721 = vrot.slane %v1720, 1
    %v1722 = vmax.f32 %v1720, %v1721
    %v1723 = vmax.f32 %v1355, %v1357
    %v1724 = vrot.slane %v1723, 4
    %v1725 = vmax.f32 %v1723, %v1724
    %v1726 = vrot.slane %v1725, 2
    %v1727 = vmax.f32 %v1725, %v1726
    %v1728 = vrot.slane %v1727, 1
    %v1729 = vmax.f32 %v1727, %v1728
    %v1730 = vmax.f32 %v1356, %v1358
    %v1731 = vrot.slane %v1730, 4
    %v1732 = vmax.f32 %v1730, %v1731
    %v1733 = vrot.slane %v1732, 2
    %v1734 = vmax.f32 %v1732, %v1733
    %v1735 = vrot.slane %v1734, 1
    %v1736 = vmax.f32 %v1734, %v1735
    %v1737 = vmax.f32 %v1359, %v1361
    %v1738 = vrot.slane %v1737, 4
    %v1739 = vmax.f32 %v1737, %v1738
    %v1740 = vrot.slane %v1739, 2
    %v1741 = vmax.f32 %v1739, %v1740
    %v1742 = vrot.slane %v1741, 1
    %v1743 = vmax.f32 %v1741, %v1742
    %v1744 = vmax.f32 %v1360, %v1362
    %v1745 = vrot.slane %v1744, 4
    %v1746 = vmax.f32 %v1744, %v1745
    %v1747 = vrot.slane %v1746, 2
    %v1748 = vmax.f32 %v1746, %v1747
    %v1749 = vrot.slane %v1748, 1
    %v1750 = vmax.f32 %v1748, %v1749
    %v1751 = vmax.f32 %v1363, %v1365
    %v1752 = vrot.slane %v1751, 4
    %v1753 = vmax.f32 %v1751, %v1752
    %v1754 = vrot.slane %v1753, 2
    %v1755 = vmax.f32 %v1753, %v1754
    %v1756 = vrot.slane %v1755, 1
    %v1757 = vmax.f32 %v1755, %v1756
    %v1758 = vmax.f32 %v1364, %v1366
    %v1759 = vrot.slane %v1758, 4
    %v1760 = vmax.f32 %v1758, %v1759
    %v1761 = vrot.slane %v1760, 2
    %v1762 = vmax.f32 %v1760, %v1761
    %v1763 = vrot.slane %v1762, 1
    %v1764 = vmax.f32 %v1762, %v1763
    %v1765 = vmax.f32 %v1367, %v1369
    %v1766 = vrot.slane %v1765, 4
    %v1767 = vmax.f32 %v1765, %v1766
    %v1768 = vrot.slane %v1767, 2
    %v1769 = vmax.f32 %v1767, %v1768
    %v1770 = vrot.slane %v1769, 1
    %v1771 = vmax.f32 %v1769, %v1770
    %v1772 = vmax.f32 %v1368, %v1370
    %v1773 = vrot.slane %v1772, 4
    %v1774 = vmax.f32 %v1772, %v1773
    %v1775 = vrot.slane %v1774, 2
    %v1776 = vmax.f32 %v1774, %v1775
    %v1777 = vrot.slane %v1776, 1
    %v1778 = vmax.f32 %v1776, %v1777
    %v1779 = vmax.f32 %v1371, %v1373
    %v1780 = vrot.slane %v1779, 4
    %v1781 = vmax.f32 %v1779, %v1780
    %v1782 = vrot.slane %v1781, 2
    %v1783 = vmax.f32 %v1781, %v1782
    %v1784 = vrot.slane %v1783, 1
    %v1785 = vmax.f32 %v1783, %v1784
    %v1786 = vmax.f32 %v1372, %v1374
    %v1787 = vrot.slane %v1786, 4
    %v1788 = vmax.f32 %v1786, %v1787
    %v1789 = vrot.slane %v1788, 2
    %v1790 = vmax.f32 %v1788, %v1789
    %v1791 = vrot.slane %v1790, 1
    %v1792 = vmax.f32 %v1790, %v1791
    %v1793 = vmax.f32 %v1375, %v1377
    %v1794 = vrot.slane %v1793, 4
    %v1795 = vmax.f32 %v1793, %v1794
    %v1796 = vrot.slane %v1795, 2
    %v1797 = vmax.f32 %v1795, %v1796
    %v1798 = vrot.slane %v1797, 1
    %v1799 = vmax.f32 %v1797, %v1798
    %v1800 = vmax.f32 %v1376, %v1378
    %v1801 = vrot.slane %v1800, 4
    %v1802 = vmax.f32 %v1800, %v1801
    %v1803 = vrot.slane %v1802, 2
    %v1804 = vmax.f32 %v1802, %v1803
    %v1805 = vrot.slane %v1804, 1
    %v1806 = vmax.f32 %v1804, %v1805
    %v1807 = vmax.f32 %v1379, %v1381
    %v1808 = vrot.slane %v1807, 4
    %v1809 = vmax.f32 %v1807, %v1808
    %v1810 = vrot.slane %v1809, 2
    %v1811 = vmax.f32 %v1809, %v1810
    %v1812 = vrot.slane %v1811, 1
    %v1813 = vmax.f32 %v1811, %v1812
    %v1814 = vmax.f32 %v1380, %v1382
    %v1815 = vrot.slane %v1814, 4
    %v1816 = vmax.f32 %v1814, %v1815
    %v1817 = vrot.slane %v1816, 2
    %v1818 = vmax.f32 %v1816, %v1817
    %v1819 = vrot.slane %v1818, 1
    %v1820 = vmax.f32 %v1818, %v1819
    %v1821 = vmax.f32 %v1383, %v1385
    %v1822 = vrot.slane %v1821, 4
    %v1823 = vmax.f32 %v1821, %v1822
    %v1824 = vrot.slane %v1823, 2
    %v1825 = vmax.f32 %v1823, %v1824
    %v1826 = vrot.slane %v1825, 1
    %v1827 = vmax.f32 %v1825, %v1826
    %v1828 = vmax.f32 %v1384, %v1386
    %v1829 = vrot.slane %v1828, 4
    %v1830 = vmax.f32 %v1828, %v1829
    %v1831 = vrot.slane %v1830, 2
    %v1832 = vmax.f32 %v1830, %v1831
    %v1833 = vrot.slane %v1832, 1
    %v1834 = vmax.f32 %v1832, %v1833
    %vm1899 = vcmask 1041409
    %v1900 = vsel %vm1899, %v1407, %v1393
    %vm1901 = vcmask 1042434
    %v1902 = vsel %vm1901, %v1421, %v1900
    %vm1903 = vcmask 1043459
    %v1904 = vsel %vm1903, %v1435, %v1902
    %vm1905 = vcmask 1044484
    %v1906 = vsel %vm1905, %v1449, %v1904
    %vm1907 = vcmask 1045509
    %v1908 = vsel %vm1907, %v1463, %v1906
    %vm1909 = vcmask 1046534
    %v1910 = vsel %vm1909, %v1477, %v1908
    %vm1911 = vcmask 1047559
    %v1912 = vsel %vm1911, %v1491, %v1910
    %v1913 = vsel %vm1899, %v1414, %v1400
    %v1914 = vsel %vm1901, %v1428, %v1913
    %v1915 = vsel %vm1903, %v1442, %v1914
    %v1916 = vsel %vm1905, %v1456, %v1915
    %v1917 = vsel %vm1907, %v1470, %v1916
    %v1918 = vsel %vm1909, %v1484, %v1917
    %v1919 = vsel %vm1911, %v1498, %v1918
    %v1920 = vsel %vm1899, %v1519, %v1505
    %v1921 = vsel %vm1901, %v1533, %v1920
    %v1922 = vsel %vm1903, %v1547, %v1921
    %v1923 = vsel %vm1905, %v1561, %v1922
    %v1924 = vsel %vm1907, %v1575, %v1923
    %v1925 = vsel %vm1909, %v1589, %v1924
    %v1926 = vsel %vm1911, %v1603, %v1925
    %v1927 = vsel %vm1899, %v1526, %v1512
    %v1928 = vsel %vm1901, %v1540, %v1927
    %v1929 = vsel %vm1903, %v1554, %v1928
    %v1930 = vsel %vm1905, %v1568, %v1929
    %v1931 = vsel %vm1907, %v1582, %v1930
    %v1932 = vsel %vm1909, %v1596, %v1931
    %v1933 = vsel %vm1911, %v1610, %v1932
    %v1934 = vsel %vm1899, %v1631, %v1617
    %v1935 = vsel %vm1901, %v1645, %v1934
    %v1936 = vsel %vm1903, %v1659, %v1935
    %v1937 = vsel %vm1905, %v1673, %v1936
    %v1938 = vsel %vm1907, %v1687, %v1937
    %v1939 = vsel %vm1909, %v1701, %v1938
    %v1940 = vsel %vm1911, %v1715, %v1939
    %v1941 = vsel %vm1899, %v1638, %v1624
    %v1942 = vsel %vm1901, %v1652, %v1941
    %v1943 = vsel %vm1903, %v1666, %v1942
    %v1944 = vsel %vm1905, %v1680, %v1943
    %v1945 = vsel %vm1907, %v1694, %v1944
    %v1946 = vsel %vm1909, %v1708, %v1945
    %v1947 = vsel %vm1911, %v1722, %v1946
    %v1948 = vsel %vm1899, %v1743, %v1729
    %v1949 = vsel %vm1901, %v1757, %v1948
    %v1950 = vsel %vm1903, %v1771, %v1949
    %v1951 = vsel %vm1905, %v1785, %v1950
    %v1952 = vsel %vm1907, %v1799, %v1951
    %v1953 = vsel %vm1909, %v1813, %v1952
    %v1954 = vsel %vm1911, %v1827, %v1953
    %v1955 = vsel %vm1899, %v1750, %v1736
    %v1956 = vsel %vm1901, %v1764, %v1955
    %v1957 = vsel %vm1903, %v1778, %v1956
    %v1958 = vsel %vm1905, %v1792, %v1957
    %v1959 = vsel %vm1907, %v1806, %v1958
    %v1960 = vsel %vm1909, %v1820, %v1959
    %v1961 = vsel %vm1911, %v1834, %v1960
    %1970 = vst [vmem:[#allocation11] sm:$0xff] %v1912
    %1971 = vst [vmem:[#allocation11 + $0x8] sm:$0xff] %v1919
    %1972 = vst [vmem:[#allocation11 + $0x10] sm:$0xff] %v1926
    %1973 = vst [vmem:[#allocation11 + $0x18] sm:$0xff] %v1933
    %1974 = vst [vmem:[#allocation11 + $0x20] sm:$0xff] %v1940
    %1975 = vst [vmem:[#allocation11 + $0x28] sm:$0xff] %v1947
    %1976 = vst [vmem:[#allocation11 + $0x30] sm:$0xff] %v1954
    %1977 = vst [vmem:[#allocation11 + $0x38] sm:$0xff] %v1961
    // Predicated region
    $region42: #{vote_qn2_forward.3} parent=1 // pred_check
      _
    $region43: #{vote_qn2_forward.3} parent=1 // pred_check_branch
      %1979 = sbr.rel (0) target = $region45
    $region44: #{vote_qn2_forward.3} parent=1 // pred_region
      %s1981 = ssub.s32 1024, 1024
      %1982 = vsyncadd [#allocation4], %s1981
      %s1983 = sshll.u32 [#allocation11], 4
      %s1984 = int_to_ptr.vmem [resolvable:$true] %s1983
      %1989 = dma.vmem_to_hbm [thread:$0]  %s1984, 1024, %s5, [#allocation4], 256, 256, 16
    $region45: #{vote_qn2_forward.3} parent=1 // pred_fallthru
      _
    // Predicated region
    $region46: #{vote_qn2_forward.3} parent=1 // pred_check
      _
    $region47: #{vote_qn2_forward.3} parent=1 // pred_check_branch
      %1991 = sbr.rel (0) target = $region49
    $region48: #{vote_qn2_forward.3} parent=1 // pred_region
      %1992 = dma.done [#allocation4], 1024
    $region49: #{vote_qn2_forward.3} parent=1 // pred_fallthru
      _
    %1993 = vsyncpa [#allocation3], 1
    %1994 = vsyncpa [#allocation6], 1
    %1995 = vsyncpa [#allocation9], 1
    %1996 = vsyncpa [#allocation4], 1

</llo_original>
